<compile_context>
chip_gen: v7x
topology: tpu7x:2x2x1
jax: 0.10.0
libtpu: 0.0.40
codegen_flags: <defaults>
</compile_context>

<pallas_src>
import jax
import jax.numpy as jnp
from jax.experimental import pallas as pl
from jax.experimental.pallas import tpu as pltpu

# ---- model dimensions (from bigram.py) ----
N_EMBED    = 384
N_HEAD     = 6
HEAD_SIZE  = N_EMBED // N_HEAD       # 64 (Block overrides head_size)
FF_HIDDEN  = 4 * N_EMBED             # 1536
BLOCK_SIZE = 256                     # max context (T must be <= this)
LN_EPS     = 1e-5
ATTN_SCALE = N_EMBED ** -0.5         # reference scales by C**-0.5 (n_embed)


def _layernorm(x, gamma, beta):
    mean = jnp.mean(x, axis=-1, keepdims=True)
    var = jnp.mean(jnp.square(x - mean), axis=-1, keepdims=True)
    inv = jax.lax.rsqrt(var + LN_EPS)
    return (x - mean) * inv * gamma + beta


def block_kernel(x_ref,
                 wqkv_ref, wproj_ref, bproj_ref,
                 w1_ref, b1_ref, w2_ref, b2_ref,
                 g1_ref, be1_ref, g2_ref, be2_ref,
                 o_ref):
    BB, T, C = x_ref.shape                       # batch rows per step, seq, embed
    TQ = o_ref.shape[1]                          # query-tile length (== T unless B==1 fallback)
    qstart = pl.multiple_of(pl.program_id(1) * TQ, TQ)

    # ---------------- LayerNorm 1 over all rows in this block (f32) --------
    x_flat = x_ref[...].reshape(BB * T, C)
    h = _layernorm(x_flat, g1_ref[0], be1_ref[0])
    h_bf = h.astype(jnp.bfloat16)

    # ---------------- fused QKV projection (full-width MXU matmul) ---------
    # columns: [Q (C) | K (C) | V (C)]; 1/sqrt(C) already folded into Q cols.
    qkv_bf = jnp.dot(h_bf, wqkv_ref[...],
                     preferred_element_type=jnp.float32).astype(jnp.bfloat16)

    # causal mask for this query tile (shared across batch rows / heads)
    row = jax.lax.broadcasted_iota(jnp.int32, (TQ, T), 0) + qstart
    col = jax.lax.broadcasted_iota(jnp.int32, (TQ, T), 1)
    causal = col <= row

    # -------- multi-head causal self-attention (bf16 MXU, f32 softmax) -----
    per_batch = []
    for b in range(BB):                                   # static unroll
        qkv_b = qkv_bf[b * T:(b + 1) * T]                 # (T, 3C), static slice
        if TQ == T:                                       # static branch
            q_rows = qkv_b[:, :C]                         # (TQ, C)
        else:
            # tiled fallback: slice query rows (sublane-aligned, no re-LN)
            q_rows = jax.lax.dynamic_slice(qkv_b, (qstart, 0), (TQ, C))

        head_outs = []
        for hh in range(N_HEAD):                          # static unroll
            qh = q_rows[:, hh * HEAD_SIZE:(hh + 1) * HEAD_SIZE]          # (TQ, 64)
            kh = qkv_b[:, C + hh * HEAD_SIZE:C + (hh + 1) * HEAD_SIZE]   # (T, 64)
            vh = qkv_b[:, 2 * C + hh * HEAD_SIZE:2 * C + (hh + 1) * HEAD_SIZE]

            s = jax.lax.dot_general(qh, kh, (((1,), (1,)), ((), ())),
                                    preferred_element_type=jnp.float32)  # (TQ, T)
            s = jnp.where(causal, s, -jnp.inf)
            s = s - jnp.max(s, axis=-1, keepdims=True)
            p = jnp.exp(s)
            p = p * pl.reciprocal(jnp.sum(p, axis=-1, keepdims=True), approx=True)

            oh = jnp.dot(p.astype(jnp.bfloat16), vh,
                         preferred_element_type=jnp.float32)             # (TQ, 64)
            head_outs.append(oh.astype(jnp.bfloat16))
        per_batch.append(jnp.concatenate(head_outs, axis=-1))            # (TQ, C)

    cat = per_batch[0] if BB == 1 else jnp.concatenate(per_batch, axis=0)

    # ---------------- fused output projection ------------------------------
    attn = jnp.dot(cat, wproj_ref[...],
                   preferred_element_type=jnp.float32) + bproj_ref[0]    # (BB*TQ, C)

    # ---------------- LayerNorm 2 + FFN (bf16 matmuls, f32 accumulate) -----
    h2 = _layernorm(attn, g2_ref[0], be2_ref[0]).astype(jnp.bfloat16)
    ff = jnp.maximum(
        jnp.dot(h2, w1_ref[...], preferred_element_type=jnp.float32) + b1_ref[0],
        0.0)
    out = jnp.dot(ff.astype(jnp.bfloat16), w2_ref[...],
                  preferred_element_type=jnp.float32) + b2_ref[0]

    o_ref[...] = out.reshape(BB, TQ, C).astype(o_ref.dtype)


def block_forward(x, p, tq=None):
    B, T, C = x.shape
    assert C == N_EMBED and T <= BLOCK_SIZE

    # --- query-tile length: only split T as a B==1 fallback on v7x ---------
    if tq is not None:
        TQ = tq
        assert T % TQ == 0
    else:
        dk = jax.devices()[0].device_kind.lower()
        multi_core = "v7" in dk            # v5e/v6e are single-TensorCore
        if B == 1 and multi_core and T > 128 and T % 128 == 0:
            TQ = 128                       # give both v7x cores work at B==1
        else:
            TQ = T
    NT = T // TQ

    # --- batch blocking: pack rows so matmul M >= ~128 for short sequences -
    BB = 1
    if NT == 1 and T < 128:
        cap = max(1, 256 // T)
        for d in range(min(B, cap), 0, -1):
            if B % d == 0:
                BB = d
                break

    bf16 = jnp.bfloat16
    # fused weights (host-side, once per call): Wqkv = [Wq*scale | Wk | Wv]
    wqkv = jnp.concatenate(
        [p["wq"] * ATTN_SCALE, p["wk"], p["wv"]], axis=1).astype(bf16)   # (C, 3C)
    wproj = p["wproj"].astype(bf16)                                      # (C, C)
    w1 = p["w1"].astype(bf16)
    w2 = p["w2"].astype(bf16)

    def fixed(shape):
        nd = len(shape)
        return pl.BlockSpec(shape, lambda b, t: (0,) * nd)

    in_specs = [
        pl.BlockSpec((BB, T, C), lambda b, t: (b, 0, 0)),    # x (full sequence)
        fixed((C, 3 * C)),                                   # Wqkv (Q pre-scaled)
        fixed((C, C)),                                       # Wproj
        fixed((1, C)),                                       # bproj
        fixed((C, FF_HIDDEN)), fixed((1, FF_HIDDEN)),        # W1, b1
        fixed((FF_HIDDEN, C)), fixed((1, C)),                # W2, b2
        fixed((1, C)), fixed((1, C)),                        # ln1 gamma, beta
        fixed((1, C)), fixed((1, C)),                        # ln2 gamma, beta
    ]

    return pl.pallas_call(
        block_kernel,
        out_shape=jax.ShapeDtypeStruct((B, T, C), x.dtype),
        grid_spec=pltpu.PrefetchScalarGridSpec(
            num_scalar_prefetch=0,
            grid=(B // BB, NT),
            in_specs=in_specs,
            out_specs=pl.BlockSpec((BB, TQ, C), lambda b, t: (b, t, 0))),
        compiler_params=pltpu.CompilerParams(
            dimension_semantics=("parallel", "parallel"),
            vmem_limit_bytes=48 * 1024 * 1024),
    )(x,
      wqkv, wproj, p["bproj"],
      w1, p["b1"], w2, p["b2"],
      p["g1"], p["be1"], p["g2"], p["be2"])


# ------------------ pure-JAX reference (for verification) ------------------
def block_reference(x, p):
    def ln(x, g, b):
        m = jnp.mean(x, -1, keepdims=True)
        v = jnp.mean((x - m) ** 2, -1, keepdims=True)
        return (x - m) / jnp.sqrt(v + LN_EPS) * g + b

    B, T, C = x.shape
    h = ln(x, p["g1"][0], p["be1"][0])
    q, k, v = h @ p["wq"], h @ p["wk"], h @ p["wv"]
    mask = jnp.tril(jnp.ones((T, T), bool))
    heads = []
    for hh in range(N_HEAD):
        s = slice(hh * HEAD_SIZE, (hh + 1) * HEAD_SIZE)
        wei = jnp.einsum("btd,bsd->bts", q[..., s], k[..., s]) * C ** -0.5
        wei = jnp.where(mask, wei, -jnp.inf)
        wei = jax.nn.softmax(wei, axis=-1)
        heads.append(jnp.einsum("bts,bsd->btd", wei, v[..., s]))
    attn = jnp.concatenate(heads, -1) @ p["wproj"] + p["bproj"][0]
    h2 = ln(attn, p["g2"][0], p["be2"][0])
    ff = jax.nn.relu(h2 @ p["w1"] + p["b1"][0])
    return ff @ p["w2"] + p["b2"][0]


def init_params(key):
    ks = jax.random.split(key, 10)
    sc = 0.02
    nrm = lambda k, shape: (jax.random.normal(k, shape, jnp.float32) * sc)
    return {
        "wq":    nrm(ks[0], (N_EMBED, N_EMBED)),
        "wk":    nrm(ks[1], (N_EMBED, N_EMBED)),
        "wv":    nrm(ks[2], (N_EMBED, N_EMBED)),
        "wproj": nrm(ks[3], (N_EMBED, N_EMBED)),
        "bproj": nrm(ks[4], (1, N_EMBED)),
        "w1":    nrm(ks[5], (N_EMBED, FF_HIDDEN)),
        "b1":    nrm(ks[6], (1, FF_HIDDEN)),
        "w2":    nrm(ks[7], (FF_HIDDEN, N_EMBED)),
        "b2":    nrm(ks[8], (1, N_EMBED)),
        # LayerNorm params: PyTorch default init (gamma=1, beta=0)
        "g1":  jnp.ones((1, N_EMBED), jnp.float32),
        "be1": jnp.zeros((1, N_EMBED), jnp.float32),
        "g2":  jnp.ones((1, N_EMBED), jnp.float32),
        "be2": jnp.zeros((1, N_EMBED), jnp.float32),
    }


if __name__ == "__main__":
    key = jax.random.PRNGKey(0)
    kx1, kx2, kp = jax.random.split(key, 3)
    params = init_params(kp)

    # small-shape check (exercises the batch-blocking path: BB=2, M=32)
    B, T = 2, 16
    x = jax.random.normal(kx1, (B, T, N_EMBED), jnp.float32)
    out = jax.block_until_ready(block_forward(x, params))
    ref = jax.block_until_ready(block_reference(x, params))
    assert out.shape == (B, T, N_EMBED)
    assert jnp.allclose(out, ref, atol=2e-2, rtol=2e-2), (
        f"T=16 max abs diff {jnp.max(jnp.abs(out - ref))}")

    # full-context check (single query tile, fused matmuls at M=256)
    T2 = BLOCK_SIZE
    x2 = jax.random.normal(kx2, (B, T2, N_EMBED), jnp.float32)
    out2 = jax.block_until_ready(block_forward(x2, params))
    ref2 = jax.block_until_ready(block_reference(x2, params))
    assert out2.shape == (B, T2, N_EMBED)
    assert jnp.allclose(out2, ref2, atol=2e-2, rtol=2e-2), (
        f"T=256 max abs diff {jnp.max(jnp.abs(out2 - ref2))}")

    # B==1 fallback path with forced query tiling (dynamic-slice branch)
    x3 = x2[:1]
    out3 = jax.block_until_ready(block_forward(x3, params, tq=128))
    ref3 = jax.block_until_ready(block_reference(x3, params))
    assert out3.shape == (1, T2, N_EMBED)
    assert jnp.allclose(out3, ref3, atol=2e-2, rtol=2e-2), (
        f"T=256/TQ=128 max abs diff {jnp.max(jnp.abs(out3 - ref3))}")

    print("KERNEL_OK")
</pallas_src>

<mosaic_0001>
module attributes {stable_mosaic.version = 11 : i64} {
  func.func @block_kernel(%arg0: i32, %arg1: i32, %arg2: memref<2x16x384xf32, #tpu.memory_space<vmem>>, %arg3: memref<384x1152xbf16, #tpu.memory_space<vmem>>, %arg4: memref<384x384xbf16, #tpu.memory_space<vmem>>, %arg5: memref<1x384xf32, #tpu.memory_space<vmem>>, %arg6: memref<384x1536xbf16, #tpu.memory_space<vmem>>, %arg7: memref<1x1536xf32, #tpu.memory_space<vmem>>, %arg8: memref<1536x384xbf16, #tpu.memory_space<vmem>>, %arg9: memref<1x384xf32, #tpu.memory_space<vmem>>, %arg10: memref<1x384xf32, #tpu.memory_space<vmem>>, %arg11: memref<1x384xf32, #tpu.memory_space<vmem>>, %arg12: memref<1x384xf32, #tpu.memory_space<vmem>>, %arg13: memref<1x384xf32, #tpu.memory_space<vmem>>, %arg14: memref<2x16x384xf32, #tpu.memory_space<vmem>>) attributes {dimension_semantics = [#tpu.dimension_semantics<parallel>, #tpu.dimension_semantics<parallel>], iteration_bounds = array<i64: 1, 1>, scalar_prefetch = 0 : i64, scratch_operands = 0 : i64, tpu.core_type = #tpu.core_type<tc>, window_params = [{transform_indices = @transform_0, window_bounds = array<i64: 2, 16, 384>}, {pipeline_mode = #tpu.pipeline_mode<synchronous>, transform_indices = @transform_1, window_bounds = array<i64: 384, 1152>}, {pipeline_mode = #tpu.pipeline_mode<synchronous>, transform_indices = @transform_2, window_bounds = array<i64: 384, 384>}, {pipeline_mode = #tpu.pipeline_mode<synchronous>, transform_indices = @transform_3, window_bounds = array<i64: 1, 384>}, {pipeline_mode = #tpu.pipeline_mode<synchronous>, transform_indices = @transform_4, window_bounds = array<i64: 384, 1536>}, {pipeline_mode = #tpu.pipeline_mode<synchronous>, transform_indices = @transform_5, window_bounds = array<i64: 1, 1536>}, {pipeline_mode = #tpu.pipeline_mode<synchronous>, transform_indices = @transform_6, window_bounds = array<i64: 1536, 384>}, {pipeline_mode = #tpu.pipeline_mode<synchronous>, transform_indices = @transform_7, window_bounds = array<i64: 1, 384>}, {pipeline_mode = #tpu.pipeline_mode<synchronous>, transform_indices = @transform_8, window_bounds = array<i64: 1, 384>}, {pipeline_mode = #tpu.pipeline_mode<synchronous>, transform_indices = @transform_9, window_bounds = array<i64: 1, 384>}, {pipeline_mode = #tpu.pipeline_mode<synchronous>, transform_indices = @transform_10, window_bounds = array<i64: 1, 384>}, {pipeline_mode = #tpu.pipeline_mode<synchronous>, transform_indices = @transform_11, window_bounds = array<i64: 1, 384>}, {transform_indices = @transform_12, window_bounds = array<i64: 2, 16, 384>}]} {
    %c16_i32 = arith.constant 16 : i32
    %0 = arith.muli %arg1, %c16_i32 : i32
    %1 = tpu.assume_multiple %0, 16 : i32
    %c0 = arith.constant 0 : index
    %c0_0 = arith.constant 0 : index
    %c0_1 = arith.constant 0 : index
    %2 = vector.load %arg2[%c0, %c0_0, %c0_1] : memref<2x16x384xf32, #tpu.memory_space<vmem>>, vector<2x16x384xf32>
    %3 = vector.shape_cast %2 : vector<2x16x384xf32> to vector<32x384xf32>
    %c0_2 = arith.constant 0 : index
    %c0_3 = arith.constant 0 : index
    %4 = vector.load %arg10[%c0_2, %c0_3] : memref<1x384xf32, #tpu.memory_space<vmem>>, vector<1x384xf32>
    %5 = vector.shape_cast %4 : vector<1x384xf32> to vector<384xf32>
    %c0_4 = arith.constant 0 : index
    %c0_5 = arith.constant 0 : index
    %6 = vector.load %arg11[%c0_4, %c0_5] : memref<1x384xf32, #tpu.memory_space<vmem>>, vector<1x384xf32>
    %7 = vector.shape_cast %6 : vector<1x384xf32> to vector<384xf32>
    %cst = arith.constant dense<0.000000e+00> : vector<32xf32>
    %8 = vector.multi_reduction <add>, %3, %cst [1] : vector<32x384xf32> to vector<32xf32>
    %9 = vector.shape_cast %8 : vector<32xf32> to vector<32x1xf32>
    %cst_6 = arith.constant 3.840000e+02 : f32
    %10 = vector.broadcast %cst_6 : f32 to vector<32x1xf32>
    %11 = arith.divf %9, %10 : vector<32x1xf32>
    %12 = vector.broadcast %11 : vector<32x1xf32> to vector<32x384xf32>
    %13 = arith.subf %3, %12 : vector<32x384xf32>
    %14 = arith.mulf %13, %13 : vector<32x384xf32>
    %cst_7 = arith.constant dense<0.000000e+00> : vector<32xf32>
    %15 = vector.multi_reduction <add>, %14, %cst_7 [1] : vector<32x384xf32> to vector<32xf32>
    %16 = vector.shape_cast %15 : vector<32xf32> to vector<32x1xf32>
    %cst_8 = arith.constant 3.840000e+02 : f32
    %17 = vector.broadcast %cst_8 : f32 to vector<32x1xf32>
    %18 = arith.divf %16, %17 : vector<32x1xf32>
    %cst_9 = arith.constant 9.99999974E-6 : f32
    %19 = vector.broadcast %cst_9 : f32 to vector<32x1xf32>
    %20 = arith.addf %18, %19 : vector<32x1xf32>
    %21 = math.rsqrt %20 : vector<32x1xf32>
    %22 = vector.broadcast %11 : vector<32x1xf32> to vector<32x384xf32>
    %23 = arith.subf %3, %22 : vector<32x384xf32>
    %24 = vector.broadcast %21 : vector<32x1xf32> to vector<32x384xf32>
    %25 = arith.mulf %23, %24 : vector<32x384xf32>
    %26 = vector.shape_cast %5 : vector<384xf32> to vector<1x384xf32>
    %27 = vector.broadcast %26 : vector<1x384xf32> to vector<32x384xf32>
    %28 = arith.mulf %25, %27 : vector<32x384xf32>
    %29 = vector.shape_cast %7 : vector<384xf32> to vector<1x384xf32>
    %30 = vector.broadcast %29 : vector<1x384xf32> to vector<32x384xf32>
    %31 = arith.addf %28, %30 : vector<32x384xf32>
    %32 = arith.truncf %31 : vector<32x384xf32> to vector<32x384xbf16>
    %c0_10 = arith.constant 0 : index
    %c0_11 = arith.constant 0 : index
    %33 = vector.load %arg3[%c0_10, %c0_11] : memref<384x1152xbf16, #tpu.memory_space<vmem>>, vector<384x1152xbf16>
    %cst_12 = arith.constant dense<0.000000e+00> : vector<32x1152xf32>
    %34 = tpu.matmul %32, %33, %cst_12 {dimension_numbers = #tpu.dot_dimension_numbers<[1], [0], [0], [1], [0, 0, 1, 1], [], []>} : vector<32x384xbf16>, vector<384x1152xbf16>, vector<32x1152xf32> -> vector<32x1152xf32>
    %35 = arith.truncf %34 : vector<32x1152xf32> to vector<32x1152xbf16>
    %36 = tpu.iota {dimensions = array<i32: 0>} : vector<16x16xi32>
    %37 = vector.broadcast %1 : i32 to vector<16x16xi32>
    %38 = arith.addi %36, %37 : vector<16x16xi32>
    %39 = tpu.iota {dimensions = array<i32: 1>} : vector<16x16xi32>
    %40 = arith.cmpi sle, %39, %38 : vector<16x16xi32>
    %41 = vector.extract_strided_slice %35 {offsets = [0, 0], sizes = [16, 1152], strides = [1, 1]} : vector<32x1152xbf16> to vector<16x1152xbf16>
    %42 = vector.extract_strided_slice %41 {offsets = [0, 0], sizes = [16, 384], strides = [1, 1]} : vector<16x1152xbf16> to vector<16x384xbf16>
    %43 = vector.extract_strided_slice %42 {offsets = [0, 0], sizes = [16, 64], strides = [1, 1]} : vector<16x384xbf16> to vector<16x64xbf16>
    %44 = vector.extract_strided_slice %41 {offsets = [0, 384], sizes = [16, 64], strides = [1, 1]} : vector<16x1152xbf16> to vector<16x64xbf16>
    %45 = vector.extract_strided_slice %41 {offsets = [0, 768], sizes = [16, 64], strides = [1, 1]} : vector<16x1152xbf16> to vector<16x64xbf16>
    %cst_13 = arith.constant dense<0.000000e+00> : vector<16x16xf32>
    %46 = tpu.matmul %43, %44, %cst_13 {dimension_numbers = #tpu.dot_dimension_numbers<[1], [1], [0], [0], [0, 0, 1, 0], [], []>} : vector<16x64xbf16>, vector<16x64xbf16>, vector<16x16xf32> -> vector<16x16xf32>
    %cst_14 = arith.constant 0xFF800000 : f32
    %47 = vector.broadcast %cst_14 : f32 to vector<16x16xf32>
    %48 = arith.select %40, %46, %47 : vector<16x16xi1>, vector<16x16xf32>
    %cst_15 = arith.constant dense<0xFF800000> : vector<16xf32>
    %49 = vector.multi_reduction <maximumf>, %48, %cst_15 [1] : vector<16x16xf32> to vector<16xf32>
    %50 = vector.shape_cast %49 : vector<16xf32> to vector<16x1xf32>
    %51 = vector.broadcast %50 : vector<16x1xf32> to vector<16x16xf32>
    %52 = arith.subf %48, %51 : vector<16x16xf32>
    %53 = math.exp %52 : vector<16x16xf32>
    %cst_16 = arith.constant dense<0.000000e+00> : vector<16xf32>
    %54 = vector.multi_reduction <add>, %53, %cst_16 [1] : vector<16x16xf32> to vector<16xf32>
    %55 = vector.shape_cast %54 : vector<16xf32> to vector<16x1xf32>
    %56 = tpu.reciprocal %55 {approx = true} : vector<16x1xf32> -> vector<16x1xf32>
    %57 = vector.broadcast %56 : vector<16x1xf32> to vector<16x16xf32>
    %58 = arith.mulf %53, %57 : vector<16x16xf32>
    %59 = arith.truncf %58 : vector<16x16xf32> to vector<16x16xbf16>
    %cst_17 = arith.constant dense<0.000000e+00> : vector<16x64xf32>
    %60 = tpu.matmul %59, %45, %cst_17 {dimension_numbers = #tpu.dot_dimension_numbers<[1], [0], [0], [1], [0, 0, 1, 1], [], []>} : vector<16x16xbf16>, vector<16x64xbf16>, vector<16x64xf32> -> vector<16x64xf32>
    %61 = arith.truncf %60 : vector<16x64xf32> to vector<16x64xbf16>
    %62 = vector.extract_strided_slice %42 {offsets = [0, 64], sizes = [16, 64], strides = [1, 1]} : vector<16x384xbf16> to vector<16x64xbf16>
    %63 = vector.extract_strided_slice %41 {offsets = [0, 448], sizes = [16, 64], strides = [1, 1]} : vector<16x1152xbf16> to vector<16x64xbf16>
    %64 = vector.extract_strided_slice %41 {offsets = [0, 832], sizes = [16, 64], strides = [1, 1]} : vector<16x1152xbf16> to vector<16x64xbf16>
    %cst_18 = arith.constant dense<0.000000e+00> : vector<16x16xf32>
    %65 = tpu.matmul %62, %63, %cst_18 {dimension_numbers = #tpu.dot_dimension_numbers<[1], [1], [0], [0], [0, 0, 1, 0], [], []>} : vector<16x64xbf16>, vector<16x64xbf16>, vector<16x16xf32> -> vector<16x16xf32>
    %cst_19 = arith.constant 0xFF800000 : f32
    %66 = vector.broadcast %cst_19 : f32 to vector<16x16xf32>
    %67 = arith.select %40, %65, %66 : vector<16x16xi1>, vector<16x16xf32>
    %cst_20 = arith.constant dense<0xFF800000> : vector<16xf32>
    %68 = vector.multi_reduction <maximumf>, %67, %cst_20 [1] : vector<16x16xf32> to vector<16xf32>
    %69 = vector.shape_cast %68 : vector<16xf32> to vector<16x1xf32>
    %70 = vector.broadcast %69 : vector<16x1xf32> to vector<16x16xf32>
    %71 = arith.subf %67, %70 : vector<16x16xf32>
    %72 = math.exp %71 : vector<16x16xf32>
    %cst_21 = arith.constant dense<0.000000e+00> : vector<16xf32>
    %73 = vector.multi_reduction <add>, %72, %cst_21 [1] : vector<16x16xf32> to vector<16xf32>
    %74 = vector.shape_cast %73 : vector<16xf32> to vector<16x1xf32>
    %75 = tpu.reciprocal %74 {approx = true} : vector<16x1xf32> -> vector<16x1xf32>
    %76 = vector.broadcast %75 : vector<16x1xf32> to vector<16x16xf32>
    %77 = arith.mulf %72, %76 : vector<16x16xf32>
    %78 = arith.truncf %77 : vector<16x16xf32> to vector<16x16xbf16>
    %cst_22 = arith.constant dense<0.000000e+00> : vector<16x64xf32>
    %79 = tpu.matmul %78, %64, %cst_22 {dimension_numbers = #tpu.dot_dimension_numbers<[1], [0], [0], [1], [0, 0, 1, 1], [], []>} : vector<16x16xbf16>, vector<16x64xbf16>, vector<16x64xf32> -> vector<16x64xf32>
    %80 = arith.truncf %79 : vector<16x64xf32> to vector<16x64xbf16>
    %81 = vector.extract_strided_slice %42 {offsets = [0, 128], sizes = [16, 64], strides = [1, 1]} : vector<16x384xbf16> to vector<16x64xbf16>
    %82 = vector.extract_strided_slice %41 {offsets = [0, 512], sizes = [16, 64], strides = [1, 1]} : vector<16x1152xbf16> to vector<16x64xbf16>
    %83 = vector.extract_strided_slice %41 {offsets = [0, 896], sizes = [16, 64], strides = [1, 1]} : vector<16x1152xbf16> to vector<16x64xbf16>
    %cst_23 = arith.constant dense<0.000000e+00> : vector<16x16xf32>
    %84 = tpu.matmul %81, %82, %cst_23 {dimension_numbers = #tpu.dot_dimension_numbers<[1], [1], [0], [0], [0, 0, 1, 0], [], []>} : vector<16x64xbf16>, vector<16x64xbf16>, vector<16x16xf32> -> vector<16x16xf32>
    %cst_24 = arith.constant 0xFF800000 : f32
    %85 = vector.broadcast %cst_24 : f32 to vector<16x16xf32>
    %86 = arith.select %40, %84, %85 : vector<16x16xi1>, vector<16x16xf32>
    %cst_25 = arith.constant dense<0xFF800000> : vector<16xf32>
    %87 = vector.multi_reduction <maximumf>, %86, %cst_25 [1] : vector<16x16xf32> to vector<16xf32>
    %88 = vector.shape_cast %87 : vector<16xf32> to vector<16x1xf32>
    %89 = vector.broadcast %88 : vector<16x1xf32> to vector<16x16xf32>
    %90 = arith.subf %86, %89 : vector<16x16xf32>
    %91 = math.exp %90 : vector<16x16xf32>
    %cst_26 = arith.constant dense<0.000000e+00> : vector<16xf32>
    %92 = vector.multi_reduction <add>, %91, %cst_26 [1] : vector<16x16xf32> to vector<16xf32>
    %93 = vector.shape_cast %92 : vector<16xf32> to vector<16x1xf32>
    %94 = tpu.reciprocal %93 {approx = true} : vector<16x1xf32> -> vector<16x1xf32>
    %95 = vector.broadcast %94 : vector<16x1xf32> to vector<16x16xf32>
    %96 = arith.mulf %91, %95 : vector<16x16xf32>
    %97 = arith.truncf %96 : vector<16x16xf32> to vector<16x16xbf16>
    %cst_27 = arith.constant dense<0.000000e+00> : vector<16x64xf32>
    %98 = tpu.matmul %97, %83, %cst_27 {dimension_numbers = #tpu.dot_dimension_numbers<[1], [0], [0], [1], [0, 0, 1, 1], [], []>} : vector<16x16xbf16>, vector<16x64xbf16>, vector<16x64xf32> -> vector<16x64xf32>
    %99 = arith.truncf %98 : vector<16x64xf32> to vector<16x64xbf16>
    %100 = vector.extract_strided_slice %42 {offsets = [0, 192], sizes = [16, 64], strides = [1, 1]} : vector<16x384xbf16> to vector<16x64xbf16>
    %101 = vector.extract_strided_slice %41 {offsets = [0, 576], sizes = [16, 64], strides = [1, 1]} : vector<16x1152xbf16> to vector<16x64xbf16>
    %102 = vector.extract_strided_slice %41 {offsets = [0, 960], sizes = [16, 64], strides = [1, 1]} : vector<16x1152xbf16> to vector<16x64xbf16>
    %cst_28 = arith.constant dense<0.000000e+00> : vector<16x16xf32>
    %103 = tpu.matmul %100, %101, %cst_28 {dimension_numbers = #tpu.dot_dimension_numbers<[1], [1], [0], [0], [0, 0, 1, 0], [], []>} : vector<16x64xbf16>, vector<16x64xbf16>, vector<16x16xf32> -> vector<16x16xf32>
    %cst_29 = arith.constant 0xFF800000 : f32
    %104 = vector.broadcast %cst_29 : f32 to vector<16x16xf32>
    %105 = arith.select %40, %103, %104 : vector<16x16xi1>, vector<16x16xf32>
    %cst_30 = arith.constant dense<0xFF800000> : vector<16xf32>
    %106 = vector.multi_reduction <maximumf>, %105, %cst_30 [1] : vector<16x16xf32> to vector<16xf32>
    %107 = vector.shape_cast %106 : vector<16xf32> to vector<16x1xf32>
    %108 = vector.broadcast %107 : vector<16x1xf32> to vector<16x16xf32>
    %109 = arith.subf %105, %108 : vector<16x16xf32>
    %110 = math.exp %109 : vector<16x16xf32>
    %cst_31 = arith.constant dense<0.000000e+00> : vector<16xf32>
    %111 = vector.multi_reduction <add>, %110, %cst_31 [1] : vector<16x16xf32> to vector<16xf32>
    %112 = vector.shape_cast %111 : vector<16xf32> to vector<16x1xf32>
    %113 = tpu.reciprocal %112 {approx = true} : vector<16x1xf32> -> vector<16x1xf32>
    %114 = vector.broadcast %113 : vector<16x1xf32> to vector<16x16xf32>
    %115 = arith.mulf %110, %114 : vector<16x16xf32>
    %116 = arith.truncf %115 : vector<16x16xf32> to vector<16x16xbf16>
    %cst_32 = arith.constant dense<0.000000e+00> : vector<16x64xf32>
    %117 = tpu.matmul %116, %102, %cst_32 {dimension_numbers = #tpu.dot_dimension_numbers<[1], [0], [0], [1], [0, 0, 1, 1], [], []>} : vector<16x16xbf16>, vector<16x64xbf16>, vector<16x64xf32> -> vector<16x64xf32>
    %118 = arith.truncf %117 : vector<16x64xf32> to vector<16x64xbf16>
    %119 = vector.extract_strided_slice %42 {offsets = [0, 256], sizes = [16, 64], strides = [1, 1]} : vector<16x384xbf16> to vector<16x64xbf16>
    %120 = vector.extract_strided_slice %41 {offsets = [0, 640], sizes = [16, 64], strides = [1, 1]} : vector<16x1152xbf16> to vector<16x64xbf16>
    %121 = vector.extract_strided_slice %41 {offsets = [0, 1024], sizes = [16, 64], strides = [1, 1]} : vector<16x1152xbf16> to vector<16x64xbf16>
    %cst_33 = arith.constant dense<0.000000e+00> : vector<16x16xf32>
    %122 = tpu.matmul %119, %120, %cst_33 {dimension_numbers = #tpu.dot_dimension_numbers<[1], [1], [0], [0], [0, 0, 1, 0], [], []>} : vector<16x64xbf16>, vector<16x64xbf16>, vector<16x16xf32> -> vector<16x16xf32>
    %cst_34 = arith.constant 0xFF800000 : f32
    %123 = vector.broadcast %cst_34 : f32 to vector<16x16xf32>
    %124 = arith.select %40, %122, %123 : vector<16x16xi1>, vector<16x16xf32>
    %cst_35 = arith.constant dense<0xFF800000> : vector<16xf32>
    %125 = vector.multi_reduction <maximumf>, %124, %cst_35 [1] : vector<16x16xf32> to vector<16xf32>
    %126 = vector.shape_cast %125 : vector<16xf32> to vector<16x1xf32>
    %127 = vector.broadcast %126 : vector<16x1xf32> to vector<16x16xf32>
    %128 = arith.subf %124, %127 : vector<16x16xf32>
    %129 = math.exp %128 : vector<16x16xf32>
    %cst_36 = arith.constant dense<0.000000e+00> : vector<16xf32>
    %130 = vector.multi_reduction <add>, %129, %cst_36 [1] : vector<16x16xf32> to vector<16xf32>
    %131 = vector.shape_cast %130 : vector<16xf32> to vector<16x1xf32>
    %132 = tpu.reciprocal %131 {approx = true} : vector<16x1xf32> -> vector<16x1xf32>
    %133 = vector.broadcast %132 : vector<16x1xf32> to vector<16x16xf32>
    %134 = arith.mulf %129, %133 : vector<16x16xf32>
    %135 = arith.truncf %134 : vector<16x16xf32> to vector<16x16xbf16>
    %cst_37 = arith.constant dense<0.000000e+00> : vector<16x64xf32>
    %136 = tpu.matmul %135, %121, %cst_37 {dimension_numbers = #tpu.dot_dimension_numbers<[1], [0], [0], [1], [0, 0, 1, 1], [], []>} : vector<16x16xbf16>, vector<16x64xbf16>, vector<16x64xf32> -> vector<16x64xf32>
    %137 = arith.truncf %136 : vector<16x64xf32> to vector<16x64xbf16>
    %138 = vector.extract_strided_slice %42 {offsets = [0, 320], sizes = [16, 64], strides = [1, 1]} : vector<16x384xbf16> to vector<16x64xbf16>
    %139 = vector.extract_strided_slice %41 {offsets = [0, 704], sizes = [16, 64], strides = [1, 1]} : vector<16x1152xbf16> to vector<16x64xbf16>
    %140 = vector.extract_strided_slice %41 {offsets = [0, 1088], sizes = [16, 64], strides = [1, 1]} : vector<16x1152xbf16> to vector<16x64xbf16>
    %cst_38 = arith.constant dense<0.000000e+00> : vector<16x16xf32>
    %141 = tpu.matmul %138, %139, %cst_38 {dimension_numbers = #tpu.dot_dimension_numbers<[1], [1], [0], [0], [0, 0, 1, 0], [], []>} : vector<16x64xbf16>, vector<16x64xbf16>, vector<16x16xf32> -> vector<16x16xf32>
    %cst_39 = arith.constant 0xFF800000 : f32
    %142 = vector.broadcast %cst_39 : f32 to vector<16x16xf32>
    %143 = arith.select %40, %141, %142 : vector<16x16xi1>, vector<16x16xf32>
    %cst_40 = arith.constant dense<0xFF800000> : vector<16xf32>
    %144 = vector.multi_reduction <maximumf>, %143, %cst_40 [1] : vector<16x16xf32> to vector<16xf32>
    %145 = vector.shape_cast %144 : vector<16xf32> to vector<16x1xf32>
    %146 = vector.broadcast %145 : vector<16x1xf32> to vector<16x16xf32>
    %147 = arith.subf %143, %146 : vector<16x16xf32>
    %148 = math.exp %147 : vector<16x16xf32>
    %cst_41 = arith.constant dense<0.000000e+00> : vector<16xf32>
    %149 = vector.multi_reduction <add>, %148, %cst_41 [1] : vector<16x16xf32> to vector<16xf32>
    %150 = vector.shape_cast %149 : vector<16xf32> to vector<16x1xf32>
    %151 = tpu.reciprocal %150 {approx = true} : vector<16x1xf32> -> vector<16x1xf32>
    %152 = vector.broadcast %151 : vector<16x1xf32> to vector<16x16xf32>
    %153 = arith.mulf %148, %152 : vector<16x16xf32>
    %154 = arith.truncf %153 : vector<16x16xf32> to vector<16x16xbf16>
    %cst_42 = arith.constant dense<0.000000e+00> : vector<16x64xf32>
    %155 = tpu.matmul %154, %140, %cst_42 {dimension_numbers = #tpu.dot_dimension_numbers<[1], [0], [0], [1], [0, 0, 1, 1], [], []>} : vector<16x16xbf16>, vector<16x64xbf16>, vector<16x64xf32> -> vector<16x64xf32>
    %156 = arith.truncf %155 : vector<16x64xf32> to vector<16x64xbf16>
    %157 = tpu.concatenate %61, %80, %99, %118, %137, %156 in 1 : vector<16x64xbf16>, vector<16x64xbf16>, vector<16x64xbf16>, vector<16x64xbf16>, vector<16x64xbf16>, vector<16x64xbf16> -> vector<16x384xbf16>
    %158 = vector.extract_strided_slice %35 {offsets = [16, 0], sizes = [16, 1152], strides = [1, 1]} : vector<32x1152xbf16> to vector<16x1152xbf16>
    %159 = vector.extract_strided_slice %158 {offsets = [0, 0], sizes = [16, 384], strides = [1, 1]} : vector<16x1152xbf16> to vector<16x384xbf16>
    %160 = vector.extract_strided_slice %159 {offsets = [0, 0], sizes = [16, 64], strides = [1, 1]} : vector<16x384xbf16> to vector<16x64xbf16>
    %161 = vector.extract_strided_slice %158 {offsets = [0, 384], sizes = [16, 64], strides = [1, 1]} : vector<16x1152xbf16> to vector<16x64xbf16>
    %162 = vector.extract_strided_slice %158 {offsets = [0, 768], sizes = [16, 64], strides = [1, 1]} : vector<16x1152xbf16> to vector<16x64xbf16>
    %cst_43 = arith.constant dense<0.000000e+00> : vector<16x16xf32>
    %163 = tpu.matmul %160, %161, %cst_43 {dimension_numbers = #tpu.dot_dimension_numbers<[1], [1], [0], [0], [0, 0, 1, 0], [], []>} : vector<16x64xbf16>, vector<16x64xbf16>, vector<16x16xf32> -> vector<16x16xf32>
    %cst_44 = arith.constant 0xFF800000 : f32
    %164 = vector.broadcast %cst_44 : f32 to vector<16x16xf32>
    %165 = arith.select %40, %163, %164 : vector<16x16xi1>, vector<16x16xf32>
    %cst_45 = arith.constant dense<0xFF800000> : vector<16xf32>
    %166 = vector.multi_reduction <maximumf>, %165, %cst_45 [1] : vector<16x16xf32> to vector<16xf32>
    %167 = vector.shape_cast %166 : vector<16xf32> to vector<16x1xf32>
    %168 = vector.broadcast %167 : vector<16x1xf32> to vector<16x16xf32>
    %169 = arith.subf %165, %168 : vector<16x16xf32>
    %170 = math.exp %169 : vector<16x16xf32>
    %cst_46 = arith.constant dense<0.000000e+00> : vector<16xf32>
    %171 = vector.multi_reduction <add>, %170, %cst_46 [1] : vector<16x16xf32> to vector<16xf32>
    %172 = vector.shape_cast %171 : vector<16xf32> to vector<16x1xf32>
    %173 = tpu.reciprocal %172 {approx = true} : vector<16x1xf32> -> vector<16x1xf32>
    %174 = vector.broadcast %173 : vector<16x1xf32> to vector<16x16xf32>
    %175 = arith.mulf %170, %174 : vector<16x16xf32>
    %176 = arith.truncf %175 : vector<16x16xf32> to vector<16x16xbf16>
    %cst_47 = arith.constant dense<0.000000e+00> : vector<16x64xf32>
    %177 = tpu.matmul %176, %162, %cst_47 {dimension_numbers = #tpu.dot_dimension_numbers<[1], [0], [0], [1], [0, 0, 1, 1], [], []>} : vector<16x16xbf16>, vector<16x64xbf16>, vector<16x64xf32> -> vector<16x64xf32>
    %178 = arith.truncf %177 : vector<16x64xf32> to vector<16x64xbf16>
    %179 = vector.extract_strided_slice %159 {offsets = [0, 64], sizes = [16, 64], strides = [1, 1]} : vector<16x384xbf16> to vector<16x64xbf16>
    %180 = vector.extract_strided_slice %158 {offsets = [0, 448], sizes = [16, 64], strides = [1, 1]} : vector<16x1152xbf16> to vector<16x64xbf16>
    %181 = vector.extract_strided_slice %158 {offsets = [0, 832], sizes = [16, 64], strides = [1, 1]} : vector<16x1152xbf16> to vector<16x64xbf16>
    %cst_48 = arith.constant dense<0.000000e+00> : vector<16x16xf32>
    %182 = tpu.matmul %179, %180, %cst_48 {dimension_numbers = #tpu.dot_dimension_numbers<[1], [1], [0], [0], [0, 0, 1, 0], [], []>} : vector<16x64xbf16>, vector<16x64xbf16>, vector<16x16xf32> -> vector<16x16xf32>
    %cst_49 = arith.constant 0xFF800000 : f32
    %183 = vector.broadcast %cst_49 : f32 to vector<16x16xf32>
    %184 = arith.select %40, %182, %183 : vector<16x16xi1>, vector<16x16xf32>
    %cst_50 = arith.constant dense<0xFF800000> : vector<16xf32>
    %185 = vector.multi_reduction <maximumf>, %184, %cst_50 [1] : vector<16x16xf32> to vector<16xf32>
    %186 = vector.shape_cast %185 : vector<16xf32> to vector<16x1xf32>
    %187 = vector.broadcast %186 : vector<16x1xf32> to vector<16x16xf32>
    %188 = arith.subf %184, %187 : vector<16x16xf32>
    %189 = math.exp %188 : vector<16x16xf32>
    %cst_51 = arith.constant dense<0.000000e+00> : vector<16xf32>
    %190 = vector.multi_reduction <add>, %189, %cst_51 [1] : vector<16x16xf32> to vector<16xf32>
    %191 = vector.shape_cast %190 : vector<16xf32> to vector<16x1xf32>
    %192 = tpu.reciprocal %191 {approx = true} : vector<16x1xf32> -> vector<16x1xf32>
    %193 = vector.broadcast %192 : vector<16x1xf32> to vector<16x16xf32>
    %194 = arith.mulf %189, %193 : vector<16x16xf32>
    %195 = arith.truncf %194 : vector<16x16xf32> to vector<16x16xbf16>
    %cst_52 = arith.constant dense<0.000000e+00> : vector<16x64xf32>
    %196 = tpu.matmul %195, %181, %cst_52 {dimension_numbers = #tpu.dot_dimension_numbers<[1], [0], [0], [1], [0, 0, 1, 1], [], []>} : vector<16x16xbf16>, vector<16x64xbf16>, vector<16x64xf32> -> vector<16x64xf32>
    %197 = arith.truncf %196 : vector<16x64xf32> to vector<16x64xbf16>
    %198 = vector.extract_strided_slice %159 {offsets = [0, 128], sizes = [16, 64], strides = [1, 1]} : vector<16x384xbf16> to vector<16x64xbf16>
    %199 = vector.extract_strided_slice %158 {offsets = [0, 512], sizes = [16, 64], strides = [1, 1]} : vector<16x1152xbf16> to vector<16x64xbf16>
    %200 = vector.extract_strided_slice %158 {offsets = [0, 896], sizes = [16, 64], strides = [1, 1]} : vector<16x1152xbf16> to vector<16x64xbf16>
    %cst_53 = arith.constant dense<0.000000e+00> : vector<16x16xf32>
    %201 = tpu.matmul %198, %199, %cst_53 {dimension_numbers = #tpu.dot_dimension_numbers<[1], [1], [0], [0], [0, 0, 1, 0], [], []>} : vector<16x64xbf16>, vector<16x64xbf16>, vector<16x16xf32> -> vector<16x16xf32>
    %cst_54 = arith.constant 0xFF800000 : f32
    %202 = vector.broadcast %cst_54 : f32 to vector<16x16xf32>
    %203 = arith.select %40, %201, %202 : vector<16x16xi1>, vector<16x16xf32>
    %cst_55 = arith.constant dense<0xFF800000> : vector<16xf32>
    %204 = vector.multi_reduction <maximumf>, %203, %cst_55 [1] : vector<16x16xf32> to vector<16xf32>
    %205 = vector.shape_cast %204 : vector<16xf32> to vector<16x1xf32>
    %206 = vector.broadcast %205 : vector<16x1xf32> to vector<16x16xf32>
    %207 = arith.subf %203, %206 : vector<16x16xf32>
    %208 = math.exp %207 : vector<16x16xf32>
    %cst_56 = arith.constant dense<0.000000e+00> : vector<16xf32>
    %209 = vector.multi_reduction <add>, %208, %cst_56 [1] : vector<16x16xf32> to vector<16xf32>
    %210 = vector.shape_cast %209 : vector<16xf32> to vector<16x1xf32>
    %211 = tpu.reciprocal %210 {approx = true} : vector<16x1xf32> -> vector<16x1xf32>
    %212 = vector.broadcast %211 : vector<16x1xf32> to vector<16x16xf32>
    %213 = arith.mulf %208, %212 : vector<16x16xf32>
    %214 = arith.truncf %213 : vector<16x16xf32> to vector<16x16xbf16>
    %cst_57 = arith.constant dense<0.000000e+00> : vector<16x64xf32>
    %215 = tpu.matmul %214, %200, %cst_57 {dimension_numbers = #tpu.dot_dimension_numbers<[1], [0], [0], [1], [0, 0, 1, 1], [], []>} : vector<16x16xbf16>, vector<16x64xbf16>, vector<16x64xf32> -> vector<16x64xf32>
    %216 = arith.truncf %215 : vector<16x64xf32> to vector<16x64xbf16>
    %217 = vector.extract_strided_slice %159 {offsets = [0, 192], sizes = [16, 64], strides = [1, 1]} : vector<16x384xbf16> to vector<16x64xbf16>
    %218 = vector.extract_strided_slice %158 {offsets = [0, 576], sizes = [16, 64], strides = [1, 1]} : vector<16x1152xbf16> to vector<16x64xbf16>
    %219 = vector.extract_strided_slice %158 {offsets = [0, 960], sizes = [16, 64], strides = [1, 1]} : vector<16x1152xbf16> to vector<16x64xbf16>
    %cst_58 = arith.constant dense<0.000000e+00> : vector<16x16xf32>
    %220 = tpu.matmul %217, %218, %cst_58 {dimension_numbers = #tpu.dot_dimension_numbers<[1], [1], [0], [0], [0, 0, 1, 0], [], []>} : vector<16x64xbf16>, vector<16x64xbf16>, vector<16x16xf32> -> vector<16x16xf32>
    %cst_59 = arith.constant 0xFF800000 : f32
    %221 = vector.broadcast %cst_59 : f32 to vector<16x16xf32>
    %222 = arith.select %40, %220, %221 : vector<16x16xi1>, vector<16x16xf32>
    %cst_60 = arith.constant dense<0xFF800000> : vector<16xf32>
    %223 = vector.multi_reduction <maximumf>, %222, %cst_60 [1] : vector<16x16xf32> to vector<16xf32>
    %224 = vector.shape_cast %223 : vector<16xf32> to vector<16x1xf32>
    %225 = vector.broadcast %224 : vector<16x1xf32> to vector<16x16xf32>
    %226 = arith.subf %222, %225 : vector<16x16xf32>
    %227 = math.exp %226 : vector<16x16xf32>
    %cst_61 = arith.constant dense<0.000000e+00> : vector<16xf32>
    %228 = vector.multi_reduction <add>, %227, %cst_61 [1] : vector<16x16xf32> to vector<16xf32>
    %229 = vector.shape_cast %228 : vector<16xf32> to vector<16x1xf32>
    %230 = tpu.reciprocal %229 {approx = true} : vector<16x1xf32> -> vector<16x1xf32>
    %231 = vector.broadcast %230 : vector<16x1xf32> to vector<16x16xf32>
    %232 = arith.mulf %227, %231 : vector<16x16xf32>
    %233 = arith.truncf %232 : vector<16x16xf32> to vector<16x16xbf16>
    %cst_62 = arith.constant dense<0.000000e+00> : vector<16x64xf32>
    %234 = tpu.matmul %233, %219, %cst_62 {dimension_numbers = #tpu.dot_dimension_numbers<[1], [0], [0], [1], [0, 0, 1, 1], [], []>} : vector<16x16xbf16>, vector<16x64xbf16>, vector<16x64xf32> -> vector<16x64xf32>
    %235 = arith.truncf %234 : vector<16x64xf32> to vector<16x64xbf16>
    %236 = vector.extract_strided_slice %159 {offsets = [0, 256], sizes = [16, 64], strides = [1, 1]} : vector<16x384xbf16> to vector<16x64xbf16>
    %237 = vector.extract_strided_slice %158 {offsets = [0, 640], sizes = [16, 64], strides = [1, 1]} : vector<16x1152xbf16> to vector<16x64xbf16>
    %238 = vector.extract_strided_slice %158 {offsets = [0, 1024], sizes = [16, 64], strides = [1, 1]} : vector<16x1152xbf16> to vector<16x64xbf16>
    %cst_63 = arith.constant dense<0.000000e+00> : vector<16x16xf32>
    %239 = tpu.matmul %236, %237, %cst_63 {dimension_numbers = #tpu.dot_dimension_numbers<[1], [1], [0], [0], [0, 0, 1, 0], [], []>} : vector<16x64xbf16>, vector<16x64xbf16>, vector<16x16xf32> -> vector<16x16xf32>
    %cst_64 = arith.constant 0xFF800000 : f32
    %240 = vector.broadcast %cst_64 : f32 to vector<16x16xf32>
    %241 = arith.select %40, %239, %240 : vector<16x16xi1>, vector<16x16xf32>
    %cst_65 = arith.constant dense<0xFF800000> : vector<16xf32>
    %242 = vector.multi_reduction <maximumf>, %241, %cst_65 [1] : vector<16x16xf32> to vector<16xf32>
    %243 = vector.shape_cast %242 : vector<16xf32> to vector<16x1xf32>
    %244 = vector.broadcast %243 : vector<16x1xf32> to vector<16x16xf32>
    %245 = arith.subf %241, %244 : vector<16x16xf32>
    %246 = math.exp %245 : vector<16x16xf32>
    %cst_66 = arith.constant dense<0.000000e+00> : vector<16xf32>
    %247 = vector.multi_reduction <add>, %246, %cst_66 [1] : vector<16x16xf32> to vector<16xf32>
    %248 = vector.shape_cast %247 : vector<16xf32> to vector<16x1xf32>
    %249 = tpu.reciprocal %248 {approx = true} : vector<16x1xf32> -> vector<16x1xf32>
    %250 = vector.broadcast %249 : vector<16x1xf32> to vector<16x16xf32>
    %251 = arith.mulf %246, %250 : vector<16x16xf32>
    %252 = arith.truncf %251 : vector<16x16xf32> to vector<16x16xbf16>
    %cst_67 = arith.constant dense<0.000000e+00> : vector<16x64xf32>
    %253 = tpu.matmul %252, %238, %cst_67 {dimension_numbers = #tpu.dot_dimension_numbers<[1], [0], [0], [1], [0, 0, 1, 1], [], []>} : vector<16x16xbf16>, vector<16x64xbf16>, vector<16x64xf32> -> vector<16x64xf32>
    %254 = arith.truncf %253 : vector<16x64xf32> to vector<16x64xbf16>
    %255 = vector.extract_strided_slice %159 {offsets = [0, 320], sizes = [16, 64], strides = [1, 1]} : vector<16x384xbf16> to vector<16x64xbf16>
    %256 = vector.extract_strided_slice %158 {offsets = [0, 704], sizes = [16, 64], strides = [1, 1]} : vector<16x1152xbf16> to vector<16x64xbf16>
    %257 = vector.extract_strided_slice %158 {offsets = [0, 1088], sizes = [16, 64], strides = [1, 1]} : vector<16x1152xbf16> to vector<16x64xbf16>
    %cst_68 = arith.constant dense<0.000000e+00> : vector<16x16xf32>
    %258 = tpu.matmul %255, %256, %cst_68 {dimension_numbers = #tpu.dot_dimension_numbers<[1], [1], [0], [0], [0, 0, 1, 0], [], []>} : vector<16x64xbf16>, vector<16x64xbf16>, vector<16x16xf32> -> vector<16x16xf32>
    %cst_69 = arith.constant 0xFF800000 : f32
    %259 = vector.broadcast %cst_69 : f32 to vector<16x16xf32>
    %260 = arith.select %40, %258, %259 : vector<16x16xi1>, vector<16x16xf32>
    %cst_70 = arith.constant dense<0xFF800000> : vector<16xf32>
    %261 = vector.multi_reduction <maximumf>, %260, %cst_70 [1] : vector<16x16xf32> to vector<16xf32>
    %262 = vector.shape_cast %261 : vector<16xf32> to vector<16x1xf32>
    %263 = vector.broadcast %262 : vector<16x1xf32> to vector<16x16xf32>
    %264 = arith.subf %260, %263 : vector<16x16xf32>
    %265 = math.exp %264 : vector<16x16xf32>
    %cst_71 = arith.constant dense<0.000000e+00> : vector<16xf32>
    %266 = vector.multi_reduction <add>, %265, %cst_71 [1] : vector<16x16xf32> to vector<16xf32>
    %267 = vector.shape_cast %266 : vector<16xf32> to vector<16x1xf32>
    %268 = tpu.reciprocal %267 {approx = true} : vector<16x1xf32> -> vector<16x1xf32>
    %269 = vector.broadcast %268 : vector<16x1xf32> to vector<16x16xf32>
    %270 = arith.mulf %265, %269 : vector<16x16xf32>
    %271 = arith.truncf %270 : vector<16x16xf32> to vector<16x16xbf16>
    %cst_72 = arith.constant dense<0.000000e+00> : vector<16x64xf32>
    %272 = tpu.matmul %271, %257, %cst_72 {dimension_numbers = #tpu.dot_dimension_numbers<[1], [0], [0], [1], [0, 0, 1, 1], [], []>} : vector<16x16xbf16>, vector<16x64xbf16>, vector<16x64xf32> -> vector<16x64xf32>
    %273 = arith.truncf %272 : vector<16x64xf32> to vector<16x64xbf16>
    %274 = tpu.concatenate %178, %197, %216, %235, %254, %273 in 1 : vector<16x64xbf16>, vector<16x64xbf16>, vector<16x64xbf16>, vector<16x64xbf16>, vector<16x64xbf16>, vector<16x64xbf16> -> vector<16x384xbf16>
    %275 = tpu.concatenate %157, %274 in 0 : vector<16x384xbf16>, vector<16x384xbf16> -> vector<32x384xbf16>
    %c0_73 = arith.constant 0 : index
    %c0_74 = arith.constant 0 : index
    %276 = vector.load %arg4[%c0_73, %c0_74] : memref<384x384xbf16, #tpu.memory_space<vmem>>, vector<384x384xbf16>
    %cst_75 = arith.constant dense<0.000000e+00> : vector<32x384xf32>
    %277 = tpu.matmul %275, %276, %cst_75 {dimension_numbers = #tpu.dot_dimension_numbers<[1], [0], [0], [1], [0, 0, 1, 1], [], []>} : vector<32x384xbf16>, vector<384x384xbf16>, vector<32x384xf32> -> vector<32x384xf32>
    %c0_76 = arith.constant 0 : index
    %c0_77 = arith.constant 0 : index
    %278 = vector.load %arg5[%c0_76, %c0_77] : memref<1x384xf32, #tpu.memory_space<vmem>>, vector<1x384xf32>
    %279 = vector.shape_cast %278 : vector<1x384xf32> to vector<384xf32>
    %280 = vector.shape_cast %279 : vector<384xf32> to vector<1x384xf32>
    %281 = vector.broadcast %280 : vector<1x384xf32> to vector<32x384xf32>
    %282 = arith.addf %277, %281 : vector<32x384xf32>
    %c0_78 = arith.constant 0 : index
    %c0_79 = arith.constant 0 : index
    %283 = vector.load %arg12[%c0_78, %c0_79] : memref<1x384xf32, #tpu.memory_space<vmem>>, vector<1x384xf32>
    %284 = vector.shape_cast %283 : vector<1x384xf32> to vector<384xf32>
    %c0_80 = arith.constant 0 : index
    %c0_81 = arith.constant 0 : index
    %285 = vector.load %arg13[%c0_80, %c0_81] : memref<1x384xf32, #tpu.memory_space<vmem>>, vector<1x384xf32>
    %286 = vector.shape_cast %285 : vector<1x384xf32> to vector<384xf32>
    %cst_82 = arith.constant dense<0.000000e+00> : vector<32xf32>
    %287 = vector.multi_reduction <add>, %282, %cst_82 [1] : vector<32x384xf32> to vector<32xf32>
    %288 = vector.shape_cast %287 : vector<32xf32> to vector<32x1xf32>
    %cst_83 = arith.constant 3.840000e+02 : f32
    %289 = vector.broadcast %cst_83 : f32 to vector<32x1xf32>
    %290 = arith.divf %288, %289 : vector<32x1xf32>
    %291 = vector.broadcast %290 : vector<32x1xf32> to vector<32x384xf32>
    %292 = arith.subf %282, %291 : vector<32x384xf32>
    %293 = arith.mulf %292, %292 : vector<32x384xf32>
    %cst_84 = arith.constant dense<0.000000e+00> : vector<32xf32>
    %294 = vector.multi_reduction <add>, %293, %cst_84 [1] : vector<32x384xf32> to vector<32xf32>
    %295 = vector.shape_cast %294 : vector<32xf32> to vector<32x1xf32>
    %cst_85 = arith.constant 3.840000e+02 : f32
    %296 = vector.broadcast %cst_85 : f32 to vector<32x1xf32>
    %297 = arith.divf %295, %296 : vector<32x1xf32>
    %cst_86 = arith.constant 9.99999974E-6 : f32
    %298 = vector.broadcast %cst_86 : f32 to vector<32x1xf32>
    %299 = arith.addf %297, %298 : vector<32x1xf32>
    %300 = math.rsqrt %299 : vector<32x1xf32>
    %301 = vector.broadcast %290 : vector<32x1xf32> to vector<32x384xf32>
    %302 = arith.subf %282, %301 : vector<32x384xf32>
    %303 = vector.broadcast %300 : vector<32x1xf32> to vector<32x384xf32>
    %304 = arith.mulf %302, %303 : vector<32x384xf32>
    %305 = vector.shape_cast %284 : vector<384xf32> to vector<1x384xf32>
    %306 = vector.broadcast %305 : vector<1x384xf32> to vector<32x384xf32>
    %307 = arith.mulf %304, %306 : vector<32x384xf32>
    %308 = vector.shape_cast %286 : vector<384xf32> to vector<1x384xf32>
    %309 = vector.broadcast %308 : vector<1x384xf32> to vector<32x384xf32>
    %310 = arith.addf %307, %309 : vector<32x384xf32>
    %311 = arith.truncf %310 : vector<32x384xf32> to vector<32x384xbf16>
    %c0_87 = arith.constant 0 : index
    %c0_88 = arith.constant 0 : index
    %312 = vector.load %arg6[%c0_87, %c0_88] : memref<384x1536xbf16, #tpu.memory_space<vmem>>, vector<384x1536xbf16>
    %cst_89 = arith.constant dense<0.000000e+00> : vector<32x1536xf32>
    %313 = tpu.matmul %311, %312, %cst_89 {dimension_numbers = #tpu.dot_dimension_numbers<[1], [0], [0], [1], [0, 0, 1, 1], [], []>} : vector<32x384xbf16>, vector<384x1536xbf16>, vector<32x1536xf32> -> vector<32x1536xf32>
    %c0_90 = arith.constant 0 : index
    %c0_91 = arith.constant 0 : index
    %314 = vector.load %arg7[%c0_90, %c0_91] : memref<1x1536xf32, #tpu.memory_space<vmem>>, vector<1x1536xf32>
    %315 = vector.shape_cast %314 : vector<1x1536xf32> to vector<1536xf32>
    %316 = vector.shape_cast %315 : vector<1536xf32> to vector<1x1536xf32>
    %317 = vector.broadcast %316 : vector<1x1536xf32> to vector<32x1536xf32>
    %318 = arith.addf %313, %317 : vector<32x1536xf32>
    %cst_92 = arith.constant 0.000000e+00 : f32
    %319 = vector.broadcast %cst_92 : f32 to vector<32x1536xf32>
    %320 = arith.maximumf %318, %319 : vector<32x1536xf32>
    %321 = arith.truncf %320 : vector<32x1536xf32> to vector<32x1536xbf16>
    %c0_93 = arith.constant 0 : index
    %c0_94 = arith.constant 0 : index
    %322 = vector.load %arg8[%c0_93, %c0_94] : memref<1536x384xbf16, #tpu.memory_space<vmem>>, vector<1536x384xbf16>
    %cst_95 = arith.constant dense<0.000000e+00> : vector<32x384xf32>
    %323 = tpu.matmul %321, %322, %cst_95 {dimension_numbers = #tpu.dot_dimension_numbers<[1], [0], [0], [1], [0, 0, 1, 1], [], []>} : vector<32x1536xbf16>, vector<1536x384xbf16>, vector<32x384xf32> -> vector<32x384xf32>
    %c0_96 = arith.constant 0 : index
    %c0_97 = arith.constant 0 : index
    %324 = vector.load %arg9[%c0_96, %c0_97] : memref<1x384xf32, #tpu.memory_space<vmem>>, vector<1x384xf32>
    %325 = vector.shape_cast %324 : vector<1x384xf32> to vector<384xf32>
    %326 = vector.shape_cast %325 : vector<384xf32> to vector<1x384xf32>
    %327 = vector.broadcast %326 : vector<1x384xf32> to vector<32x384xf32>
    %328 = arith.addf %323, %327 : vector<32x384xf32>
    %329 = vector.shape_cast %328 : vector<32x384xf32> to vector<2x16x384xf32>
    %c0_98 = arith.constant 0 : index
    %c0_99 = arith.constant 0 : index
    %c0_100 = arith.constant 0 : index
    %330 = vector.load %arg14[%c0_98, %c0_99, %c0_100] : memref<2x16x384xf32, #tpu.memory_space<vmem>>, vector<2x16x384xf32>
    tpu.vector_store %arg14[%c0_98, %c0_99, %c0_100], %329 {strides = array<i32>} : memref<2x16x384xf32, #tpu.memory_space<vmem>>, vector<2x16x384xf32>,
    return
  }
  func.func @transform_0(%arg0: i32, %arg1: i32) -> (i32, i32, i32) {
    %c0_i32 = arith.constant 0 : i32
    %c0_i32_0 = arith.constant 0 : i32
    %c0_i32_1 = arith.constant 0 : i32
    return %arg0, %c0_i32, %c0_i32_0 : i32, i32, i32
  }
  func.func @transform_1(%arg0: i32, %arg1: i32) -> (i32, i32) {
    %c0_i32 = arith.constant 0 : i32
    %c0_i32_0 = arith.constant 0 : i32
    %c0_i32_1 = arith.constant 0 : i32
    return %c0_i32, %c0_i32_0 : i32, i32
  }
  func.func @transform_2(%arg0: i32, %arg1: i32) -> (i32, i32) {
    %c0_i32 = arith.constant 0 : i32
    %c0_i32_0 = arith.constant 0 : i32
    %c0_i32_1 = arith.constant 0 : i32
    return %c0_i32, %c0_i32_0 : i32, i32
  }
  func.func @transform_3(%arg0: i32, %arg1: i32) -> (i32, i32) {
    %c0_i32 = arith.constant 0 : i32
    %c0_i32_0 = arith.constant 0 : i32
    %c0_i32_1 = arith.constant 0 : i32
    return %c0_i32, %c0_i32_0 : i32, i32
  }
  func.func @transform_4(%arg0: i32, %arg1: i32) -> (i32, i32) {
    %c0_i32 = arith.constant 0 : i32
    %c0_i32_0 = arith.constant 0 : i32
    %c0_i32_1 = arith.constant 0 : i32
    return %c0_i32, %c0_i32_0 : i32, i32
  }
  func.func @transform_5(%arg0: i32, %arg1: i32) -> (i32, i32) {
    %c0_i32 = arith.constant 0 : i32
    %c0_i32_0 = arith.constant 0 : i32
    %c0_i32_1 = arith.constant 0 : i32
    return %c0_i32, %c0_i32_0 : i32, i32
  }
  func.func @transform_6(%arg0: i32, %arg1: i32) -> (i32, i32) {
    %c0_i32 = arith.constant 0 : i32
    %c0_i32_0 = arith.constant 0 : i32
    %c0_i32_1 = arith.constant 0 : i32
    return %c0_i32, %c0_i32_0 : i32, i32
  }
  func.func @transform_7(%arg0: i32, %arg1: i32) -> (i32, i32) {
    %c0_i32 = arith.constant 0 : i32
    %c0_i32_0 = arith.constant 0 : i32
    %c0_i32_1 = arith.constant 0 : i32
    return %c0_i32, %c0_i32_0 : i32, i32
  }
  func.func @transform_8(%arg0: i32, %arg1: i32) -> (i32, i32) {
    %c0_i32 = arith.constant 0 : i32
    %c0_i32_0 = arith.constant 0 : i32
    %c0_i32_1 = arith.constant 0 : i32
    return %c0_i32, %c0_i32_0 : i32, i32
  }
  func.func @transform_9(%arg0: i32, %arg1: i32) -> (i32, i32) {
    %c0_i32 = arith.constant 0 : i32
    %c0_i32_0 = arith.constant 0 : i32
    %c0_i32_1 = arith.constant 0 : i32
    return %c0_i32, %c0_i32_0 : i32, i32
  }
  func.func @transform_10(%arg0: i32, %arg1: i32) -> (i32, i32) {
    %c0_i32 = arith.constant 0 : i32
    %c0_i32_0 = arith.constant 0 : i32
    %c0_i32_1 = arith.constant 0 : i32
    return %c0_i32, %c0_i32_0 : i32, i32
  }
  func.func @transform_11(%arg0: i32, %arg1: i32) -> (i32, i32) {
    %c0_i32 = arith.constant 0 : i32
    %c0_i32_0 = arith.constant 0 : i32
    %c0_i32_1 = arith.constant 0 : i32
    return %c0_i32, %c0_i32_0 : i32, i32
  }
  func.func @transform_12(%arg0: i32, %arg1: i32) -> (i32, i32, i32) {
    %c0_i32 = arith.constant 0 : i32
    %c0_i32_0 = arith.constant 0 : i32
    return %arg0, %arg1, %c0_i32 : i32, i32, i32
  }
}

</mosaic_0001>

<llo_original>
// kernel: tpu_custom_call.1
$region0: #{tpu_custom_call.1}
  #allocation0 [shape = 'u32[]', space=smem, size = 0x4, offset = 0x4, fixed_abs, tag = 'smem constant byte address 0x4 - core index']
  #allocation1 [shape = 'u32[144,128]{1,0:T(1,128)}', space=vmem, size = 0x12000, scoped, tag = 'internal scratch']
  %s0 = inlined_call_operand.hbm [shape: f32[2,16,384], index: 0, kind: input, shape index: {}]
  %s1 = inlined_call_operand.hbm [shape: bf16[384,1152], index: 1, kind: input, shape index: {}]
  %s2 = inlined_call_operand.hbm [shape: bf16[384,384], index: 2, kind: input, shape index: {}]
  %s3 = inlined_call_operand.hbm [shape: f32[1,384], index: 3, kind: input, shape index: {}]
  %s4 = inlined_call_operand.hbm [shape: bf16[384,1536], index: 4, kind: input, shape index: {}]
  %s5 = inlined_call_operand.hbm [shape: f32[1,1536], index: 5, kind: input, shape index: {}]
  %s6 = inlined_call_operand.hbm [shape: bf16[1536,384], index: 6, kind: input, shape index: {}]
  %s7 = inlined_call_operand.hbm [shape: f32[1,384], index: 7, kind: input, shape index: {}]
  %s8 = inlined_call_operand.hbm [shape: f32[1,384], index: 8, kind: input, shape index: {}]
  %s9 = inlined_call_operand.hbm [shape: f32[1,384], index: 9, kind: input, shape index: {}]
  %s10 = inlined_call_operand.hbm [shape: f32[1,384], index: 10, kind: input, shape index: {}]
  %s11 = inlined_call_operand.hbm [shape: f32[1,384], index: 11, kind: input, shape index: {}]
  %s12 = inlined_call_operand.hbm [shape: f32[2,16,384], index: 12, kind: output, shape index: {}]
  %s13 = sld [smem:[#allocation0]]
  $region106: #{tpu_custom_call.1} parent=0
    _
  %s15 = ssub.s32 1, %s13
  %s16 = scalar_select 0, %s15, %s13
  $region1: #{tpu_custom_call.1} parent=0
    #allocation2 [shape = 'u8[49152]{0}', space=vmem, size = 0xc000, scoped, tag = 'input window, operand 0, single buffered']
    #allocation3 [shape = 's32[1]{0}', space=sflag, size = 0x4, scoped, tag = 'scoped memory for tpu_custom_call.1']
    #allocation4 [shape = 's32[1]{0}', space=sflag, size = 0x4, scoped, tag = 'scoped memory for tpu_custom_call.1']
    #allocation5 [shape = 'u8[884736]{0}', space=vmem, size = 0xd8000, scoped, tag = 'input window, operand 1, single buffered']
    #allocation6 [shape = 's32[1]{0}', space=sflag, size = 0x4, scoped, tag = 'scoped memory for tpu_custom_call.1']
    #allocation7 [shape = 'u8[294912]{0}', space=vmem, size = 0x48000, scoped, tag = 'input window, operand 2, single buffered']
    #allocation8 [shape = 'u8[1536]{0}', space=vmem, size = 0x800, scoped, tag = 'input window, operand 3, single buffered']
    #allocation9 [shape = 's32[1]{0}', space=sflag, size = 0x4, scoped, tag = 'scoped memory for tpu_custom_call.1']
    #allocation10 [shape = 'u8[1179648]{0}', space=vmem, size = 0x120000, scoped, tag = 'input window, operand 4, single buffered']
    #allocation11 [shape = 'u8[6144]{0}', space=vmem, size = 0x1800, scoped, tag = 'input window, operand 5, single buffered']
    #allocation12 [shape = 's32[1]{0}', space=sflag, size = 0x4, scoped, tag = 'scoped memory for tpu_custom_call.1']
    #allocation13 [shape = 'u8[1179648]{0}', space=vmem, size = 0x120000, scoped, tag = 'input window, operand 6, single buffered']
    #allocation14 [shape = 'u8[1536]{0}', space=vmem, size = 0x800, scoped, tag = 'input window, operand 7, single buffered']
    #allocation15 [shape = 's32[1]{0}', space=sflag, size = 0x4, scoped, tag = 'scoped memory for tpu_custom_call.1']
    #allocation16 [shape = 'u8[1536]{0}', space=vmem, size = 0x800, scoped, tag = 'input window, operand 8, single buffered']
    #allocation17 [shape = 'u8[1536]{0}', space=vmem, size = 0x800, scoped, tag = 'input window, operand 9, single buffered']
    #allocation18 [shape = 's32[1]{0}', space=sflag, size = 0x4, scoped, tag = 'scoped memory for tpu_custom_call.1']
    #allocation19 [shape = 'u8[1536]{0}', space=vmem, size = 0x800, scoped, tag = 'input window, operand 10, single buffered']
    #allocation20 [shape = 'u8[1536]{0}', space=vmem, size = 0x800, scoped, tag = 'input window, operand 11, single buffered']
    #allocation21 [shape = 's32[1]{0}', space=sflag, size = 0x4, scoped, tag = 'scoped memory for tpu_custom_call.1']
    #allocation22 [shape = 'u8[49152]{0}', space=vmem, size = 0xc000, scoped, tag = 'output window, operand 0, single buffered']
    %17 = vsyncpa [#allocation3], 0
    %18 = vsyncpa [#allocation6], 0
    %19 = vsyncpa [#allocation9], 0
    %20 = vsyncpa [#allocation12], 0
    %21 = vsyncpa [#allocation15], 0
    %22 = vsyncpa [#allocation18], 0
    %23 = vsyncpa [#allocation21], 0
    %24 = vsyncpa [#allocation4], 0
    // Predicated region
    $region2: #{tpu_custom_call.1} parent=1 // pred_check
      _
    $region3: #{tpu_custom_call.1} parent=1 // pred_check_branch
      %26 = sbr.rel (0) target = $region5
    $region4: #{tpu_custom_call.1} parent=1 // pred_region
      %s28 = ssub.s32 1536, 1536
      %29 = vsyncadd [#allocation3], %s28
      %s30 = sshll.u32 [#allocation2], 4
      %s31 = int_to_ptr.vmem [resolvable:$true] %s30
      %36 = dma.hbm_to_vmem [thread:$0]  %s0, 1536, %s31, [#allocation3], 384, 384, 24
    $region5: #{tpu_custom_call.1} parent=1 // pred_fallthru
      _
    // Predicated region
    $region6: #{tpu_custom_call.1} parent=1 // pred_check
      _
    $region7: #{tpu_custom_call.1} parent=1 // pred_check_branch
      %38 = sbr.rel (0) target = $region9
    $region8: #{tpu_custom_call.1} parent=1 // pred_region
      %s40 = ssub.s32 27648, 27648
      %41 = vsyncadd [#allocation6], %s40
      %s42 = sshll.u32 [#allocation5], 4
      %s43 = int_to_ptr.vmem [resolvable:$true] %s42
      %48 = dma.hbm_to_vmem [thread:$0]  %s1, 27648, %s43, [#allocation6], 576, 576, 36
    $region9: #{tpu_custom_call.1} parent=1 // pred_fallthru
      _
    // Predicated region
    $region10: #{tpu_custom_call.1} parent=1 // pred_check
      _
    $region11: #{tpu_custom_call.1} parent=1 // pred_check_branch
      %50 = sbr.rel (0) target = $region13
    $region12: #{tpu_custom_call.1} parent=1 // pred_region
      %s52 = ssub.s32 9216, 9216
      %53 = vsyncadd [#allocation6], %s52
      %s54 = sshll.u32 [#allocation7], 4
      %s55 = int_to_ptr.vmem [resolvable:$true] %s54
      %60 = dma.hbm_to_vmem [thread:$0]  %s2, 9216, %s55, [#allocation6], 192, 192, 12
    $region13: #{tpu_custom_call.1} parent=1 // pred_fallthru
      _
    // Predicated region
    $region14: #{tpu_custom_call.1} parent=1 // pred_check
      _
    $region15: #{tpu_custom_call.1} parent=1 // pred_check_branch
      %62 = sbr.rel (0) target = $region17
    $region16: #{tpu_custom_call.1} parent=1 // pred_region
      %s64 = ssub.s32 48, 48
      %65 = vsyncadd [#allocation9], %s64
      %s67 = sshll.u32 [#allocation8], 4
      %s68 = int_to_ptr.vmem [resolvable:$true] %s67
      %70 = dma.hbm_to_vmem [thread:$0]  %s3, 48, %s68, [#allocation9]
    $region17: #{tpu_custom_call.1} parent=1 // pred_fallthru
      _
    // Predicated region
    $region18: #{tpu_custom_call.1} parent=1 // pred_check
      _
    $region19: #{tpu_custom_call.1} parent=1 // pred_check_branch
      %72 = sbr.rel (0) target = $region21
    $region20: #{tpu_custom_call.1} parent=1 // pred_region
      %s74 = ssub.s32 36864, 36864
      %75 = vsyncadd [#allocation9], %s74
      %s76 = sshll.u32 [#allocation10], 4
      %s77 = int_to_ptr.vmem [resolvable:$true] %s76
      %82 = dma.hbm_to_vmem [thread:$0]  %s4, 36864, %s77, [#allocation9], 768, 768, 48
    $region21: #{tpu_custom_call.1} parent=1 // pred_fallthru
      _
    // Predicated region
    $region22: #{tpu_custom_call.1} parent=1 // pred_check
      _
    $region23: #{tpu_custom_call.1} parent=1 // pred_check_branch
      %84 = sbr.rel (0) target = $region25
    $region24: #{tpu_custom_call.1} parent=1 // pred_region
      %s86 = ssub.s32 192, 192
      %87 = vsyncadd [#allocation12], %s86
      %s89 = sshll.u32 [#allocation11], 4
      %s90 = int_to_ptr.vmem [resolvable:$true] %s89
      %92 = dma.hbm_to_vmem [thread:$0]  %s5, 192, %s90, [#allocation12]
    $region25: #{tpu_custom_call.1} parent=1 // pred_fallthru
      _
    // Predicated region
    $region26: #{tpu_custom_call.1} parent=1 // pred_check
      _
    $region27: #{tpu_custom_call.1} parent=1 // pred_check_branch
      %94 = sbr.rel (0) target = $region29
    $region28: #{tpu_custom_call.1} parent=1 // pred_region
      %s96 = ssub.s32 36864, 36864
      %97 = vsyncadd [#allocation12], %s96
      %s98 = sshll.u32 [#allocation13], 4
      %s99 = int_to_ptr.vmem [resolvable:$true] %s98
      %104 = dma.hbm_to_vmem [thread:$0]  %s6, 36864, %s99, [#allocation12], 192, 192, 12
    $region29: #{tpu_custom_call.1} parent=1 // pred_fallthru
      _
    // Predicated region
    $region30: #{tpu_custom_call.1} parent=1 // pred_check
      _
    $region31: #{tpu_custom_call.1} parent=1 // pred_check_branch
      %106 = sbr.rel (0) target = $region33
    $region32: #{tpu_custom_call.1} parent=1 // pred_region
      %s108 = ssub.s32 48, 48
      %109 = vsyncadd [#allocation15], %s108
      %s111 = sshll.u32 [#allocation14], 4
      %s112 = int_to_ptr.vmem [resolvable:$true] %s111
      %114 = dma.hbm_to_vmem [thread:$0]  %s7, 48, %s112, [#allocation15]
    $region33: #{tpu_custom_call.1} parent=1 // pred_fallthru
      _
    // Predicated region
    $region34: #{tpu_custom_call.1} parent=1 // pred_check
      _
    $region35: #{tpu_custom_call.1} parent=1 // pred_check_branch
      %116 = sbr.rel (0) target = $region37
    $region36: #{tpu_custom_call.1} parent=1 // pred_region
      %s118 = ssub.s32 48, 48
      %119 = vsyncadd [#allocation15], %s118
      %s121 = sshll.u32 [#allocation16], 4
      %s122 = int_to_ptr.vmem [resolvable:$true] %s121
      %124 = dma.hbm_to_vmem [thread:$0]  %s8, 48, %s122, [#allocation15]
    $region37: #{tpu_custom_call.1} parent=1 // pred_fallthru
      _
    // Predicated region
    $region38: #{tpu_custom_call.1} parent=1 // pred_check
      _
    $region39: #{tpu_custom_call.1} parent=1 // pred_check_branch
      %126 = sbr.rel (0) target = $region41
    $region40: #{tpu_custom_call.1} parent=1 // pred_region
      %s128 = ssub.s32 48, 48
      %129 = vsyncadd [#allocation18], %s128
      %s131 = sshll.u32 [#allocation17], 4
      %s132 = int_to_ptr.vmem [resolvable:$true] %s131
      %134 = dma.hbm_to_vmem [thread:$0]  %s9, 48, %s132, [#allocation18]
    $region41: #{tpu_custom_call.1} parent=1 // pred_fallthru
      _
    // Predicated region
    $region42: #{tpu_custom_call.1} parent=1 // pred_check
      _
    $region43: #{tpu_custom_call.1} parent=1 // pred_check_branch
      %136 = sbr.rel (0) target = $region45
    $region44: #{tpu_custom_call.1} parent=1 // pred_region
      %s138 = ssub.s32 48, 48
      %139 = vsyncadd [#allocation18], %s138
      %s141 = sshll.u32 [#allocation19], 4
      %s142 = int_to_ptr.vmem [resolvable:$true] %s141
      %144 = dma.hbm_to_vmem [thread:$0]  %s10, 48, %s142, [#allocation18]
    $region45: #{tpu_custom_call.1} parent=1 // pred_fallthru
      _
    // Predicated region
    $region46: #{tpu_custom_call.1} parent=1 // pred_check
      _
    $region47: #{tpu_custom_call.1} parent=1 // pred_check_branch
      %146 = sbr.rel (0) target = $region49
    $region48: #{tpu_custom_call.1} parent=1 // pred_region
      %s148 = ssub.s32 48, 48
      %149 = vsyncadd [#allocation21], %s148
      %s151 = sshll.u32 [#allocation20], 4
      %s152 = int_to_ptr.vmem [resolvable:$true] %s151
      %154 = dma.hbm_to_vmem [thread:$0]  %s11, 48, %s152, [#allocation21]
    $region49: #{tpu_custom_call.1} parent=1 // pred_fallthru
      _
    // Predicated region
    $region50: #{tpu_custom_call.1} parent=1 // pred_check
      _
    $region51: #{tpu_custom_call.1} parent=1 // pred_check_branch
      %156 = sbr.rel (0) target = $region53
    $region52: #{tpu_custom_call.1} parent=1 // pred_region
      %157 = dma.done [#allocation3], 1536
    $region53: #{tpu_custom_call.1} parent=1 // pred_fallthru
      _
    // Predicated region
    $region54: #{tpu_custom_call.1} parent=1 // pred_check
      _
    $region55: #{tpu_custom_call.1} parent=1 // pred_check_branch
      %159 = sbr.rel (0) target = $region57
    $region56: #{tpu_custom_call.1} parent=1 // pred_region
      %160 = dma.done [#allocation6], 27648
    $region57: #{tpu_custom_call.1} parent=1 // pred_fallthru
      _
    // Predicated region
    $region58: #{tpu_custom_call.1} parent=1 // pred_check
      _
    $region59: #{tpu_custom_call.1} parent=1 // pred_check_branch
      %162 = sbr.rel (0) target = $region61
    $region60: #{tpu_custom_call.1} parent=1 // pred_region
      %163 = dma.done [#allocation6], 9216
    $region61: #{tpu_custom_call.1} parent=1 // pred_fallthru
      _
    // Predicated region
    $region62: #{tpu_custom_call.1} parent=1 // pred_check
      _
    $region63: #{tpu_custom_call.1} parent=1 // pred_check_branch
      %165 = sbr.rel (0) target = $region65
    $region64: #{tpu_custom_call.1} parent=1 // pred_region
      %166 = dma.done [#allocation9], 48
    $region65: #{tpu_custom_call.1} parent=1 // pred_fallthru
      _
    // Predicated region
    $region66: #{tpu_custom_call.1} parent=1 // pred_check
      _
    $region67: #{tpu_custom_call.1} parent=1 // pred_check_branch
      %168 = sbr.rel (0) target = $region69
    $region68: #{tpu_custom_call.1} parent=1 // pred_region
      %169 = dma.done [#allocation9], 36864
    $region69: #{tpu_custom_call.1} parent=1 // pred_fallthru
      _
    // Predicated region
    $region70: #{tpu_custom_call.1} parent=1 // pred_check
      _
    $region71: #{tpu_custom_call.1} parent=1 // pred_check_branch
      %171 = sbr.rel (0) target = $region73
    $region72: #{tpu_custom_call.1} parent=1 // pred_region
      %172 = dma.done [#allocation12], 192
    $region73: #{tpu_custom_call.1} parent=1 // pred_fallthru
      _
    // Predicated region
    $region74: #{tpu_custom_call.1} parent=1 // pred_check
      _
    $region75: #{tpu_custom_call.1} parent=1 // pred_check_branch
      %174 = sbr.rel (0) target = $region77
    $region76: #{tpu_custom_call.1} parent=1 // pred_region
      %175 = dma.done [#allocation12], 36864
    $region77: #{tpu_custom_call.1} parent=1 // pred_fallthru
      _
    // Predicated region
    $region78: #{tpu_custom_call.1} parent=1 // pred_check
      _
    $region79: #{tpu_custom_call.1} parent=1 // pred_check_branch
      %177 = sbr.rel (0) target = $region81
    $region80: #{tpu_custom_call.1} parent=1 // pred_region
      %178 = dma.done [#allocation15], 48
    $region81: #{tpu_custom_call.1} parent=1 // pred_fallthru
      _
    // Predicated region
    $region82: #{tpu_custom_call.1} parent=1 // pred_check
      _
    $region83: #{tpu_custom_call.1} parent=1 // pred_check_branch
      %180 = sbr.rel (0) target = $region85
    $region84: #{tpu_custom_call.1} parent=1 // pred_region
      %181 = dma.done [#allocation15], 48
    $region85: #{tpu_custom_call.1} parent=1 // pred_fallthru
      _
    // Predicated region
    $region86: #{tpu_custom_call.1} parent=1 // pred_check
      _
    $region87: #{tpu_custom_call.1} parent=1 // pred_check_branch
      %183 = sbr.rel (0) target = $region89
    $region88: #{tpu_custom_call.1} parent=1 // pred_region
      %184 = dma.done [#allocation18], 48
    $region89: #{tpu_custom_call.1} parent=1 // pred_fallthru
      _
    // Predicated region
    $region90: #{tpu_custom_call.1} parent=1 // pred_check
      _
    $region91: #{tpu_custom_call.1} parent=1 // pred_check_branch
      %186 = sbr.rel (0) target = $region93
    $region92: #{tpu_custom_call.1} parent=1 // pred_region
      %187 = dma.done [#allocation18], 48
    $region93: #{tpu_custom_call.1} parent=1 // pred_fallthru
      _
    // Predicated region
    $region94: #{tpu_custom_call.1} parent=1 // pred_check
      _
    $region95: #{tpu_custom_call.1} parent=1 // pred_check_branch
      %189 = sbr.rel (0) target = $region97
    $region96: #{tpu_custom_call.1} parent=1 // pred_region
      %190 = dma.done [#allocation21], 48
    $region97: #{tpu_custom_call.1} parent=1 // pred_fallthru
      _
    %s192 = smul.u32 0, 16
    %v193 = vld [vmem:[#allocation2] sm:$0xff]
    %v194 = vld [vmem:[#allocation2 + $0x8] sm:$0xff]
    %v195 = vld [vmem:[#allocation2 + $0x10] sm:$0xff]
    %v196 = vld [vmem:[#allocation2 + $0x18] sm:$0xff]
    %v197 = vld [vmem:[#allocation2 + $0x20] sm:$0xff]
    %v198 = vld [vmem:[#allocation2 + $0x28] sm:$0xff]
    %v199 = vld [vmem:[#allocation2 + $0x30] sm:$0xff]
    %v200 = vld [vmem:[#allocation2 + $0x38] sm:$0xff]
    %v201 = vld [vmem:[#allocation2 + $0x40] sm:$0xff]
    %v202 = vld [vmem:[#allocation2 + $0x48] sm:$0xff]
    %v203 = vld [vmem:[#allocation2 + $0x50] sm:$0xff]
    %v204 = vld [vmem:[#allocation2 + $0x58] sm:$0xff]
    %v205 = vld [vmem:[#allocation16] sm:$0x7]
    %v206 = vld [vmem:[#allocation17] sm:$0x7]
    %v207 = vadd.f32 %v193, %v194
    %v208 = vadd.f32 %v207, %v195
    %209 = vadd.xlane.f32.xlu0 %v208
    %v210 = vpop.xlane.xlu0 %209
    %v211 = vadd.f32 %v196, %v197
    %v212 = vadd.f32 %v211, %v198
    %213 = vadd.xlane.f32.xlu0 %v212
    %v214 = vpop.xlane.xlu0 %213
    %v215 = vadd.f32 %v199, %v200
    %v216 = vadd.f32 %v215, %v201
    %217 = vadd.xlane.f32.xlu0 %v216
    %v218 = vpop.xlane.xlu0 %217
    %v219 = vadd.f32 %v202, %v203
    %v220 = vadd.f32 %v219, %v204
    %221 = vadd.xlane.f32.xlu0 %v220
    %v222 = vpop.xlane.xlu0 %221
    %v223 = vrcp.pop 384.0
    %v224 = vmul.f32 %v210, %v223
    %v225 = vmul.f32 %v214, %v223
    %v226 = vmul.f32 %v218, %v223
    %v227 = vmul.f32 %v222, %v223
    %v228 = vsub.f32 %v193, %v224
    %v229 = vsub.f32 %v194, %v224
    %v230 = vsub.f32 %v195, %v224
    %v231 = vsub.f32 %v196, %v225
    %v232 = vsub.f32 %v197, %v225
    %v233 = vsub.f32 %v198, %v225
    %v234 = vsub.f32 %v199, %v226
    %v235 = vsub.f32 %v200, %v226
    %v236 = vsub.f32 %v201, %v226
    %v237 = vsub.f32 %v202, %v227
    %v238 = vsub.f32 %v203, %v227
    %v239 = vsub.f32 %v204, %v227
    %v240 = vmul.f32 %v228, %v228
    %v241 = vmul.f32 %v229, %v229
    %v242 = vmul.f32 %v230, %v230
    %v243 = vmul.f32 %v231, %v231
    %v244 = vmul.f32 %v232, %v232
    %v245 = vmul.f32 %v233, %v233
    %v246 = vmul.f32 %v234, %v234
    %v247 = vmul.f32 %v235, %v235
    %v248 = vmul.f32 %v236, %v236
    %v249 = vmul.f32 %v237, %v237
    %v250 = vmul.f32 %v238, %v238
    %v251 = vmul.f32 %v239, %v239
    %v252 = vadd.f32 %v240, %v241
    %v253 = vadd.f32 %v252, %v242
    %254 = vadd.xlane.f32.xlu0 %v253
    %v255 = vpop.xlane.xlu0 %254
    %v256 = vadd.f32 %v243, %v244
    %v257 = vadd.f32 %v256, %v245
    %258 = vadd.xlane.f32.xlu0 %v257
    %v259 = vpop.xlane.xlu0 %258
    %v260 = vadd.f32 %v246, %v247
    %v261 = vadd.f32 %v260, %v248
    %262 = vadd.xlane.f32.xlu0 %v261
    %v263 = vpop.xlane.xlu0 %262
    %v264 = vadd.f32 %v249, %v250
    %v265 = vadd.f32 %v264, %v251
    %266 = vadd.xlane.f32.xlu0 %v265
    %v267 = vpop.xlane.xlu0 %266
    %v268 = vmul.f32 %v255, %v223
    %v269 = vmul.f32 %v259, %v223
    %v270 = vmul.f32 %v263, %v223
    %v271 = vmul.f32 %v267, %v223
    %v272 = vadd.f32 %v268, 1e-05
    %v273 = vadd.f32 %v269, 1e-05
    %v274 = vadd.f32 %v270, 1e-05
    %v275 = vadd.f32 %v271, 1e-05
    %v276 = vrsqrt.pop %v272
    %v277 = vrsqrt.pop %v273
    %v278 = vrsqrt.pop %v274
    %v279 = vrsqrt.pop %v275
    %v280 = vmul.f32 %v228, %v276
    %v281 = vmul.f32 %v229, %v276
    %v282 = vmul.f32 %v230, %v276
    %v283 = vmul.f32 %v231, %v277
    %v284 = vmul.f32 %v232, %v277
    %v285 = vmul.f32 %v233, %v277
    %v286 = vmul.f32 %v234, %v278
    %v287 = vmul.f32 %v235, %v278
    %v288 = vmul.f32 %v236, %v278
    %v289 = vmul.f32 %v237, %v279
    %v290 = vmul.f32 %v238, %v279
    %v291 = vmul.f32 %v239, %v279
    %v293 = vlaneseq
    %v294 = vshrl.u32 %v293, 7
    %v295 = vsub.s32 0, %v294
    %v296 = vrot.slane %v205, %v295
    %v297 = vlaneseq
    %v298 = vshrl.u32 %v297, 7
    %v299 = vsub.s32 1, %v298
    %v300 = vrot.slane %v205, %v299
    %v301 = vlaneseq
    %v302 = vshrl.u32 %v301, 7
    %v303 = vsub.s32 2, %v302
    %v304 = vrot.slane %v205, %v303
    %v308 = vmul.f32 %v280, %v296
    %v309 = vmul.f32 %v281, %v300
    %v310 = vmul.f32 %v282, %v304
    %v311 = vmul.f32 %v283, %v296
    %v312 = vmul.f32 %v284, %v300
    %v313 = vmul.f32 %v285, %v304
    %v314 = vmul.f32 %v286, %v296
    %v315 = vmul.f32 %v287, %v300
    %v316 = vmul.f32 %v288, %v304
    %v317 = vmul.f32 %v289, %v296
    %v318 = vmul.f32 %v290, %v300
    %v319 = vmul.f32 %v291, %v304
    %v321 = vlaneseq
    %v322 = vshrl.u32 %v321, 7
    %v323 = vsub.s32 0, %v322
    %v324 = vrot.slane %v206, %v323
    %v325 = vlaneseq
    %v326 = vshrl.u32 %v325, 7
    %v327 = vsub.s32 1, %v326
    %v328 = vrot.slane %v206, %v327
    %v329 = vlaneseq
    %v330 = vshrl.u32 %v329, 7
    %v331 = vsub.s32 2, %v330
    %v332 = vrot.slane %v206, %v331
    %v336 = vadd.f32 %v308, %v324
    %v337 = vadd.f32 %v309, %v328
    %v338 = vadd.f32 %v310, %v332
    %v339 = vadd.f32 %v311, %v324
    %v340 = vadd.f32 %v312, %v328
    %v341 = vadd.f32 %v313, %v332
    %v342 = vadd.f32 %v314, %v324
    %v343 = vadd.f32 %v315, %v328
    %v344 = vadd.f32 %v316, %v332
    %v345 = vadd.f32 %v317, %v324
    %v346 = vadd.f32 %v318, %v328
    %v347 = vadd.f32 %v319, %v332
    %v348 = vpack.c.bf16 %v339, %v336
    %v349 = vpack.c.bf16 %v340, %v337
    %v350 = vpack.c.bf16 %v341, %v338
    %v351 = vpack.c.bf16 %v345, %v342
    %v352 = vpack.c.bf16 %v346, %v343
    %v353 = vpack.c.bf16 %v347, %v344
    %v354 = vld [vmem:[#allocation5] sm:$0xff]
    %v355 = vld [vmem:[#allocation5 + $0x8] sm:$0xff]
    %v356 = vld [vmem:[#allocation5 + $0x10] sm:$0xff]
    %v357 = vld [vmem:[#allocation5 + $0x18] sm:$0xff]
    %v358 = vld [vmem:[#allocation5 + $0x20] sm:$0xf]
    %v359 = vld [vmem:[#allocation5 + $0x24] sm:$0xff]
    %v360 = vld [vmem:[#allocation5 + $0x2c] sm:$0xff]
    %v361 = vld [vmem:[#allocation5 + $0x34] sm:$0xff]
    %v362 = vld [vmem:[#allocation5 + $0x3c] sm:$0xff]
    %v363 = vld [vmem:[#allocation5 + $0x44] sm:$0xf]
    %v364 = vld [vmem:[#allocation5 + $0x48] sm:$0xff]
    %v365 = vld [vmem:[#allocation5 + $0x50] sm:$0xff]
    %v366 = vld [vmem:[#allocation5 + $0x58] sm:$0xff]
    %v367 = vld [vmem:[#allocation5 + $0x60] sm:$0xff]
    %v368 = vld [vmem:[#allocation5 + $0x68] sm:$0xf]
    %v369 = vld [vmem:[#allocation5 + $0x6c] sm:$0xff]
    %v370 = vld [vmem:[#allocation5 + $0x74] sm:$0xff]
    %v371 = vld [vmem:[#allocation5 + $0x7c] sm:$0xff]
    %v372 = vld [vmem:[#allocation5 + $0x84] sm:$0xff]
    %v373 = vld [vmem:[#allocation5 + $0x8c] sm:$0xf]
    %v374 = vld [vmem:[#allocation5 + $0x90] sm:$0xff]
    %v375 = vld [vmem:[#allocation5 + $0x98] sm:$0xff]
    %v376 = vld [vmem:[#allocation5 + $0xa0] sm:$0xff]
    %v377 = vld [vmem:[#allocation5 + $0xa8] sm:$0xff]
    %v378 = vld [vmem:[#allocation5 + $0xb0] sm:$0xf]
    %v379 = vld [vmem:[#allocation5 + $0xb4] sm:$0xff]
    %v380 = vld [vmem:[#allocation5 + $0xbc] sm:$0xff]
    %v381 = vld [vmem:[#allocation5 + $0xc4] sm:$0xff]
    %v382 = vld [vmem:[#allocation5 + $0xcc] sm:$0xff]
    %v383 = vld [vmem:[#allocation5 + $0xd4] sm:$0xf]
    %v384 = vld [vmem:[#allocation5 + $0xd8] sm:$0xff]
    %v385 = vld [vmem:[#allocation5 + $0xe0] sm:$0xff]
    %v386 = vld [vmem:[#allocation5 + $0xe8] sm:$0xff]
    %v387 = vld [vmem:[#allocation5 + $0xf0] sm:$0xff]
    %v388 = vld [vmem:[#allocation5 + $0xf8] sm:$0xf]
    %v389 = vld [vmem:[#allocation5 + $0xfc] sm:$0xff]
    %v390 = vld [vmem:[#allocation5 + $0x104] sm:$0xff]
    %v391 = vld [vmem:[#allocation5 + $0x10c] sm:$0xff]
    %v392 = vld [vmem:[#allocation5 + $0x114] sm:$0xff]
    %v393 = vld [vmem:[#allocation5 + $0x11c] sm:$0xf]
    %v394 = vld [vmem:[#allocation5 + $0x120] sm:$0xff]
    %v395 = vld [vmem:[#allocation5 + $0x128] sm:$0xff]
    %v396 = vld [vmem:[#allocation5 + $0x130] sm:$0xff]
    %v397 = vld [vmem:[#allocation5 + $0x138] sm:$0xff]
    %v398 = vld [vmem:[#allocation5 + $0x140] sm:$0xf]
    %v399 = vld [vmem:[#allocation5 + $0x144] sm:$0xff]
    %v400 = vld [vmem:[#allocation5 + $0x14c] sm:$0xff]
    %v401 = vld [vmem:[#allocation5 + $0x154] sm:$0xff]
    %v402 = vld [vmem:[#allocation5 + $0x15c] sm:$0xff]
    %v403 = vld [vmem:[#allocation5 + $0x164] sm:$0xf]
    %v404 = vld [vmem:[#allocation5 + $0x168] sm:$0xff]
    %v405 = vld [vmem:[#allocation5 + $0x170] sm:$0xff]
    %v406 = vld [vmem:[#allocation5 + $0x178] sm:$0xff]
    %v407 = vld [vmem:[#allocation5 + $0x180] sm:$0xff]
    %v408 = vld [vmem:[#allocation5 + $0x188] sm:$0xf]
    %v409 = vld [vmem:[#allocation5 + $0x18c] sm:$0xff]
    %v410 = vld [vmem:[#allocation5 + $0x194] sm:$0xff]
    %v411 = vld [vmem:[#allocation5 + $0x19c] sm:$0xff]
    %v412 = vld [vmem:[#allocation5 + $0x1a4] sm:$0xff]
    %v413 = vld [vmem:[#allocation5 + $0x1ac] sm:$0xf]
    %v414 = vld [vmem:[#allocation5 + $0x1b0] sm:$0xff]
    %v415 = vld [vmem:[#allocation5 + $0x1b8] sm:$0xff]
    %v416 = vld [vmem:[#allocation5 + $0x1c0] sm:$0xff]
    %v417 = vld [vmem:[#allocation5 + $0x1c8] sm:$0xff]
    %v418 = vld [vmem:[#allocation5 + $0x1d0] sm:$0xf]
    %v419 = vld [vmem:[#allocation5 + $0x1d4] sm:$0xff]
    %v420 = vld [vmem:[#allocation5 + $0x1dc] sm:$0xff]
    %v421 = vld [vmem:[#allocation5 + $0x1e4] sm:$0xff]
    %v422 = vld [vmem:[#allocation5 + $0x1ec] sm:$0xff]
    %v423 = vld [vmem:[#allocation5 + $0x1f4] sm:$0xf]
    %v424 = vld [vmem:[#allocation5 + $0x1f8] sm:$0xff]
    %v425 = vld [vmem:[#allocation5 + $0x200] sm:$0xff]
    %v426 = vld [vmem:[#allocation5 + $0x208] sm:$0xff]
    %v427 = vld [vmem:[#allocation5 + $0x210] sm:$0xff]
    %v428 = vld [vmem:[#allocation5 + $0x218] sm:$0xf]
    %v429 = vld [vmem:[#allocation5 + $0x21c] sm:$0xff]
    %v430 = vld [vmem:[#allocation5 + $0x224] sm:$0xff]
    %v431 = vld [vmem:[#allocation5 + $0x22c] sm:$0xff]
    %v432 = vld [vmem:[#allocation5 + $0x234] sm:$0xff]
    %v433 = vld [vmem:[#allocation5 + $0x23c] sm:$0xf]
    %v434 = vld [vmem:[#allocation5 + $0x240] sm:$0xff]
    %v435 = vld [vmem:[#allocation5 + $0x248] sm:$0xff]
    %v436 = vld [vmem:[#allocation5 + $0x250] sm:$0xff]
    %v437 = vld [vmem:[#allocation5 + $0x258] sm:$0xff]
    %v438 = vld [vmem:[#allocation5 + $0x260] sm:$0xf]
    %v439 = vld [vmem:[#allocation5 + $0x264] sm:$0xff]
    %v440 = vld [vmem:[#allocation5 + $0x26c] sm:$0xff]
    %v441 = vld [vmem:[#allocation5 + $0x274] sm:$0xff]
    %v442 = vld [vmem:[#allocation5 + $0x27c] sm:$0xff]
    %v443 = vld [vmem:[#allocation5 + $0x284] sm:$0xf]
    %v444 = vld [vmem:[#allocation5 + $0x288] sm:$0xff]
    %v445 = vld [vmem:[#allocation5 + $0x290] sm:$0xff]
    %v446 = vld [vmem:[#allocation5 + $0x298] sm:$0xff]
    %v447 = vld [vmem:[#allocation5 + $0x2a0] sm:$0xff]
    %v448 = vld [vmem:[#allocation5 + $0x2a8] sm:$0xf]
    %v449 = vld [vmem:[#allocation5 + $0x2ac] sm:$0xff]
    %v450 = vld [vmem:[#allocation5 + $0x2b4] sm:$0xff]
    %v451 = vld [vmem:[#allocation5 + $0x2bc] sm:$0xff]
    %v452 = vld [vmem:[#allocation5 + $0x2c4] sm:$0xff]
    %v453 = vld [vmem:[#allocation5 + $0x2cc] sm:$0xf]
    %v454 = vld [vmem:[#allocation5 + $0x2d0] sm:$0xff]
    %v455 = vld [vmem:[#allocation5 + $0x2d8] sm:$0xff]
    %v456 = vld [vmem:[#allocation5 + $0x2e0] sm:$0xff]
    %v457 = vld [vmem:[#allocation5 + $0x2e8] sm:$0xff]
    %v458 = vld [vmem:[#allocation5 + $0x2f0] sm:$0xf]
    %v459 = vld [vmem:[#allocation5 + $0x2f4] sm:$0xff]
    %v460 = vld [vmem:[#allocation5 + $0x2fc] sm:$0xff]
    %v461 = vld [vmem:[#allocation5 + $0x304] sm:$0xff]
    %v462 = vld [vmem:[#allocation5 + $0x30c] sm:$0xff]
    %v463 = vld [vmem:[#allocation5 + $0x314] sm:$0xf]
    %v464 = vld [vmem:[#allocation5 + $0x318] sm:$0xff]
    %v465 = vld [vmem:[#allocation5 + $0x320] sm:$0xff]
    %v466 = vld [vmem:[#allocation5 + $0x328] sm:$0xff]
    %v467 = vld [vmem:[#allocation5 + $0x330] sm:$0xff]
    %v468 = vld [vmem:[#allocation5 + $0x338] sm:$0xf]
    %v469 = vld [vmem:[#allocation5 + $0x33c] sm:$0xff]
    %v470 = vld [vmem:[#allocation5 + $0x344] sm:$0xff]
    %v471 = vld [vmem:[#allocation5 + $0x34c] sm:$0xff]
    %v472 = vld [vmem:[#allocation5 + $0x354] sm:$0xff]
    %v473 = vld [vmem:[#allocation5 + $0x35c] sm:$0xf]
    %v474 = vld [vmem:[#allocation5 + $0x360] sm:$0xff]
    %v475 = vld [vmem:[#allocation5 + $0x368] sm:$0xff]
    %v476 = vld [vmem:[#allocation5 + $0x370] sm:$0xff]
    %v477 = vld [vmem:[#allocation5 + $0x378] sm:$0xff]
    %v478 = vld [vmem:[#allocation5 + $0x380] sm:$0xf]
    %v479 = vld [vmem:[#allocation5 + $0x384] sm:$0xff]
    %v480 = vld [vmem:[#allocation5 + $0x38c] sm:$0xff]
    %v481 = vld [vmem:[#allocation5 + $0x394] sm:$0xff]
    %v482 = vld [vmem:[#allocation5 + $0x39c] sm:$0xff]
    %v483 = vld [vmem:[#allocation5 + $0x3a4] sm:$0xf]
    %v484 = vld [vmem:[#allocation5 + $0x3a8] sm:$0xff]
    %v485 = vld [vmem:[#allocation5 + $0x3b0] sm:$0xff]
    %v486 = vld [vmem:[#allocation5 + $0x3b8] sm:$0xff]
    %v487 = vld [vmem:[#allocation5 + $0x3c0] sm:$0xff]
    %v488 = vld [vmem:[#allocation5 + $0x3c8] sm:$0xf]
    %v489 = vld [vmem:[#allocation5 + $0x3cc] sm:$0xff]
    %v490 = vld [vmem:[#allocation5 + $0x3d4] sm:$0xff]
    %v491 = vld [vmem:[#allocation5 + $0x3dc] sm:$0xff]
    %v492 = vld [vmem:[#allocation5 + $0x3e4] sm:$0xff]
    %v493 = vld [vmem:[#allocation5 + $0x3ec] sm:$0xf]
    %v494 = vld [vmem:[#allocation5 + $0x3f0] sm:$0xff]
    %v495 = vld [vmem:[#allocation5 + $0x3f8] sm:$0xff]
    %v496 = vld [vmem:[#allocation5 + $0x400] sm:$0xff]
    %v497 = vld [vmem:[#allocation5 + $0x408] sm:$0xff]
    %v498 = vld [vmem:[#allocation5 + $0x410] sm:$0xf]
    %v499 = vld [vmem:[#allocation5 + $0x414] sm:$0xff]
    %v500 = vld [vmem:[#allocation5 + $0x41c] sm:$0xff]
    %v501 = vld [vmem:[#allocation5 + $0x424] sm:$0xff]
    %v502 = vld [vmem:[#allocation5 + $0x42c] sm:$0xff]
    %v503 = vld [vmem:[#allocation5 + $0x434] sm:$0xf]
    %v504 = vld [vmem:[#allocation5 + $0x438] sm:$0xff]
    %v505 = vld [vmem:[#allocation5 + $0x440] sm:$0xff]
    %v506 = vld [vmem:[#allocation5 + $0x448] sm:$0xff]
    %v507 = vld [vmem:[#allocation5 + $0x450] sm:$0xff]
    %v508 = vld [vmem:[#allocation5 + $0x458] sm:$0xf]
    %v509 = vld [vmem:[#allocation5 + $0x45c] sm:$0xff]
    %v510 = vld [vmem:[#allocation5 + $0x464] sm:$0xff]
    %v511 = vld [vmem:[#allocation5 + $0x46c] sm:$0xff]
    %v512 = vld [vmem:[#allocation5 + $0x474] sm:$0xff]
    %v513 = vld [vmem:[#allocation5 + $0x47c] sm:$0xf]
    %v514 = vld [vmem:[#allocation5 + $0x480] sm:$0xff]
    %v515 = vld [vmem:[#allocation5 + $0x488] sm:$0xff]
    %v516 = vld [vmem:[#allocation5 + $0x490] sm:$0xff]
    %v517 = vld [vmem:[#allocation5 + $0x498] sm:$0xff]
    %v518 = vld [vmem:[#allocation5 + $0x4a0] sm:$0xf]
    %v519 = vld [vmem:[#allocation5 + $0x4a4] sm:$0xff]
    %v520 = vld [vmem:[#allocation5 + $0x4ac] sm:$0xff]
    %v521 = vld [vmem:[#allocation5 + $0x4b4] sm:$0xff]
    %v522 = vld [vmem:[#allocation5 + $0x4bc] sm:$0xff]
    %v523 = vld [vmem:[#allocation5 + $0x4c4] sm:$0xf]
    %v524 = vld [vmem:[#allocation5 + $0x4c8] sm:$0xff]
    %v525 = vld [vmem:[#allocation5 + $0x4d0] sm:$0xff]
    %v526 = vld [vmem:[#allocation5 + $0x4d8] sm:$0xff]
    %v527 = vld [vmem:[#allocation5 + $0x4e0] sm:$0xff]
    %v528 = vld [vmem:[#allocation5 + $0x4e8] sm:$0xf]
    %v529 = vld [vmem:[#allocation5 + $0x4ec] sm:$0xff]
    %v530 = vld [vmem:[#allocation5 + $0x4f4] sm:$0xff]
    %v531 = vld [vmem:[#allocation5 + $0x4fc] sm:$0xff]
    %v532 = vld [vmem:[#allocation5 + $0x504] sm:$0xff]
    %v533 = vld [vmem:[#allocation5 + $0x50c] sm:$0xf]
    %v534 = vld [vmem:[#allocation5 + $0x510] sm:$0xff]
    %v535 = vld [vmem:[#allocation5 + $0x518] sm:$0xff]
    %v536 = vld [vmem:[#allocation5 + $0x520] sm:$0xff]
    %v537 = vld [vmem:[#allocation5 + $0x528] sm:$0xff]
    %v538 = vld [vmem:[#allocation5 + $0x530] sm:$0xf]
    %v539 = vld [vmem:[#allocation5 + $0x534] sm:$0xff]
    %v540 = vld [vmem:[#allocation5 + $0x53c] sm:$0xff]
    %v541 = vld [vmem:[#allocation5 + $0x544] sm:$0xff]
    %v542 = vld [vmem:[#allocation5 + $0x54c] sm:$0xff]
    %v543 = vld [vmem:[#allocation5 + $0x554] sm:$0xf]
    %v544 = vld [vmem:[#allocation5 + $0x558] sm:$0xff]
    %v545 = vld [vmem:[#allocation5 + $0x560] sm:$0xff]
    %v546 = vld [vmem:[#allocation5 + $0x568] sm:$0xff]
    %v547 = vld [vmem:[#allocation5 + $0x570] sm:$0xff]
    %v548 = vld [vmem:[#allocation5 + $0x578] sm:$0xf]
    %v549 = vld [vmem:[#allocation5 + $0x57c] sm:$0xff]
    %v550 = vld [vmem:[#allocation5 + $0x584] sm:$0xff]
    %v551 = vld [vmem:[#allocation5 + $0x58c] sm:$0xff]
    %v552 = vld [vmem:[#allocation5 + $0x594] sm:$0xff]
    %v553 = vld [vmem:[#allocation5 + $0x59c] sm:$0xf]
    %v554 = vld [vmem:[#allocation5 + $0x5a0] sm:$0xff]
    %v555 = vld [vmem:[#allocation5 + $0x5a8] sm:$0xff]
    %v556 = vld [vmem:[#allocation5 + $0x5b0] sm:$0xff]
    %v557 = vld [vmem:[#allocation5 + $0x5b8] sm:$0xff]
    %v558 = vld [vmem:[#allocation5 + $0x5c0] sm:$0xf]
    %v559 = vld [vmem:[#allocation5 + $0x5c4] sm:$0xff]
    %v560 = vld [vmem:[#allocation5 + $0x5cc] sm:$0xff]
    %v561 = vld [vmem:[#allocation5 + $0x5d4] sm:$0xff]
    %v562 = vld [vmem:[#allocation5 + $0x5dc] sm:$0xff]
    %v563 = vld [vmem:[#allocation5 + $0x5e4] sm:$0xf]
    %v564 = vld [vmem:[#allocation5 + $0x5e8] sm:$0xff]
    %v565 = vld [vmem:[#allocation5 + $0x5f0] sm:$0xff]
    %v566 = vld [vmem:[#allocation5 + $0x5f8] sm:$0xff]
    %v567 = vld [vmem:[#allocation5 + $0x600] sm:$0xff]
    %v568 = vld [vmem:[#allocation5 + $0x608] sm:$0xf]
    %v569 = vld [vmem:[#allocation5 + $0x60c] sm:$0xff]
    %v570 = vld [vmem:[#allocation5 + $0x614] sm:$0xff]
    %v571 = vld [vmem:[#allocation5 + $0x61c] sm:$0xff]
    %v572 = vld [vmem:[#allocation5 + $0x624] sm:$0xff]
    %v573 = vld [vmem:[#allocation5 + $0x62c] sm:$0xf]
    %v574 = vld [vmem:[#allocation5 + $0x630] sm:$0xff]
    %v575 = vld [vmem:[#allocation5 + $0x638] sm:$0xff]
    %v576 = vld [vmem:[#allocation5 + $0x640] sm:$0xff]
    %v577 = vld [vmem:[#allocation5 + $0x648] sm:$0xff]
    %v578 = vld [vmem:[#allocation5 + $0x650] sm:$0xf]
    %v579 = vld [vmem:[#allocation5 + $0x654] sm:$0xff]
    %v580 = vld [vmem:[#allocation5 + $0x65c] sm:$0xff]
    %v581 = vld [vmem:[#allocation5 + $0x664] sm:$0xff]
    %v582 = vld [vmem:[#allocation5 + $0x66c] sm:$0xff]
    %v583 = vld [vmem:[#allocation5 + $0x674] sm:$0xf]
    %v584 = vld [vmem:[#allocation5 + $0x678] sm:$0xff]
    %v585 = vld [vmem:[#allocation5 + $0x680] sm:$0xff]
    %v586 = vld [vmem:[#allocation5 + $0x688] sm:$0xff]
    %v587 = vld [vmem:[#allocation5 + $0x690] sm:$0xff]
    %v588 = vld [vmem:[#allocation5 + $0x698] sm:$0xf]
    %v589 = vld [vmem:[#allocation5 + $0x69c] sm:$0xff]
    %v590 = vld [vmem:[#allocation5 + $0x6a4] sm:$0xff]
    %v591 = vld [vmem:[#allocation5 + $0x6ac] sm:$0xff]
    %v592 = vld [vmem:[#allocation5 + $0x6b4] sm:$0xff]
    %v593 = vld [vmem:[#allocation5 + $0x6bc] sm:$0xf]
    %v834 = vunpack.c.l.b16 %v354
    %v835 = vunpack.c.h.b16 %v354
    %v836 = vunpack.c.l.b16 %v355
    %v837 = vunpack.c.h.b16 %v355
    %v838 = vunpack.c.l.b16 %v356
    %v839 = vunpack.c.h.b16 %v356
    %v840 = vunpack.c.l.b16 %v357
    %v841 = vunpack.c.h.b16 %v357
    %v842 = vunpack.c.l.b16 %v358
    %v843 = vunpack.c.l.b16 %v359
    %v844 = vunpack.c.h.b16 %v359
    %v845 = vunpack.c.l.b16 %v360
    %v846 = vunpack.c.h.b16 %v360
    %v847 = vunpack.c.l.b16 %v361
    %v848 = vunpack.c.h.b16 %v361
    %v849 = vunpack.c.l.b16 %v362
    %v850 = vunpack.c.h.b16 %v362
    %v851 = vunpack.c.l.b16 %v363
    %v852 = vunpack.c.l.b16 %v364
    %v853 = vunpack.c.h.b16 %v364
    %v854 = vunpack.c.l.b16 %v365
    %v855 = vunpack.c.h.b16 %v365
    %v856 = vunpack.c.l.b16 %v366
    %v857 = vunpack.c.h.b16 %v366
    %v858 = vunpack.c.l.b16 %v367
    %v859 = vunpack.c.h.b16 %v367
    %v860 = vunpack.c.l.b16 %v368
    %v861 = vunpack.c.l.b16 %v369
    %v862 = vunpack.c.h.b16 %v369
    %v863 = vunpack.c.l.b16 %v370
    %v864 = vunpack.c.h.b16 %v370
    %v865 = vunpack.c.l.b16 %v371
    %v866 = vunpack.c.h.b16 %v371
    %v867 = vunpack.c.l.b16 %v372
    %v868 = vunpack.c.h.b16 %v372
    %v869 = vunpack.c.l.b16 %v373
    %v870 = vunpack.c.l.b16 %v374
    %v871 = vunpack.c.h.b16 %v374
    %v872 = vunpack.c.l.b16 %v375
    %v873 = vunpack.c.h.b16 %v375
    %v874 = vunpack.c.l.b16 %v376
    %v875 = vunpack.c.h.b16 %v376
    %v876 = vunpack.c.l.b16 %v377
    %v877 = vunpack.c.h.b16 %v377
    %v878 = vunpack.c.l.b16 %v378
    %v879 = vunpack.c.l.b16 %v379
    %v880 = vunpack.c.h.b16 %v379
    %v881 = vunpack.c.l.b16 %v380
    %v882 = vunpack.c.h.b16 %v380
    %v883 = vunpack.c.l.b16 %v381
    %v884 = vunpack.c.h.b16 %v381
    %v885 = vunpack.c.l.b16 %v382
    %v886 = vunpack.c.h.b16 %v382
    %v887 = vunpack.c.l.b16 %v383
    %v888 = vunpack.c.l.b16 %v384
    %v889 = vunpack.c.h.b16 %v384
    %v890 = vunpack.c.l.b16 %v385
    %v891 = vunpack.c.h.b16 %v385
    %v892 = vunpack.c.l.b16 %v386
    %v893 = vunpack.c.h.b16 %v386
    %v894 = vunpack.c.l.b16 %v387
    %v895 = vunpack.c.h.b16 %v387
    %v896 = vunpack.c.l.b16 %v388
    %v897 = vunpack.c.l.b16 %v389
    %v898 = vunpack.c.h.b16 %v389
    %v899 = vunpack.c.l.b16 %v390
    %v900 = vunpack.c.h.b16 %v390
    %v901 = vunpack.c.l.b16 %v391
    %v902 = vunpack.c.h.b16 %v391
    %v903 = vunpack.c.l.b16 %v392
    %v904 = vunpack.c.h.b16 %v392
    %v905 = vunpack.c.l.b16 %v393
    %v906 = vunpack.c.l.b16 %v394
    %v907 = vunpack.c.h.b16 %v394
    %v908 = vunpack.c.l.b16 %v395
    %v909 = vunpack.c.h.b16 %v395
    %v910 = vunpack.c.l.b16 %v396
    %v911 = vunpack.c.h.b16 %v396
    %v912 = vunpack.c.l.b16 %v397
    %v913 = vunpack.c.h.b16 %v397
    %v914 = vunpack.c.l.b16 %v398
    %v915 = vunpack.c.l.b16 %v399
    %v916 = vunpack.c.h.b16 %v399
    %v917 = vunpack.c.l.b16 %v400
    %v918 = vunpack.c.h.b16 %v400
    %v919 = vunpack.c.l.b16 %v401
    %v920 = vunpack.c.h.b16 %v401
    %v921 = vunpack.c.l.b16 %v402
    %v922 = vunpack.c.h.b16 %v402
    %v923 = vunpack.c.l.b16 %v403
    %v924 = vunpack.c.l.b16 %v404
    %v925 = vunpack.c.h.b16 %v404
    %v926 = vunpack.c.l.b16 %v405
    %v927 = vunpack.c.h.b16 %v405
    %v928 = vunpack.c.l.b16 %v406
    %v929 = vunpack.c.h.b16 %v406
    %v930 = vunpack.c.l.b16 %v407
    %v931 = vunpack.c.h.b16 %v407
    %v932 = vunpack.c.l.b16 %v408
    %v933 = vunpack.c.l.b16 %v409
    %v934 = vunpack.c.h.b16 %v409
    %v935 = vunpack.c.l.b16 %v410
    %v936 = vunpack.c.h.b16 %v410
    %v937 = vunpack.c.l.b16 %v411
    %v938 = vunpack.c.h.b16 %v411
    %v939 = vunpack.c.l.b16 %v412
    %v940 = vunpack.c.h.b16 %v412
    %v941 = vunpack.c.l.b16 %v413
    %v942 = vunpack.c.l.b16 %v414
    %v943 = vunpack.c.h.b16 %v414
    %v944 = vunpack.c.l.b16 %v415
    %v945 = vunpack.c.h.b16 %v415
    %v946 = vunpack.c.l.b16 %v416
    %v947 = vunpack.c.h.b16 %v416
    %v948 = vunpack.c.l.b16 %v417
    %v949 = vunpack.c.h.b16 %v417
    %v950 = vunpack.c.l.b16 %v418
    %v951 = vunpack.c.l.b16 %v419
    %v952 = vunpack.c.h.b16 %v419
    %v953 = vunpack.c.l.b16 %v420
    %v954 = vunpack.c.h.b16 %v420
    %v955 = vunpack.c.l.b16 %v421
    %v956 = vunpack.c.h.b16 %v421
    %v957 = vunpack.c.l.b16 %v422
    %v958 = vunpack.c.h.b16 %v422
    %v959 = vunpack.c.l.b16 %v423
    %v960 = vunpack.c.l.b16 %v424
    %v961 = vunpack.c.h.b16 %v424
    %v962 = vunpack.c.l.b16 %v425
    %v963 = vunpack.c.h.b16 %v425
    %v964 = vunpack.c.l.b16 %v426
    %v965 = vunpack.c.h.b16 %v426
    %v966 = vunpack.c.l.b16 %v427
    %v967 = vunpack.c.h.b16 %v427
    %v968 = vunpack.c.l.b16 %v428
    %v969 = vunpack.c.l.b16 %v429
    %v970 = vunpack.c.h.b16 %v429
    %v971 = vunpack.c.l.b16 %v430
    %v972 = vunpack.c.h.b16 %v430
    %v973 = vunpack.c.l.b16 %v431
    %v974 = vunpack.c.h.b16 %v431
    %v975 = vunpack.c.l.b16 %v432
    %v976 = vunpack.c.h.b16 %v432
    %v977 = vunpack.c.l.b16 %v433
    %v978 = vunpack.c.l.b16 %v434
    %v979 = vunpack.c.h.b16 %v434
    %v980 = vunpack.c.l.b16 %v435
    %v981 = vunpack.c.h.b16 %v435
    %v982 = vunpack.c.l.b16 %v436
    %v983 = vunpack.c.h.b16 %v436
    %v984 = vunpack.c.l.b16 %v437
    %v985 = vunpack.c.h.b16 %v437
    %v986 = vunpack.c.l.b16 %v438
    %v987 = vunpack.c.l.b16 %v439
    %v988 = vunpack.c.h.b16 %v439
    %v989 = vunpack.c.l.b16 %v440
    %v990 = vunpack.c.h.b16 %v440
    %v991 = vunpack.c.l.b16 %v441
    %v992 = vunpack.c.h.b16 %v441
    %v993 = vunpack.c.l.b16 %v442
    %v994 = vunpack.c.h.b16 %v442
    %v995 = vunpack.c.l.b16 %v443
    %v996 = vunpack.c.l.b16 %v444
    %v997 = vunpack.c.h.b16 %v444
    %v998 = vunpack.c.l.b16 %v445
    %v999 = vunpack.c.h.b16 %v445
    %v1000 = vunpack.c.l.b16 %v446
    %v1001 = vunpack.c.h.b16 %v446
    %v1002 = vunpack.c.l.b16 %v447
    %v1003 = vunpack.c.h.b16 %v447
    %v1004 = vunpack.c.l.b16 %v448
    %v1005 = vunpack.c.l.b16 %v449
    %v1006 = vunpack.c.h.b16 %v449
    %v1007 = vunpack.c.l.b16 %v450
    %v1008 = vunpack.c.h.b16 %v450
    %v1009 = vunpack.c.l.b16 %v451
    %v1010 = vunpack.c.h.b16 %v451
    %v1011 = vunpack.c.l.b16 %v452
    %v1012 = vunpack.c.h.b16 %v452
    %v1013 = vunpack.c.l.b16 %v453
    %v1014 = vunpack.c.l.b16 %v454
    %v1015 = vunpack.c.h.b16 %v454
    %v1016 = vunpack.c.l.b16 %v455
    %v1017 = vunpack.c.h.b16 %v455
    %v1018 = vunpack.c.l.b16 %v456
    %v1019 = vunpack.c.h.b16 %v456
    %v1020 = vunpack.c.l.b16 %v457
    %v1021 = vunpack.c.h.b16 %v457
    %v1022 = vunpack.c.l.b16 %v458
    %v1023 = vunpack.c.l.b16 %v459
    %v1024 = vunpack.c.h.b16 %v459
    %v1025 = vunpack.c.l.b16 %v460
    %v1026 = vunpack.c.h.b16 %v460
    %v1027 = vunpack.c.l.b16 %v461
    %v1028 = vunpack.c.h.b16 %v461
    %v1029 = vunpack.c.l.b16 %v462
    %v1030 = vunpack.c.h.b16 %v462
    %v1031 = vunpack.c.l.b16 %v463
    %v1032 = vunpack.c.l.b16 %v464
    %v1033 = vunpack.c.h.b16 %v464
    %v1034 = vunpack.c.l.b16 %v465
    %v1035 = vunpack.c.h.b16 %v465
    %v1036 = vunpack.c.l.b16 %v466
    %v1037 = vunpack.c.h.b16 %v466
    %v1038 = vunpack.c.l.b16 %v467
    %v1039 = vunpack.c.h.b16 %v467
    %v1040 = vunpack.c.l.b16 %v468
    %v1041 = vunpack.c.l.b16 %v469
    %v1042 = vunpack.c.h.b16 %v469
    %v1043 = vunpack.c.l.b16 %v470
    %v1044 = vunpack.c.h.b16 %v470
    %v1045 = vunpack.c.l.b16 %v471
    %v1046 = vunpack.c.h.b16 %v471
    %v1047 = vunpack.c.l.b16 %v472
    %v1048 = vunpack.c.h.b16 %v472
    %v1049 = vunpack.c.l.b16 %v473
    %v1050 = vunpack.c.l.b16 %v474
    %v1051 = vunpack.c.h.b16 %v474
    %v1052 = vunpack.c.l.b16 %v475
    %v1053 = vunpack.c.h.b16 %v475
    %v1054 = vunpack.c.l.b16 %v476
    %v1055 = vunpack.c.h.b16 %v476
    %v1056 = vunpack.c.l.b16 %v477
    %v1057 = vunpack.c.h.b16 %v477
    %v1058 = vunpack.c.l.b16 %v478
    %v1059 = vunpack.c.l.b16 %v479
    %v1060 = vunpack.c.h.b16 %v479
    %v1061 = vunpack.c.l.b16 %v480
    %v1062 = vunpack.c.h.b16 %v480
    %v1063 = vunpack.c.l.b16 %v481
    %v1064 = vunpack.c.h.b16 %v481
    %v1065 = vunpack.c.l.b16 %v482
    %v1066 = vunpack.c.h.b16 %v482
    %v1067 = vunpack.c.l.b16 %v483
    %v1068 = vunpack.c.l.b16 %v484
    %v1069 = vunpack.c.h.b16 %v484
    %v1070 = vunpack.c.l.b16 %v485
    %v1071 = vunpack.c.h.b16 %v485
    %v1072 = vunpack.c.l.b16 %v486
    %v1073 = vunpack.c.h.b16 %v486
    %v1074 = vunpack.c.l.b16 %v487
    %v1075 = vunpack.c.h.b16 %v487
    %v1076 = vunpack.c.l.b16 %v488
    %v1077 = vunpack.c.l.b16 %v489
    %v1078 = vunpack.c.h.b16 %v489
    %v1079 = vunpack.c.l.b16 %v490
    %v1080 = vunpack.c.h.b16 %v490
    %v1081 = vunpack.c.l.b16 %v491
    %v1082 = vunpack.c.h.b16 %v491
    %v1083 = vunpack.c.l.b16 %v492
    %v1084 = vunpack.c.h.b16 %v492
    %v1085 = vunpack.c.l.b16 %v493
    %v1086 = vunpack.c.l.b16 %v494
    %v1087 = vunpack.c.h.b16 %v494
    %v1088 = vunpack.c.l.b16 %v495
    %v1089 = vunpack.c.h.b16 %v495
    %v1090 = vunpack.c.l.b16 %v496
    %v1091 = vunpack.c.h.b16 %v496
    %v1092 = vunpack.c.l.b16 %v497
    %v1093 = vunpack.c.h.b16 %v497
    %v1094 = vunpack.c.l.b16 %v498
    %v1095 = vunpack.c.l.b16 %v499
    %v1096 = vunpack.c.h.b16 %v499
    %v1097 = vunpack.c.l.b16 %v500
    %v1098 = vunpack.c.h.b16 %v500
    %v1099 = vunpack.c.l.b16 %v501
    %v1100 = vunpack.c.h.b16 %v501
    %v1101 = vunpack.c.l.b16 %v502
    %v1102 = vunpack.c.h.b16 %v502
    %v1103 = vunpack.c.l.b16 %v503
    %v1104 = vunpack.c.l.b16 %v504
    %v1105 = vunpack.c.h.b16 %v504
    %v1106 = vunpack.c.l.b16 %v505
    %v1107 = vunpack.c.h.b16 %v505
    %v1108 = vunpack.c.l.b16 %v506
    %v1109 = vunpack.c.h.b16 %v506
    %v1110 = vunpack.c.l.b16 %v507
    %v1111 = vunpack.c.h.b16 %v507
    %v1112 = vunpack.c.l.b16 %v508
    %v1113 = vunpack.c.l.b16 %v509
    %v1114 = vunpack.c.h.b16 %v509
    %v1115 = vunpack.c.l.b16 %v510
    %v1116 = vunpack.c.h.b16 %v510
    %v1117 = vunpack.c.l.b16 %v511
    %v1118 = vunpack.c.h.b16 %v511
    %v1119 = vunpack.c.l.b16 %v512
    %v1120 = vunpack.c.h.b16 %v512
    %v1121 = vunpack.c.l.b16 %v513
    %v1122 = vunpack.c.l.b16 %v514
    %v1123 = vunpack.c.h.b16 %v514
    %v1124 = vunpack.c.l.b16 %v515
    %v1125 = vunpack.c.h.b16 %v515
    %v1126 = vunpack.c.l.b16 %v516
    %v1127 = vunpack.c.h.b16 %v516
    %v1128 = vunpack.c.l.b16 %v517
    %v1129 = vunpack.c.h.b16 %v517
    %v1130 = vunpack.c.l.b16 %v518
    %v1131 = vunpack.c.l.b16 %v519
    %v1132 = vunpack.c.h.b16 %v519
    %v1133 = vunpack.c.l.b16 %v520
    %v1134 = vunpack.c.h.b16 %v520
    %v1135 = vunpack.c.l.b16 %v521
    %v1136 = vunpack.c.h.b16 %v521
    %v1137 = vunpack.c.l.b16 %v522
    %v1138 = vunpack.c.h.b16 %v522
    %v1139 = vunpack.c.l.b16 %v523
    %v1140 = vunpack.c.l.b16 %v524
    %v1141 = vunpack.c.h.b16 %v524
    %v1142 = vunpack.c.l.b16 %v525
    %v1143 = vunpack.c.h.b16 %v525
    %v1144 = vunpack.c.l.b16 %v526
    %v1145 = vunpack.c.h.b16 %v526
    %v1146 = vunpack.c.l.b16 %v527
    %v1147 = vunpack.c.h.b16 %v527
    %v1148 = vunpack.c.l.b16 %v528
    %v1149 = vunpack.c.l.b16 %v529
    %v1150 = vunpack.c.h.b16 %v529
    %v1151 = vunpack.c.l.b16 %v530
    %v1152 = vunpack.c.h.b16 %v530
    %v1153 = vunpack.c.l.b16 %v531
    %v1154 = vunpack.c.h.b16 %v531
    %v1155 = vunpack.c.l.b16 %v532
    %v1156 = vunpack.c.h.b16 %v532
    %v1157 = vunpack.c.l.b16 %v533
    %v1158 = vunpack.c.l.b16 %v534
    %v1159 = vunpack.c.h.b16 %v534
    %v1160 = vunpack.c.l.b16 %v535
    %v1161 = vunpack.c.h.b16 %v535
    %v1162 = vunpack.c.l.b16 %v536
    %v1163 = vunpack.c.h.b16 %v536
    %v1164 = vunpack.c.l.b16 %v537
    %v1165 = vunpack.c.h.b16 %v537
    %v1166 = vunpack.c.l.b16 %v538
    %v1167 = vunpack.c.l.b16 %v539
    %v1168 = vunpack.c.h.b16 %v539
    %v1169 = vunpack.c.l.b16 %v540
    %v1170 = vunpack.c.h.b16 %v540
    %v1171 = vunpack.c.l.b16 %v541
    %v1172 = vunpack.c.h.b16 %v541
    %v1173 = vunpack.c.l.b16 %v542
    %v1174 = vunpack.c.h.b16 %v542
    %v1175 = vunpack.c.l.b16 %v543
    %v1176 = vunpack.c.l.b16 %v544
    %v1177 = vunpack.c.h.b16 %v544
    %v1178 = vunpack.c.l.b16 %v545
    %v1179 = vunpack.c.h.b16 %v545
    %v1180 = vunpack.c.l.b16 %v546
    %v1181 = vunpack.c.h.b16 %v546
    %v1182 = vunpack.c.l.b16 %v547
    %v1183 = vunpack.c.h.b16 %v547
    %v1184 = vunpack.c.l.b16 %v548
    %v1185 = vunpack.c.l.b16 %v549
    %v1186 = vunpack.c.h.b16 %v549
    %v1187 = vunpack.c.l.b16 %v550
    %v1188 = vunpack.c.h.b16 %v550
    %v1189 = vunpack.c.l.b16 %v551
    %v1190 = vunpack.c.h.b16 %v551
    %v1191 = vunpack.c.l.b16 %v552
    %v1192 = vunpack.c.h.b16 %v552
    %v1193 = vunpack.c.l.b16 %v553
    %v1194 = vunpack.c.l.b16 %v554
    %v1195 = vunpack.c.h.b16 %v554
    %v1196 = vunpack.c.l.b16 %v555
    %v1197 = vunpack.c.h.b16 %v555
    %v1198 = vunpack.c.l.b16 %v556
    %v1199 = vunpack.c.h.b16 %v556
    %v1200 = vunpack.c.l.b16 %v557
    %v1201 = vunpack.c.h.b16 %v557
    %v1202 = vunpack.c.l.b16 %v558
    %v1203 = vunpack.c.l.b16 %v559
    %v1204 = vunpack.c.h.b16 %v559
    %v1205 = vunpack.c.l.b16 %v560
    %v1206 = vunpack.c.h.b16 %v560
    %v1207 = vunpack.c.l.b16 %v561
    %v1208 = vunpack.c.h.b16 %v561
    %v1209 = vunpack.c.l.b16 %v562
    %v1210 = vunpack.c.h.b16 %v562
    %v1211 = vunpack.c.l.b16 %v563
    %v1212 = vunpack.c.l.b16 %v564
    %v1213 = vunpack.c.h.b16 %v564
    %v1214 = vunpack.c.l.b16 %v565
    %v1215 = vunpack.c.h.b16 %v565
    %v1216 = vunpack.c.l.b16 %v566
    %v1217 = vunpack.c.h.b16 %v566
    %v1218 = vunpack.c.l.b16 %v567
    %v1219 = vunpack.c.h.b16 %v567
    %v1220 = vunpack.c.l.b16 %v568
    %v1221 = vunpack.c.l.b16 %v569
    %v1222 = vunpack.c.h.b16 %v569
    %v1223 = vunpack.c.l.b16 %v570
    %v1224 = vunpack.c.h.b16 %v570
    %v1225 = vunpack.c.l.b16 %v571
    %v1226 = vunpack.c.h.b16 %v571
    %v1227 = vunpack.c.l.b16 %v572
    %v1228 = vunpack.c.h.b16 %v572
    %v1229 = vunpack.c.l.b16 %v573
    %v1230 = vunpack.c.l.b16 %v574
    %v1231 = vunpack.c.h.b16 %v574
    %v1232 = vunpack.c.l.b16 %v575
    %v1233 = vunpack.c.h.b16 %v575
    %v1234 = vunpack.c.l.b16 %v576
    %v1235 = vunpack.c.h.b16 %v576
    %v1236 = vunpack.c.l.b16 %v577
    %v1237 = vunpack.c.h.b16 %v577
    %v1238 = vunpack.c.l.b16 %v578
    %v1239 = vunpack.c.l.b16 %v579
    %v1240 = vunpack.c.h.b16 %v579
    %v1241 = vunpack.c.l.b16 %v580
    %v1242 = vunpack.c.h.b16 %v580
    %v1243 = vunpack.c.l.b16 %v581
    %v1244 = vunpack.c.h.b16 %v581
    %v1245 = vunpack.c.l.b16 %v582
    %v1246 = vunpack.c.h.b16 %v582
    %v1247 = vunpack.c.l.b16 %v583
    %v1248 = vunpack.c.l.b16 %v584
    %v1249 = vunpack.c.h.b16 %v584
    %v1250 = vunpack.c.l.b16 %v585
    %v1251 = vunpack.c.h.b16 %v585
    %v1252 = vunpack.c.l.b16 %v586
    %v1253 = vunpack.c.h.b16 %v586
    %v1254 = vunpack.c.l.b16 %v587
    %v1255 = vunpack.c.h.b16 %v587
    %v1256 = vunpack.c.l.b16 %v588
    %v1257 = vunpack.c.l.b16 %v589
    %v1258 = vunpack.c.h.b16 %v589
    %v1259 = vunpack.c.l.b16 %v590
    %v1260 = vunpack.c.h.b16 %v590
    %v1261 = vunpack.c.l.b16 %v591
    %v1262 = vunpack.c.h.b16 %v591
    %v1263 = vunpack.c.l.b16 %v592
    %v1264 = vunpack.c.h.b16 %v592
    %v1265 = vunpack.c.l.b16 %v593
    %v1266 = vpack.c.b16 %v843, %v834
    %v1267 = vpack.c.b16 %v844, %v835
    %v1268 = vpack.c.b16 %v845, %v836
    %v1269 = vpack.c.b16 %v846, %v837
    %v1270 = vpack.c.b16 %v847, %v838
    %v1271 = vpack.c.b16 %v848, %v839
    %v1272 = vpack.c.b16 %v849, %v840
    %v1273 = vpack.c.b16 %v850, %v841
    %v1274 = vpack.c.b16 %v851, %v842
    %v1275 = vpack.c.b16 %v861, %v852
    %v1276 = vpack.c.b16 %v862, %v853
    %v1277 = vpack.c.b16 %v863, %v854
    %v1278 = vpack.c.b16 %v864, %v855
    %v1279 = vpack.c.b16 %v865, %v856
    %v1280 = vpack.c.b16 %v866, %v857
    %v1281 = vpack.c.b16 %v867, %v858
    %v1282 = vpack.c.b16 %v868, %v859
    %v1283 = vpack.c.b16 %v869, %v860
    %v1284 = vpack.c.b16 %v879, %v870
    %v1285 = vpack.c.b16 %v880, %v871
    %v1286 = vpack.c.b16 %v881, %v872
    %v1287 = vpack.c.b16 %v882, %v873
    %v1288 = vpack.c.b16 %v883, %v874
    %v1289 = vpack.c.b16 %v884, %v875
    %v1290 = vpack.c.b16 %v885, %v876
    %v1291 = vpack.c.b16 %v886, %v877
    %v1292 = vpack.c.b16 %v887, %v878
    %v1293 = vpack.c.b16 %v897, %v888
    %v1294 = vpack.c.b16 %v898, %v889
    %v1295 = vpack.c.b16 %v899, %v890
    %v1296 = vpack.c.b16 %v900, %v891
    %v1297 = vpack.c.b16 %v901, %v892
    %v1298 = vpack.c.b16 %v902, %v893
    %v1299 = vpack.c.b16 %v903, %v894
    %v1300 = vpack.c.b16 %v904, %v895
    %v1301 = vpack.c.b16 %v905, %v896
    %v1302 = vpack.c.b16 %v915, %v906
    %v1303 = vpack.c.b16 %v916, %v907
    %v1304 = vpack.c.b16 %v917, %v908
    %v1305 = vpack.c.b16 %v918, %v909
    %v1306 = vpack.c.b16 %v919, %v910
    %v1307 = vpack.c.b16 %v920, %v911
    %v1308 = vpack.c.b16 %v921, %v912
    %v1309 = vpack.c.b16 %v922, %v913
    %v1310 = vpack.c.b16 %v923, %v914
    %v1311 = vpack.c.b16 %v933, %v924
    %v1312 = vpack.c.b16 %v934, %v925
    %v1313 = vpack.c.b16 %v935, %v926
    %v1314 = vpack.c.b16 %v936, %v927
    %v1315 = vpack.c.b16 %v937, %v928
    %v1316 = vpack.c.b16 %v938, %v929
    %v1317 = vpack.c.b16 %v939, %v930
    %v1318 = vpack.c.b16 %v940, %v931
    %v1319 = vpack.c.b16 %v941, %v932
    %v1320 = vpack.c.b16 %v951, %v942
    %v1321 = vpack.c.b16 %v952, %v943
    %v1322 = vpack.c.b16 %v953, %v944
    %v1323 = vpack.c.b16 %v954, %v945
    %v1324 = vpack.c.b16 %v955, %v946
    %v1325 = vpack.c.b16 %v956, %v947
    %v1326 = vpack.c.b16 %v957, %v948
    %v1327 = vpack.c.b16 %v958, %v949
    %v1328 = vpack.c.b16 %v959, %v950
    %v1329 = vpack.c.b16 %v969, %v960
    %v1330 = vpack.c.b16 %v970, %v961
    %v1331 = vpack.c.b16 %v971, %v962
    %v1332 = vpack.c.b16 %v972, %v963
    %v1333 = vpack.c.b16 %v973, %v964
    %v1334 = vpack.c.b16 %v974, %v965
    %v1335 = vpack.c.b16 %v975, %v966
    %v1336 = vpack.c.b16 %v976, %v967
    %v1337 = vpack.c.b16 %v977, %v968
    %v1338 = vpack.c.b16 %v987, %v978
    %v1339 = vpack.c.b16 %v988, %v979
    %v1340 = vpack.c.b16 %v989, %v980
    %v1341 = vpack.c.b16 %v990, %v981
    %v1342 = vpack.c.b16 %v991, %v982
    %v1343 = vpack.c.b16 %v992, %v983
    %v1344 = vpack.c.b16 %v993, %v984
    %v1345 = vpack.c.b16 %v994, %v985
    %v1346 = vpack.c.b16 %v995, %v986
    %v1347 = vpack.c.b16 %v1005, %v996
    %v1348 = vpack.c.b16 %v1006, %v997
    %v1349 = vpack.c.b16 %v1007, %v998
    %v1350 = vpack.c.b16 %v1008, %v999
    %v1351 = vpack.c.b16 %v1009, %v1000
    %v1352 = vpack.c.b16 %v1010, %v1001
    %v1353 = vpack.c.b16 %v1011, %v1002
    %v1354 = vpack.c.b16 %v1012, %v1003
    %v1355 = vpack.c.b16 %v1013, %v1004
    %v1356 = vpack.c.b16 %v1023, %v1014
    %v1357 = vpack.c.b16 %v1024, %v1015
    %v1358 = vpack.c.b16 %v1025, %v1016
    %v1359 = vpack.c.b16 %v1026, %v1017
    %v1360 = vpack.c.b16 %v1027, %v1018
    %v1361 = vpack.c.b16 %v1028, %v1019
    %v1362 = vpack.c.b16 %v1029, %v1020
    %v1363 = vpack.c.b16 %v1030, %v1021
    %v1364 = vpack.c.b16 %v1031, %v1022
    %v1365 = vpack.c.b16 %v1041, %v1032
    %v1366 = vpack.c.b16 %v1042, %v1033
    %v1367 = vpack.c.b16 %v1043, %v1034
    %v1368 = vpack.c.b16 %v1044, %v1035
    %v1369 = vpack.c.b16 %v1045, %v1036
    %v1370 = vpack.c.b16 %v1046, %v1037
    %v1371 = vpack.c.b16 %v1047, %v1038
    %v1372 = vpack.c.b16 %v1048, %v1039
    %v1373 = vpack.c.b16 %v1049, %v1040
    %v1374 = vpack.c.b16 %v1059, %v1050
    %v1375 = vpack.c.b16 %v1060, %v1051
    %v1376 = vpack.c.b16 %v1061, %v1052
    %v1377 = vpack.c.b16 %v1062, %v1053
    %v1378 = vpack.c.b16 %v1063, %v1054
    %v1379 = vpack.c.b16 %v1064, %v1055
    %v1380 = vpack.c.b16 %v1065, %v1056
    %v1381 = vpack.c.b16 %v1066, %v1057
    %v1382 = vpack.c.b16 %v1067, %v1058
    %v1383 = vpack.c.b16 %v1077, %v1068
    %v1384 = vpack.c.b16 %v1078, %v1069
    %v1385 = vpack.c.b16 %v1079, %v1070
    %v1386 = vpack.c.b16 %v1080, %v1071
    %v1387 = vpack.c.b16 %v1081, %v1072
    %v1388 = vpack.c.b16 %v1082, %v1073
    %v1389 = vpack.c.b16 %v1083, %v1074
    %v1390 = vpack.c.b16 %v1084, %v1075
    %v1391 = vpack.c.b16 %v1085, %v1076
    %v1392 = vpack.c.b16 %v1095, %v1086
    %v1393 = vpack.c.b16 %v1096, %v1087
    %v1394 = vpack.c.b16 %v1097, %v1088
    %v1395 = vpack.c.b16 %v1098, %v1089
    %v1396 = vpack.c.b16 %v1099, %v1090
    %v1397 = vpack.c.b16 %v1100, %v1091
    %v1398 = vpack.c.b16 %v1101, %v1092
    %v1399 = vpack.c.b16 %v1102, %v1093
    %v1400 = vpack.c.b16 %v1103, %v1094
    %v1401 = vpack.c.b16 %v1113, %v1104
    %v1402 = vpack.c.b16 %v1114, %v1105
    %v1403 = vpack.c.b16 %v1115, %v1106
    %v1404 = vpack.c.b16 %v1116, %v1107
    %v1405 = vpack.c.b16 %v1117, %v1108
    %v1406 = vpack.c.b16 %v1118, %v1109
    %v1407 = vpack.c.b16 %v1119, %v1110
    %v1408 = vpack.c.b16 %v1120, %v1111
    %v1409 = vpack.c.b16 %v1121, %v1112
    %v1410 = vpack.c.b16 %v1131, %v1122
    %v1411 = vpack.c.b16 %v1132, %v1123
    %v1412 = vpack.c.b16 %v1133, %v1124
    %v1413 = vpack.c.b16 %v1134, %v1125
    %v1414 = vpack.c.b16 %v1135, %v1126
    %v1415 = vpack.c.b16 %v1136, %v1127
    %v1416 = vpack.c.b16 %v1137, %v1128
    %v1417 = vpack.c.b16 %v1138, %v1129
    %v1418 = vpack.c.b16 %v1139, %v1130
    %v1419 = vpack.c.b16 %v1149, %v1140
    %v1420 = vpack.c.b16 %v1150, %v1141
    %v1421 = vpack.c.b16 %v1151, %v1142
    %v1422 = vpack.c.b16 %v1152, %v1143
    %v1423 = vpack.c.b16 %v1153, %v1144
    %v1424 = vpack.c.b16 %v1154, %v1145
    %v1425 = vpack.c.b16 %v1155, %v1146
    %v1426 = vpack.c.b16 %v1156, %v1147
    %v1427 = vpack.c.b16 %v1157, %v1148
    %v1428 = vpack.c.b16 %v1167, %v1158
    %v1429 = vpack.c.b16 %v1168, %v1159
    %v1430 = vpack.c.b16 %v1169, %v1160
    %v1431 = vpack.c.b16 %v1170, %v1161
    %v1432 = vpack.c.b16 %v1171, %v1162
    %v1433 = vpack.c.b16 %v1172, %v1163
    %v1434 = vpack.c.b16 %v1173, %v1164
    %v1435 = vpack.c.b16 %v1174, %v1165
    %v1436 = vpack.c.b16 %v1175, %v1166
    %v1437 = vpack.c.b16 %v1185, %v1176
    %v1438 = vpack.c.b16 %v1186, %v1177
    %v1439 = vpack.c.b16 %v1187, %v1178
    %v1440 = vpack.c.b16 %v1188, %v1179
    %v1441 = vpack.c.b16 %v1189, %v1180
    %v1442 = vpack.c.b16 %v1190, %v1181
    %v1443 = vpack.c.b16 %v1191, %v1182
    %v1444 = vpack.c.b16 %v1192, %v1183
    %v1445 = vpack.c.b16 %v1193, %v1184
    %v1446 = vpack.c.b16 %v1203, %v1194
    %v1447 = vpack.c.b16 %v1204, %v1195
    %v1448 = vpack.c.b16 %v1205, %v1196
    %v1449 = vpack.c.b16 %v1206, %v1197
    %v1450 = vpack.c.b16 %v1207, %v1198
    %v1451 = vpack.c.b16 %v1208, %v1199
    %v1452 = vpack.c.b16 %v1209, %v1200
    %v1453 = vpack.c.b16 %v1210, %v1201
    %v1454 = vpack.c.b16 %v1211, %v1202
    %v1455 = vpack.c.b16 %v1221, %v1212
    %v1456 = vpack.c.b16 %v1222, %v1213
    %v1457 = vpack.c.b16 %v1223, %v1214
    %v1458 = vpack.c.b16 %v1224, %v1215
    %v1459 = vpack.c.b16 %v1225, %v1216
    %v1460 = vpack.c.b16 %v1226, %v1217
    %v1461 = vpack.c.b16 %v1227, %v1218
    %v1462 = vpack.c.b16 %v1228, %v1219
    %v1463 = vpack.c.b16 %v1229, %v1220
    %v1464 = vpack.c.b16 %v1239, %v1230
    %v1465 = vpack.c.b16 %v1240, %v1231
    %v1466 = vpack.c.b16 %v1241, %v1232
    %v1467 = vpack.c.b16 %v1242, %v1233
    %v1468 = vpack.c.b16 %v1243, %v1234
    %v1469 = vpack.c.b16 %v1244, %v1235
    %v1470 = vpack.c.b16 %v1245, %v1236
    %v1471 = vpack.c.b16 %v1246, %v1237
    %v1472 = vpack.c.b16 %v1247, %v1238
    %v1473 = vpack.c.b16 %v1257, %v1248
    %v1474 = vpack.c.b16 %v1258, %v1249
    %v1475 = vpack.c.b16 %v1259, %v1250
    %v1476 = vpack.c.b16 %v1260, %v1251
    %v1477 = vpack.c.b16 %v1261, %v1252
    %v1478 = vpack.c.b16 %v1262, %v1253
    %v1479 = vpack.c.b16 %v1263, %v1254
    %v1480 = vpack.c.b16 %v1264, %v1255
    %v1481 = vpack.c.b16 %v1265, %v1256
    %1698 = vmatprep.subr.bf16.mxu0 %v1267
    %1699 = vmatpush1.bf16.msra.mxu0 %v1266
    %1700 = vmatprep.subr.bf16.mxu0 %v1276
    %1701 = vmatpush1.bf16.msra.mxu0 %v1275
    %1702 = vmatprep.subr.bf16.mxu0 %v1285
    %1703 = vmatpush1.bf16.msra.mxu0 %v1284
    %1704 = vmatprep.subr.bf16.mxu0 %v1294
    %1705 = vmatpush1.bf16.msra.mxu0 %v1293
    %1706 = vmatprep.subr.bf16.mxu0 %v1303
    %1707 = vmatpush1.bf16.msra.mxu0 %v1302
    %1708 = vmatprep.subr.bf16.mxu0 %v1312
    %1709 = vmatpush1.bf16.msra.mxu0 %v1311
    %1710 = vmatprep.subr.bf16.mxu0 %v1321
    %1711 = vmatpush1.bf16.msra.mxu0 %v1320
    %1712 = vmatprep.subr.bf16.mxu0 %v1330
    %1713 = vmatpush1.bf16.msra.mxu0 %v1329
    %1714 = vmatprep.subr.bf16.mxu0 %v1339
    %1715 = vmatpush1.bf16.msra.mxu0 %v1338
    %1716 = vmatprep.subr.bf16.mxu0 %v1348
    %1717 = vmatpush1.bf16.msra.mxu0 %v1347
    %1718 = vmatprep.subr.bf16.mxu0 %v1357
    %1719 = vmatpush1.bf16.msra.mxu0 %v1356
    %1720 = vmatprep.subr.bf16.mxu0 %v1366
    %1721 = vmatpush1.bf16.msra.mxu0 %v1365
    %1722 = vmatprep.subr.bf16.mxu0 %v1375
    %1723 = vmatpush1.bf16.msra.mxu0 %v1374
    %1724 = vmatprep.subr.bf16.mxu0 %v1384
    %1725 = vmatpush1.bf16.msra.mxu0 %v1383
    %1726 = vmatprep.subr.bf16.mxu0 %v1393
    %1727 = vmatpush1.bf16.msra.mxu0 %v1392
    %1728 = vmatprep.subr.bf16.mxu0 %v1402
    %1729 = vmatpush1.bf16.msra.mxu0 %v1401
    %1730 = vmatprep.mubr.bf16.mxu0 %v349
    %1731 = vmatmul.mubr.bf16.gmra.mrb[0].mxu0 %v348
    %v1732 = vpop.f32.mrb[0].mxu0
    %v1733 = vadd.f32 0.0, %v1732
    %v1734 = vpop.f32.mrb[0].mxu0
    %v1735 = vadd.f32 0.0, %v1734
    %v1736 = vpop.f32.mrb[0].mxu0
    %v1737 = vadd.f32 0.0, %v1736
    %v1738 = vpop.f32.mrb[0].mxu0
    %v1739 = vadd.f32 0.0, %v1738
    %1740 = vmatprep.mubr.bf16.mxu0 %v352
    %1741 = vmatmul.mubr.bf16.gmra.mrb[0].mxu0 %v351
    %v1742 = vpop.f32.mrb[0].mxu0
    %v1743 = vadd.f32 0.0, %v1742
    %v1744 = vpop.f32.mrb[0].mxu0
    %v1745 = vadd.f32 0.0, %v1744
    %v1746 = vpop.f32.mrb[0].mxu0
    %v1747 = vadd.f32 0.0, %v1746
    %v1748 = vpop.f32.mrb[0].mxu0
    %v1749 = vadd.f32 0.0, %v1748
    %1750 = vdwg.mxu0
    %1751 = vmatprep.subr.bf16.mxu0 %v1411
    %1752 = vmatpush1.bf16.msra.mxu0 %v1410
    %1753 = vmatprep.subr.bf16.mxu0 %v1420
    %1754 = vmatpush1.bf16.msra.mxu0 %v1419
    %1755 = vmatprep.subr.bf16.mxu0 %v1429
    %1756 = vmatpush1.bf16.msra.mxu0 %v1428
    %1757 = vmatprep.subr.bf16.mxu0 %v1438
    %1758 = vmatpush1.bf16.msra.mxu0 %v1437
    %1759 = vmatprep.subr.bf16.mxu0 %v1447
    %1760 = vmatpush1.bf16.msra.mxu0 %v1446
    %1761 = vmatprep.subr.bf16.mxu0 %v1456
    %1762 = vmatpush1.bf16.msra.mxu0 %v1455
    %1763 = vmatprep.subr.bf16.mxu0 %v1465
    %1764 = vmatpush1.bf16.msra.mxu0 %v1464
    %1765 = vmatprep.subr.bf16.mxu0 %v1474
    %1766 = vmatpush1.bf16.msra.mxu0 %v1473
    %1767 = vmatprep.subr.bf16.mxu0 0
    %1768 = vmatpush1.bf16.msra.mxu0 0
    %1769 = vmatprep.subr.bf16.mxu0 0
    %1770 = vmatpush1.bf16.msra.mxu0 0
    %1771 = vmatprep.subr.bf16.mxu0 0
    %1772 = vmatpush1.bf16.msra.mxu0 0
    %1773 = vmatprep.subr.bf16.mxu0 0
    %1774 = vmatpush1.bf16.msra.mxu0 0
    %1775 = vmatprep.subr.bf16.mxu0 0
    %1776 = vmatpush1.bf16.msra.mxu0 0
    %1777 = vmatprep.subr.bf16.mxu0 0
    %1778 = vmatpush1.bf16.msra.mxu0 0
    %1779 = vmatprep.subr.bf16.mxu0 0
    %1780 = vmatpush1.bf16.msra.mxu0 0
    %1781 = vmatprep.subr.bf16.mxu0 0
    %1782 = vmatpush1.bf16.msra.mxu0 0
    %1783 = vmatprep.mubr.bf16.mxu0 0
    %1784 = vmatmul.mubr.bf16.gmra.mrb[0].mxu0 %v350
    %v1785 = vpop.f32.mrb[0].mxu0
    %v1786 = vadd.f32 %v1733, %v1785
    %v1787 = vpop.f32.mrb[0].mxu0
    %v1788 = vadd.f32 %v1735, %v1787
    %v1789 = vpop.f32.mrb[0].mxu0
    %v1790 = vadd.f32 %v1737, %v1789
    %v1791 = vpop.f32.mrb[0].mxu0
    %v1792 = vadd.f32 %v1739, %v1791
    %1793 = vmatprep.mubr.bf16.mxu0 0
    %1794 = vmatmul.mubr.bf16.gmra.mrb[0].mxu0 %v353
    %v1795 = vpop.f32.mrb[0].mxu0
    %v1796 = vadd.f32 %v1743, %v1795
    %v1797 = vpop.f32.mrb[0].mxu0
    %v1798 = vadd.f32 %v1745, %v1797
    %v1799 = vpop.f32.mrb[0].mxu0
    %v1800 = vadd.f32 %v1747, %v1799
    %v1801 = vpop.f32.mrb[0].mxu0
    %v1802 = vadd.f32 %v1749, %v1801
    %1803 = vdwg.mxu0
    %1804 = vmatprep.subr.bf16.mxu0 %v1269
    %1805 = vmatpush1.bf16.msra.mxu0 %v1268
    %1806 = vmatprep.subr.bf16.mxu0 %v1278
    %1807 = vmatpush1.bf16.msra.mxu0 %v1277
    %1808 = vmatprep.subr.bf16.mxu0 %v1287
    %1809 = vmatpush1.bf16.msra.mxu0 %v1286
    %1810 = vmatprep.subr.bf16.mxu0 %v1296
    %1811 = vmatpush1.bf16.msra.mxu0 %v1295
    %1812 = vmatprep.subr.bf16.mxu0 %v1305
    %1813 = vmatpush1.bf16.msra.mxu0 %v1304
    %1814 = vmatprep.subr.bf16.mxu0 %v1314
    %1815 = vmatpush1.bf16.msra.mxu0 %v1313
    %1816 = vmatprep.subr.bf16.mxu0 %v1323
    %1817 = vmatpush1.bf16.msra.mxu0 %v1322
    %1818 = vmatprep.subr.bf16.mxu0 %v1332
    %1819 = vmatpush1.bf16.msra.mxu0 %v1331
    %1820 = vmatprep.subr.bf16.mxu0 %v1341
    %1821 = vmatpush1.bf16.msra.mxu0 %v1340
    %1822 = vmatprep.subr.bf16.mxu0 %v1350
    %1823 = vmatpush1.bf16.msra.mxu0 %v1349
    %1824 = vmatprep.subr.bf16.mxu0 %v1359
    %1825 = vmatpush1.bf16.msra.mxu0 %v1358
    %1826 = vmatprep.subr.bf16.mxu0 %v1368
    %1827 = vmatpush1.bf16.msra.mxu0 %v1367
    %1828 = vmatprep.subr.bf16.mxu0 %v1377
    %1829 = vmatpush1.bf16.msra.mxu0 %v1376
    %1830 = vmatprep.subr.bf16.mxu0 %v1386
    %1831 = vmatpush1.bf16.msra.mxu0 %v1385
    %1832 = vmatprep.subr.bf16.mxu0 %v1395
    %1833 = vmatpush1.bf16.msra.mxu0 %v1394
    %1834 = vmatprep.subr.bf16.mxu0 %v1404
    %1835 = vmatpush1.bf16.msra.mxu0 %v1403
    %1836 = vmatprep.mubr.bf16.mxu0 %v349
    %1837 = vmatmul.mubr.bf16.gmra.mrb[0].mxu0 %v348
    %v1838 = vpop.f32.mrb[0].mxu0
    %v1839 = vadd.f32 0.0, %v1838
    %v1840 = vpop.f32.mrb[0].mxu0
    %v1841 = vadd.f32 0.0, %v1840
    %v1842 = vpop.f32.mrb[0].mxu0
    %v1843 = vadd.f32 0.0, %v1842
    %v1844 = vpop.f32.mrb[0].mxu0
    %v1845 = vadd.f32 0.0, %v1844
    %1846 = vmatprep.mubr.bf16.mxu0 %v352
    %1847 = vmatmul.mubr.bf16.gmra.mrb[0].mxu0 %v351
    %v1848 = vpop.f32.mrb[0].mxu0
    %v1849 = vadd.f32 0.0, %v1848
    %v1850 = vpop.f32.mrb[0].mxu0
    %v1851 = vadd.f32 0.0, %v1850
    %v1852 = vpop.f32.mrb[0].mxu0
    %v1853 = vadd.f32 0.0, %v1852
    %v1854 = vpop.f32.mrb[0].mxu0
    %v1855 = vadd.f32 0.0, %v1854
    %1856 = vdwg.mxu0
    %1857 = vmatprep.subr.bf16.mxu0 %v1413
    %1858 = vmatpush1.bf16.msra.mxu0 %v1412
    %1859 = vmatprep.subr.bf16.mxu0 %v1422
    %1860 = vmatpush1.bf16.msra.mxu0 %v1421
    %1861 = vmatprep.subr.bf16.mxu0 %v1431
    %1862 = vmatpush1.bf16.msra.mxu0 %v1430
    %1863 = vmatprep.subr.bf16.mxu0 %v1440
    %1864 = vmatpush1.bf16.msra.mxu0 %v1439
    %1865 = vmatprep.subr.bf16.mxu0 %v1449
    %1866 = vmatpush1.bf16.msra.mxu0 %v1448
    %1867 = vmatprep.subr.bf16.mxu0 %v1458
    %1868 = vmatpush1.bf16.msra.mxu0 %v1457
    %1869 = vmatprep.subr.bf16.mxu0 %v1467
    %1870 = vmatpush1.bf16.msra.mxu0 %v1466
    %1871 = vmatprep.subr.bf16.mxu0 %v1476
    %1872 = vmatpush1.bf16.msra.mxu0 %v1475
    %1873 = vmatprep.subr.bf16.mxu0 0
    %1874 = vmatpush1.bf16.msra.mxu0 0
    %1875 = vmatprep.subr.bf16.mxu0 0
    %1876 = vmatpush1.bf16.msra.mxu0 0
    %1877 = vmatprep.subr.bf16.mxu0 0
    %1878 = vmatpush1.bf16.msra.mxu0 0
    %1879 = vmatprep.subr.bf16.mxu0 0
    %1880 = vmatpush1.bf16.msra.mxu0 0
    %1881 = vmatprep.subr.bf16.mxu0 0
    %1882 = vmatpush1.bf16.msra.mxu0 0
    %1883 = vmatprep.subr.bf16.mxu0 0
    %1884 = vmatpush1.bf16.msra.mxu0 0
    %1885 = vmatprep.subr.bf16.mxu0 0
    %1886 = vmatpush1.bf16.msra.mxu0 0
    %1887 = vmatprep.subr.bf16.mxu0 0
    %1888 = vmatpush1.bf16.msra.mxu0 0
    %1889 = vmatprep.mubr.bf16.mxu0 0
    %1890 = vmatmul.mubr.bf16.gmra.mrb[0].mxu0 %v350
    %v1891 = vpop.f32.mrb[0].mxu0
    %v1892 = vadd.f32 %v1839, %v1891
    %v1893 = vpop.f32.mrb[0].mxu0
    %v1894 = vadd.f32 %v1841, %v1893
    %v1895 = vpop.f32.mrb[0].mxu0
    %v1896 = vadd.f32 %v1843, %v1895
    %v1897 = vpop.f32.mrb[0].mxu0
    %v1898 = vadd.f32 %v1845, %v1897
    %1899 = vmatprep.mubr.bf16.mxu0 0
    %1900 = vmatmul.mubr.bf16.gmra.mrb[0].mxu0 %v353
    %v1901 = vpop.f32.mrb[0].mxu0
    %v1902 = vadd.f32 %v1849, %v1901
    %v1903 = vpop.f32.mrb[0].mxu0
    %v1904 = vadd.f32 %v1851, %v1903
    %v1905 = vpop.f32.mrb[0].mxu0
    %v1906 = vadd.f32 %v1853, %v1905
    %v1907 = vpop.f32.mrb[0].mxu0
    %v1908 = vadd.f32 %v1855, %v1907
    %1909 = vdwg.mxu0
    %1910 = vmatprep.subr.bf16.mxu0 %v1271
    %1911 = vmatpush1.bf16.msra.mxu0 %v1270
    %1912 = vmatprep.subr.bf16.mxu0 %v1280
    %1913 = vmatpush1.bf16.msra.mxu0 %v1279
    %1914 = vmatprep.subr.bf16.mxu0 %v1289
    %1915 = vmatpush1.bf16.msra.mxu0 %v1288
    %1916 = vmatprep.subr.bf16.mxu0 %v1298
    %1917 = vmatpush1.bf16.msra.mxu0 %v1297
    %1918 = vmatprep.subr.bf16.mxu0 %v1307
    %1919 = vmatpush1.bf16.msra.mxu0 %v1306
    %1920 = vmatprep.subr.bf16.mxu0 %v1316
    %1921 = vmatpush1.bf16.msra.mxu0 %v1315
    %1922 = vmatprep.subr.bf16.mxu0 %v1325
    %1923 = vmatpush1.bf16.msra.mxu0 %v1324
    %1924 = vmatprep.subr.bf16.mxu0 %v1334
    %1925 = vmatpush1.bf16.msra.mxu0 %v1333
    %1926 = vmatprep.subr.bf16.mxu0 %v1343
    %1927 = vmatpush1.bf16.msra.mxu0 %v1342
    %1928 = vmatprep.subr.bf16.mxu0 %v1352
    %1929 = vmatpush1.bf16.msra.mxu0 %v1351
    %1930 = vmatprep.subr.bf16.mxu0 %v1361
    %1931 = vmatpush1.bf16.msra.mxu0 %v1360
    %1932 = vmatprep.subr.bf16.mxu0 %v1370
    %1933 = vmatpush1.bf16.msra.mxu0 %v1369
    %1934 = vmatprep.subr.bf16.mxu0 %v1379
    %1935 = vmatpush1.bf16.msra.mxu0 %v1378
    %1936 = vmatprep.subr.bf16.mxu0 %v1388
    %1937 = vmatpush1.bf16.msra.mxu0 %v1387
    %1938 = vmatprep.subr.bf16.mxu0 %v1397
    %1939 = vmatpush1.bf16.msra.mxu0 %v1396
    %1940 = vmatprep.subr.bf16.mxu0 %v1406
    %1941 = vmatpush1.bf16.msra.mxu0 %v1405
    %1942 = vmatprep.mubr.bf16.mxu0 %v349
    %1943 = vmatmul.mubr.bf16.gmra.mrb[0].mxu0 %v348
    %v1944 = vpop.f32.mrb[0].mxu0
    %v1945 = vadd.f32 0.0, %v1944
    %v1946 = vpop.f32.mrb[0].mxu0
    %v1947 = vadd.f32 0.0, %v1946
    %v1948 = vpop.f32.mrb[0].mxu0
    %v1949 = vadd.f32 0.0, %v1948
    %v1950 = vpop.f32.mrb[0].mxu0
    %v1951 = vadd.f32 0.0, %v1950
    %1952 = vmatprep.mubr.bf16.mxu0 %v352
    %1953 = vmatmul.mubr.bf16.gmra.mrb[0].mxu0 %v351
    %v1954 = vpop.f32.mrb[0].mxu0
    %v1955 = vadd.f32 0.0, %v1954
    %v1956 = vpop.f32.mrb[0].mxu0
    %v1957 = vadd.f32 0.0, %v1956
    %v1958 = vpop.f32.mrb[0].mxu0
    %v1959 = vadd.f32 0.0, %v1958
    %v1960 = vpop.f32.mrb[0].mxu0
    %v1961 = vadd.f32 0.0, %v1960
    %1962 = vdwg.mxu0
    %1963 = vmatprep.subr.bf16.mxu0 %v1415
    %1964 = vmatpush1.bf16.msra.mxu0 %v1414
    %1965 = vmatprep.subr.bf16.mxu0 %v1424
    %1966 = vmatpush1.bf16.msra.mxu0 %v1423
    %1967 = vmatprep.subr.bf16.mxu0 %v1433
    %1968 = vmatpush1.bf16.msra.mxu0 %v1432
    %1969 = vmatprep.subr.bf16.mxu0 %v1442
    %1970 = vmatpush1.bf16.msra.mxu0 %v1441
    %1971 = vmatprep.subr.bf16.mxu0 %v1451
    %1972 = vmatpush1.bf16.msra.mxu0 %v1450
    %1973 = vmatprep.subr.bf16.mxu0 %v1460
    %1974 = vmatpush1.bf16.msra.mxu0 %v1459
    %1975 = vmatprep.subr.bf16.mxu0 %v1469
    %1976 = vmatpush1.bf16.msra.mxu0 %v1468
    %1977 = vmatprep.subr.bf16.mxu0 %v1478
    %1978 = vmatpush1.bf16.msra.mxu0 %v1477
    %1979 = vmatprep.subr.bf16.mxu0 0
    %1980 = vmatpush1.bf16.msra.mxu0 0
    %1981 = vmatprep.subr.bf16.mxu0 0
    %1982 = vmatpush1.bf16.msra.mxu0 0
    %1983 = vmatprep.subr.bf16.mxu0 0
    %1984 = vmatpush1.bf16.msra.mxu0 0
    %1985 = vmatprep.subr.bf16.mxu0 0
    %1986 = vmatpush1.bf16.msra.mxu0 0
    %1987 = vmatprep.subr.bf16.mxu0 0
    %1988 = vmatpush1.bf16.msra.mxu0 0
    %1989 = vmatprep.subr.bf16.mxu0 0
    %1990 = vmatpush1.bf16.msra.mxu0 0
    %1991 = vmatprep.subr.bf16.mxu0 0
    %1992 = vmatpush1.bf16.msra.mxu0 0
    %1993 = vmatprep.subr.bf16.mxu0 0
    %1994 = vmatpush1.bf16.msra.mxu0 0
    %1995 = vmatprep.mubr.bf16.mxu0 0
    %1996 = vmatmul.mubr.bf16.gmra.mrb[0].mxu0 %v350
    %v1997 = vpop.f32.mrb[0].mxu0
    %v1998 = vadd.f32 %v1945, %v1997
    %v1999 = vpop.f32.mrb[0].mxu0
    %v2000 = vadd.f32 %v1947, %v1999
    %v2001 = vpop.f32.mrb[0].mxu0
    %v2002 = vadd.f32 %v1949, %v2001
    %v2003 = vpop.f32.mrb[0].mxu0
    %v2004 = vadd.f32 %v1951, %v2003
    %2005 = vmatprep.mubr.bf16.mxu0 0
    %2006 = vmatmul.mubr.bf16.gmra.mrb[0].mxu0 %v353
    %v2007 = vpop.f32.mrb[0].mxu0
    %v2008 = vadd.f32 %v1955, %v2007
    %v2009 = vpop.f32.mrb[0].mxu0
    %v2010 = vadd.f32 %v1957, %v2009
    %v2011 = vpop.f32.mrb[0].mxu0
    %v2012 = vadd.f32 %v1959, %v2011
    %v2013 = vpop.f32.mrb[0].mxu0
    %v2014 = vadd.f32 %v1961, %v2013
    %2015 = vdwg.mxu0
    %2016 = vmatprep.subr.bf16.mxu0 %v1273
    %2017 = vmatpush1.bf16.msra.mxu0 %v1272
    %2018 = vmatprep.subr.bf16.mxu0 %v1282
    %2019 = vmatpush1.bf16.msra.mxu0 %v1281
    %2020 = vmatprep.subr.bf16.mxu0 %v1291
    %2021 = vmatpush1.bf16.msra.mxu0 %v1290
    %2022 = vmatprep.subr.bf16.mxu0 %v1300
    %2023 = vmatpush1.bf16.msra.mxu0 %v1299
    %2024 = vmatprep.subr.bf16.mxu0 %v1309
    %2025 = vmatpush1.bf16.msra.mxu0 %v1308
    %2026 = vmatprep.subr.bf16.mxu0 %v1318
    %2027 = vmatpush1.bf16.msra.mxu0 %v1317
    %2028 = vmatprep.subr.bf16.mxu0 %v1327
    %2029 = vmatpush1.bf16.msra.mxu0 %v1326
    %2030 = vmatprep.subr.bf16.mxu0 %v1336
    %2031 = vmatpush1.bf16.msra.mxu0 %v1335
    %2032 = vmatprep.subr.bf16.mxu0 %v1345
    %2033 = vmatpush1.bf16.msra.mxu0 %v1344
    %2034 = vmatprep.subr.bf16.mxu0 %v1354
    %2035 = vmatpush1.bf16.msra.mxu0 %v1353
    %2036 = vmatprep.subr.bf16.mxu0 %v1363
    %2037 = vmatpush1.bf16.msra.mxu0 %v1362
    %2038 = vmatprep.subr.bf16.mxu0 %v1372
    %2039 = vmatpush1.bf16.msra.mxu0 %v1371
    %2040 = vmatprep.subr.bf16.mxu0 %v1381
    %2041 = vmatpush1.bf16.msra.mxu0 %v1380
    %2042 = vmatprep.subr.bf16.mxu0 %v1390
    %2043 = vmatpush1.bf16.msra.mxu0 %v1389
    %2044 = vmatprep.subr.bf16.mxu0 %v1399
    %2045 = vmatpush1.bf16.msra.mxu0 %v1398
    %2046 = vmatprep.subr.bf16.mxu0 %v1408
    %2047 = vmatpush1.bf16.msra.mxu0 %v1407
    %2048 = vmatprep.mubr.bf16.mxu0 %v349
    %2049 = vmatmul.mubr.bf16.gmra.mrb[0].mxu0 %v348
    %v2050 = vpop.f32.mrb[0].mxu0
    %v2051 = vadd.f32 0.0, %v2050
    %v2052 = vpop.f32.mrb[0].mxu0
    %v2053 = vadd.f32 0.0, %v2052
    %v2054 = vpop.f32.mrb[0].mxu0
    %v2055 = vadd.f32 0.0, %v2054
    %v2056 = vpop.f32.mrb[0].mxu0
    %v2057 = vadd.f32 0.0, %v2056
    %2058 = vmatprep.mubr.bf16.mxu0 %v352
    %2059 = vmatmul.mubr.bf16.gmra.mrb[0].mxu0 %v351
    %v2060 = vpop.f32.mrb[0].mxu0
    %v2061 = vadd.f32 0.0, %v2060
    %v2062 = vpop.f32.mrb[0].mxu0
    %v2063 = vadd.f32 0.0, %v2062
    %v2064 = vpop.f32.mrb[0].mxu0
    %v2065 = vadd.f32 0.0, %v2064
    %v2066 = vpop.f32.mrb[0].mxu0
    %v2067 = vadd.f32 0.0, %v2066
    %2068 = vdwg.mxu0
    %2069 = vmatprep.subr.bf16.mxu0 %v1417
    %2070 = vmatpush1.bf16.msra.mxu0 %v1416
    %2071 = vmatprep.subr.bf16.mxu0 %v1426
    %2072 = vmatpush1.bf16.msra.mxu0 %v1425
    %2073 = vmatprep.subr.bf16.mxu0 %v1435
    %2074 = vmatpush1.bf16.msra.mxu0 %v1434
    %2075 = vmatprep.subr.bf16.mxu0 %v1444
    %2076 = vmatpush1.bf16.msra.mxu0 %v1443
    %2077 = vmatprep.subr.bf16.mxu0 %v1453
    %2078 = vmatpush1.bf16.msra.mxu0 %v1452
    %2079 = vmatprep.subr.bf16.mxu0 %v1462
    %2080 = vmatpush1.bf16.msra.mxu0 %v1461
    %2081 = vmatprep.subr.bf16.mxu0 %v1471
    %2082 = vmatpush1.bf16.msra.mxu0 %v1470
    %2083 = vmatprep.subr.bf16.mxu0 %v1480
    %2084 = vmatpush1.bf16.msra.mxu0 %v1479
    %2085 = vmatprep.subr.bf16.mxu0 0
    %2086 = vmatpush1.bf16.msra.mxu0 0
    %2087 = vmatprep.subr.bf16.mxu0 0
    %2088 = vmatpush1.bf16.msra.mxu0 0
    %2089 = vmatprep.subr.bf16.mxu0 0
    %2090 = vmatpush1.bf16.msra.mxu0 0
    %2091 = vmatprep.subr.bf16.mxu0 0
    %2092 = vmatpush1.bf16.msra.mxu0 0
    %2093 = vmatprep.subr.bf16.mxu0 0
    %2094 = vmatpush1.bf16.msra.mxu0 0
    %2095 = vmatprep.subr.bf16.mxu0 0
    %2096 = vmatpush1.bf16.msra.mxu0 0
    %2097 = vmatprep.subr.bf16.mxu0 0
    %2098 = vmatpush1.bf16.msra.mxu0 0
    %2099 = vmatprep.subr.bf16.mxu0 0
    %2100 = vmatpush1.bf16.msra.mxu0 0
    %2101 = vmatprep.mubr.bf16.mxu0 0
    %2102 = vmatmul.mubr.bf16.gmra.mrb[0].mxu0 %v350
    %v2103 = vpop.f32.mrb[0].mxu0
    %v2104 = vadd.f32 %v2051, %v2103
    %v2105 = vpop.f32.mrb[0].mxu0
    %v2106 = vadd.f32 %v2053, %v2105
    %v2107 = vpop.f32.mrb[0].mxu0
    %v2108 = vadd.f32 %v2055, %v2107
    %v2109 = vpop.f32.mrb[0].mxu0
    %v2110 = vadd.f32 %v2057, %v2109
    %2111 = vmatprep.mubr.bf16.mxu0 0
    %2112 = vmatmul.mubr.bf16.gmra.mrb[0].mxu0 %v353
    %v2113 = vpop.f32.mrb[0].mxu0
    %v2114 = vadd.f32 %v2061, %v2113
    %v2115 = vpop.f32.mrb[0].mxu0
    %v2116 = vadd.f32 %v2063, %v2115
    %v2117 = vpop.f32.mrb[0].mxu0
    %v2118 = vadd.f32 %v2065, %v2117
    %v2119 = vpop.f32.mrb[0].mxu0
    %v2120 = vadd.f32 %v2067, %v2119
    %2121 = vdwg.mxu0
    %2122 = vmatprep.subr.bf16.mxu0 0
    %2123 = vmatpush1.bf16.msra.mxu0 %v1274
    %2124 = vmatprep.subr.bf16.mxu0 0
    %2125 = vmatpush1.bf16.msra.mxu0 %v1283
    %2126 = vmatprep.subr.bf16.mxu0 0
    %2127 = vmatpush1.bf16.msra.mxu0 %v1292
    %2128 = vmatprep.subr.bf16.mxu0 0
    %2129 = vmatpush1.bf16.msra.mxu0 %v1301
    %2130 = vmatprep.subr.bf16.mxu0 0
    %2131 = vmatpush1.bf16.msra.mxu0 %v1310
    %2132 = vmatprep.subr.bf16.mxu0 0
    %2133 = vmatpush1.bf16.msra.mxu0 %v1319
    %2134 = vmatprep.subr.bf16.mxu0 0
    %2135 = vmatpush1.bf16.msra.mxu0 %v1328
    %2136 = vmatprep.subr.bf16.mxu0 0
    %2137 = vmatpush1.bf16.msra.mxu0 %v1337
    %2138 = vmatprep.subr.bf16.mxu0 0
    %2139 = vmatpush1.bf16.msra.mxu0 %v1346
    %2140 = vmatprep.subr.bf16.mxu0 0
    %2141 = vmatpush1.bf16.msra.mxu0 %v1355
    %2142 = vmatprep.subr.bf16.mxu0 0
    %2143 = vmatpush1.bf16.msra.mxu0 %v1364
    %2144 = vmatprep.subr.bf16.mxu0 0
    %2145 = vmatpush1.bf16.msra.mxu0 %v1373
    %2146 = vmatprep.subr.bf16.mxu0 0
    %2147 = vmatpush1.bf16.msra.mxu0 %v1382
    %2148 = vmatprep.subr.bf16.mxu0 0
    %2149 = vmatpush1.bf16.msra.mxu0 %v1391
    %2150 = vmatprep.subr.bf16.mxu0 0
    %2151 = vmatpush1.bf16.msra.mxu0 %v1400
    %2152 = vmatprep.subr.bf16.mxu0 0
    %2153 = vmatpush1.bf16.msra.mxu0 %v1409
    %2154 = vmatprep.mubr.bf16.mxu0 %v349
    %2155 = vmatmul.mubr.bf16.gmra.mrb[0].mxu0 %v348
    %v2156 = vpop.f32.mrb[0].mxu0
    %v2157 = vadd.f32 0.0, %v2156
    %v2158 = vpop.f32.mrb[0].mxu0
    %v2159 = vpop.f32.mrb[0].mxu0
    %v2160 = vadd.f32 0.0, %v2159
    %v2161 = vpop.f32.mrb[0].mxu0
    %2162 = vmatprep.mubr.bf16.mxu0 %v352
    %2163 = vmatmul.mubr.bf16.gmra.mrb[0].mxu0 %v351
    %v2164 = vpop.f32.mrb[0].mxu0
    %v2165 = vadd.f32 0.0, %v2164
    %v2166 = vpop.f32.mrb[0].mxu0
    %v2167 = vpop.f32.mrb[0].mxu0
    %v2168 = vadd.f32 0.0, %v2167
    %v2169 = vpop.f32.mrb[0].mxu0
    %2170 = vdwg.mxu0
    %2171 = vmatprep.subr.bf16.mxu0 0
    %2172 = vmatpush1.bf16.msra.mxu0 %v1418
    %2173 = vmatprep.subr.bf16.mxu0 0
    %2174 = vmatpush1.bf16.msra.mxu0 %v1427
    %2175 = vmatprep.subr.bf16.mxu0 0
    %2176 = vmatpush1.bf16.msra.mxu0 %v1436
    %2177 = vmatprep.subr.bf16.mxu0 0
    %2178 = vmatpush1.bf16.msra.mxu0 %v1445
    %2179 = vmatprep.subr.bf16.mxu0 0
    %2180 = vmatpush1.bf16.msra.mxu0 %v1454
    %2181 = vmatprep.subr.bf16.mxu0 0
    %2182 = vmatpush1.bf16.msra.mxu0 %v1463
    %2183 = vmatprep.subr.bf16.mxu0 0
    %2184 = vmatpush1.bf16.msra.mxu0 %v1472
    %2185 = vmatprep.subr.bf16.mxu0 0
    %2186 = vmatpush1.bf16.msra.mxu0 %v1481
    %2187 = vmatprep.subr.bf16.mxu0 0
    %2188 = vmatpush1.bf16.msra.mxu0 0
    %2189 = vmatprep.subr.bf16.mxu0 0
    %2190 = vmatpush1.bf16.msra.mxu0 0
    %2191 = vmatprep.subr.bf16.mxu0 0
    %2192 = vmatpush1.bf16.msra.mxu0 0
    %2193 = vmatprep.subr.bf16.mxu0 0
    %2194 = vmatpush1.bf16.msra.mxu0 0
    %2195 = vmatprep.subr.bf16.mxu0 0
    %2196 = vmatpush1.bf16.msra.mxu0 0
    %2197 = vmatprep.subr.bf16.mxu0 0
    %2198 = vmatpush1.bf16.msra.mxu0 0
    %2199 = vmatprep.subr.bf16.mxu0 0
    %2200 = vmatpush1.bf16.msra.mxu0 0
    %2201 = vmatprep.subr.bf16.mxu0 0
    %2202 = vmatpush1.bf16.msra.mxu0 0
    %2203 = vmatprep.mubr.bf16.mxu0 0
    %2204 = vmatmul.mubr.bf16.gmra.mrb[0].mxu0 %v350
    %v2205 = vpop.f32.mrb[0].mxu0
    %v2206 = vadd.f32 %v2157, %v2205
    %v2207 = vpop.f32.mrb[0].mxu0
    %v2208 = vpop.f32.mrb[0].mxu0
    %v2209 = vadd.f32 %v2160, %v2208
    %v2210 = vpop.f32.mrb[0].mxu0
    %2211 = vmatprep.mubr.bf16.mxu0 0
    %2212 = vmatmul.mubr.bf16.gmra.mrb[0].mxu0 %v353
    %v2213 = vpop.f32.mrb[0].mxu0
    %v2214 = vadd.f32 %v2165, %v2213
    %v2215 = vpop.f32.mrb[0].mxu0
    %v2216 = vpop.f32.mrb[0].mxu0
    %v2217 = vadd.f32 %v2168, %v2216
    %v2218 = vpop.f32.mrb[0].mxu0
    %2219 = vdwg.mxu0
    %v2220 = vpack.c.bf16 %v1790, %v1786
    %v2221 = vpack.c.bf16 %v1792, %v1788
    %v2222 = vpack.c.bf16 %v1896, %v1892
    %v2223 = vpack.c.bf16 %v1898, %v1894
    %v2224 = vpack.c.bf16 %v2002, %v1998
    %v2225 = vpack.c.bf16 %v2004, %v2000
    %v2226 = vpack.c.bf16 %v2108, %v2104
    %v2227 = vpack.c.bf16 %v2110, %v2106
    %v2228 = vpack.c.bf16 %v2209, %v2206
    %v2229 = vpack.c.bf16 %v1800, %v1796
    %v2230 = vpack.c.bf16 %v1802, %v1798
    %v2231 = vpack.c.bf16 %v1906, %v1902
    %v2232 = vpack.c.bf16 %v1908, %v1904
    %v2233 = vpack.c.bf16 %v2012, %v2008
    %v2234 = vpack.c.bf16 %v2014, %v2010
    %v2235 = vpack.c.bf16 %v2118, %v2114
    %v2236 = vpack.c.bf16 %v2120, %v2116
    %v2237 = vpack.c.bf16 %v2217, %v2214
    %v2238 = vlaneseq
    %v2239 = vshrl.u32 %v2238, 7
    %v2240 = vadd.s32 %v2239, 8
    %v2241 = vstv %s192
    %v2242 = vadd.s32 %v2239, %v2241
    %v2243 = vadd.s32 %v2240, %v2241
    %v2244 = vlaneseq
    %v2245 = vand.u32 %v2244, 127
    %vm2246 = vcmp.le.s32.totalorder %v2245, %v2242
    %vm2247 = vcmp.le.s32.totalorder %v2245, %v2243
    %vm2248 = vcmask 523264
    %v2250 = vsel %vm2248, %v2220, 0
    %v2253 = vsel %vm2248, %v2223, 0
    %2255 = vmatprep.subr.bf16.mxu0 0
    %2256 = vmatpush1.bf16.xpose.msra.mxu0 %v2253
    %2257 = vmatprep.subr.bf16.mxu0 0
    %2258 = vmatpush1.bf16.xpose.msra.mxu0 0
    %2259 = vmatprep.subr.bf16.mxu0 0
    %2260 = vmatpush1.bf16.xpose.msra.mxu0 0
    %2261 = vmatprep.subr.bf16.mxu0 0
    %2262 = vmatpush1.bf16.xpose.msra.mxu0 0
    %2263 = vmatprep.subr.bf16.mxu0 0
    %2264 = vmatpush1.bf16.xpose.msra.mxu0 0
    %2265 = vmatprep.subr.bf16.mxu0 0
    %2266 = vmatpush1.bf16.xpose.msra.mxu0 0
    %2267 = vmatprep.subr.bf16.mxu0 0
    %2268 = vmatpush1.bf16.xpose.msra.mxu0 0
    %2269 = vmatprep.subr.bf16.mxu0 0
    %2270 = vmatpush1.bf16.xpose.msra.mxu0 0
    %2271 = vmatprep.subr.bf16.mxu0 0
    %2272 = vmatpush1.bf16.xpose.msra.mxu0 0
    %2273 = vmatprep.subr.bf16.mxu0 0
    %2274 = vmatpush1.bf16.xpose.msra.mxu0 0
    %2275 = vmatprep.subr.bf16.mxu0 0
    %2276 = vmatpush1.bf16.xpose.msra.mxu0 0
    %2277 = vmatprep.subr.bf16.mxu0 0
    %2278 = vmatpush1.bf16.xpose.msra.mxu0 0
    %2279 = vmatprep.subr.bf16.mxu0 0
    %2280 = vmatpush1.bf16.xpose.msra.mxu0 0
    %2281 = vmatprep.subr.bf16.mxu0 0
    %2282 = vmatpush1.bf16.xpose.msra.mxu0 0
    %2283 = vmatprep.subr.bf16.mxu0 0
    %2284 = vmatpush1.bf16.xpose.msra.mxu0 0
    %2285 = vmatprep.subr.bf16.mxu0 0
    %2286 = vmatpush1.bf16.xpose.msra.mxu0 0
    %2287 = vmatprep.mubr.bf16.mxu0 0
    %2288 = vmatmul.mubr.bf16.gmra.mrb[0].mxu0 %v2250
    %v2289 = vpop.f32.mrb[0].mxu0
    %v2290 = vadd.f32 0.0, %v2289
    %v2291 = vpop.f32.mrb[0].mxu0
    %v2292 = vpop.f32.mrb[0].mxu0
    %v2293 = vadd.f32 0.0, %v2292
    %v2294 = vpop.f32.mrb[0].mxu0
    %2295 = vdwg.mxu0
    %v2296 = vsel %vm2246, %v2290, -inf
    %v2297 = vsel %vm2247, %v2293, -inf
    %vm2298 = vcmask 130048
    %v2299 = vsel %vm2298, %v2296, -inf
    %2300 = vmax.xlane.f32.xlu0 %v2299
    %v2301 = vpop.xlane.xlu0 %2300
    %v2302 = vsel %vm2298, %v2297, -inf
    %2303 = vmax.xlane.f32.xlu0 %v2302
    %v2304 = vpop.xlane.xlu0 %2303
    %v2305 = vsub.f32 %v2296, %v2301
    %v2306 = vsub.f32 %v2297, %v2304
    %v2307 = vmul.f32 %v2305, 1.442695
    %v2308 = vpow.pop %v2307
    %v2309 = vmul.f32 %v2306, 1.442695
    %v2310 = vpow.pop %v2309
    %v2311 = vsel %vm2298, %v2308, 0.0
    %2312 = vadd.xlane.f32.xlu0 %v2311
    %v2313 = vpop.xlane.xlu0 %2312
    %v2314 = vsel %vm2298, %v2310, 0.0
    %2315 = vadd.xlane.f32.xlu0 %v2314
    %v2316 = vpop.xlane.xlu0 %2315
    %v2317 = vrcp.pop %v2313
    %v2318 = vrcp.pop %v2316
    %v2319 = vmul.f32 %v2308, %v2317
    %v2320 = vmul.f32 %v2310, %v2318
    %v2321 = vpack.c.bf16 %v2320, %v2319
    %v2323 = vsel %vm2298, %v2321, 0
    %2325 = vmatprep.subr.bf16.mxu0 0
    %2326 = vmatpush1.bf16.msra.mxu0 %v2226
    %2327 = vmatprep.subr.bf16.mxu0 0
    %2328 = vmatpush1.bf16.msra.mxu0 0
    %2329 = vmatprep.subr.bf16.mxu0 0
    %2330 = vmatpush1.bf16.msra.mxu0 0
    %2331 = vmatprep.subr.bf16.mxu0 0
    %2332 = vmatpush1.bf16.msra.mxu0 0
    %2333 = vmatprep.subr.bf16.mxu0 0
    %2334 = vmatpush1.bf16.msra.mxu0 0
    %2335 = vmatprep.subr.bf16.mxu0 0
    %2336 = vmatpush1.bf16.msra.mxu0 0
    %2337 = vmatprep.subr.bf16.mxu0 0
    %2338 = vmatpush1.bf16.msra.mxu0 0
    %2339 = vmatprep.subr.bf16.mxu0 0
    %2340 = vmatpush1.bf16.msra.mxu0 0
    %2341 = vmatprep.subr.bf16.mxu0 0
    %2342 = vmatpush1.bf16.msra.mxu0 0
    %2343 = vmatprep.subr.bf16.mxu0 0
    %2344 = vmatpush1.bf16.msra.mxu0 0
    %2345 = vmatprep.subr.bf16.mxu0 0
    %2346 = vmatpush1.bf16.msra.mxu0 0
    %2347 = vmatprep.subr.bf16.mxu0 0
    %2348 = vmatpush1.bf16.msra.mxu0 0
    %2349 = vmatprep.subr.bf16.mxu0 0
    %2350 = vmatpush1.bf16.msra.mxu0 0
    %2351 = vmatprep.subr.bf16.mxu0 0
    %2352 = vmatpush1.bf16.msra.mxu0 0
    %2353 = vmatprep.subr.bf16.mxu0 0
    %2354 = vmatpush1.bf16.msra.mxu0 0
    %2355 = vmatprep.subr.bf16.mxu0 0
    %2356 = vmatpush1.bf16.msra.mxu0 0
    %2357 = vmatprep.mubr.bf16.mxu0 0
    %2358 = vmatmul.mubr.bf16.gmra.mrb[0].mxu0 %v2323
    %v2359 = vpop.f32.mrb[0].mxu0
    %v2360 = vadd.f32 0.0, %v2359
    %v2361 = vpop.f32.mrb[0].mxu0
    %v2362 = vpop.f32.mrb[0].mxu0
    %v2363 = vadd.f32 0.0, %v2362
    %v2364 = vpop.f32.mrb[0].mxu0
    %2365 = vdwg.mxu0
    %v2366 = vpack.c.bf16 %v2363, %v2360
    %2368 = vrot.lane.b32.xlu0 %v2220, 64
    %v2369 = vpop.permute.xlu0 %2368
    %2371 = vrot.lane.b32.xlu0 %v2223, 64
    %v2372 = vpop.permute.xlu0 %2371
    %v2374 = vsel %vm2248, %v2369, 0
    %v2377 = vsel %vm2248, %v2372, 0
    %2379 = vmatprep.subr.bf16.mxu0 0
    %2380 = vmatpush1.bf16.xpose.msra.mxu0 %v2377
    %2381 = vmatprep.subr.bf16.mxu0 0
    %2382 = vmatpush1.bf16.xpose.msra.mxu0 0
    %2383 = vmatprep.subr.bf16.mxu0 0
    %2384 = vmatpush1.bf16.xpose.msra.mxu0 0
    %2385 = vmatprep.subr.bf16.mxu0 0
    %2386 = vmatpush1.bf16.xpose.msra.mxu0 0
    %2387 = vmatprep.subr.bf16.mxu0 0
    %2388 = vmatpush1.bf16.xpose.msra.mxu0 0
    %2389 = vmatprep.subr.bf16.mxu0 0
    %2390 = vmatpush1.bf16.xpose.msra.mxu0 0
    %2391 = vmatprep.subr.bf16.mxu0 0
    %2392 = vmatpush1.bf16.xpose.msra.mxu0 0
    %2393 = vmatprep.subr.bf16.mxu0 0
    %2394 = vmatpush1.bf16.xpose.msra.mxu0 0
    %2395 = vmatprep.subr.bf16.mxu0 0
    %2396 = vmatpush1.bf16.xpose.msra.mxu0 0
    %2397 = vmatprep.subr.bf16.mxu0 0
    %2398 = vmatpush1.bf16.xpose.msra.mxu0 0
    %2399 = vmatprep.subr.bf16.mxu0 0
    %2400 = vmatpush1.bf16.xpose.msra.mxu0 0
    %2401 = vmatprep.subr.bf16.mxu0 0
    %2402 = vmatpush1.bf16.xpose.msra.mxu0 0
    %2403 = vmatprep.subr.bf16.mxu0 0
    %2404 = vmatpush1.bf16.xpose.msra.mxu0 0
    %2405 = vmatprep.subr.bf16.mxu0 0
    %2406 = vmatpush1.bf16.xpose.msra.mxu0 0
    %2407 = vmatprep.subr.bf16.mxu0 0
    %2408 = vmatpush1.bf16.xpose.msra.mxu0 0
    %2409 = vmatprep.subr.bf16.mxu0 0
    %2410 = vmatpush1.bf16.xpose.msra.mxu0 0
    %2411 = vmatprep.mubr.bf16.mxu0 0
    %2412 = vmatmul.mubr.bf16.gmra.mrb[0].mxu0 %v2374
    %v2413 = vpop.f32.mrb[0].mxu0
    %v2414 = vadd.f32 0.0, %v2413
    %v2415 = vpop.f32.mrb[0].mxu0
    %v2416 = vpop.f32.mrb[0].mxu0
    %v2417 = vadd.f32 0.0, %v2416
    %v2418 = vpop.f32.mrb[0].mxu0
    %2419 = vdwg.mxu0
    %v2420 = vsel %vm2246, %v2414, -inf
    %v2421 = vsel %vm2247, %v2417, -inf
    %v2422 = vsel %vm2298, %v2420, -inf
    %2423 = vmax.xlane.f32.xlu0 %v2422
    %v2424 = vpop.xlane.xlu0 %2423
    %v2425 = vsel %vm2298, %v2421, -inf
    %2426 = vmax.xlane.f32.xlu0 %v2425
    %v2427 = vpop.xlane.xlu0 %2426
    %v2428 = vsub.f32 %v2420, %v2424
    %v2429 = vsub.f32 %v2421, %v2427
    %v2430 = vmul.f32 %v2428, 1.442695
    %v2431 = vpow.pop %v2430
    %v2432 = vmul.f32 %v2429, 1.442695
    %v2433 = vpow.pop %v2432
    %v2434 = vsel %vm2298, %v2431, 0.0
    %2435 = vadd.xlane.f32.xlu0 %v2434
    %v2436 = vpop.xlane.xlu0 %2435
    %v2437 = vsel %vm2298, %v2433, 0.0
    %2438 = vadd.xlane.f32.xlu0 %v2437
    %v2439 = vpop.xlane.xlu0 %2438
    %v2440 = vrcp.pop %v2436
    %v2441 = vrcp.pop %v2439
    %v2442 = vmul.f32 %v2431, %v2440
    %v2443 = vmul.f32 %v2433, %v2441
    %v2444 = vpack.c.bf16 %v2443, %v2442
    %2446 = vrot.lane.b32.xlu0 %v2226, 64
    %v2447 = vpop.permute.xlu0 %2446
    %v2450 = vsel %vm2298, %v2444, 0
    %2452 = vmatprep.subr.bf16.mxu0 0
    %2453 = vmatpush1.bf16.msra.mxu0 %v2447
    %2454 = vmatprep.subr.bf16.mxu0 0
    %2455 = vmatpush1.bf16.msra.mxu0 0
    %2456 = vmatprep.subr.bf16.mxu0 0
    %2457 = vmatpush1.bf16.msra.mxu0 0
    %2458 = vmatprep.subr.bf16.mxu0 0
    %2459 = vmatpush1.bf16.msra.mxu0 0
    %2460 = vmatprep.subr.bf16.mxu0 0
    %2461 = vmatpush1.bf16.msra.mxu0 0
    %2462 = vmatprep.subr.bf16.mxu0 0
    %2463 = vmatpush1.bf16.msra.mxu0 0
    %2464 = vmatprep.subr.bf16.mxu0 0
    %2465 = vmatpush1.bf16.msra.mxu0 0
    %2466 = vmatprep.subr.bf16.mxu0 0
    %2467 = vmatpush1.bf16.msra.mxu0 0
    %2468 = vmatprep.subr.bf16.mxu0 0
    %2469 = vmatpush1.bf16.msra.mxu0 0
    %2470 = vmatprep.subr.bf16.mxu0 0
    %2471 = vmatpush1.bf16.msra.mxu0 0
    %2472 = vmatprep.subr.bf16.mxu0 0
    %2473 = vmatpush1.bf16.msra.mxu0 0
    %2474 = vmatprep.subr.bf16.mxu0 0
    %2475 = vmatpush1.bf16.msra.mxu0 0
    %2476 = vmatprep.subr.bf16.mxu0 0
    %2477 = vmatpush1.bf16.msra.mxu0 0
    %2478 = vmatprep.subr.bf16.mxu0 0
    %2479 = vmatpush1.bf16.msra.mxu0 0
    %2480 = vmatprep.subr.bf16.mxu0 0
    %2481 = vmatpush1.bf16.msra.mxu0 0
    %2482 = vmatprep.subr.bf16.mxu0 0
    %2483 = vmatpush1.bf16.msra.mxu0 0
    %2484 = vmatprep.mubr.bf16.mxu0 0
    %2485 = vmatmul.mubr.bf16.gmra.mrb[0].mxu0 %v2450
    %v2486 = vpop.f32.mrb[0].mxu0
    %v2487 = vadd.f32 0.0, %v2486
    %v2488 = vpop.f32.mrb[0].mxu0
    %v2489 = vpop.f32.mrb[0].mxu0
    %v2490 = vadd.f32 0.0, %v2489
    %v2491 = vpop.f32.mrb[0].mxu0
    %2492 = vdwg.mxu0
    %v2493 = vpack.c.bf16 %v2490, %v2487
    %v2495 = vsel %vm2248, %v2221, 0
    %v2498 = vsel %vm2248, %v2224, 0
    %2500 = vmatprep.subr.bf16.mxu0 0
    %2501 = vmatpush1.bf16.xpose.msra.mxu0 %v2498
    %2502 = vmatprep.subr.bf16.mxu0 0
    %2503 = vmatpush1.bf16.xpose.msra.mxu0 0
    %2504 = vmatprep.subr.bf16.mxu0 0
    %2505 = vmatpush1.bf16.xpose.msra.mxu0 0
    %2506 = vmatprep.subr.bf16.mxu0 0
    %2507 = vmatpush1.bf16.xpose.msra.mxu0 0
    %2508 = vmatprep.subr.bf16.mxu0 0
    %2509 = vmatpush1.bf16.xpose.msra.mxu0 0
    %2510 = vmatprep.subr.bf16.mxu0 0
    %2511 = vmatpush1.bf16.xpose.msra.mxu0 0
    %2512 = vmatprep.subr.bf16.mxu0 0
    %2513 = vmatpush1.bf16.xpose.msra.mxu0 0
    %2514 = vmatprep.subr.bf16.mxu0 0
    %2515 = vmatpush1.bf16.xpose.msra.mxu0 0
    %2516 = vmatprep.subr.bf16.mxu0 0
    %2517 = vmatpush1.bf16.xpose.msra.mxu0 0
    %2518 = vmatprep.subr.bf16.mxu0 0
    %2519 = vmatpush1.bf16.xpose.msra.mxu0 0
    %2520 = vmatprep.subr.bf16.mxu0 0
    %2521 = vmatpush1.bf16.xpose.msra.mxu0 0
    %2522 = vmatprep.subr.bf16.mxu0 0
    %2523 = vmatpush1.bf16.xpose.msra.mxu0 0
    %2524 = vmatprep.subr.bf16.mxu0 0
    %2525 = vmatpush1.bf16.xpose.msra.mxu0 0
    %2526 = vmatprep.subr.bf16.mxu0 0
    %2527 = vmatpush1.bf16.xpose.msra.mxu0 0
    %2528 = vmatprep.subr.bf16.mxu0 0
    %2529 = vmatpush1.bf16.xpose.msra.mxu0 0
    %2530 = vmatprep.subr.bf16.mxu0 0
    %2531 = vmatpush1.bf16.xpose.msra.mxu0 0
    %2532 = vmatprep.mubr.bf16.mxu0 0
    %2533 = vmatmul.mubr.bf16.gmra.mrb[0].mxu0 %v2495
    %v2534 = vpop.f32.mrb[0].mxu0
    %v2535 = vadd.f32 0.0, %v2534
    %v2536 = vpop.f32.mrb[0].mxu0
    %v2537 = vpop.f32.mrb[0].mxu0
    %v2538 = vadd.f32 0.0, %v2537
    %v2539 = vpop.f32.mrb[0].mxu0
    %2540 = vdwg.mxu0
    %v2541 = vsel %vm2246, %v2535, -inf
    %v2542 = vsel %vm2247, %v2538, -inf
    %v2543 = vsel %vm2298, %v2541, -inf
    %2544 = vmax.xlane.f32.xlu0 %v2543
    %v2545 = vpop.xlane.xlu0 %2544
    %v2546 = vsel %vm2298, %v2542, -inf
    %2547 = vmax.xlane.f32.xlu0 %v2546
    %v2548 = vpop.xlane.xlu0 %2547
    %v2549 = vsub.f32 %v2541, %v2545
    %v2550 = vsub.f32 %v2542, %v2548
    %v2551 = vmul.f32 %v2549, 1.442695
    %v2552 = vpow.pop %v2551
    %v2553 = vmul.f32 %v2550, 1.442695
    %v2554 = vpow.pop %v2553
    %v2555 = vsel %vm2298, %v2552, 0.0
    %2556 = vadd.xlane.f32.xlu0 %v2555
    %v2557 = vpop.xlane.xlu0 %2556
    %v2558 = vsel %vm2298, %v2554, 0.0
    %2559 = vadd.xlane.f32.xlu0 %v2558
    %v2560 = vpop.xlane.xlu0 %2559
    %v2561 = vrcp.pop %v2557
    %v2562 = vrcp.pop %v2560
    %v2563 = vmul.f32 %v2552, %v2561
    %v2564 = vmul.f32 %v2554, %v2562
    %v2565 = vpack.c.bf16 %v2564, %v2563
    %v2567 = vsel %vm2298, %v2565, 0
    %2569 = vmatprep.subr.bf16.mxu0 0
    %2570 = vmatpush1.bf16.msra.mxu0 %v2227
    %2571 = vmatprep.subr.bf16.mxu0 0
    %2572 = vmatpush1.bf16.msra.mxu0 0
    %2573 = vmatprep.subr.bf16.mxu0 0
    %2574 = vmatpush1.bf16.msra.mxu0 0
    %2575 = vmatprep.subr.bf16.mxu0 0
    %2576 = vmatpush1.bf16.msra.mxu0 0
    %2577 = vmatprep.subr.bf16.mxu0 0
    %2578 = vmatpush1.bf16.msra.mxu0 0
    %2579 = vmatprep.subr.bf16.mxu0 0
    %2580 = vmatpush1.bf16.msra.mxu0 0
    %2581 = vmatprep.subr.bf16.mxu0 0
    %2582 = vmatpush1.bf16.msra.mxu0 0
    %2583 = vmatprep.subr.bf16.mxu0 0
    %2584 = vmatpush1.bf16.msra.mxu0 0
    %2585 = vmatprep.subr.bf16.mxu0 0
    %2586 = vmatpush1.bf16.msra.mxu0 0
    %2587 = vmatprep.subr.bf16.mxu0 0
    %2588 = vmatpush1.bf16.msra.mxu0 0
    %2589 = vmatprep.subr.bf16.mxu0 0
    %2590 = vmatpush1.bf16.msra.mxu0 0
    %2591 = vmatprep.subr.bf16.mxu0 0
    %2592 = vmatpush1.bf16.msra.mxu0 0
    %2593 = vmatprep.subr.bf16.mxu0 0
    %2594 = vmatpush1.bf16.msra.mxu0 0
    %2595 = vmatprep.subr.bf16.mxu0 0
    %2596 = vmatpush1.bf16.msra.mxu0 0
    %2597 = vmatprep.subr.bf16.mxu0 0
    %2598 = vmatpush1.bf16.msra.mxu0 0
    %2599 = vmatprep.subr.bf16.mxu0 0
    %2600 = vmatpush1.bf16.msra.mxu0 0
    %2601 = vmatprep.mubr.bf16.mxu0 0
    %2602 = vmatmul.mubr.bf16.gmra.mrb[0].mxu0 %v2567
    %v2603 = vpop.f32.mrb[0].mxu0
    %v2604 = vadd.f32 0.0, %v2603
    %v2605 = vpop.f32.mrb[0].mxu0
    %v2606 = vpop.f32.mrb[0].mxu0
    %v2607 = vadd.f32 0.0, %v2606
    %v2608 = vpop.f32.mrb[0].mxu0
    %2609 = vdwg.mxu0
    %v2610 = vpack.c.bf16 %v2607, %v2604
    %2612 = vrot.lane.b32.xlu0 %v2221, 64
    %v2613 = vpop.permute.xlu0 %2612
    %2615 = vrot.lane.b32.xlu0 %v2224, 64
    %v2616 = vpop.permute.xlu0 %2615
    %v2618 = vsel %vm2248, %v2613, 0
    %v2621 = vsel %vm2248, %v2616, 0
    %2623 = vmatprep.subr.bf16.mxu0 0
    %2624 = vmatpush1.bf16.xpose.msra.mxu0 %v2621
    %2625 = vmatprep.subr.bf16.mxu0 0
    %2626 = vmatpush1.bf16.xpose.msra.mxu0 0
    %2627 = vmatprep.subr.bf16.mxu0 0
    %2628 = vmatpush1.bf16.xpose.msra.mxu0 0
    %2629 = vmatprep.subr.bf16.mxu0 0
    %2630 = vmatpush1.bf16.xpose.msra.mxu0 0
    %2631 = vmatprep.subr.bf16.mxu0 0
    %2632 = vmatpush1.bf16.xpose.msra.mxu0 0
    %2633 = vmatprep.subr.bf16.mxu0 0
    %2634 = vmatpush1.bf16.xpose.msra.mxu0 0
    %2635 = vmatprep.subr.bf16.mxu0 0
    %2636 = vmatpush1.bf16.xpose.msra.mxu0 0
    %2637 = vmatprep.subr.bf16.mxu0 0
    %2638 = vmatpush1.bf16.xpose.msra.mxu0 0
    %2639 = vmatprep.subr.bf16.mxu0 0
    %2640 = vmatpush1.bf16.xpose.msra.mxu0 0
    %2641 = vmatprep.subr.bf16.mxu0 0
    %2642 = vmatpush1.bf16.xpose.msra.mxu0 0
    %2643 = vmatprep.subr.bf16.mxu0 0
    %2644 = vmatpush1.bf16.xpose.msra.mxu0 0
    %2645 = vmatprep.subr.bf16.mxu0 0
    %2646 = vmatpush1.bf16.xpose.msra.mxu0 0
    %2647 = vmatprep.subr.bf16.mxu0 0
    %2648 = vmatpush1.bf16.xpose.msra.mxu0 0
    %2649 = vmatprep.subr.bf16.mxu0 0
    %2650 = vmatpush1.bf16.xpose.msra.mxu0 0
    %2651 = vmatprep.subr.bf16.mxu0 0
    %2652 = vmatpush1.bf16.xpose.msra.mxu0 0
    %2653 = vmatprep.subr.bf16.mxu0 0
    %2654 = vmatpush1.bf16.xpose.msra.mxu0 0
    %2655 = vmatprep.mubr.bf16.mxu0 0
    %2656 = vmatmul.mubr.bf16.gmra.mrb[0].mxu0 %v2618
    %v2657 = vpop.f32.mrb[0].mxu0
    %v2658 = vadd.f32 0.0, %v2657
    %v2659 = vpop.f32.mrb[0].mxu0
    %v2660 = vpop.f32.mrb[0].mxu0
    %v2661 = vadd.f32 0.0, %v2660
    %v2662 = vpop.f32.mrb[0].mxu0
    %2663 = vdwg.mxu0
    %v2664 = vsel %vm2246, %v2658, -inf
    %v2665 = vsel %vm2247, %v2661, -inf
    %v2666 = vsel %vm2298, %v2664, -inf
    %2667 = vmax.xlane.f32.xlu0 %v2666
    %v2668 = vpop.xlane.xlu0 %2667
    %v2669 = vsel %vm2298, %v2665, -inf
    %2670 = vmax.xlane.f32.xlu0 %v2669
    %v2671 = vpop.xlane.xlu0 %2670
    %v2672 = vsub.f32 %v2664, %v2668
    %v2673 = vsub.f32 %v2665, %v2671
    %v2674 = vmul.f32 %v2672, 1.442695
    %v2675 = vpow.pop %v2674
    %v2676 = vmul.f32 %v2673, 1.442695
    %v2677 = vpow.pop %v2676
    %v2678 = vsel %vm2298, %v2675, 0.0
    %2679 = vadd.xlane.f32.xlu0 %v2678
    %v2680 = vpop.xlane.xlu0 %2679
    %v2681 = vsel %vm2298, %v2677, 0.0
    %2682 = vadd.xlane.f32.xlu0 %v2681
    %v2683 = vpop.xlane.xlu0 %2682
    %v2684 = vrcp.pop %v2680
    %v2685 = vrcp.pop %v2683
    %v2686 = vmul.f32 %v2675, %v2684
    %v2687 = vmul.f32 %v2677, %v2685
    %v2688 = vpack.c.bf16 %v2687, %v2686
    %2690 = vrot.lane.b32.xlu0 %v2227, 64
    %v2691 = vpop.permute.xlu0 %2690
    %v2694 = vsel %vm2298, %v2688, 0
    %2696 = vmatprep.subr.bf16.mxu0 0
    %2697 = vmatpush1.bf16.msra.mxu0 %v2691
    %2698 = vmatprep.subr.bf16.mxu0 0
    %2699 = vmatpush1.bf16.msra.mxu0 0
    %2700 = vmatprep.subr.bf16.mxu0 0
    %2701 = vmatpush1.bf16.msra.mxu0 0
    %2702 = vmatprep.subr.bf16.mxu0 0
    %2703 = vmatpush1.bf16.msra.mxu0 0
    %2704 = vmatprep.subr.bf16.mxu0 0
    %2705 = vmatpush1.bf16.msra.mxu0 0
    %2706 = vmatprep.subr.bf16.mxu0 0
    %2707 = vmatpush1.bf16.msra.mxu0 0
    %2708 = vmatprep.subr.bf16.mxu0 0
    %2709 = vmatpush1.bf16.msra.mxu0 0
    %2710 = vmatprep.subr.bf16.mxu0 0
    %2711 = vmatpush1.bf16.msra.mxu0 0
    %2712 = vmatprep.subr.bf16.mxu0 0
    %2713 = vmatpush1.bf16.msra.mxu0 0
    %2714 = vmatprep.subr.bf16.mxu0 0
    %2715 = vmatpush1.bf16.msra.mxu0 0
    %2716 = vmatprep.subr.bf16.mxu0 0
    %2717 = vmatpush1.bf16.msra.mxu0 0
    %2718 = vmatprep.subr.bf16.mxu0 0
    %2719 = vmatpush1.bf16.msra.mxu0 0
    %2720 = vmatprep.subr.bf16.mxu0 0
    %2721 = vmatpush1.bf16.msra.mxu0 0
    %2722 = vmatprep.subr.bf16.mxu0 0
    %2723 = vmatpush1.bf16.msra.mxu0 0
    %2724 = vmatprep.subr.bf16.mxu0 0
    %2725 = vmatpush1.bf16.msra.mxu0 0
    %2726 = vmatprep.subr.bf16.mxu0 0
    %2727 = vmatpush1.bf16.msra.mxu0 0
    %2728 = vmatprep.mubr.bf16.mxu0 0
    %2729 = vmatmul.mubr.bf16.gmra.mrb[0].mxu0 %v2694
    %v2730 = vpop.f32.mrb[0].mxu0
    %v2731 = vadd.f32 0.0, %v2730
    %v2732 = vpop.f32.mrb[0].mxu0
    %v2733 = vpop.f32.mrb[0].mxu0
    %v2734 = vadd.f32 0.0, %v2733
    %v2735 = vpop.f32.mrb[0].mxu0
    %2736 = vdwg.mxu0
    %v2737 = vpack.c.bf16 %v2734, %v2731
    %v2739 = vsel %vm2248, %v2222, 0
    %v2742 = vsel %vm2248, %v2225, 0
    %2744 = vmatprep.subr.bf16.mxu0 0
    %2745 = vmatpush1.bf16.xpose.msra.mxu0 %v2742
    %2746 = vmatprep.subr.bf16.mxu0 0
    %2747 = vmatpush1.bf16.xpose.msra.mxu0 0
    %2748 = vmatprep.subr.bf16.mxu0 0
    %2749 = vmatpush1.bf16.xpose.msra.mxu0 0
    %2750 = vmatprep.subr.bf16.mxu0 0
    %2751 = vmatpush1.bf16.xpose.msra.mxu0 0
    %2752 = vmatprep.subr.bf16.mxu0 0
    %2753 = vmatpush1.bf16.xpose.msra.mxu0 0
    %2754 = vmatprep.subr.bf16.mxu0 0
    %2755 = vmatpush1.bf16.xpose.msra.mxu0 0
    %2756 = vmatprep.subr.bf16.mxu0 0
    %2757 = vmatpush1.bf16.xpose.msra.mxu0 0
    %2758 = vmatprep.subr.bf16.mxu0 0
    %2759 = vmatpush1.bf16.xpose.msra.mxu0 0
    %2760 = vmatprep.subr.bf16.mxu0 0
    %2761 = vmatpush1.bf16.xpose.msra.mxu0 0
    %2762 = vmatprep.subr.bf16.mxu0 0
    %2763 = vmatpush1.bf16.xpose.msra.mxu0 0
    %2764 = vmatprep.subr.bf16.mxu0 0
    %2765 = vmatpush1.bf16.xpose.msra.mxu0 0
    %2766 = vmatprep.subr.bf16.mxu0 0
    %2767 = vmatpush1.bf16.xpose.msra.mxu0 0
    %2768 = vmatprep.subr.bf16.mxu0 0
    %2769 = vmatpush1.bf16.xpose.msra.mxu0 0
    %2770 = vmatprep.subr.bf16.mxu0 0
    %2771 = vmatpush1.bf16.xpose.msra.mxu0 0
    %2772 = vmatprep.subr.bf16.mxu0 0
    %2773 = vmatpush1.bf16.xpose.msra.mxu0 0
    %2774 = vmatprep.subr.bf16.mxu0 0
    %2775 = vmatpush1.bf16.xpose.msra.mxu0 0
    %2776 = vmatprep.mubr.bf16.mxu0 0
    %2777 = vmatmul.mubr.bf16.gmra.mrb[0].mxu0 %v2739
    %v2778 = vpop.f32.mrb[0].mxu0
    %v2779 = vadd.f32 0.0, %v2778
    %v2780 = vpop.f32.mrb[0].mxu0
    %v2781 = vpop.f32.mrb[0].mxu0
    %v2782 = vadd.f32 0.0, %v2781
    %v2783 = vpop.f32.mrb[0].mxu0
    %2784 = vdwg.mxu0
    %v2785 = vsel %vm2246, %v2779, -inf
    %v2786 = vsel %vm2247, %v2782, -inf
    %v2787 = vsel %vm2298, %v2785, -inf
    %2788 = vmax.xlane.f32.xlu0 %v2787
    %v2789 = vpop.xlane.xlu0 %2788
    %v2790 = vsel %vm2298, %v2786, -inf
    %2791 = vmax.xlane.f32.xlu0 %v2790
    %v2792 = vpop.xlane.xlu0 %2791
    %v2793 = vsub.f32 %v2785, %v2789
    %v2794 = vsub.f32 %v2786, %v2792
    %v2795 = vmul.f32 %v2793, 1.442695
    %v2796 = vpow.pop %v2795
    %v2797 = vmul.f32 %v2794, 1.442695
    %v2798 = vpow.pop %v2797
    %v2799 = vsel %vm2298, %v2796, 0.0
    %2800 = vadd.xlane.f32.xlu0 %v2799
    %v2801 = vpop.xlane.xlu0 %2800
    %v2802 = vsel %vm2298, %v2798, 0.0
    %2803 = vadd.xlane.f32.xlu0 %v2802
    %v2804 = vpop.xlane.xlu0 %2803
    %v2805 = vrcp.pop %v2801
    %v2806 = vrcp.pop %v2804
    %v2807 = vmul.f32 %v2796, %v2805
    %v2808 = vmul.f32 %v2798, %v2806
    %v2809 = vpack.c.bf16 %v2808, %v2807
    %v2811 = vsel %vm2298, %v2809, 0
    %2813 = vmatprep.subr.bf16.mxu0 0
    %2814 = vmatpush1.bf16.msra.mxu0 %v2228
    %2815 = vmatprep.subr.bf16.mxu0 0
    %2816 = vmatpush1.bf16.msra.mxu0 0
    %2817 = vmatprep.subr.bf16.mxu0 0
    %2818 = vmatpush1.bf16.msra.mxu0 0
    %2819 = vmatprep.subr.bf16.mxu0 0
    %2820 = vmatpush1.bf16.msra.mxu0 0
    %2821 = vmatprep.subr.bf16.mxu0 0
    %2822 = vmatpush1.bf16.msra.mxu0 0
    %2823 = vmatprep.subr.bf16.mxu0 0
    %2824 = vmatpush1.bf16.msra.mxu0 0
    %2825 = vmatprep.subr.bf16.mxu0 0
    %2826 = vmatpush1.bf16.msra.mxu0 0
    %2827 = vmatprep.subr.bf16.mxu0 0
    %2828 = vmatpush1.bf16.msra.mxu0 0
    %2829 = vmatprep.subr.bf16.mxu0 0
    %2830 = vmatpush1.bf16.msra.mxu0 0
    %2831 = vmatprep.subr.bf16.mxu0 0
    %2832 = vmatpush1.bf16.msra.mxu0 0
    %2833 = vmatprep.subr.bf16.mxu0 0
    %2834 = vmatpush1.bf16.msra.mxu0 0
    %2835 = vmatprep.subr.bf16.mxu0 0
    %2836 = vmatpush1.bf16.msra.mxu0 0
    %2837 = vmatprep.subr.bf16.mxu0 0
    %2838 = vmatpush1.bf16.msra.mxu0 0
    %2839 = vmatprep.subr.bf16.mxu0 0
    %2840 = vmatpush1.bf16.msra.mxu0 0
    %2841 = vmatprep.subr.bf16.mxu0 0
    %2842 = vmatpush1.bf16.msra.mxu0 0
    %2843 = vmatprep.subr.bf16.mxu0 0
    %2844 = vmatpush1.bf16.msra.mxu0 0
    %2845 = vmatprep.mubr.bf16.mxu0 0
    %2846 = vmatmul.mubr.bf16.gmra.mrb[0].mxu0 %v2811
    %v2847 = vpop.f32.mrb[0].mxu0
    %v2848 = vadd.f32 0.0, %v2847
    %v2849 = vpop.f32.mrb[0].mxu0
    %v2850 = vpop.f32.mrb[0].mxu0
    %v2851 = vadd.f32 0.0, %v2850
    %v2852 = vpop.f32.mrb[0].mxu0
    %2853 = vdwg.mxu0
    %v2854 = vpack.c.bf16 %v2851, %v2848
    %2856 = vrot.lane.b32.xlu0 %v2222, 64
    %v2857 = vpop.permute.xlu0 %2856
    %2859 = vrot.lane.b32.xlu0 %v2225, 64
    %v2860 = vpop.permute.xlu0 %2859
    %v2862 = vsel %vm2248, %v2857, 0
    %v2865 = vsel %vm2248, %v2860, 0
    %2867 = vmatprep.subr.bf16.mxu0 0
    %2868 = vmatpush1.bf16.xpose.msra.mxu0 %v2865
    %2869 = vmatprep.subr.bf16.mxu0 0
    %2870 = vmatpush1.bf16.xpose.msra.mxu0 0
    %2871 = vmatprep.subr.bf16.mxu0 0
    %2872 = vmatpush1.bf16.xpose.msra.mxu0 0
    %2873 = vmatprep.subr.bf16.mxu0 0
    %2874 = vmatpush1.bf16.xpose.msra.mxu0 0
    %2875 = vmatprep.subr.bf16.mxu0 0
    %2876 = vmatpush1.bf16.xpose.msra.mxu0 0
    %2877 = vmatprep.subr.bf16.mxu0 0
    %2878 = vmatpush1.bf16.xpose.msra.mxu0 0
    %2879 = vmatprep.subr.bf16.mxu0 0
    %2880 = vmatpush1.bf16.xpose.msra.mxu0 0
    %2881 = vmatprep.subr.bf16.mxu0 0
    %2882 = vmatpush1.bf16.xpose.msra.mxu0 0
    %2883 = vmatprep.subr.bf16.mxu0 0
    %2884 = vmatpush1.bf16.xpose.msra.mxu0 0
    %2885 = vmatprep.subr.bf16.mxu0 0
    %2886 = vmatpush1.bf16.xpose.msra.mxu0 0
    %2887 = vmatprep.subr.bf16.mxu0 0
    %2888 = vmatpush1.bf16.xpose.msra.mxu0 0
    %2889 = vmatprep.subr.bf16.mxu0 0
    %2890 = vmatpush1.bf16.xpose.msra.mxu0 0
    %2891 = vmatprep.subr.bf16.mxu0 0
    %2892 = vmatpush1.bf16.xpose.msra.mxu0 0
    %2893 = vmatprep.subr.bf16.mxu0 0
    %2894 = vmatpush1.bf16.xpose.msra.mxu0 0
    %2895 = vmatprep.subr.bf16.mxu0 0
    %2896 = vmatpush1.bf16.xpose.msra.mxu0 0
    %2897 = vmatprep.subr.bf16.mxu0 0
    %2898 = vmatpush1.bf16.xpose.msra.mxu0 0
    %2899 = vmatprep.mubr.bf16.mxu0 0
    %2900 = vmatmul.mubr.bf16.gmra.mrb[0].mxu0 %v2862
    %v2901 = vpop.f32.mrb[0].mxu0
    %v2902 = vadd.f32 0.0, %v2901
    %v2903 = vpop.f32.mrb[0].mxu0
    %v2904 = vpop.f32.mrb[0].mxu0
    %v2905 = vadd.f32 0.0, %v2904
    %v2906 = vpop.f32.mrb[0].mxu0
    %2907 = vdwg.mxu0
    %v2908 = vsel %vm2246, %v2902, -inf
    %v2909 = vsel %vm2247, %v2905, -inf
    %v2910 = vsel %vm2298, %v2908, -inf
    %2911 = vmax.xlane.f32.xlu0 %v2910
    %v2912 = vpop.xlane.xlu0 %2911
    %v2913 = vsel %vm2298, %v2909, -inf
    %2914 = vmax.xlane.f32.xlu0 %v2913
    %v2915 = vpop.xlane.xlu0 %2914
    %v2916 = vsub.f32 %v2908, %v2912
    %v2917 = vsub.f32 %v2909, %v2915
    %v2918 = vmul.f32 %v2916, 1.442695
    %v2919 = vpow.pop %v2918
    %v2920 = vmul.f32 %v2917, 1.442695
    %v2921 = vpow.pop %v2920
    %v2922 = vsel %vm2298, %v2919, 0.0
    %2923 = vadd.xlane.f32.xlu0 %v2922
    %v2924 = vpop.xlane.xlu0 %2923
    %v2925 = vsel %vm2298, %v2921, 0.0
    %2926 = vadd.xlane.f32.xlu0 %v2925
    %v2927 = vpop.xlane.xlu0 %2926
    %v2928 = vrcp.pop %v2924
    %v2929 = vrcp.pop %v2927
    %v2930 = vmul.f32 %v2919, %v2928
    %v2931 = vmul.f32 %v2921, %v2929
    %v2932 = vpack.c.bf16 %v2931, %v2930
    %2934 = vrot.lane.b32.xlu0 %v2228, 64
    %v2935 = vpop.permute.xlu0 %2934
    %v2938 = vsel %vm2298, %v2932, 0
    %2940 = vmatprep.subr.bf16.mxu0 0
    %2941 = vmatpush1.bf16.msra.mxu0 %v2935
    %2942 = vmatprep.subr.bf16.mxu0 0
    %2943 = vmatpush1.bf16.msra.mxu0 0
    %2944 = vmatprep.subr.bf16.mxu0 0
    %2945 = vmatpush1.bf16.msra.mxu0 0
    %2946 = vmatprep.subr.bf16.mxu0 0
    %2947 = vmatpush1.bf16.msra.mxu0 0
    %2948 = vmatprep.subr.bf16.mxu0 0
    %2949 = vmatpush1.bf16.msra.mxu0 0
    %2950 = vmatprep.subr.bf16.mxu0 0
    %2951 = vmatpush1.bf16.msra.mxu0 0
    %2952 = vmatprep.subr.bf16.mxu0 0
    %2953 = vmatpush1.bf16.msra.mxu0 0
    %2954 = vmatprep.subr.bf16.mxu0 0
    %2955 = vmatpush1.bf16.msra.mxu0 0
    %2956 = vmatprep.subr.bf16.mxu0 0
    %2957 = vmatpush1.bf16.msra.mxu0 0
    %2958 = vmatprep.subr.bf16.mxu0 0
    %2959 = vmatpush1.bf16.msra.mxu0 0
    %2960 = vmatprep.subr.bf16.mxu0 0
    %2961 = vmatpush1.bf16.msra.mxu0 0
    %2962 = vmatprep.subr.bf16.mxu0 0
    %2963 = vmatpush1.bf16.msra.mxu0 0
    %2964 = vmatprep.subr.bf16.mxu0 0
    %2965 = vmatpush1.bf16.msra.mxu0 0
    %2966 = vmatprep.subr.bf16.mxu0 0
    %2967 = vmatpush1.bf16.msra.mxu0 0
    %2968 = vmatprep.subr.bf16.mxu0 0
    %2969 = vmatpush1.bf16.msra.mxu0 0
    %2970 = vmatprep.subr.bf16.mxu0 0
    %2971 = vmatpush1.bf16.msra.mxu0 0
    %2972 = vmatprep.mubr.bf16.mxu0 0
    %2973 = vmatmul.mubr.bf16.gmra.mrb[0].mxu0 %v2938
    %v2974 = vpop.f32.mrb[0].mxu0
    %v2975 = vadd.f32 0.0, %v2974
    %v2976 = vpop.f32.mrb[0].mxu0
    %v2977 = vpop.f32.mrb[0].mxu0
    %v2978 = vadd.f32 0.0, %v2977
    %v2979 = vpop.f32.mrb[0].mxu0
    %2980 = vdwg.mxu0
    %v2981 = vpack.c.bf16 %v2978, %v2975
    %2983 = vrot.lane.b32.xlu0 %v2493, 64
    %v2984 = vpop.permute.xlu0 %2983
    %2986 = vrot.lane.b32.xlu0 %v2737, 64
    %v2987 = vpop.permute.xlu0 %2986
    %2989 = vrot.lane.b32.xlu0 %v2981, 64
    %v2990 = vpop.permute.xlu0 %2989
    %v2993 = vsel %vm2248, %v2366, %v2984
    %v2997 = vsel %vm2248, %v2610, %v2987
    %v3001 = vsel %vm2248, %v2854, %v2990
    %v3004 = vsel %vm2248, %v2229, 0
    %v3007 = vsel %vm2248, %v2232, 0
    %3009 = vmatprep.subr.bf16.mxu0 0
    %3010 = vmatpush1.bf16.xpose.msra.mxu0 %v3007
    %3011 = vmatprep.subr.bf16.mxu0 0
    %3012 = vmatpush1.bf16.xpose.msra.mxu0 0
    %3013 = vmatprep.subr.bf16.mxu0 0
    %3014 = vmatpush1.bf16.xpose.msra.mxu0 0
    %3015 = vmatprep.subr.bf16.mxu0 0
    %3016 = vmatpush1.bf16.xpose.msra.mxu0 0
    %3017 = vmatprep.subr.bf16.mxu0 0
    %3018 = vmatpush1.bf16.xpose.msra.mxu0 0
    %3019 = vmatprep.subr.bf16.mxu0 0
    %3020 = vmatpush1.bf16.xpose.msra.mxu0 0
    %3021 = vmatprep.subr.bf16.mxu0 0
    %3022 = vmatpush1.bf16.xpose.msra.mxu0 0
    %3023 = vmatprep.subr.bf16.mxu0 0
    %3024 = vmatpush1.bf16.xpose.msra.mxu0 0
    %3025 = vmatprep.subr.bf16.mxu0 0
    %3026 = vmatpush1.bf16.xpose.msra.mxu0 0
    %3027 = vmatprep.subr.bf16.mxu0 0
    %3028 = vmatpush1.bf16.xpose.msra.mxu0 0
    %3029 = vmatprep.subr.bf16.mxu0 0
    %3030 = vmatpush1.bf16.xpose.msra.mxu0 0
    %3031 = vmatprep.subr.bf16.mxu0 0
    %3032 = vmatpush1.bf16.xpose.msra.mxu0 0
    %3033 = vmatprep.subr.bf16.mxu0 0
    %3034 = vmatpush1.bf16.xpose.msra.mxu0 0
    %3035 = vmatprep.subr.bf16.mxu0 0
    %3036 = vmatpush1.bf16.xpose.msra.mxu0 0
    %3037 = vmatprep.subr.bf16.mxu0 0
    %3038 = vmatpush1.bf16.xpose.msra.mxu0 0
    %3039 = vmatprep.subr.bf16.mxu0 0
    %3040 = vmatpush1.bf16.xpose.msra.mxu0 0
    %3041 = vmatprep.mubr.bf16.mxu0 0
    %3042 = vmatmul.mubr.bf16.gmra.mrb[0].mxu0 %v3004
    %v3043 = vpop.f32.mrb[0].mxu0
    %v3044 = vadd.f32 0.0, %v3043
    %v3045 = vpop.f32.mrb[0].mxu0
    %v3046 = vpop.f32.mrb[0].mxu0
    %v3047 = vadd.f32 0.0, %v3046
    %v3048 = vpop.f32.mrb[0].mxu0
    %3049 = vdwg.mxu0
    %v3050 = vsel %vm2246, %v3044, -inf
    %v3051 = vsel %vm2247, %v3047, -inf
    %v3052 = vsel %vm2298, %v3050, -inf
    %3053 = vmax.xlane.f32.xlu0 %v3052
    %v3054 = vpop.xlane.xlu0 %3053
    %v3055 = vsel %vm2298, %v3051, -inf
    %3056 = vmax.xlane.f32.xlu0 %v3055
    %v3057 = vpop.xlane.xlu0 %3056
    %v3058 = vsub.f32 %v3050, %v3054
    %v3059 = vsub.f32 %v3051, %v3057
    %v3060 = vmul.f32 %v3058, 1.442695
    %v3061 = vpow.pop %v3060
    %v3062 = vmul.f32 %v3059, 1.442695
    %v3063 = vpow.pop %v3062
    %v3064 = vsel %vm2298, %v3061, 0.0
    %3065 = vadd.xlane.f32.xlu0 %v3064
    %v3066 = vpop.xlane.xlu0 %3065
    %v3067 = vsel %vm2298, %v3063, 0.0
    %3068 = vadd.xlane.f32.xlu0 %v3067
    %v3069 = vpop.xlane.xlu0 %3068
    %v3070 = vrcp.pop %v3066
    %v3071 = vrcp.pop %v3069
    %v3072 = vmul.f32 %v3061, %v3070
    %v3073 = vmul.f32 %v3063, %v3071
    %v3074 = vpack.c.bf16 %v3073, %v3072
    %v3076 = vsel %vm2298, %v3074, 0
    %3078 = vmatprep.subr.bf16.mxu0 0
    %3079 = vmatpush1.bf16.msra.mxu0 %v2235
    %3080 = vmatprep.subr.bf16.mxu0 0
    %3081 = vmatpush1.bf16.msra.mxu0 0
    %3082 = vmatprep.subr.bf16.mxu0 0
    %3083 = vmatpush1.bf16.msra.mxu0 0
    %3084 = vmatprep.subr.bf16.mxu0 0
    %3085 = vmatpush1.bf16.msra.mxu0 0
    %3086 = vmatprep.subr.bf16.mxu0 0
    %3087 = vmatpush1.bf16.msra.mxu0 0
    %3088 = vmatprep.subr.bf16.mxu0 0
    %3089 = vmatpush1.bf16.msra.mxu0 0
    %3090 = vmatprep.subr.bf16.mxu0 0
    %3091 = vmatpush1.bf16.msra.mxu0 0
    %3092 = vmatprep.subr.bf16.mxu0 0
    %3093 = vmatpush1.bf16.msra.mxu0 0
    %3094 = vmatprep.subr.bf16.mxu0 0
    %3095 = vmatpush1.bf16.msra.mxu0 0
    %3096 = vmatprep.subr.bf16.mxu0 0
    %3097 = vmatpush1.bf16.msra.mxu0 0
    %3098 = vmatprep.subr.bf16.mxu0 0
    %3099 = vmatpush1.bf16.msra.mxu0 0
    %3100 = vmatprep.subr.bf16.mxu0 0
    %3101 = vmatpush1.bf16.msra.mxu0 0
    %3102 = vmatprep.subr.bf16.mxu0 0
    %3103 = vmatpush1.bf16.msra.mxu0 0
    %3104 = vmatprep.subr.bf16.mxu0 0
    %3105 = vmatpush1.bf16.msra.mxu0 0
    %3106 = vmatprep.subr.bf16.mxu0 0
    %3107 = vmatpush1.bf16.msra.mxu0 0
    %3108 = vmatprep.subr.bf16.mxu0 0
    %3109 = vmatpush1.bf16.msra.mxu0 0
    %3110 = vmatprep.mubr.bf16.mxu0 0
    %3111 = vmatmul.mubr.bf16.gmra.mrb[0].mxu0 %v3076
    %v3112 = vpop.f32.mrb[0].mxu0
    %v3113 = vadd.f32 0.0, %v3112
    %v3114 = vpop.f32.mrb[0].mxu0
    %v3115 = vpop.f32.mrb[0].mxu0
    %v3116 = vadd.f32 0.0, %v3115
    %v3117 = vpop.f32.mrb[0].mxu0
    %3118 = vdwg.mxu0
    %v3119 = vpack.c.bf16 %v3116, %v3113
    %3121 = vrot.lane.b32.xlu0 %v2229, 64
    %v3122 = vpop.permute.xlu0 %3121
    %3124 = vrot.lane.b32.xlu0 %v2232, 64
    %v3125 = vpop.permute.xlu0 %3124
    %v3127 = vsel %vm2248, %v3122, 0
    %v3130 = vsel %vm2248, %v3125, 0
    %3132 = vmatprep.subr.bf16.mxu0 0
    %3133 = vmatpush1.bf16.xpose.msra.mxu0 %v3130
    %3134 = vmatprep.subr.bf16.mxu0 0
    %3135 = vmatpush1.bf16.xpose.msra.mxu0 0
    %3136 = vmatprep.subr.bf16.mxu0 0
    %3137 = vmatpush1.bf16.xpose.msra.mxu0 0
    %3138 = vmatprep.subr.bf16.mxu0 0
    %3139 = vmatpush1.bf16.xpose.msra.mxu0 0
    %3140 = vmatprep.subr.bf16.mxu0 0
    %3141 = vmatpush1.bf16.xpose.msra.mxu0 0
    %3142 = vmatprep.subr.bf16.mxu0 0
    %3143 = vmatpush1.bf16.xpose.msra.mxu0 0
    %3144 = vmatprep.subr.bf16.mxu0 0
    %3145 = vmatpush1.bf16.xpose.msra.mxu0 0
    %3146 = vmatprep.subr.bf16.mxu0 0
    %3147 = vmatpush1.bf16.xpose.msra.mxu0 0
    %3148 = vmatprep.subr.bf16.mxu0 0
    %3149 = vmatpush1.bf16.xpose.msra.mxu0 0
    %3150 = vmatprep.subr.bf16.mxu0 0
    %3151 = vmatpush1.bf16.xpose.msra.mxu0 0
    %3152 = vmatprep.subr.bf16.mxu0 0
    %3153 = vmatpush1.bf16.xpose.msra.mxu0 0
    %3154 = vmatprep.subr.bf16.mxu0 0
    %3155 = vmatpush1.bf16.xpose.msra.mxu0 0
    %3156 = vmatprep.subr.bf16.mxu0 0
    %3157 = vmatpush1.bf16.xpose.msra.mxu0 0
    %3158 = vmatprep.subr.bf16.mxu0 0
    %3159 = vmatpush1.bf16.xpose.msra.mxu0 0
    %3160 = vmatprep.subr.bf16.mxu0 0
    %3161 = vmatpush1.bf16.xpose.msra.mxu0 0
    %3162 = vmatprep.subr.bf16.mxu0 0
    %3163 = vmatpush1.bf16.xpose.msra.mxu0 0
    %3164 = vmatprep.mubr.bf16.mxu0 0
    %3165 = vmatmul.mubr.bf16.gmra.mrb[0].mxu0 %v3127
    %v3166 = vpop.f32.mrb[0].mxu0
    %v3167 = vadd.f32 0.0, %v3166
    %v3168 = vpop.f32.mrb[0].mxu0
    %v3169 = vpop.f32.mrb[0].mxu0
    %v3170 = vadd.f32 0.0, %v3169
    %v3171 = vpop.f32.mrb[0].mxu0
    %3172 = vdwg.mxu0
    %v3173 = vsel %vm2246, %v3167, -inf
    %v3174 = vsel %vm2247, %v3170, -inf
    %v3175 = vsel %vm2298, %v3173, -inf
    %3176 = vmax.xlane.f32.xlu0 %v3175
    %v3177 = vpop.xlane.xlu0 %3176
    %v3178 = vsel %vm2298, %v3174, -inf
    %3179 = vmax.xlane.f32.xlu0 %v3178
    %v3180 = vpop.xlane.xlu0 %3179
    %v3181 = vsub.f32 %v3173, %v3177
    %v3182 = vsub.f32 %v3174, %v3180
    %v3183 = vmul.f32 %v3181, 1.442695
    %v3184 = vpow.pop %v3183
    %v3185 = vmul.f32 %v3182, 1.442695
    %v3186 = vpow.pop %v3185
    %v3187 = vsel %vm2298, %v3184, 0.0
    %3188 = vadd.xlane.f32.xlu0 %v3187
    %v3189 = vpop.xlane.xlu0 %3188
    %v3190 = vsel %vm2298, %v3186, 0.0
    %3191 = vadd.xlane.f32.xlu0 %v3190
    %v3192 = vpop.xlane.xlu0 %3191
    %v3193 = vrcp.pop %v3189
    %v3194 = vrcp.pop %v3192
    %v3195 = vmul.f32 %v3184, %v3193
    %v3196 = vmul.f32 %v3186, %v3194
    %v3197 = vpack.c.bf16 %v3196, %v3195
    %3199 = vrot.lane.b32.xlu0 %v2235, 64
    %v3200 = vpop.permute.xlu0 %3199
    %v3203 = vsel %vm2298, %v3197, 0
    %3205 = vmatprep.subr.bf16.mxu0 0
    %3206 = vmatpush1.bf16.msra.mxu0 %v3200
    %3207 = vmatprep.subr.bf16.mxu0 0
    %3208 = vmatpush1.bf16.msra.mxu0 0
    %3209 = vmatprep.subr.bf16.mxu0 0
    %3210 = vmatpush1.bf16.msra.mxu0 0
    %3211 = vmatprep.subr.bf16.mxu0 0
    %3212 = vmatpush1.bf16.msra.mxu0 0
    %3213 = vmatprep.subr.bf16.mxu0 0
    %3214 = vmatpush1.bf16.msra.mxu0 0
    %3215 = vmatprep.subr.bf16.mxu0 0
    %3216 = vmatpush1.bf16.msra.mxu0 0
    %3217 = vmatprep.subr.bf16.mxu0 0
    %3218 = vmatpush1.bf16.msra.mxu0 0
    %3219 = vmatprep.subr.bf16.mxu0 0
    %3220 = vmatpush1.bf16.msra.mxu0 0
    %3221 = vmatprep.subr.bf16.mxu0 0
    %3222 = vmatpush1.bf16.msra.mxu0 0
    %3223 = vmatprep.subr.bf16.mxu0 0
    %3224 = vmatpush1.bf16.msra.mxu0 0
    %3225 = vmatprep.subr.bf16.mxu0 0
    %3226 = vmatpush1.bf16.msra.mxu0 0
    %3227 = vmatprep.subr.bf16.mxu0 0
    %3228 = vmatpush1.bf16.msra.mxu0 0
    %3229 = vmatprep.subr.bf16.mxu0 0
    %3230 = vmatpush1.bf16.msra.mxu0 0
    %3231 = vmatprep.subr.bf16.mxu0 0
    %3232 = vmatpush1.bf16.msra.mxu0 0
    %3233 = vmatprep.subr.bf16.mxu0 0
    %3234 = vmatpush1.bf16.msra.mxu0 0
    %3235 = vmatprep.subr.bf16.mxu0 0
    %3236 = vmatpush1.bf16.msra.mxu0 0
    %3237 = vmatprep.mubr.bf16.mxu0 0
    %3238 = vmatmul.mubr.bf16.gmra.mrb[0].mxu0 %v3203
    %v3239 = vpop.f32.mrb[0].mxu0
    %v3240 = vadd.f32 0.0, %v3239
    %v3241 = vpop.f32.mrb[0].mxu0
    %v3242 = vpop.f32.mrb[0].mxu0
    %v3243 = vadd.f32 0.0, %v3242
    %v3244 = vpop.f32.mrb[0].mxu0
    %3245 = vdwg.mxu0
    %v3246 = vpack.c.bf16 %v3243, %v3240
    %v3248 = vsel %vm2248, %v2230, 0
    %v3251 = vsel %vm2248, %v2233, 0
    %3253 = vmatprep.subr.bf16.mxu0 0
    %3254 = vmatpush1.bf16.xpose.msra.mxu0 %v3251
    %3255 = vmatprep.subr.bf16.mxu0 0
    %3256 = vmatpush1.bf16.xpose.msra.mxu0 0
    %3257 = vmatprep.subr.bf16.mxu0 0
    %3258 = vmatpush1.bf16.xpose.msra.mxu0 0
    %3259 = vmatprep.subr.bf16.mxu0 0
    %3260 = vmatpush1.bf16.xpose.msra.mxu0 0
    %3261 = vmatprep.subr.bf16.mxu0 0
    %3262 = vmatpush1.bf16.xpose.msra.mxu0 0
    %3263 = vmatprep.subr.bf16.mxu0 0
    %3264 = vmatpush1.bf16.xpose.msra.mxu0 0
    %3265 = vmatprep.subr.bf16.mxu0 0
    %3266 = vmatpush1.bf16.xpose.msra.mxu0 0
    %3267 = vmatprep.subr.bf16.mxu0 0
    %3268 = vmatpush1.bf16.xpose.msra.mxu0 0
    %3269 = vmatprep.subr.bf16.mxu0 0
    %3270 = vmatpush1.bf16.xpose.msra.mxu0 0
    %3271 = vmatprep.subr.bf16.mxu0 0
    %3272 = vmatpush1.bf16.xpose.msra.mxu0 0
    %3273 = vmatprep.subr.bf16.mxu0 0
    %3274 = vmatpush1.bf16.xpose.msra.mxu0 0
    %3275 = vmatprep.subr.bf16.mxu0 0
    %3276 = vmatpush1.bf16.xpose.msra.mxu0 0
    %3277 = vmatprep.subr.bf16.mxu0 0
    %3278 = vmatpush1.bf16.xpose.msra.mxu0 0
    %3279 = vmatprep.subr.bf16.mxu0 0
    %3280 = vmatpush1.bf16.xpose.msra.mxu0 0
    %3281 = vmatprep.subr.bf16.mxu0 0
    %3282 = vmatpush1.bf16.xpose.msra.mxu0 0
    %3283 = vmatprep.subr.bf16.mxu0 0
    %3284 = vmatpush1.bf16.xpose.msra.mxu0 0
    %3285 = vmatprep.mubr.bf16.mxu0 0
    %3286 = vmatmul.mubr.bf16.gmra.mrb[0].mxu0 %v3248
    %v3287 = vpop.f32.mrb[0].mxu0
    %v3288 = vadd.f32 0.0, %v3287
    %v3289 = vpop.f32.mrb[0].mxu0
    %v3290 = vpop.f32.mrb[0].mxu0
    %v3291 = vadd.f32 0.0, %v3290
    %v3292 = vpop.f32.mrb[0].mxu0
    %3293 = vdwg.mxu0
    %v3294 = vsel %vm2246, %v3288, -inf
    %v3295 = vsel %vm2247, %v3291, -inf
    %v3296 = vsel %vm2298, %v3294, -inf
    %3297 = vmax.xlane.f32.xlu0 %v3296
    %v3298 = vpop.xlane.xlu0 %3297
    %v3299 = vsel %vm2298, %v3295, -inf
    %3300 = vmax.xlane.f32.xlu0 %v3299
    %v3301 = vpop.xlane.xlu0 %3300
    %v3302 = vsub.f32 %v3294, %v3298
    %v3303 = vsub.f32 %v3295, %v3301
    %v3304 = vmul.f32 %v3302, 1.442695
    %v3305 = vpow.pop %v3304
    %v3306 = vmul.f32 %v3303, 1.442695
    %v3307 = vpow.pop %v3306
    %v3308 = vsel %vm2298, %v3305, 0.0
    %3309 = vadd.xlane.f32.xlu0 %v3308
    %v3310 = vpop.xlane.xlu0 %3309
    %v3311 = vsel %vm2298, %v3307, 0.0
    %3312 = vadd.xlane.f32.xlu0 %v3311
    %v3313 = vpop.xlane.xlu0 %3312
    %v3314 = vrcp.pop %v3310
    %v3315 = vrcp.pop %v3313
    %v3316 = vmul.f32 %v3305, %v3314
    %v3317 = vmul.f32 %v3307, %v3315
    %v3318 = vpack.c.bf16 %v3317, %v3316
    %v3320 = vsel %vm2298, %v3318, 0
    %3322 = vmatprep.subr.bf16.mxu0 0
    %3323 = vmatpush1.bf16.msra.mxu0 %v2236
    %3324 = vmatprep.subr.bf16.mxu0 0
    %3325 = vmatpush1.bf16.msra.mxu0 0
    %3326 = vmatprep.subr.bf16.mxu0 0
    %3327 = vmatpush1.bf16.msra.mxu0 0
    %3328 = vmatprep.subr.bf16.mxu0 0
    %3329 = vmatpush1.bf16.msra.mxu0 0
    %3330 = vmatprep.subr.bf16.mxu0 0
    %3331 = vmatpush1.bf16.msra.mxu0 0
    %3332 = vmatprep.subr.bf16.mxu0 0
    %3333 = vmatpush1.bf16.msra.mxu0 0
    %3334 = vmatprep.subr.bf16.mxu0 0
    %3335 = vmatpush1.bf16.msra.mxu0 0
    %3336 = vmatprep.subr.bf16.mxu0 0
    %3337 = vmatpush1.bf16.msra.mxu0 0
    %3338 = vmatprep.subr.bf16.mxu0 0
    %3339 = vmatpush1.bf16.msra.mxu0 0
    %3340 = vmatprep.subr.bf16.mxu0 0
    %3341 = vmatpush1.bf16.msra.mxu0 0
    %3342 = vmatprep.subr.bf16.mxu0 0
    %3343 = vmatpush1.bf16.msra.mxu0 0
    %3344 = vmatprep.subr.bf16.mxu0 0
    %3345 = vmatpush1.bf16.msra.mxu0 0
    %3346 = vmatprep.subr.bf16.mxu0 0
    %3347 = vmatpush1.bf16.msra.mxu0 0
    %3348 = vmatprep.subr.bf16.mxu0 0
    %3349 = vmatpush1.bf16.msra.mxu0 0
    %3350 = vmatprep.subr.bf16.mxu0 0
    %3351 = vmatpush1.bf16.msra.mxu0 0
    %3352 = vmatprep.subr.bf16.mxu0 0
    %3353 = vmatpush1.bf16.msra.mxu0 0
    %3354 = vmatprep.mubr.bf16.mxu0 0
    %3355 = vmatmul.mubr.bf16.gmra.mrb[0].mxu0 %v3320
    %v3356 = vpop.f32.mrb[0].mxu0
    %v3357 = vadd.f32 0.0, %v3356
    %v3358 = vpop.f32.mrb[0].mxu0
    %v3359 = vpop.f32.mrb[0].mxu0
    %v3360 = vadd.f32 0.0, %v3359
    %v3361 = vpop.f32.mrb[0].mxu0
    %3362 = vdwg.mxu0
    %v3363 = vpack.c.bf16 %v3360, %v3357
    %3365 = vrot.lane.b32.xlu0 %v2230, 64
    %v3366 = vpop.permute.xlu0 %3365
    %3368 = vrot.lane.b32.xlu0 %v2233, 64
    %v3369 = vpop.permute.xlu0 %3368
    %v3371 = vsel %vm2248, %v3366, 0
    %v3374 = vsel %vm2248, %v3369, 0
    %3376 = vmatprep.subr.bf16.mxu0 0
    %3377 = vmatpush1.bf16.xpose.msra.mxu0 %v3374
    %3378 = vmatprep.subr.bf16.mxu0 0
    %3379 = vmatpush1.bf16.xpose.msra.mxu0 0
    %3380 = vmatprep.subr.bf16.mxu0 0
    %3381 = vmatpush1.bf16.xpose.msra.mxu0 0
    %3382 = vmatprep.subr.bf16.mxu0 0
    %3383 = vmatpush1.bf16.xpose.msra.mxu0 0
    %3384 = vmatprep.subr.bf16.mxu0 0
    %3385 = vmatpush1.bf16.xpose.msra.mxu0 0
    %3386 = vmatprep.subr.bf16.mxu0 0
    %3387 = vmatpush1.bf16.xpose.msra.mxu0 0
    %3388 = vmatprep.subr.bf16.mxu0 0
    %3389 = vmatpush1.bf16.xpose.msra.mxu0 0
    %3390 = vmatprep.subr.bf16.mxu0 0
    %3391 = vmatpush1.bf16.xpose.msra.mxu0 0
    %3392 = vmatprep.subr.bf16.mxu0 0
    %3393 = vmatpush1.bf16.xpose.msra.mxu0 0
    %3394 = vmatprep.subr.bf16.mxu0 0
    %3395 = vmatpush1.bf16.xpose.msra.mxu0 0
    %3396 = vmatprep.subr.bf16.mxu0 0
    %3397 = vmatpush1.bf16.xpose.msra.mxu0 0
    %3398 = vmatprep.subr.bf16.mxu0 0
    %3399 = vmatpush1.bf16.xpose.msra.mxu0 0
    %3400 = vmatprep.subr.bf16.mxu0 0
    %3401 = vmatpush1.bf16.xpose.msra.mxu0 0
    %3402 = vmatprep.subr.bf16.mxu0 0
    %3403 = vmatpush1.bf16.xpose.msra.mxu0 0
    %3404 = vmatprep.subr.bf16.mxu0 0
    %3405 = vmatpush1.bf16.xpose.msra.mxu0 0
    %3406 = vmatprep.subr.bf16.mxu0 0
    %3407 = vmatpush1.bf16.xpose.msra.mxu0 0
    %3408 = vmatprep.mubr.bf16.mxu0 0
    %3409 = vmatmul.mubr.bf16.gmra.mrb[0].mxu0 %v3371
    %v3410 = vpop.f32.mrb[0].mxu0
    %v3411 = vadd.f32 0.0, %v3410
    %v3412 = vpop.f32.mrb[0].mxu0
    %v3413 = vpop.f32.mrb[0].mxu0
    %v3414 = vadd.f32 0.0, %v3413
    %v3415 = vpop.f32.mrb[0].mxu0
    %3416 = vdwg.mxu0
    %v3417 = vsel %vm2246, %v3411, -inf
    %v3418 = vsel %vm2247, %v3414, -inf
    %v3419 = vsel %vm2298, %v3417, -inf
    %3420 = vmax.xlane.f32.xlu0 %v3419
    %v3421 = vpop.xlane.xlu0 %3420
    %v3422 = vsel %vm2298, %v3418, -inf
    %3423 = vmax.xlane.f32.xlu0 %v3422
    %v3424 = vpop.xlane.xlu0 %3423
    %v3425 = vsub.f32 %v3417, %v3421
    %v3426 = vsub.f32 %v3418, %v3424
    %v3427 = vmul.f32 %v3425, 1.442695
    %v3428 = vpow.pop %v3427
    %v3429 = vmul.f32 %v3426, 1.442695
    %v3430 = vpow.pop %v3429
    %v3431 = vsel %vm2298, %v3428, 0.0
    %3432 = vadd.xlane.f32.xlu0 %v3431
    %v3433 = vpop.xlane.xlu0 %3432
    %v3434 = vsel %vm2298, %v3430, 0.0
    %3435 = vadd.xlane.f32.xlu0 %v3434
    %v3436 = vpop.xlane.xlu0 %3435
    %v3437 = vrcp.pop %v3433
    %v3438 = vrcp.pop %v3436
    %v3439 = vmul.f32 %v3428, %v3437
    %v3440 = vmul.f32 %v3430, %v3438
    %v3441 = vpack.c.bf16 %v3440, %v3439
    %3443 = vrot.lane.b32.xlu0 %v2236, 64
    %v3444 = vpop.permute.xlu0 %3443
    %v3447 = vsel %vm2298, %v3441, 0
    %3449 = vmatprep.subr.bf16.mxu0 0
    %3450 = vmatpush1.bf16.msra.mxu0 %v3444
    %3451 = vmatprep.subr.bf16.mxu0 0
    %3452 = vmatpush1.bf16.msra.mxu0 0
    %3453 = vmatprep.subr.bf16.mxu0 0
    %3454 = vmatpush1.bf16.msra.mxu0 0
    %3455 = vmatprep.subr.bf16.mxu0 0
    %3456 = vmatpush1.bf16.msra.mxu0 0
    %3457 = vmatprep.subr.bf16.mxu0 0
    %3458 = vmatpush1.bf16.msra.mxu0 0
    %3459 = vmatprep.subr.bf16.mxu0 0
    %3460 = vmatpush1.bf16.msra.mxu0 0
    %3461 = vmatprep.subr.bf16.mxu0 0
    %3462 = vmatpush1.bf16.msra.mxu0 0
    %3463 = vmatprep.subr.bf16.mxu0 0
    %3464 = vmatpush1.bf16.msra.mxu0 0
    %3465 = vmatprep.subr.bf16.mxu0 0
    %3466 = vmatpush1.bf16.msra.mxu0 0
    %3467 = vmatprep.subr.bf16.mxu0 0
    %3468 = vmatpush1.bf16.msra.mxu0 0
    %3469 = vmatprep.subr.bf16.mxu0 0
    %3470 = vmatpush1.bf16.msra.mxu0 0
    %3471 = vmatprep.subr.bf16.mxu0 0
    %3472 = vmatpush1.bf16.msra.mxu0 0
    %3473 = vmatprep.subr.bf16.mxu0 0
    %3474 = vmatpush1.bf16.msra.mxu0 0
    %3475 = vmatprep.subr.bf16.mxu0 0
    %3476 = vmatpush1.bf16.msra.mxu0 0
    %3477 = vmatprep.subr.bf16.mxu0 0
    %3478 = vmatpush1.bf16.msra.mxu0 0
    %3479 = vmatprep.subr.bf16.mxu0 0
    %3480 = vmatpush1.bf16.msra.mxu0 0
    %3481 = vmatprep.mubr.bf16.mxu0 0
    %3482 = vmatmul.mubr.bf16.gmra.mrb[0].mxu0 %v3447
    %v3483 = vpop.f32.mrb[0].mxu0
    %v3484 = vadd.f32 0.0, %v3483
    %v3485 = vpop.f32.mrb[0].mxu0
    %v3486 = vpop.f32.mrb[0].mxu0
    %v3487 = vadd.f32 0.0, %v3486
    %v3488 = vpop.f32.mrb[0].mxu0
    %3489 = vdwg.mxu0
    %v3490 = vpack.c.bf16 %v3487, %v3484
    %v3492 = vsel %vm2248, %v2231, 0
    %v3495 = vsel %vm2248, %v2234, 0
    %3497 = vmatprep.subr.bf16.mxu0 0
    %3498 = vmatpush1.bf16.xpose.msra.mxu0 %v3495
    %3499 = vmatprep.subr.bf16.mxu0 0
    %3500 = vmatpush1.bf16.xpose.msra.mxu0 0
    %3501 = vmatprep.subr.bf16.mxu0 0
    %3502 = vmatpush1.bf16.xpose.msra.mxu0 0
    %3503 = vmatprep.subr.bf16.mxu0 0
    %3504 = vmatpush1.bf16.xpose.msra.mxu0 0
    %3505 = vmatprep.subr.bf16.mxu0 0
    %3506 = vmatpush1.bf16.xpose.msra.mxu0 0
    %3507 = vmatprep.subr.bf16.mxu0 0
    %3508 = vmatpush1.bf16.xpose.msra.mxu0 0
    %3509 = vmatprep.subr.bf16.mxu0 0
    %3510 = vmatpush1.bf16.xpose.msra.mxu0 0
    %3511 = vmatprep.subr.bf16.mxu0 0
    %3512 = vmatpush1.bf16.xpose.msra.mxu0 0
    %3513 = vmatprep.subr.bf16.mxu0 0
    %3514 = vmatpush1.bf16.xpose.msra.mxu0 0
    %3515 = vmatprep.subr.bf16.mxu0 0
    %3516 = vmatpush1.bf16.xpose.msra.mxu0 0
    %3517 = vmatprep.subr.bf16.mxu0 0
    %3518 = vmatpush1.bf16.xpose.msra.mxu0 0
    %3519 = vmatprep.subr.bf16.mxu0 0
    %3520 = vmatpush1.bf16.xpose.msra.mxu0 0
    %3521 = vmatprep.subr.bf16.mxu0 0
    %3522 = vmatpush1.bf16.xpose.msra.mxu0 0
    %3523 = vmatprep.subr.bf16.mxu0 0
    %3524 = vmatpush1.bf16.xpose.msra.mxu0 0
    %3525 = vmatprep.subr.bf16.mxu0 0
    %3526 = vmatpush1.bf16.xpose.msra.mxu0 0
    %3527 = vmatprep.subr.bf16.mxu0 0
    %3528 = vmatpush1.bf16.xpose.msra.mxu0 0
    %3529 = vmatprep.mubr.bf16.mxu0 0
    %3530 = vmatmul.mubr.bf16.gmra.mrb[0].mxu0 %v3492
    %v3531 = vpop.f32.mrb[0].mxu0
    %v3532 = vadd.f32 0.0, %v3531
    %v3533 = vpop.f32.mrb[0].mxu0
    %v3534 = vpop.f32.mrb[0].mxu0
    %v3535 = vadd.f32 0.0, %v3534
    %v3536 = vpop.f32.mrb[0].mxu0
    %3537 = vdwg.mxu0
    %v3538 = vsel %vm2246, %v3532, -inf
    %v3539 = vsel %vm2247, %v3535, -inf
    %v3540 = vsel %vm2298, %v3538, -inf
    %3541 = vmax.xlane.f32.xlu0 %v3540
    %v3542 = vpop.xlane.xlu0 %3541
    %v3543 = vsel %vm2298, %v3539, -inf
    %3544 = vmax.xlane.f32.xlu0 %v3543
    %v3545 = vpop.xlane.xlu0 %3544
    %v3546 = vsub.f32 %v3538, %v3542
    %v3547 = vsub.f32 %v3539, %v3545
    %v3548 = vmul.f32 %v3546, 1.442695
    %v3549 = vpow.pop %v3548
    %v3550 = vmul.f32 %v3547, 1.442695
    %v3551 = vpow.pop %v3550
    %v3552 = vsel %vm2298, %v3549, 0.0
    %3553 = vadd.xlane.f32.xlu0 %v3552
    %v3554 = vpop.xlane.xlu0 %3553
    %v3555 = vsel %vm2298, %v3551, 0.0
    %3556 = vadd.xlane.f32.xlu0 %v3555
    %v3557 = vpop.xlane.xlu0 %3556
    %v3558 = vrcp.pop %v3554
    %v3559 = vrcp.pop %v3557
    %v3560 = vmul.f32 %v3549, %v3558
    %v3561 = vmul.f32 %v3551, %v3559
    %v3562 = vpack.c.bf16 %v3561, %v3560
    %v3564 = vsel %vm2298, %v3562, 0
    %3566 = vmatprep.subr.bf16.mxu0 0
    %3567 = vmatpush1.bf16.msra.mxu0 %v2237
    %3568 = vmatprep.subr.bf16.mxu0 0
    %3569 = vmatpush1.bf16.msra.mxu0 0
    %3570 = vmatprep.subr.bf16.mxu0 0
    %3571 = vmatpush1.bf16.msra.mxu0 0
    %3572 = vmatprep.subr.bf16.mxu0 0
    %3573 = vmatpush1.bf16.msra.mxu0 0
    %3574 = vmatprep.subr.bf16.mxu0 0
    %3575 = vmatpush1.bf16.msra.mxu0 0
    %3576 = vmatprep.subr.bf16.mxu0 0
    %3577 = vmatpush1.bf16.msra.mxu0 0
    %3578 = vmatprep.subr.bf16.mxu0 0
    %3579 = vmatpush1.bf16.msra.mxu0 0
    %3580 = vmatprep.subr.bf16.mxu0 0
    %3581 = vmatpush1.bf16.msra.mxu0 0
    %3582 = vmatprep.subr.bf16.mxu0 0
    %3583 = vmatpush1.bf16.msra.mxu0 0
    %3584 = vmatprep.subr.bf16.mxu0 0
    %3585 = vmatpush1.bf16.msra.mxu0 0
    %3586 = vmatprep.subr.bf16.mxu0 0
    %3587 = vmatpush1.bf16.msra.mxu0 0
    %3588 = vmatprep.subr.bf16.mxu0 0
    %3589 = vmatpush1.bf16.msra.mxu0 0
    %3590 = vmatprep.subr.bf16.mxu0 0
    %3591 = vmatpush1.bf16.msra.mxu0 0
    %3592 = vmatprep.subr.bf16.mxu0 0
    %3593 = vmatpush1.bf16.msra.mxu0 0
    %3594 = vmatprep.subr.bf16.mxu0 0
    %3595 = vmatpush1.bf16.msra.mxu0 0
    %3596 = vmatprep.subr.bf16.mxu0 0
    %3597 = vmatpush1.bf16.msra.mxu0 0
    %3598 = vmatprep.mubr.bf16.mxu0 0
    %3599 = vmatmul.mubr.bf16.gmra.mrb[0].mxu0 %v3564
    %v3600 = vpop.f32.mrb[0].mxu0
    %v3601 = vadd.f32 0.0, %v3600
    %v3602 = vpop.f32.mrb[0].mxu0
    %v3603 = vpop.f32.mrb[0].mxu0
    %v3604 = vadd.f32 0.0, %v3603
    %v3605 = vpop.f32.mrb[0].mxu0
    %3606 = vdwg.mxu0
    %v3607 = vpack.c.bf16 %v3604, %v3601
    %3609 = vrot.lane.b32.xlu0 %v2231, 64
    %v3610 = vpop.permute.xlu0 %3609
    %3612 = vrot.lane.b32.xlu0 %v2234, 64
    %v3613 = vpop.permute.xlu0 %3612
    %v3615 = vsel %vm2248, %v3610, 0
    %v3618 = vsel %vm2248, %v3613, 0
    %3620 = vmatprep.subr.bf16.mxu0 0
    %3621 = vmatpush1.bf16.xpose.msra.mxu0 %v3618
    %3622 = vmatprep.subr.bf16.mxu0 0
    %3623 = vmatpush1.bf16.xpose.msra.mxu0 0
    %3624 = vmatprep.subr.bf16.mxu0 0
    %3625 = vmatpush1.bf16.xpose.msra.mxu0 0
    %3626 = vmatprep.subr.bf16.mxu0 0
    %3627 = vmatpush1.bf16.xpose.msra.mxu0 0
    %3628 = vmatprep.subr.bf16.mxu0 0
    %3629 = vmatpush1.bf16.xpose.msra.mxu0 0
    %3630 = vmatprep.subr.bf16.mxu0 0
    %3631 = vmatpush1.bf16.xpose.msra.mxu0 0
    %3632 = vmatprep.subr.bf16.mxu0 0
    %3633 = vmatpush1.bf16.xpose.msra.mxu0 0
    %3634 = vmatprep.subr.bf16.mxu0 0
    %3635 = vmatpush1.bf16.xpose.msra.mxu0 0
    %3636 = vmatprep.subr.bf16.mxu0 0
    %3637 = vmatpush1.bf16.xpose.msra.mxu0 0
    %3638 = vmatprep.subr.bf16.mxu0 0
    %3639 = vmatpush1.bf16.xpose.msra.mxu0 0
    %3640 = vmatprep.subr.bf16.mxu0 0
    %3641 = vmatpush1.bf16.xpose.msra.mxu0 0
    %3642 = vmatprep.subr.bf16.mxu0 0
    %3643 = vmatpush1.bf16.xpose.msra.mxu0 0
    %3644 = vmatprep.subr.bf16.mxu0 0
    %3645 = vmatpush1.bf16.xpose.msra.mxu0 0
    %3646 = vmatprep.subr.bf16.mxu0 0
    %3647 = vmatpush1.bf16.xpose.msra.mxu0 0
    %3648 = vmatprep.subr.bf16.mxu0 0
    %3649 = vmatpush1.bf16.xpose.msra.mxu0 0
    %3650 = vmatprep.subr.bf16.mxu0 0
    %3651 = vmatpush1.bf16.xpose.msra.mxu0 0
    %3652 = vmatprep.mubr.bf16.mxu0 0
    %3653 = vmatmul.mubr.bf16.gmra.mrb[0].mxu0 %v3615
    %v3654 = vpop.f32.mrb[0].mxu0
    %v3655 = vadd.f32 0.0, %v3654
    %v3656 = vpop.f32.mrb[0].mxu0
    %v3657 = vpop.f32.mrb[0].mxu0
    %v3658 = vadd.f32 0.0, %v3657
    %v3659 = vpop.f32.mrb[0].mxu0
    %3660 = vdwg.mxu0
    %v3661 = vsel %vm2246, %v3655, -inf
    %v3662 = vsel %vm2247, %v3658, -inf
    %v3663 = vsel %vm2298, %v3661, -inf
    %3664 = vmax.xlane.f32.xlu0 %v3663
    %v3665 = vpop.xlane.xlu0 %3664
    %v3666 = vsel %vm2298, %v3662, -inf
    %3667 = vmax.xlane.f32.xlu0 %v3666
    %v3668 = vpop.xlane.xlu0 %3667
    %v3669 = vsub.f32 %v3661, %v3665
    %v3670 = vsub.f32 %v3662, %v3668
    %v3671 = vmul.f32 %v3669, 1.442695
    %v3672 = vpow.pop %v3671
    %v3673 = vmul.f32 %v3670, 1.442695
    %v3674 = vpow.pop %v3673
    %v3675 = vsel %vm2298, %v3672, 0.0
    %3676 = vadd.xlane.f32.xlu0 %v3675
    %v3677 = vpop.xlane.xlu0 %3676
    %v3678 = vsel %vm2298, %v3674, 0.0
    %3679 = vadd.xlane.f32.xlu0 %v3678
    %v3680 = vpop.xlane.xlu0 %3679
    %v3681 = vrcp.pop %v3677
    %v3682 = vrcp.pop %v3680
    %v3683 = vmul.f32 %v3672, %v3681
    %v3684 = vmul.f32 %v3674, %v3682
    %v3685 = vpack.c.bf16 %v3684, %v3683
    %3687 = vrot.lane.b32.xlu0 %v2237, 64
    %v3688 = vpop.permute.xlu0 %3687
    %v3691 = vsel %vm2298, %v3685, 0
    %3693 = vmatprep.subr.bf16.mxu0 0
    %3694 = vmatpush1.bf16.msra.mxu0 %v3688
    %3695 = vmatprep.subr.bf16.mxu0 0
    %3696 = vmatpush1.bf16.msra.mxu0 0
    %3697 = vmatprep.subr.bf16.mxu0 0
    %3698 = vmatpush1.bf16.msra.mxu0 0
    %3699 = vmatprep.subr.bf16.mxu0 0
    %3700 = vmatpush1.bf16.msra.mxu0 0
    %3701 = vmatprep.subr.bf16.mxu0 0
    %3702 = vmatpush1.bf16.msra.mxu0 0
    %3703 = vmatprep.subr.bf16.mxu0 0
    %3704 = vmatpush1.bf16.msra.mxu0 0
    %3705 = vmatprep.subr.bf16.mxu0 0
    %3706 = vmatpush1.bf16.msra.mxu0 0
    %3707 = vmatprep.subr.bf16.mxu0 0
    %3708 = vmatpush1.bf16.msra.mxu0 0
    %3709 = vmatprep.subr.bf16.mxu0 0
    %3710 = vmatpush1.bf16.msra.mxu0 0
    %3711 = vmatprep.subr.bf16.mxu0 0
    %3712 = vmatpush1.bf16.msra.mxu0 0
    %3713 = vmatprep.subr.bf16.mxu0 0
    %3714 = vmatpush1.bf16.msra.mxu0 0
    %3715 = vmatprep.subr.bf16.mxu0 0
    %3716 = vmatpush1.bf16.msra.mxu0 0
    %3717 = vmatprep.subr.bf16.mxu0 0
    %3718 = vmatpush1.bf16.msra.mxu0 0
    %3719 = vmatprep.subr.bf16.mxu0 0
    %3720 = vmatpush1.bf16.msra.mxu0 0
    %3721 = vmatprep.subr.bf16.mxu0 0
    %3722 = vmatpush1.bf16.msra.mxu0 0
    %3723 = vmatprep.subr.bf16.mxu0 0
    %3724 = vmatpush1.bf16.msra.mxu0 0
    %3725 = vmatprep.mubr.bf16.mxu0 0
    %3726 = vmatmul.mubr.bf16.gmra.mrb[0].mxu0 %v3691
    %v3727 = vpop.f32.mrb[0].mxu0
    %v3728 = vadd.f32 0.0, %v3727
    %v3729 = vpop.f32.mrb[0].mxu0
    %v3730 = vpop.f32.mrb[0].mxu0
    %v3731 = vadd.f32 0.0, %v3730
    %v3732 = vpop.f32.mrb[0].mxu0
    %3733 = vdwg.mxu0
    %v3734 = vpack.c.bf16 %v3731, %v3728
    %3736 = vrot.lane.b32.xlu0 %v3246, 64
    %v3737 = vpop.permute.xlu0 %3736
    %3739 = vrot.lane.b32.xlu0 %v3490, 64
    %v3740 = vpop.permute.xlu0 %3739
    %3742 = vrot.lane.b32.xlu0 %v3734, 64
    %v3743 = vpop.permute.xlu0 %3742
    %v3746 = vsel %vm2248, %v3119, %v3737
    %v3750 = vsel %vm2248, %v3363, %v3740
    %v3754 = vsel %vm2248, %v3607, %v3743
    %v3756 = vld [vmem:[#allocation7] sm:$0xff]
    %v3757 = vld [vmem:[#allocation7 + $0x8] sm:$0xf]
    %v3758 = vld [vmem:[#allocation7 + $0xc] sm:$0xff]
    %v3759 = vld [vmem:[#allocation7 + $0x14] sm:$0xf]
    %v3760 = vld [vmem:[#allocation7 + $0x18] sm:$0xff]
    %v3761 = vld [vmem:[#allocation7 + $0x20] sm:$0xf]
    %v3762 = vld [vmem:[#allocation7 + $0x24] sm:$0xff]
    %v3763 = vld [vmem:[#allocation7 + $0x2c] sm:$0xf]
    %v3764 = vld [vmem:[#allocation7 + $0x30] sm:$0xff]
    %v3765 = vld [vmem:[#allocation7 + $0x38] sm:$0xf]
    %v3766 = vld [vmem:[#allocation7 + $0x3c] sm:$0xff]
    %v3767 = vld [vmem:[#allocation7 + $0x44] sm:$0xf]
    %v3768 = vld [vmem:[#allocation7 + $0x48] sm:$0xff]
    %v3769 = vld [vmem:[#allocation7 + $0x50] sm:$0xf]
    %v3770 = vld [vmem:[#allocation7 + $0x54] sm:$0xff]
    %v3771 = vld [vmem:[#allocation7 + $0x5c] sm:$0xf]
    %v3772 = vld [vmem:[#allocation7 + $0x60] sm:$0xff]
    %v3773 = vld [vmem:[#allocation7 + $0x68] sm:$0xf]
    %v3774 = vld [vmem:[#allocation7 + $0x6c] sm:$0xff]
    %v3775 = vld [vmem:[#allocation7 + $0x74] sm:$0xf]
    %v3776 = vld [vmem:[#allocation7 + $0x78] sm:$0xff]
    %v3777 = vld [vmem:[#allocation7 + $0x80] sm:$0xf]
    %v3778 = vld [vmem:[#allocation7 + $0x84] sm:$0xff]
    %v3779 = vld [vmem:[#allocation7 + $0x8c] sm:$0xf]
    %v3780 = vld [vmem:[#allocation7 + $0x90] sm:$0xff]
    %v3781 = vld [vmem:[#allocation7 + $0x98] sm:$0xf]
    %v3782 = vld [vmem:[#allocation7 + $0x9c] sm:$0xff]
    %v3783 = vld [vmem:[#allocation7 + $0xa4] sm:$0xf]
    %v3784 = vld [vmem:[#allocation7 + $0xa8] sm:$0xff]
    %v3785 = vld [vmem:[#allocation7 + $0xb0] sm:$0xf]
    %v3786 = vld [vmem:[#allocation7 + $0xb4] sm:$0xff]
    %v3787 = vld [vmem:[#allocation7 + $0xbc] sm:$0xf]
    %v3788 = vld [vmem:[#allocation7 + $0xc0] sm:$0xff]
    %v3789 = vld [vmem:[#allocation7 + $0xc8] sm:$0xf]
    %v3790 = vld [vmem:[#allocation7 + $0xcc] sm:$0xff]
    %v3791 = vld [vmem:[#allocation7 + $0xd4] sm:$0xf]
    %v3792 = vld [vmem:[#allocation7 + $0xd8] sm:$0xff]
    %v3793 = vld [vmem:[#allocation7 + $0xe0] sm:$0xf]
    %v3794 = vld [vmem:[#allocation7 + $0xe4] sm:$0xff]
    %v3795 = vld [vmem:[#allocation7 + $0xec] sm:$0xf]
    %v3796 = vld [vmem:[#allocation7 + $0xf0] sm:$0xff]
    %v3797 = vld [vmem:[#allocation7 + $0xf8] sm:$0xf]
    %v3798 = vld [vmem:[#allocation7 + $0xfc] sm:$0xff]
    %v3799 = vld [vmem:[#allocation7 + $0x104] sm:$0xf]
    %v3800 = vld [vmem:[#allocation7 + $0x108] sm:$0xff]
    %v3801 = vld [vmem:[#allocation7 + $0x110] sm:$0xf]
    %v3802 = vld [vmem:[#allocation7 + $0x114] sm:$0xff]
    %v3803 = vld [vmem:[#allocation7 + $0x11c] sm:$0xf]
    %v3804 = vld [vmem:[#allocation7 + $0x120] sm:$0xff]
    %v3805 = vld [vmem:[#allocation7 + $0x128] sm:$0xf]
    %v3806 = vld [vmem:[#allocation7 + $0x12c] sm:$0xff]
    %v3807 = vld [vmem:[#allocation7 + $0x134] sm:$0xf]
    %v3808 = vld [vmem:[#allocation7 + $0x138] sm:$0xff]
    %v3809 = vld [vmem:[#allocation7 + $0x140] sm:$0xf]
    %v3810 = vld [vmem:[#allocation7 + $0x144] sm:$0xff]
    %v3811 = vld [vmem:[#allocation7 + $0x14c] sm:$0xf]
    %v3812 = vld [vmem:[#allocation7 + $0x150] sm:$0xff]
    %v3813 = vld [vmem:[#allocation7 + $0x158] sm:$0xf]
    %v3814 = vld [vmem:[#allocation7 + $0x15c] sm:$0xff]
    %v3815 = vld [vmem:[#allocation7 + $0x164] sm:$0xf]
    %v3816 = vld [vmem:[#allocation7 + $0x168] sm:$0xff]
    %v3817 = vld [vmem:[#allocation7 + $0x170] sm:$0xf]
    %v3818 = vld [vmem:[#allocation7 + $0x174] sm:$0xff]
    %v3819 = vld [vmem:[#allocation7 + $0x17c] sm:$0xf]
    %v3820 = vld [vmem:[#allocation7 + $0x180] sm:$0xff]
    %v3821 = vld [vmem:[#allocation7 + $0x188] sm:$0xf]
    %v3822 = vld [vmem:[#allocation7 + $0x18c] sm:$0xff]
    %v3823 = vld [vmem:[#allocation7 + $0x194] sm:$0xf]
    %v3824 = vld [vmem:[#allocation7 + $0x198] sm:$0xff]
    %v3825 = vld [vmem:[#allocation7 + $0x1a0] sm:$0xf]
    %v3826 = vld [vmem:[#allocation7 + $0x1a4] sm:$0xff]
    %v3827 = vld [vmem:[#allocation7 + $0x1ac] sm:$0xf]
    %v3828 = vld [vmem:[#allocation7 + $0x1b0] sm:$0xff]
    %v3829 = vld [vmem:[#allocation7 + $0x1b8] sm:$0xf]
    %v3830 = vld [vmem:[#allocation7 + $0x1bc] sm:$0xff]
    %v3831 = vld [vmem:[#allocation7 + $0x1c4] sm:$0xf]
    %v3832 = vld [vmem:[#allocation7 + $0x1c8] sm:$0xff]
    %v3833 = vld [vmem:[#allocation7 + $0x1d0] sm:$0xf]
    %v3834 = vld [vmem:[#allocation7 + $0x1d4] sm:$0xff]
    %v3835 = vld [vmem:[#allocation7 + $0x1dc] sm:$0xf]
    %v3836 = vld [vmem:[#allocation7 + $0x1e0] sm:$0xff]
    %v3837 = vld [vmem:[#allocation7 + $0x1e8] sm:$0xf]
    %v3838 = vld [vmem:[#allocation7 + $0x1ec] sm:$0xff]
    %v3839 = vld [vmem:[#allocation7 + $0x1f4] sm:$0xf]
    %v3840 = vld [vmem:[#allocation7 + $0x1f8] sm:$0xff]
    %v3841 = vld [vmem:[#allocation7 + $0x200] sm:$0xf]
    %v3842 = vld [vmem:[#allocation7 + $0x204] sm:$0xff]
    %v3843 = vld [vmem:[#allocation7 + $0x20c] sm:$0xf]
    %v3844 = vld [vmem:[#allocation7 + $0x210] sm:$0xff]
    %v3845 = vld [vmem:[#allocation7 + $0x218] sm:$0xf]
    %v3846 = vld [vmem:[#allocation7 + $0x21c] sm:$0xff]
    %v3847 = vld [vmem:[#allocation7 + $0x224] sm:$0xf]
    %v3848 = vld [vmem:[#allocation7 + $0x228] sm:$0xff]
    %v3849 = vld [vmem:[#allocation7 + $0x230] sm:$0xf]
    %v3850 = vld [vmem:[#allocation7 + $0x234] sm:$0xff]
    %v3851 = vld [vmem:[#allocation7 + $0x23c] sm:$0xf]
    %v3852 = vld [vmem:[#allocation8] sm:$0x7]
    %v3854 = vlaneseq
    %v3855 = vshrl.u32 %v3854, 7
    %v3856 = vsub.s32 0, %v3855
    %v3857 = vrot.slane %v3852, %v3856
    %v3858 = vlaneseq
    %v3859 = vshrl.u32 %v3858, 7
    %v3860 = vsub.s32 1, %v3859
    %v3861 = vrot.slane %v3852, %v3860
    %v3862 = vlaneseq
    %v3863 = vshrl.u32 %v3862, 7
    %v3864 = vsub.s32 2, %v3863
    %v3865 = vrot.slane %v3852, %v3864
    %v3965 = vunpack.c.l.b16 %v3756
    %v3966 = vunpack.c.h.b16 %v3756
    %v3967 = vunpack.c.l.b16 %v3757
    %v3968 = vunpack.c.l.b16 %v3758
    %v3969 = vunpack.c.h.b16 %v3758
    %v3970 = vunpack.c.l.b16 %v3759
    %v3971 = vunpack.c.l.b16 %v3760
    %v3972 = vunpack.c.h.b16 %v3760
    %v3973 = vunpack.c.l.b16 %v3761
    %v3974 = vunpack.c.l.b16 %v3762
    %v3975 = vunpack.c.h.b16 %v3762
    %v3976 = vunpack.c.l.b16 %v3763
    %v3977 = vunpack.c.l.b16 %v3764
    %v3978 = vunpack.c.h.b16 %v3764
    %v3979 = vunpack.c.l.b16 %v3765
    %v3980 = vunpack.c.l.b16 %v3766
    %v3981 = vunpack.c.h.b16 %v3766
    %v3982 = vunpack.c.l.b16 %v3767
    %v3983 = vunpack.c.l.b16 %v3768
    %v3984 = vunpack.c.h.b16 %v3768
    %v3985 = vunpack.c.l.b16 %v3769
    %v3986 = vunpack.c.l.b16 %v3770
    %v3987 = vunpack.c.h.b16 %v3770
    %v3988 = vunpack.c.l.b16 %v3771
    %v3989 = vunpack.c.l.b16 %v3772
    %v3990 = vunpack.c.h.b16 %v3772
    %v3991 = vunpack.c.l.b16 %v3773
    %v3992 = vunpack.c.l.b16 %v3774
    %v3993 = vunpack.c.h.b16 %v3774
    %v3994 = vunpack.c.l.b16 %v3775
    %v3995 = vunpack.c.l.b16 %v3776
    %v3996 = vunpack.c.h.b16 %v3776
    %v3997 = vunpack.c.l.b16 %v3777
    %v3998 = vunpack.c.l.b16 %v3778
    %v3999 = vunpack.c.h.b16 %v3778
    %v4000 = vunpack.c.l.b16 %v3779
    %v4001 = vunpack.c.l.b16 %v3780
    %v4002 = vunpack.c.h.b16 %v3780
    %v4003 = vunpack.c.l.b16 %v3781
    %v4004 = vunpack.c.l.b16 %v3782
    %v4005 = vunpack.c.h.b16 %v3782
    %v4006 = vunpack.c.l.b16 %v3783
    %v4007 = vunpack.c.l.b16 %v3784
    %v4008 = vunpack.c.h.b16 %v3784
    %v4009 = vunpack.c.l.b16 %v3785
    %v4010 = vunpack.c.l.b16 %v3786
    %v4011 = vunpack.c.h.b16 %v3786
    %v4012 = vunpack.c.l.b16 %v3787
    %v4013 = vunpack.c.l.b16 %v3788
    %v4014 = vunpack.c.h.b16 %v3788
    %v4015 = vunpack.c.l.b16 %v3789
    %v4016 = vunpack.c.l.b16 %v3790
    %v4017 = vunpack.c.h.b16 %v3790
    %v4018 = vunpack.c.l.b16 %v3791
    %v4019 = vunpack.c.l.b16 %v3792
    %v4020 = vunpack.c.h.b16 %v3792
    %v4021 = vunpack.c.l.b16 %v3793
    %v4022 = vunpack.c.l.b16 %v3794
    %v4023 = vunpack.c.h.b16 %v3794
    %v4024 = vunpack.c.l.b16 %v3795
    %v4025 = vunpack.c.l.b16 %v3796
    %v4026 = vunpack.c.h.b16 %v3796
    %v4027 = vunpack.c.l.b16 %v3797
    %v4028 = vunpack.c.l.b16 %v3798
    %v4029 = vunpack.c.h.b16 %v3798
    %v4030 = vunpack.c.l.b16 %v3799
    %v4031 = vunpack.c.l.b16 %v3800
    %v4032 = vunpack.c.h.b16 %v3800
    %v4033 = vunpack.c.l.b16 %v3801
    %v4034 = vunpack.c.l.b16 %v3802
    %v4035 = vunpack.c.h.b16 %v3802
    %v4036 = vunpack.c.l.b16 %v3803
    %v4037 = vunpack.c.l.b16 %v3804
    %v4038 = vunpack.c.h.b16 %v3804
    %v4039 = vunpack.c.l.b16 %v3805
    %v4040 = vunpack.c.l.b16 %v3806
    %v4041 = vunpack.c.h.b16 %v3806
    %v4042 = vunpack.c.l.b16 %v3807
    %v4043 = vunpack.c.l.b16 %v3808
    %v4044 = vunpack.c.h.b16 %v3808
    %v4045 = vunpack.c.l.b16 %v3809
    %v4046 = vunpack.c.l.b16 %v3810
    %v4047 = vunpack.c.h.b16 %v3810
    %v4048 = vunpack.c.l.b16 %v3811
    %v4049 = vunpack.c.l.b16 %v3812
    %v4050 = vunpack.c.h.b16 %v3812
    %v4051 = vunpack.c.l.b16 %v3813
    %v4052 = vunpack.c.l.b16 %v3814
    %v4053 = vunpack.c.h.b16 %v3814
    %v4054 = vunpack.c.l.b16 %v3815
    %v4055 = vunpack.c.l.b16 %v3816
    %v4056 = vunpack.c.h.b16 %v3816
    %v4057 = vunpack.c.l.b16 %v3817
    %v4058 = vunpack.c.l.b16 %v3818
    %v4059 = vunpack.c.h.b16 %v3818
    %v4060 = vunpack.c.l.b16 %v3819
    %v4061 = vunpack.c.l.b16 %v3820
    %v4062 = vunpack.c.h.b16 %v3820
    %v4063 = vunpack.c.l.b16 %v3821
    %v4064 = vunpack.c.l.b16 %v3822
    %v4065 = vunpack.c.h.b16 %v3822
    %v4066 = vunpack.c.l.b16 %v3823
    %v4067 = vunpack.c.l.b16 %v3824
    %v4068 = vunpack.c.h.b16 %v3824
    %v4069 = vunpack.c.l.b16 %v3825
    %v4070 = vunpack.c.l.b16 %v3826
    %v4071 = vunpack.c.h.b16 %v3826
    %v4072 = vunpack.c.l.b16 %v3827
    %v4073 = vunpack.c.l.b16 %v3828
    %v4074 = vunpack.c.h.b16 %v3828
    %v4075 = vunpack.c.l.b16 %v3829
    %v4076 = vunpack.c.l.b16 %v3830
    %v4077 = vunpack.c.h.b16 %v3830
    %v4078 = vunpack.c.l.b16 %v3831
    %v4079 = vunpack.c.l.b16 %v3832
    %v4080 = vunpack.c.h.b16 %v3832
    %v4081 = vunpack.c.l.b16 %v3833
    %v4082 = vunpack.c.l.b16 %v3834
    %v4083 = vunpack.c.h.b16 %v3834
    %v4084 = vunpack.c.l.b16 %v3835
    %v4085 = vunpack.c.l.b16 %v3836
    %v4086 = vunpack.c.h.b16 %v3836
    %v4087 = vunpack.c.l.b16 %v3837
    %v4088 = vunpack.c.l.b16 %v3838
    %v4089 = vunpack.c.h.b16 %v3838
    %v4090 = vunpack.c.l.b16 %v3839
    %v4091 = vunpack.c.l.b16 %v3840
    %v4092 = vunpack.c.h.b16 %v3840
    %v4093 = vunpack.c.l.b16 %v3841
    %v4094 = vunpack.c.l.b16 %v3842
    %v4095 = vunpack.c.h.b16 %v3842
    %v4096 = vunpack.c.l.b16 %v3843
    %v4097 = vunpack.c.l.b16 %v3844
    %v4098 = vunpack.c.h.b16 %v3844
    %v4099 = vunpack.c.l.b16 %v3845
    %v4100 = vunpack.c.l.b16 %v3846
    %v4101 = vunpack.c.h.b16 %v3846
    %v4102 = vunpack.c.l.b16 %v3847
    %v4103 = vunpack.c.l.b16 %v3848
    %v4104 = vunpack.c.h.b16 %v3848
    %v4105 = vunpack.c.l.b16 %v3849
    %v4106 = vunpack.c.l.b16 %v3850
    %v4107 = vunpack.c.h.b16 %v3850
    %v4108 = vunpack.c.l.b16 %v3851
    %v4109 = vpack.c.b16 %v3968, %v3965
    %v4110 = vpack.c.b16 %v3969, %v3966
    %v4111 = vpack.c.b16 %v3970, %v3967
    %v4112 = vpack.c.b16 %v3974, %v3971
    %v4113 = vpack.c.b16 %v3975, %v3972
    %v4114 = vpack.c.b16 %v3976, %v3973
    %v4115 = vpack.c.b16 %v3980, %v3977
    %v4116 = vpack.c.b16 %v3981, %v3978
    %v4117 = vpack.c.b16 %v3982, %v3979
    %v4118 = vpack.c.b16 %v3986, %v3983
    %v4119 = vpack.c.b16 %v3987, %v3984
    %v4120 = vpack.c.b16 %v3988, %v3985
    %v4121 = vpack.c.b16 %v3992, %v3989
    %v4122 = vpack.c.b16 %v3993, %v3990
    %v4123 = vpack.c.b16 %v3994, %v3991
    %v4124 = vpack.c.b16 %v3998, %v3995
    %v4125 = vpack.c.b16 %v3999, %v3996
    %v4126 = vpack.c.b16 %v4000, %v3997
    %v4127 = vpack.c.b16 %v4004, %v4001
    %v4128 = vpack.c.b16 %v4005, %v4002
    %v4129 = vpack.c.b16 %v4006, %v4003
    %v4130 = vpack.c.b16 %v4010, %v4007
    %v4131 = vpack.c.b16 %v4011, %v4008
    %v4132 = vpack.c.b16 %v4012, %v4009
    %v4133 = vpack.c.b16 %v4016, %v4013
    %v4134 = vpack.c.b16 %v4017, %v4014
    %v4135 = vpack.c.b16 %v4018, %v4015
    %v4136 = vpack.c.b16 %v4022, %v4019
    %v4137 = vpack.c.b16 %v4023, %v4020
    %v4138 = vpack.c.b16 %v4024, %v4021
    %v4139 = vpack.c.b16 %v4028, %v4025
    %v4140 = vpack.c.b16 %v4029, %v4026
    %v4141 = vpack.c.b16 %v4030, %v4027
    %v4142 = vpack.c.b16 %v4034, %v4031
    %v4143 = vpack.c.b16 %v4035, %v4032
    %v4144 = vpack.c.b16 %v4036, %v4033
    %v4145 = vpack.c.b16 %v4040, %v4037
    %v4146 = vpack.c.b16 %v4041, %v4038
    %v4147 = vpack.c.b16 %v4042, %v4039
    %v4148 = vpack.c.b16 %v4046, %v4043
    %v4149 = vpack.c.b16 %v4047, %v4044
    %v4150 = vpack.c.b16 %v4048, %v4045
    %v4151 = vpack.c.b16 %v4052, %v4049
    %v4152 = vpack.c.b16 %v4053, %v4050
    %v4153 = vpack.c.b16 %v4054, %v4051
    %v4154 = vpack.c.b16 %v4058, %v4055
    %v4155 = vpack.c.b16 %v4059, %v4056
    %v4156 = vpack.c.b16 %v4060, %v4057
    %v4157 = vpack.c.b16 %v4064, %v4061
    %v4158 = vpack.c.b16 %v4065, %v4062
    %v4159 = vpack.c.b16 %v4066, %v4063
    %v4160 = vpack.c.b16 %v4070, %v4067
    %v4161 = vpack.c.b16 %v4071, %v4068
    %v4162 = vpack.c.b16 %v4072, %v4069
    %v4163 = vpack.c.b16 %v4076, %v4073
    %v4164 = vpack.c.b16 %v4077, %v4074
    %v4165 = vpack.c.b16 %v4078, %v4075
    %v4166 = vpack.c.b16 %v4082, %v4079
    %v4167 = vpack.c.b16 %v4083, %v4080
    %v4168 = vpack.c.b16 %v4084, %v4081
    %v4169 = vpack.c.b16 %v4088, %v4085
    %v4170 = vpack.c.b16 %v4089, %v4086
    %v4171 = vpack.c.b16 %v4090, %v4087
    %v4172 = vpack.c.b16 %v4094, %v4091
    %v4173 = vpack.c.b16 %v4095, %v4092
    %v4174 = vpack.c.b16 %v4096, %v4093
    %v4175 = vpack.c.b16 %v4100, %v4097
    %v4176 = vpack.c.b16 %v4101, %v4098
    %v4177 = vpack.c.b16 %v4102, %v4099
    %v4178 = vpack.c.b16 %v4106, %v4103
    %v4179 = vpack.c.b16 %v4107, %v4104
    %v4180 = vpack.c.b16 %v4108, %v4105
    %4253 = vmatprep.subr.bf16.mxu0 %v4110
    %4254 = vmatpush1.bf16.msra.mxu0 %v4109
    %4255 = vmatprep.subr.bf16.mxu0 %v4113
    %4256 = vmatpush1.bf16.msra.mxu0 %v4112
    %4257 = vmatprep.subr.bf16.mxu0 %v4116
    %4258 = vmatpush1.bf16.msra.mxu0 %v4115
    %4259 = vmatprep.subr.bf16.mxu0 %v4119
    %4260 = vmatpush1.bf16.msra.mxu0 %v4118
    %4261 = vmatprep.subr.bf16.mxu0 %v4122
    %4262 = vmatpush1.bf16.msra.mxu0 %v4121
    %4263 = vmatprep.subr.bf16.mxu0 %v4125
    %4264 = vmatpush1.bf16.msra.mxu0 %v4124
    %4265 = vmatprep.subr.bf16.mxu0 %v4128
    %4266 = vmatpush1.bf16.msra.mxu0 %v4127
    %4267 = vmatprep.subr.bf16.mxu0 %v4131
    %4268 = vmatpush1.bf16.msra.mxu0 %v4130
    %4269 = vmatprep.subr.bf16.mxu0 %v4134
    %4270 = vmatpush1.bf16.msra.mxu0 %v4133
    %4271 = vmatprep.subr.bf16.mxu0 %v4137
    %4272 = vmatpush1.bf16.msra.mxu0 %v4136
    %4273 = vmatprep.subr.bf16.mxu0 %v4140
    %4274 = vmatpush1.bf16.msra.mxu0 %v4139
    %4275 = vmatprep.subr.bf16.mxu0 %v4143
    %4276 = vmatpush1.bf16.msra.mxu0 %v4142
    %4277 = vmatprep.subr.bf16.mxu0 %v4146
    %4278 = vmatpush1.bf16.msra.mxu0 %v4145
    %4279 = vmatprep.subr.bf16.mxu0 %v4149
    %4280 = vmatpush1.bf16.msra.mxu0 %v4148
    %4281 = vmatprep.subr.bf16.mxu0 %v4152
    %4282 = vmatpush1.bf16.msra.mxu0 %v4151
    %4283 = vmatprep.subr.bf16.mxu0 %v4155
    %4284 = vmatpush1.bf16.msra.mxu0 %v4154
    %4285 = vmatprep.mubr.bf16.mxu0 %v2997
    %4286 = vmatmul.mubr.bf16.gmra.mrb[0].mxu0 %v2993
    %v4287 = vpop.f32.mrb[0].mxu0
    %v4288 = vadd.f32 %v3857, %v4287
    %v4289 = vpop.f32.mrb[0].mxu0
    %v4290 = vadd.f32 %v3861, %v4289
    %v4291 = vpop.f32.mrb[0].mxu0
    %v4292 = vadd.f32 %v3857, %v4291
    %v4293 = vpop.f32.mrb[0].mxu0
    %v4294 = vadd.f32 %v3861, %v4293
    %4295 = vmatprep.mubr.bf16.mxu0 %v3750
    %4296 = vmatmul.mubr.bf16.gmra.mrb[0].mxu0 %v3746
    %v4297 = vpop.f32.mrb[0].mxu0
    %v4298 = vadd.f32 %v3857, %v4297
    %v4299 = vpop.f32.mrb[0].mxu0
    %v4300 = vadd.f32 %v3861, %v4299
    %v4301 = vpop.f32.mrb[0].mxu0
    %v4302 = vadd.f32 %v3857, %v4301
    %v4303 = vpop.f32.mrb[0].mxu0
    %v4304 = vadd.f32 %v3861, %v4303
    %4305 = vdwg.mxu0
    %4306 = vmatprep.subr.bf16.mxu0 %v4158
    %4307 = vmatpush1.bf16.msra.mxu0 %v4157
    %4308 = vmatprep.subr.bf16.mxu0 %v4161
    %4309 = vmatpush1.bf16.msra.mxu0 %v4160
    %4310 = vmatprep.subr.bf16.mxu0 %v4164
    %4311 = vmatpush1.bf16.msra.mxu0 %v4163
    %4312 = vmatprep.subr.bf16.mxu0 %v4167
    %4313 = vmatpush1.bf16.msra.mxu0 %v4166
    %4314 = vmatprep.subr.bf16.mxu0 %v4170
    %4315 = vmatpush1.bf16.msra.mxu0 %v4169
    %4316 = vmatprep.subr.bf16.mxu0 %v4173
    %4317 = vmatpush1.bf16.msra.mxu0 %v4172
    %4318 = vmatprep.subr.bf16.mxu0 %v4176
    %4319 = vmatpush1.bf16.msra.mxu0 %v4175
    %4320 = vmatprep.subr.bf16.mxu0 %v4179
    %4321 = vmatpush1.bf16.msra.mxu0 %v4178
    %4322 = vmatprep.subr.bf16.mxu0 0
    %4323 = vmatpush1.bf16.msra.mxu0 0
    %4324 = vmatprep.subr.bf16.mxu0 0
    %4325 = vmatpush1.bf16.msra.mxu0 0
    %4326 = vmatprep.subr.bf16.mxu0 0
    %4327 = vmatpush1.bf16.msra.mxu0 0
    %4328 = vmatprep.subr.bf16.mxu0 0
    %4329 = vmatpush1.bf16.msra.mxu0 0
    %4330 = vmatprep.subr.bf16.mxu0 0
    %4331 = vmatpush1.bf16.msra.mxu0 0
    %4332 = vmatprep.subr.bf16.mxu0 0
    %4333 = vmatpush1.bf16.msra.mxu0 0
    %4334 = vmatprep.subr.bf16.mxu0 0
    %4335 = vmatpush1.bf16.msra.mxu0 0
    %4336 = vmatprep.subr.bf16.mxu0 0
    %4337 = vmatpush1.bf16.msra.mxu0 0
    %4338 = vmatprep.mubr.bf16.mxu0 0
    %4339 = vmatmul.mubr.bf16.gmra.mrb[0].mxu0 %v3001
    %v4340 = vpop.f32.mrb[0].mxu0
    %v4341 = vadd.f32 %v4288, %v4340
    %v4342 = vpop.f32.mrb[0].mxu0
    %v4343 = vadd.f32 %v4290, %v4342
    %v4344 = vpop.f32.mrb[0].mxu0
    %v4345 = vadd.f32 %v4292, %v4344
    %v4346 = vpop.f32.mrb[0].mxu0
    %v4347 = vadd.f32 %v4294, %v4346
    %4348 = vmatprep.mubr.bf16.mxu0 0
    %4349 = vmatmul.mubr.bf16.gmra.mrb[0].mxu0 %v3754
    %v4350 = vpop.f32.mrb[0].mxu0
    %v4351 = vadd.f32 %v4298, %v4350
    %v4352 = vpop.f32.mrb[0].mxu0
    %v4353 = vadd.f32 %v4300, %v4352
    %v4354 = vpop.f32.mrb[0].mxu0
    %v4355 = vadd.f32 %v4302, %v4354
    %v4356 = vpop.f32.mrb[0].mxu0
    %v4357 = vadd.f32 %v4304, %v4356
    %4358 = vdwg.mxu0
    %4359 = vmatprep.subr.bf16.mxu0 0
    %4360 = vmatpush1.bf16.msra.mxu0 %v4111
    %4361 = vmatprep.subr.bf16.mxu0 0
    %4362 = vmatpush1.bf16.msra.mxu0 %v4114
    %4363 = vmatprep.subr.bf16.mxu0 0
    %4364 = vmatpush1.bf16.msra.mxu0 %v4117
    %4365 = vmatprep.subr.bf16.mxu0 0
    %4366 = vmatpush1.bf16.msra.mxu0 %v4120
    %4367 = vmatprep.subr.bf16.mxu0 0
    %4368 = vmatpush1.bf16.msra.mxu0 %v4123
    %4369 = vmatprep.subr.bf16.mxu0 0
    %4370 = vmatpush1.bf16.msra.mxu0 %v4126
    %4371 = vmatprep.subr.bf16.mxu0 0
    %4372 = vmatpush1.bf16.msra.mxu0 %v4129
    %4373 = vmatprep.subr.bf16.mxu0 0
    %4374 = vmatpush1.bf16.msra.mxu0 %v4132
    %4375 = vmatprep.subr.bf16.mxu0 0
    %4376 = vmatpush1.bf16.msra.mxu0 %v4135
    %4377 = vmatprep.subr.bf16.mxu0 0
    %4378 = vmatpush1.bf16.msra.mxu0 %v4138
    %4379 = vmatprep.subr.bf16.mxu0 0
    %4380 = vmatpush1.bf16.msra.mxu0 %v4141
    %4381 = vmatprep.subr.bf16.mxu0 0
    %4382 = vmatpush1.bf16.msra.mxu0 %v4144
    %4383 = vmatprep.subr.bf16.mxu0 0
    %4384 = vmatpush1.bf16.msra.mxu0 %v4147
    %4385 = vmatprep.subr.bf16.mxu0 0
    %4386 = vmatpush1.bf16.msra.mxu0 %v4150
    %4387 = vmatprep.subr.bf16.mxu0 0
    %4388 = vmatpush1.bf16.msra.mxu0 %v4153
    %4389 = vmatprep.subr.bf16.mxu0 0
    %4390 = vmatpush1.bf16.msra.mxu0 %v4156
    %4391 = vmatprep.mubr.bf16.mxu0 %v2997
    %4392 = vmatmul.mubr.bf16.gmra.mrb[0].mxu0 %v2993
    %v4393 = vpop.f32.mrb[0].mxu0
    %v4394 = vadd.f32 %v3865, %v4393
    %v4395 = vpop.f32.mrb[0].mxu0
    %v4396 = vpop.f32.mrb[0].mxu0
    %v4397 = vadd.f32 %v3865, %v4396
    %v4398 = vpop.f32.mrb[0].mxu0
    %4399 = vmatprep.mubr.bf16.mxu0 %v3750
    %4400 = vmatmul.mubr.bf16.gmra.mrb[0].mxu0 %v3746
    %v4401 = vpop.f32.mrb[0].mxu0
    %v4402 = vadd.f32 %v3865, %v4401
    %v4403 = vpop.f32.mrb[0].mxu0
    %v4404 = vpop.f32.mrb[0].mxu0
    %v4405 = vadd.f32 %v3865, %v4404
    %v4406 = vpop.f32.mrb[0].mxu0
    %4407 = vdwg.mxu0
    %4408 = vmatprep.subr.bf16.mxu0 0
    %4409 = vmatpush1.bf16.msra.mxu0 %v4159
    %4410 = vmatprep.subr.bf16.mxu0 0
    %4411 = vmatpush1.bf16.msra.mxu0 %v4162
    %4412 = vmatprep.subr.bf16.mxu0 0
    %4413 = vmatpush1.bf16.msra.mxu0 %v4165
    %4414 = vmatprep.subr.bf16.mxu0 0
    %4415 = vmatpush1.bf16.msra.mxu0 %v4168
    %4416 = vmatprep.subr.bf16.mxu0 0
    %4417 = vmatpush1.bf16.msra.mxu0 %v4171
    %4418 = vmatprep.subr.bf16.mxu0 0
    %4419 = vmatpush1.bf16.msra.mxu0 %v4174
    %4420 = vmatprep.subr.bf16.mxu0 0
    %4421 = vmatpush1.bf16.msra.mxu0 %v4177
    %4422 = vmatprep.subr.bf16.mxu0 0
    %4423 = vmatpush1.bf16.msra.mxu0 %v4180
    %4424 = vmatprep.subr.bf16.mxu0 0
    %4425 = vmatpush1.bf16.msra.mxu0 0
    %4426 = vmatprep.subr.bf16.mxu0 0
    %4427 = vmatpush1.bf16.msra.mxu0 0
    %4428 = vmatprep.subr.bf16.mxu0 0
    %4429 = vmatpush1.bf16.msra.mxu0 0
    %4430 = vmatprep.subr.bf16.mxu0 0
    %4431 = vmatpush1.bf16.msra.mxu0 0
    %4432 = vmatprep.subr.bf16.mxu0 0
    %4433 = vmatpush1.bf16.msra.mxu0 0
    %4434 = vmatprep.subr.bf16.mxu0 0
    %4435 = vmatpush1.bf16.msra.mxu0 0
    %4436 = vmatprep.subr.bf16.mxu0 0
    %4437 = vmatpush1.bf16.msra.mxu0 0
    %4438 = vmatprep.subr.bf16.mxu0 0
    %4439 = vmatpush1.bf16.msra.mxu0 0
    %4440 = vmatprep.mubr.bf16.mxu0 0
    %4441 = vmatmul.mubr.bf16.gmra.mrb[0].mxu0 %v3001
    %v4442 = vpop.f32.mrb[0].mxu0
    %v4443 = vadd.f32 %v4394, %v4442
    %v4444 = vpop.f32.mrb[0].mxu0
    %v4445 = vpop.f32.mrb[0].mxu0
    %v4446 = vadd.f32 %v4397, %v4445
    %v4447 = vpop.f32.mrb[0].mxu0
    %4448 = vmatprep.mubr.bf16.mxu0 0
    %4449 = vmatmul.mubr.bf16.gmra.mrb[0].mxu0 %v3754
    %v4450 = vpop.f32.mrb[0].mxu0
    %v4451 = vadd.f32 %v4402, %v4450
    %v4452 = vpop.f32.mrb[0].mxu0
    %v4453 = vpop.f32.mrb[0].mxu0
    %v4454 = vadd.f32 %v4405, %v4453
    %v4455 = vpop.f32.mrb[0].mxu0
    %4456 = vdwg.mxu0
    %v4457 = vld [vmem:[#allocation19] sm:$0x7]
    %v4458 = vld [vmem:[#allocation20] sm:$0x7]
    %v4459 = vadd.f32 %v4341, %v4343
    %v4460 = vadd.f32 %v4459, %v4443
    %4461 = vadd.xlane.f32.xlu0 %v4460
    %v4462 = vpop.xlane.xlu0 %4461
    %v4463 = vadd.f32 %v4345, %v4347
    %v4464 = vadd.f32 %v4463, %v4446
    %4465 = vadd.xlane.f32.xlu0 %v4464
    %v4466 = vpop.xlane.xlu0 %4465
    %v4467 = vadd.f32 %v4351, %v4353
    %v4468 = vadd.f32 %v4467, %v4451
    %4469 = vadd.xlane.f32.xlu0 %v4468
    %v4470 = vpop.xlane.xlu0 %4469
    %v4471 = vadd.f32 %v4355, %v4357
    %v4472 = vadd.f32 %v4471, %v4454
    %4473 = vadd.xlane.f32.xlu0 %v4472
    %v4474 = vpop.xlane.xlu0 %4473
    %v4475 = vmul.f32 %v4462, %v223
    %v4476 = vmul.f32 %v4466, %v223
    %v4477 = vmul.f32 %v4470, %v223
    %v4478 = vmul.f32 %v4474, %v223
    %v4479 = vsub.f32 %v4341, %v4475
    %v4480 = vsub.f32 %v4343, %v4475
    %v4481 = vsub.f32 %v4443, %v4475
    %v4482 = vsub.f32 %v4345, %v4476
    %v4483 = vsub.f32 %v4347, %v4476
    %v4484 = vsub.f32 %v4446, %v4476
    %v4485 = vsub.f32 %v4351, %v4477
    %v4486 = vsub.f32 %v4353, %v4477
    %v4487 = vsub.f32 %v4451, %v4477
    %v4488 = vsub.f32 %v4355, %v4478
    %v4489 = vsub.f32 %v4357, %v4478
    %v4490 = vsub.f32 %v4454, %v4478
    %v4491 = vmul.f32 %v4479, %v4479
    %v4492 = vmul.f32 %v4480, %v4480
    %v4493 = vmul.f32 %v4481, %v4481
    %v4494 = vmul.f32 %v4482, %v4482
    %v4495 = vmul.f32 %v4483, %v4483
    %v4496 = vmul.f32 %v4484, %v4484
    %v4497 = vmul.f32 %v4485, %v4485
    %v4498 = vmul.f32 %v4486, %v4486
    %v4499 = vmul.f32 %v4487, %v4487
    %v4500 = vmul.f32 %v4488, %v4488
    %v4501 = vmul.f32 %v4489, %v4489
    %v4502 = vmul.f32 %v4490, %v4490
    %v4503 = vadd.f32 %v4491, %v4492
    %v4504 = vadd.f32 %v4503, %v4493
    %4505 = vadd.xlane.f32.xlu0 %v4504
    %v4506 = vpop.xlane.xlu0 %4505
    %v4507 = vadd.f32 %v4494, %v4495
    %v4508 = vadd.f32 %v4507, %v4496
    %4509 = vadd.xlane.f32.xlu0 %v4508
    %v4510 = vpop.xlane.xlu0 %4509
    %v4511 = vadd.f32 %v4497, %v4498
    %v4512 = vadd.f32 %v4511, %v4499
    %4513 = vadd.xlane.f32.xlu0 %v4512
    %v4514 = vpop.xlane.xlu0 %4513
    %v4515 = vadd.f32 %v4500, %v4501
    %v4516 = vadd.f32 %v4515, %v4502
    %4517 = vadd.xlane.f32.xlu0 %v4516
    %v4518 = vpop.xlane.xlu0 %4517
    %v4519 = vmul.f32 %v4506, %v223
    %v4520 = vmul.f32 %v4510, %v223
    %v4521 = vmul.f32 %v4514, %v223
    %v4522 = vmul.f32 %v4518, %v223
    %v4523 = vadd.f32 %v4519, 1e-05
    %v4524 = vadd.f32 %v4520, 1e-05
    %v4525 = vadd.f32 %v4521, 1e-05
    %v4526 = vadd.f32 %v4522, 1e-05
    %v4527 = vrsqrt.pop %v4523
    %v4528 = vrsqrt.pop %v4524
    %v4529 = vrsqrt.pop %v4525
    %v4530 = vrsqrt.pop %v4526
    %v4531 = vmul.f32 %v4479, %v4527
    %v4532 = vmul.f32 %v4480, %v4527
    %v4533 = vmul.f32 %v4481, %v4527
    %v4534 = vmul.f32 %v4482, %v4528
    %v4535 = vmul.f32 %v4483, %v4528
    %v4536 = vmul.f32 %v4484, %v4528
    %v4537 = vmul.f32 %v4485, %v4529
    %v4538 = vmul.f32 %v4486, %v4529
    %v4539 = vmul.f32 %v4487, %v4529
    %v4540 = vmul.f32 %v4488, %v4530
    %v4541 = vmul.f32 %v4489, %v4530
    %v4542 = vmul.f32 %v4490, %v4530
    %v4544 = vlaneseq
    %v4545 = vshrl.u32 %v4544, 7
    %v4546 = vsub.s32 0, %v4545
    %v4547 = vrot.slane %v4457, %v4546
    %v4548 = vlaneseq
    %v4549 = vshrl.u32 %v4548, 7
    %v4550 = vsub.s32 1, %v4549
    %v4551 = vrot.slane %v4457, %v4550
    %v4552 = vlaneseq
    %v4553 = vshrl.u32 %v4552, 7
    %v4554 = vsub.s32 2, %v4553
    %v4555 = vrot.slane %v4457, %v4554
    %v4559 = vmul.f32 %v4531, %v4547
    %v4560 = vmul.f32 %v4532, %v4551
    %v4561 = vmul.f32 %v4533, %v4555
    %v4562 = vmul.f32 %v4534, %v4547
    %v4563 = vmul.f32 %v4535, %v4551
    %v4564 = vmul.f32 %v4536, %v4555
    %v4565 = vmul.f32 %v4537, %v4547
    %v4566 = vmul.f32 %v4538, %v4551
    %v4567 = vmul.f32 %v4539, %v4555
    %v4568 = vmul.f32 %v4540, %v4547
    %v4569 = vmul.f32 %v4541, %v4551
    %v4570 = vmul.f32 %v4542, %v4555
    %v4572 = vlaneseq
    %v4573 = vshrl.u32 %v4572, 7
    %v4574 = vsub.s32 0, %v4573
    %v4575 = vrot.slane %v4458, %v4574
    %v4576 = vlaneseq
    %v4577 = vshrl.u32 %v4576, 7
    %v4578 = vsub.s32 1, %v4577
    %v4579 = vrot.slane %v4458, %v4578
    %v4580 = vlaneseq
    %v4581 = vshrl.u32 %v4580, 7
    %v4582 = vsub.s32 2, %v4581
    %v4583 = vrot.slane %v4458, %v4582
    %v4587 = vadd.f32 %v4559, %v4575
    %v4588 = vadd.f32 %v4560, %v4579
    %v4589 = vadd.f32 %v4561, %v4583
    %v4590 = vadd.f32 %v4562, %v4575
    %v4591 = vadd.f32 %v4563, %v4579
    %v4592 = vadd.f32 %v4564, %v4583
    %v4593 = vadd.f32 %v4565, %v4575
    %v4594 = vadd.f32 %v4566, %v4579
    %v4595 = vadd.f32 %v4567, %v4583
    %v4596 = vadd.f32 %v4568, %v4575
    %v4597 = vadd.f32 %v4569, %v4579
    %v4598 = vadd.f32 %v4570, %v4583
    %v4599 = vpack.c.bf16 %v4590, %v4587
    %v4600 = vpack.c.bf16 %v4591, %v4588
    %v4601 = vpack.c.bf16 %v4592, %v4589
    %v4602 = vpack.c.bf16 %v4596, %v4593
    %v4603 = vpack.c.bf16 %v4597, %v4594
    %v4604 = vpack.c.bf16 %v4598, %v4595
    %v4605 = vld [vmem:[#allocation10] sm:$0xff]
    %v4606 = vld [vmem:[#allocation10 + $0x8] sm:$0xff]
    %v4607 = vld [vmem:[#allocation10 + $0x10] sm:$0xff]
    %v4608 = vld [vmem:[#allocation10 + $0x18] sm:$0xff]
    %v4609 = vld [vmem:[#allocation10 + $0x20] sm:$0xff]
    %v4610 = vld [vmem:[#allocation10 + $0x28] sm:$0xff]
    %v4611 = vld [vmem:[#allocation10 + $0x30] sm:$0xff]
    %v4612 = vld [vmem:[#allocation10 + $0x38] sm:$0xff]
    %v4613 = vld [vmem:[#allocation10 + $0x40] sm:$0xff]
    %v4614 = vld [vmem:[#allocation10 + $0x48] sm:$0xff]
    %v4615 = vld [vmem:[#allocation10 + $0x50] sm:$0xff]
    %v4616 = vld [vmem:[#allocation10 + $0x58] sm:$0xff]
    %v4617 = vld [vmem:[#allocation10 + $0x60] sm:$0xff]
    %v4618 = vld [vmem:[#allocation10 + $0x68] sm:$0xff]
    %v4619 = vld [vmem:[#allocation10 + $0x70] sm:$0xff]
    %v4620 = vld [vmem:[#allocation10 + $0x78] sm:$0xff]
    %v4621 = vld [vmem:[#allocation10 + $0x80] sm:$0xff]
    %v4622 = vld [vmem:[#allocation10 + $0x88] sm:$0xff]
    %v4623 = vld [vmem:[#allocation10 + $0x90] sm:$0xff]
    %v4624 = vld [vmem:[#allocation10 + $0x98] sm:$0xff]
    %v4625 = vld [vmem:[#allocation10 + $0xa0] sm:$0xff]
    %v4626 = vld [vmem:[#allocation10 + $0xa8] sm:$0xff]
    %v4627 = vld [vmem:[#allocation10 + $0xb0] sm:$0xff]
    %v4628 = vld [vmem:[#allocation10 + $0xb8] sm:$0xff]
    %v4629 = vld [vmem:[#allocation10 + $0xc0] sm:$0xff]
    %v4630 = vld [vmem:[#allocation10 + $0xc8] sm:$0xff]
    %v4631 = vld [vmem:[#allocation10 + $0xd0] sm:$0xff]
    %v4632 = vld [vmem:[#allocation10 + $0xd8] sm:$0xff]
    %v4633 = vld [vmem:[#allocation10 + $0xe0] sm:$0xff]
    %v4634 = vld [vmem:[#allocation10 + $0xe8] sm:$0xff]
    %v4635 = vld [vmem:[#allocation10 + $0xf0] sm:$0xff]
    %v4636 = vld [vmem:[#allocation10 + $0xf8] sm:$0xff]
    %v4637 = vld [vmem:[#allocation10 + $0x100] sm:$0xff]
    %v4638 = vld [vmem:[#allocation10 + $0x108] sm:$0xff]
    %v4639 = vld [vmem:[#allocation10 + $0x110] sm:$0xff]
    %v4640 = vld [vmem:[#allocation10 + $0x118] sm:$0xff]
    %v4641 = vld [vmem:[#allocation10 + $0x120] sm:$0xff]
    %v4642 = vld [vmem:[#allocation10 + $0x128] sm:$0xff]
    %v4643 = vld [vmem:[#allocation10 + $0x130] sm:$0xff]
    %v4644 = vld [vmem:[#allocation10 + $0x138] sm:$0xff]
    %v4645 = vld [vmem:[#allocation10 + $0x140] sm:$0xff]
    %v4646 = vld [vmem:[#allocation10 + $0x148] sm:$0xff]
    %v4647 = vld [vmem:[#allocation10 + $0x150] sm:$0xff]
    %v4648 = vld [vmem:[#allocation10 + $0x158] sm:$0xff]
    %v4649 = vld [vmem:[#allocation10 + $0x160] sm:$0xff]
    %v4650 = vld [vmem:[#allocation10 + $0x168] sm:$0xff]
    %v4651 = vld [vmem:[#allocation10 + $0x170] sm:$0xff]
    %v4652 = vld [vmem:[#allocation10 + $0x178] sm:$0xff]
    %v4653 = vld [vmem:[#allocation10 + $0x180] sm:$0xff]
    %v4654 = vld [vmem:[#allocation10 + $0x188] sm:$0xff]
    %v4655 = vld [vmem:[#allocation10 + $0x190] sm:$0xff]
    %v4656 = vld [vmem:[#allocation10 + $0x198] sm:$0xff]
    %v4657 = vld [vmem:[#allocation10 + $0x1a0] sm:$0xff]
    %v4658 = vld [vmem:[#allocation10 + $0x1a8] sm:$0xff]
    %v4659 = vld [vmem:[#allocation10 + $0x1b0] sm:$0xff]
    %v4660 = vld [vmem:[#allocation10 + $0x1b8] sm:$0xff]
    %v4661 = vld [vmem:[#allocation10 + $0x1c0] sm:$0xff]
    %v4662 = vld [vmem:[#allocation10 + $0x1c8] sm:$0xff]
    %v4663 = vld [vmem:[#allocation10 + $0x1d0] sm:$0xff]
    %v4664 = vld [vmem:[#allocation10 + $0x1d8] sm:$0xff]
    %v4665 = vld [vmem:[#allocation10 + $0x1e0] sm:$0xff]
    %v4666 = vld [vmem:[#allocation10 + $0x1e8] sm:$0xff]
    %v4667 = vld [vmem:[#allocation10 + $0x1f0] sm:$0xff]
    %v4668 = vld [vmem:[#allocation10 + $0x1f8] sm:$0xff]
    %v4669 = vld [vmem:[#allocation10 + $0x200] sm:$0xff]
    %v4670 = vld [vmem:[#allocation10 + $0x208] sm:$0xff]
    %v4671 = vld [vmem:[#allocation10 + $0x210] sm:$0xff]
    %v4672 = vld [vmem:[#allocation10 + $0x218] sm:$0xff]
    %v4673 = vld [vmem:[#allocation10 + $0x220] sm:$0xff]
    %v4674 = vld [vmem:[#allocation10 + $0x228] sm:$0xff]
    %v4675 = vld [vmem:[#allocation10 + $0x230] sm:$0xff]
    %v4676 = vld [vmem:[#allocation10 + $0x238] sm:$0xff]
    %v4677 = vld [vmem:[#allocation10 + $0x240] sm:$0xff]
    %v4678 = vld [vmem:[#allocation10 + $0x248] sm:$0xff]
    %v4679 = vld [vmem:[#allocation10 + $0x250] sm:$0xff]
    %v4680 = vld [vmem:[#allocation10 + $0x258] sm:$0xff]
    %v4681 = vld [vmem:[#allocation10 + $0x260] sm:$0xff]
    %v4682 = vld [vmem:[#allocation10 + $0x268] sm:$0xff]
    %v4683 = vld [vmem:[#allocation10 + $0x270] sm:$0xff]
    %v4684 = vld [vmem:[#allocation10 + $0x278] sm:$0xff]
    %v4685 = vld [vmem:[#allocation10 + $0x280] sm:$0xff]
    %v4686 = vld [vmem:[#allocation10 + $0x288] sm:$0xff]
    %v4687 = vld [vmem:[#allocation10 + $0x290] sm:$0xff]
    %v4688 = vld [vmem:[#allocation10 + $0x298] sm:$0xff]
    %v4689 = vld [vmem:[#allocation10 + $0x2a0] sm:$0xff]
    %v4690 = vld [vmem:[#allocation10 + $0x2a8] sm:$0xff]
    %v4691 = vld [vmem:[#allocation10 + $0x2b0] sm:$0xff]
    %v4692 = vld [vmem:[#allocation10 + $0x2b8] sm:$0xff]
    %v4693 = vld [vmem:[#allocation10 + $0x2c0] sm:$0xff]
    %v4694 = vld [vmem:[#allocation10 + $0x2c8] sm:$0xff]
    %v4695 = vld [vmem:[#allocation10 + $0x2d0] sm:$0xff]
    %v4696 = vld [vmem:[#allocation10 + $0x2d8] sm:$0xff]
    %v4697 = vld [vmem:[#allocation10 + $0x2e0] sm:$0xff]
    %v4698 = vld [vmem:[#allocation10 + $0x2e8] sm:$0xff]
    %v4699 = vld [vmem:[#allocation10 + $0x2f0] sm:$0xff]
    %v4700 = vld [vmem:[#allocation10 + $0x2f8] sm:$0xff]
    %v4701 = vld [vmem:[#allocation10 + $0x300] sm:$0xff]
    %v4702 = vld [vmem:[#allocation10 + $0x308] sm:$0xff]
    %v4703 = vld [vmem:[#allocation10 + $0x310] sm:$0xff]
    %v4704 = vld [vmem:[#allocation10 + $0x318] sm:$0xff]
    %v4705 = vld [vmem:[#allocation10 + $0x320] sm:$0xff]
    %v4706 = vld [vmem:[#allocation10 + $0x328] sm:$0xff]
    %v4707 = vld [vmem:[#allocation10 + $0x330] sm:$0xff]
    %v4708 = vld [vmem:[#allocation10 + $0x338] sm:$0xff]
    %v4709 = vld [vmem:[#allocation10 + $0x340] sm:$0xff]
    %v4710 = vld [vmem:[#allocation10 + $0x348] sm:$0xff]
    %v4711 = vld [vmem:[#allocation10 + $0x350] sm:$0xff]
    %v4712 = vld [vmem:[#allocation10 + $0x358] sm:$0xff]
    %v4713 = vld [vmem:[#allocation10 + $0x360] sm:$0xff]
    %v4714 = vld [vmem:[#allocation10 + $0x368] sm:$0xff]
    %v4715 = vld [vmem:[#allocation10 + $0x370] sm:$0xff]
    %v4716 = vld [vmem:[#allocation10 + $0x378] sm:$0xff]
    %v4717 = vld [vmem:[#allocation10 + $0x380] sm:$0xff]
    %v4718 = vld [vmem:[#allocation10 + $0x388] sm:$0xff]
    %v4719 = vld [vmem:[#allocation10 + $0x390] sm:$0xff]
    %v4720 = vld [vmem:[#allocation10 + $0x398] sm:$0xff]
    %v4721 = vld [vmem:[#allocation10 + $0x3a0] sm:$0xff]
    %v4722 = vld [vmem:[#allocation10 + $0x3a8] sm:$0xff]
    %v4723 = vld [vmem:[#allocation10 + $0x3b0] sm:$0xff]
    %v4724 = vld [vmem:[#allocation10 + $0x3b8] sm:$0xff]
    %v4725 = vld [vmem:[#allocation10 + $0x3c0] sm:$0xff]
    %v4726 = vld [vmem:[#allocation10 + $0x3c8] sm:$0xff]
    %v4727 = vld [vmem:[#allocation10 + $0x3d0] sm:$0xff]
    %v4728 = vld [vmem:[#allocation10 + $0x3d8] sm:$0xff]
    %v4729 = vld [vmem:[#allocation10 + $0x3e0] sm:$0xff]
    %v4730 = vld [vmem:[#allocation10 + $0x3e8] sm:$0xff]
    %v4731 = vld [vmem:[#allocation10 + $0x3f0] sm:$0xff]
    %v4732 = vld [vmem:[#allocation10 + $0x3f8] sm:$0xff]
    %v4733 = vld [vmem:[#allocation10 + $0x400] sm:$0xff]
    %v4734 = vld [vmem:[#allocation10 + $0x408] sm:$0xff]
    %v4735 = vld [vmem:[#allocation10 + $0x410] sm:$0xff]
    %v4736 = vld [vmem:[#allocation10 + $0x418] sm:$0xff]
    %v4737 = vld [vmem:[#allocation10 + $0x420] sm:$0xff]
    %v4738 = vld [vmem:[#allocation10 + $0x428] sm:$0xff]
    %v4739 = vld [vmem:[#allocation10 + $0x430] sm:$0xff]
    %v4740 = vld [vmem:[#allocation10 + $0x438] sm:$0xff]
    %v4741 = vld [vmem:[#allocation10 + $0x440] sm:$0xff]
    %v4742 = vld [vmem:[#allocation10 + $0x448] sm:$0xff]
    %v4743 = vld [vmem:[#allocation10 + $0x450] sm:$0xff]
    %v4744 = vld [vmem:[#allocation10 + $0x458] sm:$0xff]
    %v4745 = vld [vmem:[#allocation10 + $0x460] sm:$0xff]
    %v4746 = vld [vmem:[#allocation10 + $0x468] sm:$0xff]
    %v4747 = vld [vmem:[#allocation10 + $0x470] sm:$0xff]
    %v4748 = vld [vmem:[#allocation10 + $0x478] sm:$0xff]
    %v4749 = vld [vmem:[#allocation10 + $0x480] sm:$0xff]
    %v4750 = vld [vmem:[#allocation10 + $0x488] sm:$0xff]
    %v4751 = vld [vmem:[#allocation10 + $0x490] sm:$0xff]
    %v4752 = vld [vmem:[#allocation10 + $0x498] sm:$0xff]
    %v4753 = vld [vmem:[#allocation10 + $0x4a0] sm:$0xff]
    %v4754 = vld [vmem:[#allocation10 + $0x4a8] sm:$0xff]
    %v4755 = vld [vmem:[#allocation10 + $0x4b0] sm:$0xff]
    %v4756 = vld [vmem:[#allocation10 + $0x4b8] sm:$0xff]
    %v4757 = vld [vmem:[#allocation10 + $0x4c0] sm:$0xff]
    %v4758 = vld [vmem:[#allocation10 + $0x4c8] sm:$0xff]
    %v4759 = vld [vmem:[#allocation10 + $0x4d0] sm:$0xff]
    %v4760 = vld [vmem:[#allocation10 + $0x4d8] sm:$0xff]
    %v4761 = vld [vmem:[#allocation10 + $0x4e0] sm:$0xff]
    %v4762 = vld [vmem:[#allocation10 + $0x4e8] sm:$0xff]
    %v4763 = vld [vmem:[#allocation10 + $0x4f0] sm:$0xff]
    %v4764 = vld [vmem:[#allocation10 + $0x4f8] sm:$0xff]
    %v4765 = vld [vmem:[#allocation10 + $0x500] sm:$0xff]
    %v4766 = vld [vmem:[#allocation10 + $0x508] sm:$0xff]
    %v4767 = vld [vmem:[#allocation10 + $0x510] sm:$0xff]
    %v4768 = vld [vmem:[#allocation10 + $0x518] sm:$0xff]
    %v4769 = vld [vmem:[#allocation10 + $0x520] sm:$0xff]
    %v4770 = vld [vmem:[#allocation10 + $0x528] sm:$0xff]
    %v4771 = vld [vmem:[#allocation10 + $0x530] sm:$0xff]
    %v4772 = vld [vmem:[#allocation10 + $0x538] sm:$0xff]
    %v4773 = vld [vmem:[#allocation10 + $0x540] sm:$0xff]
    %v4774 = vld [vmem:[#allocation10 + $0x548] sm:$0xff]
    %v4775 = vld [vmem:[#allocation10 + $0x550] sm:$0xff]
    %v4776 = vld [vmem:[#allocation10 + $0x558] sm:$0xff]
    %v4777 = vld [vmem:[#allocation10 + $0x560] sm:$0xff]
    %v4778 = vld [vmem:[#allocation10 + $0x568] sm:$0xff]
    %v4779 = vld [vmem:[#allocation10 + $0x570] sm:$0xff]
    %v4780 = vld [vmem:[#allocation10 + $0x578] sm:$0xff]
    %v4781 = vld [vmem:[#allocation10 + $0x580] sm:$0xff]
    %v4782 = vld [vmem:[#allocation10 + $0x588] sm:$0xff]
    %v4783 = vld [vmem:[#allocation10 + $0x590] sm:$0xff]
    %v4784 = vld [vmem:[#allocation10 + $0x598] sm:$0xff]
    %v4785 = vld [vmem:[#allocation10 + $0x5a0] sm:$0xff]
    %v4786 = vld [vmem:[#allocation10 + $0x5a8] sm:$0xff]
    %v4787 = vld [vmem:[#allocation10 + $0x5b0] sm:$0xff]
    %v4788 = vld [vmem:[#allocation10 + $0x5b8] sm:$0xff]
    %v4789 = vld [vmem:[#allocation10 + $0x5c0] sm:$0xff]
    %v4790 = vld [vmem:[#allocation10 + $0x5c8] sm:$0xff]
    %v4791 = vld [vmem:[#allocation10 + $0x5d0] sm:$0xff]
    %v4792 = vld [vmem:[#allocation10 + $0x5d8] sm:$0xff]
    %v4793 = vld [vmem:[#allocation10 + $0x5e0] sm:$0xff]
    %v4794 = vld [vmem:[#allocation10 + $0x5e8] sm:$0xff]
    %v4795 = vld [vmem:[#allocation10 + $0x5f0] sm:$0xff]
    %v4796 = vld [vmem:[#allocation10 + $0x5f8] sm:$0xff]
    %v4797 = vld [vmem:[#allocation10 + $0x600] sm:$0xff]
    %v4798 = vld [vmem:[#allocation10 + $0x608] sm:$0xff]
    %v4799 = vld [vmem:[#allocation10 + $0x610] sm:$0xff]
    %v4800 = vld [vmem:[#allocation10 + $0x618] sm:$0xff]
    %v4801 = vld [vmem:[#allocation10 + $0x620] sm:$0xff]
    %v4802 = vld [vmem:[#allocation10 + $0x628] sm:$0xff]
    %v4803 = vld [vmem:[#allocation10 + $0x630] sm:$0xff]
    %v4804 = vld [vmem:[#allocation10 + $0x638] sm:$0xff]
    %v4805 = vld [vmem:[#allocation10 + $0x640] sm:$0xff]
    %v4806 = vld [vmem:[#allocation10 + $0x648] sm:$0xff]
    %v4807 = vld [vmem:[#allocation10 + $0x650] sm:$0xff]
    %v4808 = vld [vmem:[#allocation10 + $0x658] sm:$0xff]
    %v4809 = vld [vmem:[#allocation10 + $0x660] sm:$0xff]
    %v4810 = vld [vmem:[#allocation10 + $0x668] sm:$0xff]
    %v4811 = vld [vmem:[#allocation10 + $0x670] sm:$0xff]
    %v4812 = vld [vmem:[#allocation10 + $0x678] sm:$0xff]
    %v4813 = vld [vmem:[#allocation10 + $0x680] sm:$0xff]
    %v4814 = vld [vmem:[#allocation10 + $0x688] sm:$0xff]
    %v4815 = vld [vmem:[#allocation10 + $0x690] sm:$0xff]
    %v4816 = vld [vmem:[#allocation10 + $0x698] sm:$0xff]
    %v4817 = vld [vmem:[#allocation10 + $0x6a0] sm:$0xff]
    %v4818 = vld [vmem:[#allocation10 + $0x6a8] sm:$0xff]
    %v4819 = vld [vmem:[#allocation10 + $0x6b0] sm:$0xff]
    %v4820 = vld [vmem:[#allocation10 + $0x6b8] sm:$0xff]
    %v4821 = vld [vmem:[#allocation10 + $0x6c0] sm:$0xff]
    %v4822 = vld [vmem:[#allocation10 + $0x6c8] sm:$0xff]
    %v4823 = vld [vmem:[#allocation10 + $0x6d0] sm:$0xff]
    %v4824 = vld [vmem:[#allocation10 + $0x6d8] sm:$0xff]
    %v4825 = vld [vmem:[#allocation10 + $0x6e0] sm:$0xff]
    %v4826 = vld [vmem:[#allocation10 + $0x6e8] sm:$0xff]
    %v4827 = vld [vmem:[#allocation10 + $0x6f0] sm:$0xff]
    %v4828 = vld [vmem:[#allocation10 + $0x6f8] sm:$0xff]
    %v4829 = vld [vmem:[#allocation10 + $0x700] sm:$0xff]
    %v4830 = vld [vmem:[#allocation10 + $0x708] sm:$0xff]
    %v4831 = vld [vmem:[#allocation10 + $0x710] sm:$0xff]
    %v4832 = vld [vmem:[#allocation10 + $0x718] sm:$0xff]
    %v4833 = vld [vmem:[#allocation10 + $0x720] sm:$0xff]
    %v4834 = vld [vmem:[#allocation10 + $0x728] sm:$0xff]
    %v4835 = vld [vmem:[#allocation10 + $0x730] sm:$0xff]
    %v4836 = vld [vmem:[#allocation10 + $0x738] sm:$0xff]
    %v4837 = vld [vmem:[#allocation10 + $0x740] sm:$0xff]
    %v4838 = vld [vmem:[#allocation10 + $0x748] sm:$0xff]
    %v4839 = vld [vmem:[#allocation10 + $0x750] sm:$0xff]
    %v4840 = vld [vmem:[#allocation10 + $0x758] sm:$0xff]
    %v4841 = vld [vmem:[#allocation10 + $0x760] sm:$0xff]
    %v4842 = vld [vmem:[#allocation10 + $0x768] sm:$0xff]
    %v4843 = vld [vmem:[#allocation10 + $0x770] sm:$0xff]
    %v4844 = vld [vmem:[#allocation10 + $0x778] sm:$0xff]
    %v4845 = vld [vmem:[#allocation10 + $0x780] sm:$0xff]
    %v4846 = vld [vmem:[#allocation10 + $0x788] sm:$0xff]
    %v4847 = vld [vmem:[#allocation10 + $0x790] sm:$0xff]
    %v4848 = vld [vmem:[#allocation10 + $0x798] sm:$0xff]
    %v4849 = vld [vmem:[#allocation10 + $0x7a0] sm:$0xff]
    %v4850 = vld [vmem:[#allocation10 + $0x7a8] sm:$0xff]
    %v4851 = vld [vmem:[#allocation10 + $0x7b0] sm:$0xff]
    %v4852 = vld [vmem:[#allocation10 + $0x7b8] sm:$0xff]
    %v4853 = vld [vmem:[#allocation10 + $0x7c0] sm:$0xff]
    %v4854 = vld [vmem:[#allocation10 + $0x7c8] sm:$0xff]
    %v4855 = vld [vmem:[#allocation10 + $0x7d0] sm:$0xff]
    %v4856 = vld [vmem:[#allocation10 + $0x7d8] sm:$0xff]
    %v4857 = vld [vmem:[#allocation10 + $0x7e0] sm:$0xff]
    %v4858 = vld [vmem:[#allocation10 + $0x7e8] sm:$0xff]
    %v4859 = vld [vmem:[#allocation10 + $0x7f0] sm:$0xff]
    %v4860 = vld [vmem:[#allocation10 + $0x7f8] sm:$0xff]
    %v4861 = vld [vmem:[#allocation10 + $0x800] sm:$0xff]
    %v4862 = vld [vmem:[#allocation10 + $0x808] sm:$0xff]
    %v4863 = vld [vmem:[#allocation10 + $0x810] sm:$0xff]
    %v4864 = vld [vmem:[#allocation10 + $0x818] sm:$0xff]
    %v4865 = vld [vmem:[#allocation10 + $0x820] sm:$0xff]
    %v4866 = vld [vmem:[#allocation10 + $0x828] sm:$0xff]
    %v4867 = vld [vmem:[#allocation10 + $0x830] sm:$0xff]
    %v4868 = vld [vmem:[#allocation10 + $0x838] sm:$0xff]
    %v4869 = vld [vmem:[#allocation10 + $0x840] sm:$0xff]
    %v4870 = vld [vmem:[#allocation10 + $0x848] sm:$0xff]
    %v4871 = vld [vmem:[#allocation10 + $0x850] sm:$0xff]
    %v4872 = vld [vmem:[#allocation10 + $0x858] sm:$0xff]
    %v4873 = vld [vmem:[#allocation10 + $0x860] sm:$0xff]
    %v4874 = vld [vmem:[#allocation10 + $0x868] sm:$0xff]
    %v4875 = vld [vmem:[#allocation10 + $0x870] sm:$0xff]
    %v4876 = vld [vmem:[#allocation10 + $0x878] sm:$0xff]
    %v4877 = vld [vmem:[#allocation10 + $0x880] sm:$0xff]
    %v4878 = vld [vmem:[#allocation10 + $0x888] sm:$0xff]
    %v4879 = vld [vmem:[#allocation10 + $0x890] sm:$0xff]
    %v4880 = vld [vmem:[#allocation10 + $0x898] sm:$0xff]
    %v4881 = vld [vmem:[#allocation10 + $0x8a0] sm:$0xff]
    %v4882 = vld [vmem:[#allocation10 + $0x8a8] sm:$0xff]
    %v4883 = vld [vmem:[#allocation10 + $0x8b0] sm:$0xff]
    %v4884 = vld [vmem:[#allocation10 + $0x8b8] sm:$0xff]
    %v4885 = vld [vmem:[#allocation10 + $0x8c0] sm:$0xff]
    %v4886 = vld [vmem:[#allocation10 + $0x8c8] sm:$0xff]
    %v4887 = vld [vmem:[#allocation10 + $0x8d0] sm:$0xff]
    %v4888 = vld [vmem:[#allocation10 + $0x8d8] sm:$0xff]
    %v4889 = vld [vmem:[#allocation10 + $0x8e0] sm:$0xff]
    %v4890 = vld [vmem:[#allocation10 + $0x8e8] sm:$0xff]
    %v4891 = vld [vmem:[#allocation10 + $0x8f0] sm:$0xff]
    %v4892 = vld [vmem:[#allocation10 + $0x8f8] sm:$0xff]
    %v4893 = vld [vmem:[#allocation11] sm:$0xff]
    %v4894 = vld [vmem:[#allocation11 + $0x8] sm:$0xf]
    %v4897 = vlaneseq
    %v4898 = vshrl.u32 %v4897, 7
    %v4899 = vsub.s32 0, %v4898
    %v4900 = vrot.slane %v4893, %v4899
    %v4901 = vlaneseq
    %v4902 = vshrl.u32 %v4901, 7
    %v4903 = vsub.s32 1, %v4902
    %v4904 = vrot.slane %v4893, %v4903
    %v4905 = vlaneseq
    %v4906 = vshrl.u32 %v4905, 7
    %v4907 = vsub.s32 2, %v4906
    %v4908 = vrot.slane %v4893, %v4907
    %v4909 = vlaneseq
    %v4910 = vshrl.u32 %v4909, 7
    %v4911 = vsub.s32 3, %v4910
    %v4912 = vrot.slane %v4893, %v4911
    %v4913 = vlaneseq
    %v4914 = vshrl.u32 %v4913, 7
    %v4915 = vsub.s32 4, %v4914
    %v4916 = vrot.slane %v4893, %v4915
    %v4917 = vlaneseq
    %v4918 = vshrl.u32 %v4917, 7
    %v4919 = vsub.s32 5, %v4918
    %v4920 = vrot.slane %v4893, %v4919
    %v4921 = vlaneseq
    %v4922 = vshrl.u32 %v4921, 7
    %v4923 = vsub.s32 6, %v4922
    %v4924 = vrot.slane %v4893, %v4923
    %v4925 = vlaneseq
    %v4926 = vshrl.u32 %v4925, 7
    %v4927 = vsub.s32 7, %v4926
    %v4928 = vrot.slane %v4893, %v4927
    %v4929 = vlaneseq
    %v4930 = vshrl.u32 %v4929, 7
    %v4931 = vsub.s32 0, %v4930
    %v4932 = vrot.slane %v4894, %v4931
    %v4933 = vlaneseq
    %v4934 = vshrl.u32 %v4933, 7
    %v4935 = vsub.s32 1, %v4934
    %v4936 = vrot.slane %v4894, %v4935
    %v4937 = vlaneseq
    %v4938 = vshrl.u32 %v4937, 7
    %v4939 = vsub.s32 2, %v4938
    %v4940 = vrot.slane %v4894, %v4939
    %v4941 = vlaneseq
    %v4942 = vshrl.u32 %v4941, 7
    %v4943 = vsub.s32 3, %v4942
    %v4944 = vrot.slane %v4894, %v4943
    %v5245 = vunpack.c.l.b16 %v4605
    %v5246 = vunpack.c.h.b16 %v4605
    %v5247 = vunpack.c.l.b16 %v4606
    %v5248 = vunpack.c.h.b16 %v4606
    %v5249 = vunpack.c.l.b16 %v4607
    %v5250 = vunpack.c.h.b16 %v4607
    %v5251 = vunpack.c.l.b16 %v4608
    %v5252 = vunpack.c.h.b16 %v4608
    %v5253 = vunpack.c.l.b16 %v4609
    %v5254 = vunpack.c.h.b16 %v4609
    %v5255 = vunpack.c.l.b16 %v4610
    %v5256 = vunpack.c.h.b16 %v4610
    %v5257 = vunpack.c.l.b16 %v4611
    %v5258 = vunpack.c.h.b16 %v4611
    %v5259 = vunpack.c.l.b16 %v4612
    %v5260 = vunpack.c.h.b16 %v4612
    %v5261 = vunpack.c.l.b16 %v4613
    %v5262 = vunpack.c.h.b16 %v4613
    %v5263 = vunpack.c.l.b16 %v4614
    %v5264 = vunpack.c.h.b16 %v4614
    %v5265 = vunpack.c.l.b16 %v4615
    %v5266 = vunpack.c.h.b16 %v4615
    %v5267 = vunpack.c.l.b16 %v4616
    %v5268 = vunpack.c.h.b16 %v4616
    %v5269 = vunpack.c.l.b16 %v4617
    %v5270 = vunpack.c.h.b16 %v4617
    %v5271 = vunpack.c.l.b16 %v4618
    %v5272 = vunpack.c.h.b16 %v4618
    %v5273 = vunpack.c.l.b16 %v4619
    %v5274 = vunpack.c.h.b16 %v4619
    %v5275 = vunpack.c.l.b16 %v4620
    %v5276 = vunpack.c.h.b16 %v4620
    %v5277 = vunpack.c.l.b16 %v4621
    %v5278 = vunpack.c.h.b16 %v4621
    %v5279 = vunpack.c.l.b16 %v4622
    %v5280 = vunpack.c.h.b16 %v4622
    %v5281 = vunpack.c.l.b16 %v4623
    %v5282 = vunpack.c.h.b16 %v4623
    %v5283 = vunpack.c.l.b16 %v4624
    %v5284 = vunpack.c.h.b16 %v4624
    %v5285 = vunpack.c.l.b16 %v4625
    %v5286 = vunpack.c.h.b16 %v4625
    %v5287 = vunpack.c.l.b16 %v4626
    %v5288 = vunpack.c.h.b16 %v4626
    %v5289 = vunpack.c.l.b16 %v4627
    %v5290 = vunpack.c.h.b16 %v4627
    %v5291 = vunpack.c.l.b16 %v4628
    %v5292 = vunpack.c.h.b16 %v4628
    %v5293 = vunpack.c.l.b16 %v4629
    %v5294 = vunpack.c.h.b16 %v4629
    %v5295 = vunpack.c.l.b16 %v4630
    %v5296 = vunpack.c.h.b16 %v4630
    %v5297 = vunpack.c.l.b16 %v4631
    %v5298 = vunpack.c.h.b16 %v4631
    %v5299 = vunpack.c.l.b16 %v4632
    %v5300 = vunpack.c.h.b16 %v4632
    %v5301 = vunpack.c.l.b16 %v4633
    %v5302 = vunpack.c.h.b16 %v4633
    %v5303 = vunpack.c.l.b16 %v4634
    %v5304 = vunpack.c.h.b16 %v4634
    %v5305 = vunpack.c.l.b16 %v4635
    %v5306 = vunpack.c.h.b16 %v4635
    %v5307 = vunpack.c.l.b16 %v4636
    %v5308 = vunpack.c.h.b16 %v4636
    %v5309 = vunpack.c.l.b16 %v4637
    %v5310 = vunpack.c.h.b16 %v4637
    %v5311 = vunpack.c.l.b16 %v4638
    %v5312 = vunpack.c.h.b16 %v4638
    %v5313 = vunpack.c.l.b16 %v4639
    %v5314 = vunpack.c.h.b16 %v4639
    %v5315 = vunpack.c.l.b16 %v4640
    %v5316 = vunpack.c.h.b16 %v4640
    %v5317 = vunpack.c.l.b16 %v4641
    %v5318 = vunpack.c.h.b16 %v4641
    %v5319 = vunpack.c.l.b16 %v4642
    %v5320 = vunpack.c.h.b16 %v4642
    %v5321 = vunpack.c.l.b16 %v4643
    %v5322 = vunpack.c.h.b16 %v4643
    %v5323 = vunpack.c.l.b16 %v4644
    %v5324 = vunpack.c.h.b16 %v4644
    %v5325 = vunpack.c.l.b16 %v4645
    %v5326 = vunpack.c.h.b16 %v4645
    %v5327 = vunpack.c.l.b16 %v4646
    %v5328 = vunpack.c.h.b16 %v4646
    %v5329 = vunpack.c.l.b16 %v4647
    %v5330 = vunpack.c.h.b16 %v4647
    %v5331 = vunpack.c.l.b16 %v4648
    %v5332 = vunpack.c.h.b16 %v4648
    %v5333 = vunpack.c.l.b16 %v4649
    %v5334 = vunpack.c.h.b16 %v4649
    %v5335 = vunpack.c.l.b16 %v4650
    %v5336 = vunpack.c.h.b16 %v4650
    %v5337 = vunpack.c.l.b16 %v4651
    %v5338 = vunpack.c.h.b16 %v4651
    %v5339 = vunpack.c.l.b16 %v4652
    %v5340 = vunpack.c.h.b16 %v4652
    %v5341 = vunpack.c.l.b16 %v4653
    %v5342 = vunpack.c.h.b16 %v4653
    %v5343 = vunpack.c.l.b16 %v4654
    %v5344 = vunpack.c.h.b16 %v4654
    %v5345 = vunpack.c.l.b16 %v4655
    %v5346 = vunpack.c.h.b16 %v4655
    %v5347 = vunpack.c.l.b16 %v4656
    %v5348 = vunpack.c.h.b16 %v4656
    %v5349 = vunpack.c.l.b16 %v4657
    %v5350 = vunpack.c.h.b16 %v4657
    %v5351 = vunpack.c.l.b16 %v4658
    %v5352 = vunpack.c.h.b16 %v4658
    %v5353 = vunpack.c.l.b16 %v4659
    %v5354 = vunpack.c.h.b16 %v4659
    %v5355 = vunpack.c.l.b16 %v4660
    %v5356 = vunpack.c.h.b16 %v4660
    %v5357 = vunpack.c.l.b16 %v4661
    %v5358 = vunpack.c.h.b16 %v4661
    %v5359 = vunpack.c.l.b16 %v4662
    %v5360 = vunpack.c.h.b16 %v4662
    %v5361 = vunpack.c.l.b16 %v4663
    %v5362 = vunpack.c.h.b16 %v4663
    %v5363 = vunpack.c.l.b16 %v4664
    %v5364 = vunpack.c.h.b16 %v4664
    %v5365 = vunpack.c.l.b16 %v4665
    %v5366 = vunpack.c.h.b16 %v4665
    %v5367 = vunpack.c.l.b16 %v4666
    %v5368 = vunpack.c.h.b16 %v4666
    %v5369 = vunpack.c.l.b16 %v4667
    %v5370 = vunpack.c.h.b16 %v4667
    %v5371 = vunpack.c.l.b16 %v4668
    %v5372 = vunpack.c.h.b16 %v4668
    %v5373 = vunpack.c.l.b16 %v4669
    %v5374 = vunpack.c.h.b16 %v4669
    %v5375 = vunpack.c.l.b16 %v4670
    %v5376 = vunpack.c.h.b16 %v4670
    %v5377 = vunpack.c.l.b16 %v4671
    %v5378 = vunpack.c.h.b16 %v4671
    %v5379 = vunpack.c.l.b16 %v4672
    %v5380 = vunpack.c.h.b16 %v4672
    %v5381 = vunpack.c.l.b16 %v4673
    %v5382 = vunpack.c.h.b16 %v4673
    %v5383 = vunpack.c.l.b16 %v4674
    %v5384 = vunpack.c.h.b16 %v4674
    %v5385 = vunpack.c.l.b16 %v4675
    %v5386 = vunpack.c.h.b16 %v4675
    %v5387 = vunpack.c.l.b16 %v4676
    %v5388 = vunpack.c.h.b16 %v4676
    %v5389 = vunpack.c.l.b16 %v4677
    %v5390 = vunpack.c.h.b16 %v4677
    %v5391 = vunpack.c.l.b16 %v4678
    %v5392 = vunpack.c.h.b16 %v4678
    %v5393 = vunpack.c.l.b16 %v4679
    %v5394 = vunpack.c.h.b16 %v4679
    %v5395 = vunpack.c.l.b16 %v4680
    %v5396 = vunpack.c.h.b16 %v4680
    %v5397 = vunpack.c.l.b16 %v4681
    %v5398 = vunpack.c.h.b16 %v4681
    %v5399 = vunpack.c.l.b16 %v4682
    %v5400 = vunpack.c.h.b16 %v4682
    %v5401 = vunpack.c.l.b16 %v4683
    %v5402 = vunpack.c.h.b16 %v4683
    %v5403 = vunpack.c.l.b16 %v4684
    %v5404 = vunpack.c.h.b16 %v4684
    %v5405 = vunpack.c.l.b16 %v4685
    %v5406 = vunpack.c.h.b16 %v4685
    %v5407 = vunpack.c.l.b16 %v4686
    %v5408 = vunpack.c.h.b16 %v4686
    %v5409 = vunpack.c.l.b16 %v4687
    %v5410 = vunpack.c.h.b16 %v4687
    %v5411 = vunpack.c.l.b16 %v4688
    %v5412 = vunpack.c.h.b16 %v4688
    %v5413 = vunpack.c.l.b16 %v4689
    %v5414 = vunpack.c.h.b16 %v4689
    %v5415 = vunpack.c.l.b16 %v4690
    %v5416 = vunpack.c.h.b16 %v4690
    %v5417 = vunpack.c.l.b16 %v4691
    %v5418 = vunpack.c.h.b16 %v4691
    %v5419 = vunpack.c.l.b16 %v4692
    %v5420 = vunpack.c.h.b16 %v4692
    %v5421 = vunpack.c.l.b16 %v4693
    %v5422 = vunpack.c.h.b16 %v4693
    %v5423 = vunpack.c.l.b16 %v4694
    %v5424 = vunpack.c.h.b16 %v4694
    %v5425 = vunpack.c.l.b16 %v4695
    %v5426 = vunpack.c.h.b16 %v4695
    %v5427 = vunpack.c.l.b16 %v4696
    %v5428 = vunpack.c.h.b16 %v4696
    %v5429 = vunpack.c.l.b16 %v4697
    %v5430 = vunpack.c.h.b16 %v4697
    %v5431 = vunpack.c.l.b16 %v4698
    %v5432 = vunpack.c.h.b16 %v4698
    %v5433 = vunpack.c.l.b16 %v4699
    %v5434 = vunpack.c.h.b16 %v4699
    %v5435 = vunpack.c.l.b16 %v4700
    %v5436 = vunpack.c.h.b16 %v4700
    %v5437 = vunpack.c.l.b16 %v4701
    %v5438 = vunpack.c.h.b16 %v4701
    %v5439 = vunpack.c.l.b16 %v4702
    %v5440 = vunpack.c.h.b16 %v4702
    %v5441 = vunpack.c.l.b16 %v4703
    %v5442 = vunpack.c.h.b16 %v4703
    %v5443 = vunpack.c.l.b16 %v4704
    %v5444 = vunpack.c.h.b16 %v4704
    %v5445 = vunpack.c.l.b16 %v4705
    %v5446 = vunpack.c.h.b16 %v4705
    %v5447 = vunpack.c.l.b16 %v4706
    %v5448 = vunpack.c.h.b16 %v4706
    %v5449 = vunpack.c.l.b16 %v4707
    %v5450 = vunpack.c.h.b16 %v4707
    %v5451 = vunpack.c.l.b16 %v4708
    %v5452 = vunpack.c.h.b16 %v4708
    %v5453 = vunpack.c.l.b16 %v4709
    %v5454 = vunpack.c.h.b16 %v4709
    %v5455 = vunpack.c.l.b16 %v4710
    %v5456 = vunpack.c.h.b16 %v4710
    %v5457 = vunpack.c.l.b16 %v4711
    %v5458 = vunpack.c.h.b16 %v4711
    %v5459 = vunpack.c.l.b16 %v4712
    %v5460 = vunpack.c.h.b16 %v4712
    %v5461 = vunpack.c.l.b16 %v4713
    %v5462 = vunpack.c.h.b16 %v4713
    %v5463 = vunpack.c.l.b16 %v4714
    %v5464 = vunpack.c.h.b16 %v4714
    %v5465 = vunpack.c.l.b16 %v4715
    %v5466 = vunpack.c.h.b16 %v4715
    %v5467 = vunpack.c.l.b16 %v4716
    %v5468 = vunpack.c.h.b16 %v4716
    %v5469 = vunpack.c.l.b16 %v4717
    %v5470 = vunpack.c.h.b16 %v4717
    %v5471 = vunpack.c.l.b16 %v4718
    %v5472 = vunpack.c.h.b16 %v4718
    %v5473 = vunpack.c.l.b16 %v4719
    %v5474 = vunpack.c.h.b16 %v4719
    %v5475 = vunpack.c.l.b16 %v4720
    %v5476 = vunpack.c.h.b16 %v4720
    %v5477 = vunpack.c.l.b16 %v4721
    %v5478 = vunpack.c.h.b16 %v4721
    %v5479 = vunpack.c.l.b16 %v4722
    %v5480 = vunpack.c.h.b16 %v4722
    %v5481 = vunpack.c.l.b16 %v4723
    %v5482 = vunpack.c.h.b16 %v4723
    %v5483 = vunpack.c.l.b16 %v4724
    %v5484 = vunpack.c.h.b16 %v4724
    %v5485 = vunpack.c.l.b16 %v4725
    %v5486 = vunpack.c.h.b16 %v4725
    %v5487 = vunpack.c.l.b16 %v4726
    %v5488 = vunpack.c.h.b16 %v4726
    %v5489 = vunpack.c.l.b16 %v4727
    %v5490 = vunpack.c.h.b16 %v4727
    %v5491 = vunpack.c.l.b16 %v4728
    %v5492 = vunpack.c.h.b16 %v4728
    %v5493 = vunpack.c.l.b16 %v4729
    %v5494 = vunpack.c.h.b16 %v4729
    %v5495 = vunpack.c.l.b16 %v4730
    %v5496 = vunpack.c.h.b16 %v4730
    %v5497 = vunpack.c.l.b16 %v4731
    %v5498 = vunpack.c.h.b16 %v4731
    %v5499 = vunpack.c.l.b16 %v4732
    %v5500 = vunpack.c.h.b16 %v4732
    %v5501 = vunpack.c.l.b16 %v4733
    %v5502 = vunpack.c.h.b16 %v4733
    %v5503 = vunpack.c.l.b16 %v4734
    %v5504 = vunpack.c.h.b16 %v4734
    %v5505 = vunpack.c.l.b16 %v4735
    %v5506 = vunpack.c.h.b16 %v4735
    %v5507 = vunpack.c.l.b16 %v4736
    %v5508 = vunpack.c.h.b16 %v4736
    %v5509 = vunpack.c.l.b16 %v4737
    %v5510 = vunpack.c.h.b16 %v4737
    %v5511 = vunpack.c.l.b16 %v4738
    %v5512 = vunpack.c.h.b16 %v4738
    %v5513 = vunpack.c.l.b16 %v4739
    %v5514 = vunpack.c.h.b16 %v4739
    %v5515 = vunpack.c.l.b16 %v4740
    %v5516 = vunpack.c.h.b16 %v4740
    %v5517 = vunpack.c.l.b16 %v4741
    %v5518 = vunpack.c.h.b16 %v4741
    %v5519 = vunpack.c.l.b16 %v4742
    %v5520 = vunpack.c.h.b16 %v4742
    %v5521 = vunpack.c.l.b16 %v4743
    %v5522 = vunpack.c.h.b16 %v4743
    %v5523 = vunpack.c.l.b16 %v4744
    %v5524 = vunpack.c.h.b16 %v4744
    %v5525 = vunpack.c.l.b16 %v4745
    %v5526 = vunpack.c.h.b16 %v4745
    %v5527 = vunpack.c.l.b16 %v4746
    %v5528 = vunpack.c.h.b16 %v4746
    %v5529 = vunpack.c.l.b16 %v4747
    %v5530 = vunpack.c.h.b16 %v4747
    %v5531 = vunpack.c.l.b16 %v4748
    %v5532 = vunpack.c.h.b16 %v4748
    %v5533 = vunpack.c.l.b16 %v4749
    %v5534 = vunpack.c.h.b16 %v4749
    %v5535 = vunpack.c.l.b16 %v4750
    %v5536 = vunpack.c.h.b16 %v4750
    %v5537 = vunpack.c.l.b16 %v4751
    %v5538 = vunpack.c.h.b16 %v4751
    %v5539 = vunpack.c.l.b16 %v4752
    %v5540 = vunpack.c.h.b16 %v4752
    %v5541 = vunpack.c.l.b16 %v4753
    %v5542 = vunpack.c.h.b16 %v4753
    %v5543 = vunpack.c.l.b16 %v4754
    %v5544 = vunpack.c.h.b16 %v4754
    %v5545 = vunpack.c.l.b16 %v4755
    %v5546 = vunpack.c.h.b16 %v4755
    %v5547 = vunpack.c.l.b16 %v4756
    %v5548 = vunpack.c.h.b16 %v4756
    %v5549 = vunpack.c.l.b16 %v4757
    %v5550 = vunpack.c.h.b16 %v4757
    %v5551 = vunpack.c.l.b16 %v4758
    %v5552 = vunpack.c.h.b16 %v4758
    %v5553 = vunpack.c.l.b16 %v4759
    %v5554 = vunpack.c.h.b16 %v4759
    %v5555 = vunpack.c.l.b16 %v4760
    %v5556 = vunpack.c.h.b16 %v4760
    %v5557 = vunpack.c.l.b16 %v4761
    %v5558 = vunpack.c.h.b16 %v4761
    %v5559 = vunpack.c.l.b16 %v4762
    %v5560 = vunpack.c.h.b16 %v4762
    %v5561 = vunpack.c.l.b16 %v4763
    %v5562 = vunpack.c.h.b16 %v4763
    %v5563 = vunpack.c.l.b16 %v4764
    %v5564 = vunpack.c.h.b16 %v4764
    %v5565 = vunpack.c.l.b16 %v4765
    %v5566 = vunpack.c.h.b16 %v4765
    %v5567 = vunpack.c.l.b16 %v4766
    %v5568 = vunpack.c.h.b16 %v4766
    %v5569 = vunpack.c.l.b16 %v4767
    %v5570 = vunpack.c.h.b16 %v4767
    %v5571 = vunpack.c.l.b16 %v4768
    %v5572 = vunpack.c.h.b16 %v4768
    %v5573 = vunpack.c.l.b16 %v4769
    %v5574 = vunpack.c.h.b16 %v4769
    %v5575 = vunpack.c.l.b16 %v4770
    %v5576 = vunpack.c.h.b16 %v4770
    %v5577 = vunpack.c.l.b16 %v4771
    %v5578 = vunpack.c.h.b16 %v4771
    %v5579 = vunpack.c.l.b16 %v4772
    %v5580 = vunpack.c.h.b16 %v4772
    %v5581 = vunpack.c.l.b16 %v4773
    %v5582 = vunpack.c.h.b16 %v4773
    %v5583 = vunpack.c.l.b16 %v4774
    %v5584 = vunpack.c.h.b16 %v4774
    %v5585 = vunpack.c.l.b16 %v4775
    %v5586 = vunpack.c.h.b16 %v4775
    %v5587 = vunpack.c.l.b16 %v4776
    %v5588 = vunpack.c.h.b16 %v4776
    %v5589 = vunpack.c.l.b16 %v4777
    %v5590 = vunpack.c.h.b16 %v4777
    %v5591 = vunpack.c.l.b16 %v4778
    %v5592 = vunpack.c.h.b16 %v4778
    %v5593 = vunpack.c.l.b16 %v4779
    %v5594 = vunpack.c.h.b16 %v4779
    %v5595 = vunpack.c.l.b16 %v4780
    %v5596 = vunpack.c.h.b16 %v4780
    %v5597 = vunpack.c.l.b16 %v4781
    %v5598 = vunpack.c.h.b16 %v4781
    %v5599 = vunpack.c.l.b16 %v4782
    %v5600 = vunpack.c.h.b16 %v4782
    %v5601 = vunpack.c.l.b16 %v4783
    %v5602 = vunpack.c.h.b16 %v4783
    %v5603 = vunpack.c.l.b16 %v4784
    %v5604 = vunpack.c.h.b16 %v4784
    %v5605 = vunpack.c.l.b16 %v4785
    %v5606 = vunpack.c.h.b16 %v4785
    %v5607 = vunpack.c.l.b16 %v4786
    %v5608 = vunpack.c.h.b16 %v4786
    %v5609 = vunpack.c.l.b16 %v4787
    %v5610 = vunpack.c.h.b16 %v4787
    %v5611 = vunpack.c.l.b16 %v4788
    %v5612 = vunpack.c.h.b16 %v4788
    %v5613 = vunpack.c.l.b16 %v4789
    %v5614 = vunpack.c.h.b16 %v4789
    %v5615 = vunpack.c.l.b16 %v4790
    %v5616 = vunpack.c.h.b16 %v4790
    %v5617 = vunpack.c.l.b16 %v4791
    %v5618 = vunpack.c.h.b16 %v4791
    %v5619 = vunpack.c.l.b16 %v4792
    %v5620 = vunpack.c.h.b16 %v4792
    %v5621 = vunpack.c.l.b16 %v4793
    %v5622 = vunpack.c.h.b16 %v4793
    %v5623 = vunpack.c.l.b16 %v4794
    %v5624 = vunpack.c.h.b16 %v4794
    %v5625 = vunpack.c.l.b16 %v4795
    %v5626 = vunpack.c.h.b16 %v4795
    %v5627 = vunpack.c.l.b16 %v4796
    %v5628 = vunpack.c.h.b16 %v4796
    %v5629 = vunpack.c.l.b16 %v4797
    %v5630 = vunpack.c.h.b16 %v4797
    %v5631 = vunpack.c.l.b16 %v4798
    %v5632 = vunpack.c.h.b16 %v4798
    %v5633 = vunpack.c.l.b16 %v4799
    %v5634 = vunpack.c.h.b16 %v4799
    %v5635 = vunpack.c.l.b16 %v4800
    %v5636 = vunpack.c.h.b16 %v4800
    %v5637 = vunpack.c.l.b16 %v4801
    %v5638 = vunpack.c.h.b16 %v4801
    %v5639 = vunpack.c.l.b16 %v4802
    %v5640 = vunpack.c.h.b16 %v4802
    %v5641 = vunpack.c.l.b16 %v4803
    %v5642 = vunpack.c.h.b16 %v4803
    %v5643 = vunpack.c.l.b16 %v4804
    %v5644 = vunpack.c.h.b16 %v4804
    %v5645 = vunpack.c.l.b16 %v4805
    %v5646 = vunpack.c.h.b16 %v4805
    %v5647 = vunpack.c.l.b16 %v4806
    %v5648 = vunpack.c.h.b16 %v4806
    %v5649 = vunpack.c.l.b16 %v4807
    %v5650 = vunpack.c.h.b16 %v4807
    %v5651 = vunpack.c.l.b16 %v4808
    %v5652 = vunpack.c.h.b16 %v4808
    %v5653 = vunpack.c.l.b16 %v4809
    %v5654 = vunpack.c.h.b16 %v4809
    %v5655 = vunpack.c.l.b16 %v4810
    %v5656 = vunpack.c.h.b16 %v4810
    %v5657 = vunpack.c.l.b16 %v4811
    %v5658 = vunpack.c.h.b16 %v4811
    %v5659 = vunpack.c.l.b16 %v4812
    %v5660 = vunpack.c.h.b16 %v4812
    %v5661 = vunpack.c.l.b16 %v4813
    %v5662 = vunpack.c.h.b16 %v4813
    %v5663 = vunpack.c.l.b16 %v4814
    %v5664 = vunpack.c.h.b16 %v4814
    %v5665 = vunpack.c.l.b16 %v4815
    %v5666 = vunpack.c.h.b16 %v4815
    %v5667 = vunpack.c.l.b16 %v4816
    %v5668 = vunpack.c.h.b16 %v4816
    %v5669 = vunpack.c.l.b16 %v4817
    %v5670 = vunpack.c.h.b16 %v4817
    %v5671 = vunpack.c.l.b16 %v4818
    %v5672 = vunpack.c.h.b16 %v4818
    %v5673 = vunpack.c.l.b16 %v4819
    %v5674 = vunpack.c.h.b16 %v4819
    %v5675 = vunpack.c.l.b16 %v4820
    %v5676 = vunpack.c.h.b16 %v4820
    %v5677 = vunpack.c.l.b16 %v4821
    %v5678 = vunpack.c.h.b16 %v4821
    %v5679 = vunpack.c.l.b16 %v4822
    %v5680 = vunpack.c.h.b16 %v4822
    %v5681 = vunpack.c.l.b16 %v4823
    %v5682 = vunpack.c.h.b16 %v4823
    %v5683 = vunpack.c.l.b16 %v4824
    %v5684 = vunpack.c.h.b16 %v4824
    %v5685 = vunpack.c.l.b16 %v4825
    %v5686 = vunpack.c.h.b16 %v4825
    %v5687 = vunpack.c.l.b16 %v4826
    %v5688 = vunpack.c.h.b16 %v4826
    %v5689 = vunpack.c.l.b16 %v4827
    %v5690 = vunpack.c.h.b16 %v4827
    %v5691 = vunpack.c.l.b16 %v4828
    %v5692 = vunpack.c.h.b16 %v4828
    %v5693 = vunpack.c.l.b16 %v4829
    %v5694 = vunpack.c.h.b16 %v4829
    %v5695 = vunpack.c.l.b16 %v4830
    %v5696 = vunpack.c.h.b16 %v4830
    %v5697 = vunpack.c.l.b16 %v4831
    %v5698 = vunpack.c.h.b16 %v4831
    %v5699 = vunpack.c.l.b16 %v4832
    %v5700 = vunpack.c.h.b16 %v4832
    %v5701 = vunpack.c.l.b16 %v4833
    %v5702 = vunpack.c.h.b16 %v4833
    %v5703 = vunpack.c.l.b16 %v4834
    %v5704 = vunpack.c.h.b16 %v4834
    %v5705 = vunpack.c.l.b16 %v4835
    %v5706 = vunpack.c.h.b16 %v4835
    %v5707 = vunpack.c.l.b16 %v4836
    %v5708 = vunpack.c.h.b16 %v4836
    %v5709 = vunpack.c.l.b16 %v4837
    %v5710 = vunpack.c.h.b16 %v4837
    %v5711 = vunpack.c.l.b16 %v4838
    %v5712 = vunpack.c.h.b16 %v4838
    %v5713 = vunpack.c.l.b16 %v4839
    %v5714 = vunpack.c.h.b16 %v4839
    %v5715 = vunpack.c.l.b16 %v4840
    %v5716 = vunpack.c.h.b16 %v4840
    %v5717 = vunpack.c.l.b16 %v4841
    %v5718 = vunpack.c.h.b16 %v4841
    %v5719 = vunpack.c.l.b16 %v4842
    %v5720 = vunpack.c.h.b16 %v4842
    %v5721 = vunpack.c.l.b16 %v4843
    %v5722 = vunpack.c.h.b16 %v4843
    %v5723 = vunpack.c.l.b16 %v4844
    %v5724 = vunpack.c.h.b16 %v4844
    %v5725 = vunpack.c.l.b16 %v4845
    %v5726 = vunpack.c.h.b16 %v4845
    %v5727 = vunpack.c.l.b16 %v4846
    %v5728 = vunpack.c.h.b16 %v4846
    %v5729 = vunpack.c.l.b16 %v4847
    %v5730 = vunpack.c.h.b16 %v4847
    %v5731 = vunpack.c.l.b16 %v4848
    %v5732 = vunpack.c.h.b16 %v4848
    %v5733 = vunpack.c.l.b16 %v4849
    %v5734 = vunpack.c.h.b16 %v4849
    %v5735 = vunpack.c.l.b16 %v4850
    %v5736 = vunpack.c.h.b16 %v4850
    %v5737 = vunpack.c.l.b16 %v4851
    %v5738 = vunpack.c.h.b16 %v4851
    %v5739 = vunpack.c.l.b16 %v4852
    %v5740 = vunpack.c.h.b16 %v4852
    %v5741 = vunpack.c.l.b16 %v4853
    %v5742 = vunpack.c.h.b16 %v4853
    %v5743 = vunpack.c.l.b16 %v4854
    %v5744 = vunpack.c.h.b16 %v4854
    %v5745 = vunpack.c.l.b16 %v4855
    %v5746 = vunpack.c.h.b16 %v4855
    %v5747 = vunpack.c.l.b16 %v4856
    %v5748 = vunpack.c.h.b16 %v4856
    %v5749 = vunpack.c.l.b16 %v4857
    %v5750 = vunpack.c.h.b16 %v4857
    %v5751 = vunpack.c.l.b16 %v4858
    %v5752 = vunpack.c.h.b16 %v4858
    %v5753 = vunpack.c.l.b16 %v4859
    %v5754 = vunpack.c.h.b16 %v4859
    %v5755 = vunpack.c.l.b16 %v4860
    %v5756 = vunpack.c.h.b16 %v4860
    %v5757 = vunpack.c.l.b16 %v4861
    %v5758 = vunpack.c.h.b16 %v4861
    %v5759 = vunpack.c.l.b16 %v4862
    %v5760 = vunpack.c.h.b16 %v4862
    %v5761 = vunpack.c.l.b16 %v4863
    %v5762 = vunpack.c.h.b16 %v4863
    %v5763 = vunpack.c.l.b16 %v4864
    %v5764 = vunpack.c.h.b16 %v4864
    %v5765 = vunpack.c.l.b16 %v4865
    %v5766 = vunpack.c.h.b16 %v4865
    %v5767 = vunpack.c.l.b16 %v4866
    %v5768 = vunpack.c.h.b16 %v4866
    %v5769 = vunpack.c.l.b16 %v4867
    %v5770 = vunpack.c.h.b16 %v4867
    %v5771 = vunpack.c.l.b16 %v4868
    %v5772 = vunpack.c.h.b16 %v4868
    %v5773 = vunpack.c.l.b16 %v4869
    %v5774 = vunpack.c.h.b16 %v4869
    %v5775 = vunpack.c.l.b16 %v4870
    %v5776 = vunpack.c.h.b16 %v4870
    %v5777 = vunpack.c.l.b16 %v4871
    %v5778 = vunpack.c.h.b16 %v4871
    %v5779 = vunpack.c.l.b16 %v4872
    %v5780 = vunpack.c.h.b16 %v4872
    %v5781 = vunpack.c.l.b16 %v4873
    %v5782 = vunpack.c.h.b16 %v4873
    %v5783 = vunpack.c.l.b16 %v4874
    %v5784 = vunpack.c.h.b16 %v4874
    %v5785 = vunpack.c.l.b16 %v4875
    %v5786 = vunpack.c.h.b16 %v4875
    %v5787 = vunpack.c.l.b16 %v4876
    %v5788 = vunpack.c.h.b16 %v4876
    %v5789 = vunpack.c.l.b16 %v4877
    %v5790 = vunpack.c.h.b16 %v4877
    %v5791 = vunpack.c.l.b16 %v4878
    %v5792 = vunpack.c.h.b16 %v4878
    %v5793 = vunpack.c.l.b16 %v4879
    %v5794 = vunpack.c.h.b16 %v4879
    %v5795 = vunpack.c.l.b16 %v4880
    %v5796 = vunpack.c.h.b16 %v4880
    %v5797 = vunpack.c.l.b16 %v4881
    %v5798 = vunpack.c.h.b16 %v4881
    %v5799 = vunpack.c.l.b16 %v4882
    %v5800 = vunpack.c.h.b16 %v4882
    %v5801 = vunpack.c.l.b16 %v4883
    %v5802 = vunpack.c.h.b16 %v4883
    %v5803 = vunpack.c.l.b16 %v4884
    %v5804 = vunpack.c.h.b16 %v4884
    %v5805 = vunpack.c.l.b16 %v4885
    %v5806 = vunpack.c.h.b16 %v4885
    %v5807 = vunpack.c.l.b16 %v4886
    %v5808 = vunpack.c.h.b16 %v4886
    %v5809 = vunpack.c.l.b16 %v4887
    %v5810 = vunpack.c.h.b16 %v4887
    %v5811 = vunpack.c.l.b16 %v4888
    %v5812 = vunpack.c.h.b16 %v4888
    %v5813 = vunpack.c.l.b16 %v4889
    %v5814 = vunpack.c.h.b16 %v4889
    %v5815 = vunpack.c.l.b16 %v4890
    %v5816 = vunpack.c.h.b16 %v4890
    %v5817 = vunpack.c.l.b16 %v4891
    %v5818 = vunpack.c.h.b16 %v4891
    %v5819 = vunpack.c.l.b16 %v4892
    %v5820 = vunpack.c.h.b16 %v4892
    %v5821 = vpack.c.b16 %v5257, %v5245
    %v5822 = vpack.c.b16 %v5258, %v5246
    %v5823 = vpack.c.b16 %v5259, %v5247
    %v5824 = vpack.c.b16 %v5260, %v5248
    %v5825 = vpack.c.b16 %v5261, %v5249
    %v5826 = vpack.c.b16 %v5262, %v5250
    %v5827 = vpack.c.b16 %v5263, %v5251
    %v5828 = vpack.c.b16 %v5264, %v5252
    %v5829 = vpack.c.b16 %v5265, %v5253
    %v5830 = vpack.c.b16 %v5266, %v5254
    %v5831 = vpack.c.b16 %v5267, %v5255
    %v5832 = vpack.c.b16 %v5268, %v5256
    %v5833 = vpack.c.b16 %v5281, %v5269
    %v5834 = vpack.c.b16 %v5282, %v5270
    %v5835 = vpack.c.b16 %v5283, %v5271
    %v5836 = vpack.c.b16 %v5284, %v5272
    %v5837 = vpack.c.b16 %v5285, %v5273
    %v5838 = vpack.c.b16 %v5286, %v5274
    %v5839 = vpack.c.b16 %v5287, %v5275
    %v5840 = vpack.c.b16 %v5288, %v5276
    %v5841 = vpack.c.b16 %v5289, %v5277
    %v5842 = vpack.c.b16 %v5290, %v5278
    %v5843 = vpack.c.b16 %v5291, %v5279
    %v5844 = vpack.c.b16 %v5292, %v5280
    %v5845 = vpack.c.b16 %v5305, %v5293
    %v5846 = vpack.c.b16 %v5306, %v5294
    %v5847 = vpack.c.b16 %v5307, %v5295
    %v5848 = vpack.c.b16 %v5308, %v5296
    %v5849 = vpack.c.b16 %v5309, %v5297
    %v5850 = vpack.c.b16 %v5310, %v5298
    %v5851 = vpack.c.b16 %v5311, %v5299
    %v5852 = vpack.c.b16 %v5312, %v5300
    %v5853 = vpack.c.b16 %v5313, %v5301
    %v5854 = vpack.c.b16 %v5314, %v5302
    %v5855 = vpack.c.b16 %v5315, %v5303
    %v5856 = vpack.c.b16 %v5316, %v5304
    %v5857 = vpack.c.b16 %v5329, %v5317
    %v5858 = vpack.c.b16 %v5330, %v5318
    %v5859 = vpack.c.b16 %v5331, %v5319
    %v5860 = vpack.c.b16 %v5332, %v5320
    %v5861 = vpack.c.b16 %v5333, %v5321
    %v5862 = vpack.c.b16 %v5334, %v5322
    %v5863 = vpack.c.b16 %v5335, %v5323
    %v5864 = vpack.c.b16 %v5336, %v5324
    %v5865 = vpack.c.b16 %v5337, %v5325
    %v5866 = vpack.c.b16 %v5338, %v5326
    %v5867 = vpack.c.b16 %v5339, %v5327
    %v5868 = vpack.c.b16 %v5340, %v5328
    %v5869 = vpack.c.b16 %v5353, %v5341
    %v5870 = vpack.c.b16 %v5354, %v5342
    %v5871 = vpack.c.b16 %v5355, %v5343
    %v5872 = vpack.c.b16 %v5356, %v5344
    %v5873 = vpack.c.b16 %v5357, %v5345
    %v5874 = vpack.c.b16 %v5358, %v5346
    %v5875 = vpack.c.b16 %v5359, %v5347
    %v5876 = vpack.c.b16 %v5360, %v5348
    %v5877 = vpack.c.b16 %v5361, %v5349
    %v5878 = vpack.c.b16 %v5362, %v5350
    %v5879 = vpack.c.b16 %v5363, %v5351
    %v5880 = vpack.c.b16 %v5364, %v5352
    %v5881 = vpack.c.b16 %v5377, %v5365
    %v5882 = vpack.c.b16 %v5378, %v5366
    %v5883 = vpack.c.b16 %v5379, %v5367
    %v5884 = vpack.c.b16 %v5380, %v5368
    %v5885 = vpack.c.b16 %v5381, %v5369
    %v5886 = vpack.c.b16 %v5382, %v5370
    %v5887 = vpack.c.b16 %v5383, %v5371
    %v5888 = vpack.c.b16 %v5384, %v5372
    %v5889 = vpack.c.b16 %v5385, %v5373
    %v5890 = vpack.c.b16 %v5386, %v5374
    %v5891 = vpack.c.b16 %v5387, %v5375
    %v5892 = vpack.c.b16 %v5388, %v5376
    %v5893 = vpack.c.b16 %v5401, %v5389
    %v5894 = vpack.c.b16 %v5402, %v5390
    %v5895 = vpack.c.b16 %v5403, %v5391
    %v5896 = vpack.c.b16 %v5404, %v5392
    %v5897 = vpack.c.b16 %v5405, %v5393
    %v5898 = vpack.c.b16 %v5406, %v5394
    %v5899 = vpack.c.b16 %v5407, %v5395
    %v5900 = vpack.c.b16 %v5408, %v5396
    %v5901 = vpack.c.b16 %v5409, %v5397
    %v5902 = vpack.c.b16 %v5410, %v5398
    %v5903 = vpack.c.b16 %v5411, %v5399
    %v5904 = vpack.c.b16 %v5412, %v5400
    %v5905 = vpack.c.b16 %v5425, %v5413
    %v5906 = vpack.c.b16 %v5426, %v5414
    %v5907 = vpack.c.b16 %v5427, %v5415
    %v5908 = vpack.c.b16 %v5428, %v5416
    %v5909 = vpack.c.b16 %v5429, %v5417
    %v5910 = vpack.c.b16 %v5430, %v5418
    %v5911 = vpack.c.b16 %v5431, %v5419
    %v5912 = vpack.c.b16 %v5432, %v5420
    %v5913 = vpack.c.b16 %v5433, %v5421
    %v5914 = vpack.c.b16 %v5434, %v5422
    %v5915 = vpack.c.b16 %v5435, %v5423
    %v5916 = vpack.c.b16 %v5436, %v5424
    %v5917 = vpack.c.b16 %v5449, %v5437
    %v5918 = vpack.c.b16 %v5450, %v5438
    %v5919 = vpack.c.b16 %v5451, %v5439
    %v5920 = vpack.c.b16 %v5452, %v5440
    %v5921 = vpack.c.b16 %v5453, %v5441
    %v5922 = vpack.c.b16 %v5454, %v5442
    %v5923 = vpack.c.b16 %v5455, %v5443
    %v5924 = vpack.c.b16 %v5456, %v5444
    %v5925 = vpack.c.b16 %v5457, %v5445
    %v5926 = vpack.c.b16 %v5458, %v5446
    %v5927 = vpack.c.b16 %v5459, %v5447
    %v5928 = vpack.c.b16 %v5460, %v5448
    %v5929 = vpack.c.b16 %v5473, %v5461
    %v5930 = vpack.c.b16 %v5474, %v5462
    %v5931 = vpack.c.b16 %v5475, %v5463
    %v5932 = vpack.c.b16 %v5476, %v5464
    %v5933 = vpack.c.b16 %v5477, %v5465
    %v5934 = vpack.c.b16 %v5478, %v5466
    %v5935 = vpack.c.b16 %v5479, %v5467
    %v5936 = vpack.c.b16 %v5480, %v5468
    %v5937 = vpack.c.b16 %v5481, %v5469
    %v5938 = vpack.c.b16 %v5482, %v5470
    %v5939 = vpack.c.b16 %v5483, %v5471
    %v5940 = vpack.c.b16 %v5484, %v5472
    %v5941 = vpack.c.b16 %v5497, %v5485
    %v5942 = vpack.c.b16 %v5498, %v5486
    %v5943 = vpack.c.b16 %v5499, %v5487
    %v5944 = vpack.c.b16 %v5500, %v5488
    %v5945 = vpack.c.b16 %v5501, %v5489
    %v5946 = vpack.c.b16 %v5502, %v5490
    %v5947 = vpack.c.b16 %v5503, %v5491
    %v5948 = vpack.c.b16 %v5504, %v5492
    %v5949 = vpack.c.b16 %v5505, %v5493
    %v5950 = vpack.c.b16 %v5506, %v5494
    %v5951 = vpack.c.b16 %v5507, %v5495
    %v5952 = vpack.c.b16 %v5508, %v5496
    %v5953 = vpack.c.b16 %v5521, %v5509
    %v5954 = vpack.c.b16 %v5522, %v5510
    %v5955 = vpack.c.b16 %v5523, %v5511
    %v5956 = vpack.c.b16 %v5524, %v5512
    %v5957 = vpack.c.b16 %v5525, %v5513
    %v5958 = vpack.c.b16 %v5526, %v5514
    %v5959 = vpack.c.b16 %v5527, %v5515
    %v5960 = vpack.c.b16 %v5528, %v5516
    %v5961 = vpack.c.b16 %v5529, %v5517
    %v5962 = vpack.c.b16 %v5530, %v5518
    %v5963 = vpack.c.b16 %v5531, %v5519
    %v5964 = vpack.c.b16 %v5532, %v5520
    %v5965 = vpack.c.b16 %v5545, %v5533
    %v5966 = vpack.c.b16 %v5546, %v5534
    %v5967 = vpack.c.b16 %v5547, %v5535
    %v5968 = vpack.c.b16 %v5548, %v5536
    %v5969 = vpack.c.b16 %v5549, %v5537
    %v5970 = vpack.c.b16 %v5550, %v5538
    %v5971 = vpack.c.b16 %v5551, %v5539
    %v5972 = vpack.c.b16 %v5552, %v5540
    %v5973 = vpack.c.b16 %v5553, %v5541
    %v5974 = vpack.c.b16 %v5554, %v5542
    %v5975 = vpack.c.b16 %v5555, %v5543
    %v5976 = vpack.c.b16 %v5556, %v5544
    %v5977 = vpack.c.b16 %v5569, %v5557
    %v5978 = vpack.c.b16 %v5570, %v5558
    %v5979 = vpack.c.b16 %v5571, %v5559
    %v5980 = vpack.c.b16 %v5572, %v5560
    %v5981 = vpack.c.b16 %v5573, %v5561
    %v5982 = vpack.c.b16 %v5574, %v5562
    %v5983 = vpack.c.b16 %v5575, %v5563
    %v5984 = vpack.c.b16 %v5576, %v5564
    %v5985 = vpack.c.b16 %v5577, %v5565
    %v5986 = vpack.c.b16 %v5578, %v5566
    %v5987 = vpack.c.b16 %v5579, %v5567
    %v5988 = vpack.c.b16 %v5580, %v5568
    %v5989 = vpack.c.b16 %v5593, %v5581
    %v5990 = vpack.c.b16 %v5594, %v5582
    %v5991 = vpack.c.b16 %v5595, %v5583
    %v5992 = vpack.c.b16 %v5596, %v5584
    %v5993 = vpack.c.b16 %v5597, %v5585
    %v5994 = vpack.c.b16 %v5598, %v5586
    %v5995 = vpack.c.b16 %v5599, %v5587
    %v5996 = vpack.c.b16 %v5600, %v5588
    %v5997 = vpack.c.b16 %v5601, %v5589
    %v5998 = vpack.c.b16 %v5602, %v5590
    %v5999 = vpack.c.b16 %v5603, %v5591
    %v6000 = vpack.c.b16 %v5604, %v5592
    %v6001 = vpack.c.b16 %v5617, %v5605
    %v6002 = vpack.c.b16 %v5618, %v5606
    %v6003 = vpack.c.b16 %v5619, %v5607
    %v6004 = vpack.c.b16 %v5620, %v5608
    %v6005 = vpack.c.b16 %v5621, %v5609
    %v6006 = vpack.c.b16 %v5622, %v5610
    %v6007 = vpack.c.b16 %v5623, %v5611
    %v6008 = vpack.c.b16 %v5624, %v5612
    %v6009 = vpack.c.b16 %v5625, %v5613
    %v6010 = vpack.c.b16 %v5626, %v5614
    %v6011 = vpack.c.b16 %v5627, %v5615
    %v6012 = vpack.c.b16 %v5628, %v5616
    %v6013 = vpack.c.b16 %v5641, %v5629
    %v6014 = vpack.c.b16 %v5642, %v5630
    %v6015 = vpack.c.b16 %v5643, %v5631
    %v6016 = vpack.c.b16 %v5644, %v5632
    %v6017 = vpack.c.b16 %v5645, %v5633
    %v6018 = vpack.c.b16 %v5646, %v5634
    %v6019 = vpack.c.b16 %v5647, %v5635
    %v6020 = vpack.c.b16 %v5648, %v5636
    %v6021 = vpack.c.b16 %v5649, %v5637
    %v6022 = vpack.c.b16 %v5650, %v5638
    %v6023 = vpack.c.b16 %v5651, %v5639
    %v6024 = vpack.c.b16 %v5652, %v5640
    %v6025 = vpack.c.b16 %v5665, %v5653
    %v6026 = vpack.c.b16 %v5666, %v5654
    %v6027 = vpack.c.b16 %v5667, %v5655
    %v6028 = vpack.c.b16 %v5668, %v5656
    %v6029 = vpack.c.b16 %v5669, %v5657
    %v6030 = vpack.c.b16 %v5670, %v5658
    %v6031 = vpack.c.b16 %v5671, %v5659
    %v6032 = vpack.c.b16 %v5672, %v5660
    %v6033 = vpack.c.b16 %v5673, %v5661
    %v6034 = vpack.c.b16 %v5674, %v5662
    %v6035 = vpack.c.b16 %v5675, %v5663
    %v6036 = vpack.c.b16 %v5676, %v5664
    %v6037 = vpack.c.b16 %v5689, %v5677
    %v6038 = vpack.c.b16 %v5690, %v5678
    %v6039 = vpack.c.b16 %v5691, %v5679
    %v6040 = vpack.c.b16 %v5692, %v5680
    %v6041 = vpack.c.b16 %v5693, %v5681
    %v6042 = vpack.c.b16 %v5694, %v5682
    %v6043 = vpack.c.b16 %v5695, %v5683
    %v6044 = vpack.c.b16 %v5696, %v5684
    %v6045 = vpack.c.b16 %v5697, %v5685
    %v6046 = vpack.c.b16 %v5698, %v5686
    %v6047 = vpack.c.b16 %v5699, %v5687
    %v6048 = vpack.c.b16 %v5700, %v5688
    %v6049 = vpack.c.b16 %v5713, %v5701
    %v6050 = vpack.c.b16 %v5714, %v5702
    %v6051 = vpack.c.b16 %v5715, %v5703
    %v6052 = vpack.c.b16 %v5716, %v5704
    %v6053 = vpack.c.b16 %v5717, %v5705
    %v6054 = vpack.c.b16 %v5718, %v5706
    %v6055 = vpack.c.b16 %v5719, %v5707
    %v6056 = vpack.c.b16 %v5720, %v5708
    %v6057 = vpack.c.b16 %v5721, %v5709
    %v6058 = vpack.c.b16 %v5722, %v5710
    %v6059 = vpack.c.b16 %v5723, %v5711
    %v6060 = vpack.c.b16 %v5724, %v5712
    %v6061 = vpack.c.b16 %v5737, %v5725
    %v6062 = vpack.c.b16 %v5738, %v5726
    %v6063 = vpack.c.b16 %v5739, %v5727
    %v6064 = vpack.c.b16 %v5740, %v5728
    %v6065 = vpack.c.b16 %v5741, %v5729
    %v6066 = vpack.c.b16 %v5742, %v5730
    %v6067 = vpack.c.b16 %v5743, %v5731
    %v6068 = vpack.c.b16 %v5744, %v5732
    %v6069 = vpack.c.b16 %v5745, %v5733
    %v6070 = vpack.c.b16 %v5746, %v5734
    %v6071 = vpack.c.b16 %v5747, %v5735
    %v6072 = vpack.c.b16 %v5748, %v5736
    %v6073 = vpack.c.b16 %v5761, %v5749
    %v6074 = vpack.c.b16 %v5762, %v5750
    %v6075 = vpack.c.b16 %v5763, %v5751
    %v6076 = vpack.c.b16 %v5764, %v5752
    %v6077 = vpack.c.b16 %v5765, %v5753
    %v6078 = vpack.c.b16 %v5766, %v5754
    %v6079 = vpack.c.b16 %v5767, %v5755
    %v6080 = vpack.c.b16 %v5768, %v5756
    %v6081 = vpack.c.b16 %v5769, %v5757
    %v6082 = vpack.c.b16 %v5770, %v5758
    %v6083 = vpack.c.b16 %v5771, %v5759
    %v6084 = vpack.c.b16 %v5772, %v5760
    %v6085 = vpack.c.b16 %v5785, %v5773
    %v6086 = vpack.c.b16 %v5786, %v5774
    %v6087 = vpack.c.b16 %v5787, %v5775
    %v6088 = vpack.c.b16 %v5788, %v5776
    %v6089 = vpack.c.b16 %v5789, %v5777
    %v6090 = vpack.c.b16 %v5790, %v5778
    %v6091 = vpack.c.b16 %v5791, %v5779
    %v6092 = vpack.c.b16 %v5792, %v5780
    %v6093 = vpack.c.b16 %v5793, %v5781
    %v6094 = vpack.c.b16 %v5794, %v5782
    %v6095 = vpack.c.b16 %v5795, %v5783
    %v6096 = vpack.c.b16 %v5796, %v5784
    %v6097 = vpack.c.b16 %v5809, %v5797
    %v6098 = vpack.c.b16 %v5810, %v5798
    %v6099 = vpack.c.b16 %v5811, %v5799
    %v6100 = vpack.c.b16 %v5812, %v5800
    %v6101 = vpack.c.b16 %v5813, %v5801
    %v6102 = vpack.c.b16 %v5814, %v5802
    %v6103 = vpack.c.b16 %v5815, %v5803
    %v6104 = vpack.c.b16 %v5816, %v5804
    %v6105 = vpack.c.b16 %v5817, %v5805
    %v6106 = vpack.c.b16 %v5818, %v5806
    %v6107 = vpack.c.b16 %v5819, %v5807
    %v6108 = vpack.c.b16 %v5820, %v5808
    %6397 = vmatprep.subr.bf16.mxu0 %v5822
    %6398 = vmatpush1.bf16.msra.mxu0 %v5821
    %6399 = vmatprep.subr.bf16.mxu0 %v5834
    %6400 = vmatpush1.bf16.msra.mxu0 %v5833
    %6401 = vmatprep.subr.bf16.mxu0 %v5846
    %6402 = vmatpush1.bf16.msra.mxu0 %v5845
    %6403 = vmatprep.subr.bf16.mxu0 %v5858
    %6404 = vmatpush1.bf16.msra.mxu0 %v5857
    %6405 = vmatprep.subr.bf16.mxu0 %v5870
    %6406 = vmatpush1.bf16.msra.mxu0 %v5869
    %6407 = vmatprep.subr.bf16.mxu0 %v5882
    %6408 = vmatpush1.bf16.msra.mxu0 %v5881
    %6409 = vmatprep.subr.bf16.mxu0 %v5894
    %6410 = vmatpush1.bf16.msra.mxu0 %v5893
    %6411 = vmatprep.subr.bf16.mxu0 %v5906
    %6412 = vmatpush1.bf16.msra.mxu0 %v5905
    %6413 = vmatprep.subr.bf16.mxu0 %v5918
    %6414 = vmatpush1.bf16.msra.mxu0 %v5917
    %6415 = vmatprep.subr.bf16.mxu0 %v5930
    %6416 = vmatpush1.bf16.msra.mxu0 %v5929
    %6417 = vmatprep.subr.bf16.mxu0 %v5942
    %6418 = vmatpush1.bf16.msra.mxu0 %v5941
    %6419 = vmatprep.subr.bf16.mxu0 %v5954
    %6420 = vmatpush1.bf16.msra.mxu0 %v5953
    %6421 = vmatprep.subr.bf16.mxu0 %v5966
    %6422 = vmatpush1.bf16.msra.mxu0 %v5965
    %6423 = vmatprep.subr.bf16.mxu0 %v5978
    %6424 = vmatpush1.bf16.msra.mxu0 %v5977
    %6425 = vmatprep.subr.bf16.mxu0 %v5990
    %6426 = vmatpush1.bf16.msra.mxu0 %v5989
    %6427 = vmatprep.subr.bf16.mxu0 %v6002
    %6428 = vmatpush1.bf16.msra.mxu0 %v6001
    %6429 = vmatprep.mubr.bf16.mxu0 %v4600
    %6430 = vmatmul.mubr.bf16.gmra.mrb[0].mxu0 %v4599
    %v6431 = vpop.f32.mrb[0].mxu0
    %v6432 = vadd.f32 %v4900, %v6431
    %v6433 = vpop.f32.mrb[0].mxu0
    %v6434 = vadd.f32 %v4904, %v6433
    %v6435 = vpop.f32.mrb[0].mxu0
    %v6436 = vadd.f32 %v4900, %v6435
    %v6437 = vpop.f32.mrb[0].mxu0
    %v6438 = vadd.f32 %v4904, %v6437
    %6439 = vmatprep.mubr.bf16.mxu0 %v4603
    %6440 = vmatmul.mubr.bf16.gmra.mrb[0].mxu0 %v4602
    %v6441 = vpop.f32.mrb[0].mxu0
    %v6442 = vadd.f32 %v4900, %v6441
    %v6443 = vpop.f32.mrb[0].mxu0
    %v6444 = vadd.f32 %v4904, %v6443
    %v6445 = vpop.f32.mrb[0].mxu0
    %v6446 = vadd.f32 %v4900, %v6445
    %v6447 = vpop.f32.mrb[0].mxu0
    %v6448 = vadd.f32 %v4904, %v6447
    %6449 = vdwg.mxu0
    %6450 = vmatprep.subr.bf16.mxu0 %v6014
    %6451 = vmatpush1.bf16.msra.mxu0 %v6013
    %6452 = vmatprep.subr.bf16.mxu0 %v6026
    %6453 = vmatpush1.bf16.msra.mxu0 %v6025
    %6454 = vmatprep.subr.bf16.mxu0 %v6038
    %6455 = vmatpush1.bf16.msra.mxu0 %v6037
    %6456 = vmatprep.subr.bf16.mxu0 %v6050
    %6457 = vmatpush1.bf16.msra.mxu0 %v6049
    %6458 = vmatprep.subr.bf16.mxu0 %v6062
    %6459 = vmatpush1.bf16.msra.mxu0 %v6061
    %6460 = vmatprep.subr.bf16.mxu0 %v6074
    %6461 = vmatpush1.bf16.msra.mxu0 %v6073
    %6462 = vmatprep.subr.bf16.mxu0 %v6086
    %6463 = vmatpush1.bf16.msra.mxu0 %v6085
    %6464 = vmatprep.subr.bf16.mxu0 %v6098
    %6465 = vmatpush1.bf16.msra.mxu0 %v6097
    %6466 = vmatprep.subr.bf16.mxu0 0
    %6467 = vmatpush1.bf16.msra.mxu0 0
    %6468 = vmatprep.subr.bf16.mxu0 0
    %6469 = vmatpush1.bf16.msra.mxu0 0
    %6470 = vmatprep.subr.bf16.mxu0 0
    %6471 = vmatpush1.bf16.msra.mxu0 0
    %6472 = vmatprep.subr.bf16.mxu0 0
    %6473 = vmatpush1.bf16.msra.mxu0 0
    %6474 = vmatprep.subr.bf16.mxu0 0
    %6475 = vmatpush1.bf16.msra.mxu0 0
    %6476 = vmatprep.subr.bf16.mxu0 0
    %6477 = vmatpush1.bf16.msra.mxu0 0
    %6478 = vmatprep.subr.bf16.mxu0 0
    %6479 = vmatpush1.bf16.msra.mxu0 0
    %6480 = vmatprep.subr.bf16.mxu0 0
    %6481 = vmatpush1.bf16.msra.mxu0 0
    %6482 = vmatprep.mubr.bf16.mxu0 0
    %6483 = vmatmul.mubr.bf16.gmra.mrb[0].mxu0 %v4601
    %v6484 = vpop.f32.mrb[0].mxu0
    %v6485 = vadd.f32 %v6432, %v6484
    %v6486 = vpop.f32.mrb[0].mxu0
    %v6487 = vadd.f32 %v6434, %v6486
    %v6488 = vpop.f32.mrb[0].mxu0
    %v6489 = vadd.f32 %v6436, %v6488
    %v6490 = vpop.f32.mrb[0].mxu0
    %v6491 = vadd.f32 %v6438, %v6490
    %6492 = vmatprep.mubr.bf16.mxu0 0
    %6493 = vmatmul.mubr.bf16.gmra.mrb[0].mxu0 %v4604
    %v6494 = vpop.f32.mrb[0].mxu0
    %v6495 = vadd.f32 %v6442, %v6494
    %v6496 = vpop.f32.mrb[0].mxu0
    %v6497 = vadd.f32 %v6444, %v6496
    %v6498 = vpop.f32.mrb[0].mxu0
    %v6499 = vadd.f32 %v6446, %v6498
    %v6500 = vpop.f32.mrb[0].mxu0
    %v6501 = vadd.f32 %v6448, %v6500
    %6502 = vdwg.mxu0
    %6503 = vmatprep.subr.bf16.mxu0 %v5824
    %6504 = vmatpush1.bf16.msra.mxu0 %v5823
    %6505 = vmatprep.subr.bf16.mxu0 %v5836
    %6506 = vmatpush1.bf16.msra.mxu0 %v5835
    %6507 = vmatprep.subr.bf16.mxu0 %v5848
    %6508 = vmatpush1.bf16.msra.mxu0 %v5847
    %6509 = vmatprep.subr.bf16.mxu0 %v5860
    %6510 = vmatpush1.bf16.msra.mxu0 %v5859
    %6511 = vmatprep.subr.bf16.mxu0 %v5872
    %6512 = vmatpush1.bf16.msra.mxu0 %v5871
    %6513 = vmatprep.subr.bf16.mxu0 %v5884
    %6514 = vmatpush1.bf16.msra.mxu0 %v5883
    %6515 = vmatprep.subr.bf16.mxu0 %v5896
    %6516 = vmatpush1.bf16.msra.mxu0 %v5895
    %6517 = vmatprep.subr.bf16.mxu0 %v5908
    %6518 = vmatpush1.bf16.msra.mxu0 %v5907
    %6519 = vmatprep.subr.bf16.mxu0 %v5920
    %6520 = vmatpush1.bf16.msra.mxu0 %v5919
    %6521 = vmatprep.subr.bf16.mxu0 %v5932
    %6522 = vmatpush1.bf16.msra.mxu0 %v5931
    %6523 = vmatprep.subr.bf16.mxu0 %v5944
    %6524 = vmatpush1.bf16.msra.mxu0 %v5943
    %6525 = vmatprep.subr.bf16.mxu0 %v5956
    %6526 = vmatpush1.bf16.msra.mxu0 %v5955
    %6527 = vmatprep.subr.bf16.mxu0 %v5968
    %6528 = vmatpush1.bf16.msra.mxu0 %v5967
    %6529 = vmatprep.subr.bf16.mxu0 %v5980
    %6530 = vmatpush1.bf16.msra.mxu0 %v5979
    %6531 = vmatprep.subr.bf16.mxu0 %v5992
    %6532 = vmatpush1.bf16.msra.mxu0 %v5991
    %6533 = vmatprep.subr.bf16.mxu0 %v6004
    %6534 = vmatpush1.bf16.msra.mxu0 %v6003
    %6535 = vmatprep.mubr.bf16.mxu0 %v4600
    %6536 = vmatmul.mubr.bf16.gmra.mrb[0].mxu0 %v4599
    %v6537 = vpop.f32.mrb[0].mxu0
    %v6538 = vadd.f32 %v4908, %v6537
    %v6539 = vpop.f32.mrb[0].mxu0
    %v6540 = vadd.f32 %v4912, %v6539
    %v6541 = vpop.f32.mrb[0].mxu0
    %v6542 = vadd.f32 %v4908, %v6541
    %v6543 = vpop.f32.mrb[0].mxu0
    %v6544 = vadd.f32 %v4912, %v6543
    %6545 = vmatprep.mubr.bf16.mxu0 %v4603
    %6546 = vmatmul.mubr.bf16.gmra.mrb[0].mxu0 %v4602
    %v6547 = vpop.f32.mrb[0].mxu0
    %v6548 = vadd.f32 %v4908, %v6547
    %v6549 = vpop.f32.mrb[0].mxu0
    %v6550 = vadd.f32 %v4912, %v6549
    %v6551 = vpop.f32.mrb[0].mxu0
    %v6552 = vadd.f32 %v4908, %v6551
    %v6553 = vpop.f32.mrb[0].mxu0
    %v6554 = vadd.f32 %v4912, %v6553
    %6555 = vdwg.mxu0
    %6556 = vmatprep.subr.bf16.mxu0 %v6016
    %6557 = vmatpush1.bf16.msra.mxu0 %v6015
    %6558 = vmatprep.subr.bf16.mxu0 %v6028
    %6559 = vmatpush1.bf16.msra.mxu0 %v6027
    %6560 = vmatprep.subr.bf16.mxu0 %v6040
    %6561 = vmatpush1.bf16.msra.mxu0 %v6039
    %6562 = vmatprep.subr.bf16.mxu0 %v6052
    %6563 = vmatpush1.bf16.msra.mxu0 %v6051
    %6564 = vmatprep.subr.bf16.mxu0 %v6064
    %6565 = vmatpush1.bf16.msra.mxu0 %v6063
    %6566 = vmatprep.subr.bf16.mxu0 %v6076
    %6567 = vmatpush1.bf16.msra.mxu0 %v6075
    %6568 = vmatprep.subr.bf16.mxu0 %v6088
    %6569 = vmatpush1.bf16.msra.mxu0 %v6087
    %6570 = vmatprep.subr.bf16.mxu0 %v6100
    %6571 = vmatpush1.bf16.msra.mxu0 %v6099
    %6572 = vmatprep.subr.bf16.mxu0 0
    %6573 = vmatpush1.bf16.msra.mxu0 0
    %6574 = vmatprep.subr.bf16.mxu0 0
    %6575 = vmatpush1.bf16.msra.mxu0 0
    %6576 = vmatprep.subr.bf16.mxu0 0
    %6577 = vmatpush1.bf16.msra.mxu0 0
    %6578 = vmatprep.subr.bf16.mxu0 0
    %6579 = vmatpush1.bf16.msra.mxu0 0
    %6580 = vmatprep.subr.bf16.mxu0 0
    %6581 = vmatpush1.bf16.msra.mxu0 0
    %6582 = vmatprep.subr.bf16.mxu0 0
    %6583 = vmatpush1.bf16.msra.mxu0 0
    %6584 = vmatprep.subr.bf16.mxu0 0
    %6585 = vmatpush1.bf16.msra.mxu0 0
    %6586 = vmatprep.subr.bf16.mxu0 0
    %6587 = vmatpush1.bf16.msra.mxu0 0
    %6588 = vmatprep.mubr.bf16.mxu0 0
    %6589 = vmatmul.mubr.bf16.gmra.mrb[0].mxu0 %v4601
    %v6590 = vpop.f32.mrb[0].mxu0
    %v6591 = vadd.f32 %v6538, %v6590
    %v6592 = vpop.f32.mrb[0].mxu0
    %v6593 = vadd.f32 %v6540, %v6592
    %v6594 = vpop.f32.mrb[0].mxu0
    %v6595 = vadd.f32 %v6542, %v6594
    %v6596 = vpop.f32.mrb[0].mxu0
    %v6597 = vadd.f32 %v6544, %v6596
    %6598 = vmatprep.mubr.bf16.mxu0 0
    %6599 = vmatmul.mubr.bf16.gmra.mrb[0].mxu0 %v4604
    %v6600 = vpop.f32.mrb[0].mxu0
    %v6601 = vadd.f32 %v6548, %v6600
    %v6602 = vpop.f32.mrb[0].mxu0
    %v6603 = vadd.f32 %v6550, %v6602
    %v6604 = vpop.f32.mrb[0].mxu0
    %v6605 = vadd.f32 %v6552, %v6604
    %v6606 = vpop.f32.mrb[0].mxu0
    %v6607 = vadd.f32 %v6554, %v6606
    %6608 = vdwg.mxu0
    %6609 = vmatprep.subr.bf16.mxu0 %v5826
    %6610 = vmatpush1.bf16.msra.mxu0 %v5825
    %6611 = vmatprep.subr.bf16.mxu0 %v5838
    %6612 = vmatpush1.bf16.msra.mxu0 %v5837
    %6613 = vmatprep.subr.bf16.mxu0 %v5850
    %6614 = vmatpush1.bf16.msra.mxu0 %v5849
    %6615 = vmatprep.subr.bf16.mxu0 %v5862
    %6616 = vmatpush1.bf16.msra.mxu0 %v5861
    %6617 = vmatprep.subr.bf16.mxu0 %v5874
    %6618 = vmatpush1.bf16.msra.mxu0 %v5873
    %6619 = vmatprep.subr.bf16.mxu0 %v5886
    %6620 = vmatpush1.bf16.msra.mxu0 %v5885
    %6621 = vmatprep.subr.bf16.mxu0 %v5898
    %6622 = vmatpush1.bf16.msra.mxu0 %v5897
    %6623 = vmatprep.subr.bf16.mxu0 %v5910
    %6624 = vmatpush1.bf16.msra.mxu0 %v5909
    %6625 = vmatprep.subr.bf16.mxu0 %v5922
    %6626 = vmatpush1.bf16.msra.mxu0 %v5921
    %6627 = vmatprep.subr.bf16.mxu0 %v5934
    %6628 = vmatpush1.bf16.msra.mxu0 %v5933
    %6629 = vmatprep.subr.bf16.mxu0 %v5946
    %6630 = vmatpush1.bf16.msra.mxu0 %v5945
    %6631 = vmatprep.subr.bf16.mxu0 %v5958
    %6632 = vmatpush1.bf16.msra.mxu0 %v5957
    %6633 = vmatprep.subr.bf16.mxu0 %v5970
    %6634 = vmatpush1.bf16.msra.mxu0 %v5969
    %6635 = vmatprep.subr.bf16.mxu0 %v5982
    %6636 = vmatpush1.bf16.msra.mxu0 %v5981
    %6637 = vmatprep.subr.bf16.mxu0 %v5994
    %6638 = vmatpush1.bf16.msra.mxu0 %v5993
    %6639 = vmatprep.subr.bf16.mxu0 %v6006
    %6640 = vmatpush1.bf16.msra.mxu0 %v6005
    %6641 = vmatprep.mubr.bf16.mxu0 %v4600
    %6642 = vmatmul.mubr.bf16.gmra.mrb[0].mxu0 %v4599
    %v6643 = vpop.f32.mrb[0].mxu0
    %v6644 = vadd.f32 %v4916, %v6643
    %v6645 = vpop.f32.mrb[0].mxu0
    %v6646 = vadd.f32 %v4920, %v6645
    %v6647 = vpop.f32.mrb[0].mxu0
    %v6648 = vadd.f32 %v4916, %v6647
    %v6649 = vpop.f32.mrb[0].mxu0
    %v6650 = vadd.f32 %v4920, %v6649
    %6651 = vmatprep.mubr.bf16.mxu0 %v4603
    %6652 = vmatmul.mubr.bf16.gmra.mrb[0].mxu0 %v4602
    %v6653 = vpop.f32.mrb[0].mxu0
    %v6654 = vadd.f32 %v4916, %v6653
    %v6655 = vpop.f32.mrb[0].mxu0
    %v6656 = vadd.f32 %v4920, %v6655
    %v6657 = vpop.f32.mrb[0].mxu0
    %v6658 = vadd.f32 %v4916, %v6657
    %v6659 = vpop.f32.mrb[0].mxu0
    %v6660 = vadd.f32 %v4920, %v6659
    %6661 = vdwg.mxu0
    %6662 = vmatprep.subr.bf16.mxu0 %v6018
    %6663 = vmatpush1.bf16.msra.mxu0 %v6017
    %6664 = vmatprep.subr.bf16.mxu0 %v6030
    %6665 = vmatpush1.bf16.msra.mxu0 %v6029
    %6666 = vmatprep.subr.bf16.mxu0 %v6042
    %6667 = vmatpush1.bf16.msra.mxu0 %v6041
    %6668 = vmatprep.subr.bf16.mxu0 %v6054
    %6669 = vmatpush1.bf16.msra.mxu0 %v6053
    %6670 = vmatprep.subr.bf16.mxu0 %v6066
    %6671 = vmatpush1.bf16.msra.mxu0 %v6065
    %6672 = vmatprep.subr.bf16.mxu0 %v6078
    %6673 = vmatpush1.bf16.msra.mxu0 %v6077
    %6674 = vmatprep.subr.bf16.mxu0 %v6090
    %6675 = vmatpush1.bf16.msra.mxu0 %v6089
    %6676 = vmatprep.subr.bf16.mxu0 %v6102
    %6677 = vmatpush1.bf16.msra.mxu0 %v6101
    %6678 = vmatprep.subr.bf16.mxu0 0
    %6679 = vmatpush1.bf16.msra.mxu0 0
    %6680 = vmatprep.subr.bf16.mxu0 0
    %6681 = vmatpush1.bf16.msra.mxu0 0
    %6682 = vmatprep.subr.bf16.mxu0 0
    %6683 = vmatpush1.bf16.msra.mxu0 0
    %6684 = vmatprep.subr.bf16.mxu0 0
    %6685 = vmatpush1.bf16.msra.mxu0 0
    %6686 = vmatprep.subr.bf16.mxu0 0
    %6687 = vmatpush1.bf16.msra.mxu0 0
    %6688 = vmatprep.subr.bf16.mxu0 0
    %6689 = vmatpush1.bf16.msra.mxu0 0
    %6690 = vmatprep.subr.bf16.mxu0 0
    %6691 = vmatpush1.bf16.msra.mxu0 0
    %6692 = vmatprep.subr.bf16.mxu0 0
    %6693 = vmatpush1.bf16.msra.mxu0 0
    %6694 = vmatprep.mubr.bf16.mxu0 0
    %6695 = vmatmul.mubr.bf16.gmra.mrb[0].mxu0 %v4601
    %v6696 = vpop.f32.mrb[0].mxu0
    %v6697 = vadd.f32 %v6644, %v6696
    %v6698 = vpop.f32.mrb[0].mxu0
    %v6699 = vadd.f32 %v6646, %v6698
    %v6700 = vpop.f32.mrb[0].mxu0
    %v6701 = vadd.f32 %v6648, %v6700
    %v6702 = vpop.f32.mrb[0].mxu0
    %v6703 = vadd.f32 %v6650, %v6702
    %6704 = vmatprep.mubr.bf16.mxu0 0
    %6705 = vmatmul.mubr.bf16.gmra.mrb[0].mxu0 %v4604
    %v6706 = vpop.f32.mrb[0].mxu0
    %v6707 = vadd.f32 %v6654, %v6706
    %v6708 = vpop.f32.mrb[0].mxu0
    %v6709 = vadd.f32 %v6656, %v6708
    %v6710 = vpop.f32.mrb[0].mxu0
    %v6711 = vadd.f32 %v6658, %v6710
    %v6712 = vpop.f32.mrb[0].mxu0
    %v6713 = vadd.f32 %v6660, %v6712
    %6714 = vdwg.mxu0
    %6715 = vmatprep.subr.bf16.mxu0 %v5828
    %6716 = vmatpush1.bf16.msra.mxu0 %v5827
    %6717 = vmatprep.subr.bf16.mxu0 %v5840
    %6718 = vmatpush1.bf16.msra.mxu0 %v5839
    %6719 = vmatprep.subr.bf16.mxu0 %v5852
    %6720 = vmatpush1.bf16.msra.mxu0 %v5851
    %6721 = vmatprep.subr.bf16.mxu0 %v5864
    %6722 = vmatpush1.bf16.msra.mxu0 %v5863
    %6723 = vmatprep.subr.bf16.mxu0 %v5876
    %6724 = vmatpush1.bf16.msra.mxu0 %v5875
    %6725 = vmatprep.subr.bf16.mxu0 %v5888
    %6726 = vmatpush1.bf16.msra.mxu0 %v5887
    %6727 = vmatprep.subr.bf16.mxu0 %v5900
    %6728 = vmatpush1.bf16.msra.mxu0 %v5899
    %6729 = vmatprep.subr.bf16.mxu0 %v5912
    %6730 = vmatpush1.bf16.msra.mxu0 %v5911
    %6731 = vmatprep.subr.bf16.mxu0 %v5924
    %6732 = vmatpush1.bf16.msra.mxu0 %v5923
    %6733 = vmatprep.subr.bf16.mxu0 %v5936
    %6734 = vmatpush1.bf16.msra.mxu0 %v5935
    %6735 = vmatprep.subr.bf16.mxu0 %v5948
    %6736 = vmatpush1.bf16.msra.mxu0 %v5947
    %6737 = vmatprep.subr.bf16.mxu0 %v5960
    %6738 = vmatpush1.bf16.msra.mxu0 %v5959
    %6739 = vmatprep.subr.bf16.mxu0 %v5972
    %6740 = vmatpush1.bf16.msra.mxu0 %v5971
    %6741 = vmatprep.subr.bf16.mxu0 %v5984
    %6742 = vmatpush1.bf16.msra.mxu0 %v5983
    %6743 = vmatprep.subr.bf16.mxu0 %v5996
    %6744 = vmatpush1.bf16.msra.mxu0 %v5995
    %6745 = vmatprep.subr.bf16.mxu0 %v6008
    %6746 = vmatpush1.bf16.msra.mxu0 %v6007
    %6747 = vmatprep.mubr.bf16.mxu0 %v4600
    %6748 = vmatmul.mubr.bf16.gmra.mrb[0].mxu0 %v4599
    %v6749 = vpop.f32.mrb[0].mxu0
    %v6750 = vadd.f32 %v4924, %v6749
    %v6751 = vpop.f32.mrb[0].mxu0
    %v6752 = vadd.f32 %v4928, %v6751
    %v6753 = vpop.f32.mrb[0].mxu0
    %v6754 = vadd.f32 %v4924, %v6753
    %v6755 = vpop.f32.mrb[0].mxu0
    %v6756 = vadd.f32 %v4928, %v6755
    %6757 = vmatprep.mubr.bf16.mxu0 %v4603
    %6758 = vmatmul.mubr.bf16.gmra.mrb[0].mxu0 %v4602
    %v6759 = vpop.f32.mrb[0].mxu0
    %v6760 = vadd.f32 %v4924, %v6759
    %v6761 = vpop.f32.mrb[0].mxu0
    %v6762 = vadd.f32 %v4928, %v6761
    %v6763 = vpop.f32.mrb[0].mxu0
    %v6764 = vadd.f32 %v4924, %v6763
    %v6765 = vpop.f32.mrb[0].mxu0
    %v6766 = vadd.f32 %v4928, %v6765
    %6767 = vdwg.mxu0
    %6768 = vmatprep.subr.bf16.mxu0 %v6020
    %6769 = vmatpush1.bf16.msra.mxu0 %v6019
    %6770 = vmatprep.subr.bf16.mxu0 %v6032
    %6771 = vmatpush1.bf16.msra.mxu0 %v6031
    %6772 = vmatprep.subr.bf16.mxu0 %v6044
    %6773 = vmatpush1.bf16.msra.mxu0 %v6043
    %6774 = vmatprep.subr.bf16.mxu0 %v6056
    %6775 = vmatpush1.bf16.msra.mxu0 %v6055
    %6776 = vmatprep.subr.bf16.mxu0 %v6068
    %6777 = vmatpush1.bf16.msra.mxu0 %v6067
    %6778 = vmatprep.subr.bf16.mxu0 %v6080
    %6779 = vmatpush1.bf16.msra.mxu0 %v6079
    %6780 = vmatprep.subr.bf16.mxu0 %v6092
    %6781 = vmatpush1.bf16.msra.mxu0 %v6091
    %6782 = vmatprep.subr.bf16.mxu0 %v6104
    %6783 = vmatpush1.bf16.msra.mxu0 %v6103
    %6784 = vmatprep.subr.bf16.mxu0 0
    %6785 = vmatpush1.bf16.msra.mxu0 0
    %6786 = vmatprep.subr.bf16.mxu0 0
    %6787 = vmatpush1.bf16.msra.mxu0 0
    %6788 = vmatprep.subr.bf16.mxu0 0
    %6789 = vmatpush1.bf16.msra.mxu0 0
    %6790 = vmatprep.subr.bf16.mxu0 0
    %6791 = vmatpush1.bf16.msra.mxu0 0
    %6792 = vmatprep.subr.bf16.mxu0 0
    %6793 = vmatpush1.bf16.msra.mxu0 0
    %6794 = vmatprep.subr.bf16.mxu0 0
    %6795 = vmatpush1.bf16.msra.mxu0 0
    %6796 = vmatprep.subr.bf16.mxu0 0
    %6797 = vmatpush1.bf16.msra.mxu0 0
    %6798 = vmatprep.subr.bf16.mxu0 0
    %6799 = vmatpush1.bf16.msra.mxu0 0
    %6800 = vmatprep.mubr.bf16.mxu0 0
    %6801 = vmatmul.mubr.bf16.gmra.mrb[0].mxu0 %v4601
    %v6802 = vpop.f32.mrb[0].mxu0
    %v6803 = vadd.f32 %v6750, %v6802
    %v6804 = vpop.f32.mrb[0].mxu0
    %v6805 = vadd.f32 %v6752, %v6804
    %v6806 = vpop.f32.mrb[0].mxu0
    %v6807 = vadd.f32 %v6754, %v6806
    %v6808 = vpop.f32.mrb[0].mxu0
    %v6809 = vadd.f32 %v6756, %v6808
    %6810 = vmatprep.mubr.bf16.mxu0 0
    %6811 = vmatmul.mubr.bf16.gmra.mrb[0].mxu0 %v4604
    %v6812 = vpop.f32.mrb[0].mxu0
    %v6813 = vadd.f32 %v6760, %v6812
    %v6814 = vpop.f32.mrb[0].mxu0
    %v6815 = vadd.f32 %v6762, %v6814
    %v6816 = vpop.f32.mrb[0].mxu0
    %v6817 = vadd.f32 %v6764, %v6816
    %v6818 = vpop.f32.mrb[0].mxu0
    %v6819 = vadd.f32 %v6766, %v6818
    %6820 = vdwg.mxu0
    %6821 = vmatprep.subr.bf16.mxu0 %v5830
    %6822 = vmatpush1.bf16.msra.mxu0 %v5829
    %6823 = vmatprep.subr.bf16.mxu0 %v5842
    %6824 = vmatpush1.bf16.msra.mxu0 %v5841
    %6825 = vmatprep.subr.bf16.mxu0 %v5854
    %6826 = vmatpush1.bf16.msra.mxu0 %v5853
    %6827 = vmatprep.subr.bf16.mxu0 %v5866
    %6828 = vmatpush1.bf16.msra.mxu0 %v5865
    %6829 = vmatprep.subr.bf16.mxu0 %v5878
    %6830 = vmatpush1.bf16.msra.mxu0 %v5877
    %6831 = vmatprep.subr.bf16.mxu0 %v5890
    %6832 = vmatpush1.bf16.msra.mxu0 %v5889
    %6833 = vmatprep.subr.bf16.mxu0 %v5902
    %6834 = vmatpush1.bf16.msra.mxu0 %v5901
    %6835 = vmatprep.subr.bf16.mxu0 %v5914
    %6836 = vmatpush1.bf16.msra.mxu0 %v5913
    %6837 = vmatprep.subr.bf16.mxu0 %v5926
    %6838 = vmatpush1.bf16.msra.mxu0 %v5925
    %6839 = vmatprep.subr.bf16.mxu0 %v5938
    %6840 = vmatpush1.bf16.msra.mxu0 %v5937
    %6841 = vmatprep.subr.bf16.mxu0 %v5950
    %6842 = vmatpush1.bf16.msra.mxu0 %v5949
    %6843 = vmatprep.subr.bf16.mxu0 %v5962
    %6844 = vmatpush1.bf16.msra.mxu0 %v5961
    %6845 = vmatprep.subr.bf16.mxu0 %v5974
    %6846 = vmatpush1.bf16.msra.mxu0 %v5973
    %6847 = vmatprep.subr.bf16.mxu0 %v5986
    %6848 = vmatpush1.bf16.msra.mxu0 %v5985
    %6849 = vmatprep.subr.bf16.mxu0 %v5998
    %6850 = vmatpush1.bf16.msra.mxu0 %v5997
    %6851 = vmatprep.subr.bf16.mxu0 %v6010
    %6852 = vmatpush1.bf16.msra.mxu0 %v6009
    %6853 = vmatprep.mubr.bf16.mxu0 %v4600
    %6854 = vmatmul.mubr.bf16.gmra.mrb[0].mxu0 %v4599
    %v6855 = vpop.f32.mrb[0].mxu0
    %v6856 = vadd.f32 %v4932, %v6855
    %v6857 = vpop.f32.mrb[0].mxu0
    %v6858 = vadd.f32 %v4936, %v6857
    %v6859 = vpop.f32.mrb[0].mxu0
    %v6860 = vadd.f32 %v4932, %v6859
    %v6861 = vpop.f32.mrb[0].mxu0
    %v6862 = vadd.f32 %v4936, %v6861
    %6863 = vmatprep.mubr.bf16.mxu0 %v4603
    %6864 = vmatmul.mubr.bf16.gmra.mrb[0].mxu0 %v4602
    %v6865 = vpop.f32.mrb[0].mxu0
    %v6866 = vadd.f32 %v4932, %v6865
    %v6867 = vpop.f32.mrb[0].mxu0
    %v6868 = vadd.f32 %v4936, %v6867
    %v6869 = vpop.f32.mrb[0].mxu0
    %v6870 = vadd.f32 %v4932, %v6869
    %v6871 = vpop.f32.mrb[0].mxu0
    %v6872 = vadd.f32 %v4936, %v6871
    %6873 = vdwg.mxu0
    %6874 = vmatprep.subr.bf16.mxu0 %v6022
    %6875 = vmatpush1.bf16.msra.mxu0 %v6021
    %6876 = vmatprep.subr.bf16.mxu0 %v6034
    %6877 = vmatpush1.bf16.msra.mxu0 %v6033
    %6878 = vmatprep.subr.bf16.mxu0 %v6046
    %6879 = vmatpush1.bf16.msra.mxu0 %v6045
    %6880 = vmatprep.subr.bf16.mxu0 %v6058
    %6881 = vmatpush1.bf16.msra.mxu0 %v6057
    %6882 = vmatprep.subr.bf16.mxu0 %v6070
    %6883 = vmatpush1.bf16.msra.mxu0 %v6069
    %6884 = vmatprep.subr.bf16.mxu0 %v6082
    %6885 = vmatpush1.bf16.msra.mxu0 %v6081
    %6886 = vmatprep.subr.bf16.mxu0 %v6094
    %6887 = vmatpush1.bf16.msra.mxu0 %v6093
    %6888 = vmatprep.subr.bf16.mxu0 %v6106
    %6889 = vmatpush1.bf16.msra.mxu0 %v6105
    %6890 = vmatprep.subr.bf16.mxu0 0
    %6891 = vmatpush1.bf16.msra.mxu0 0
    %6892 = vmatprep.subr.bf16.mxu0 0
    %6893 = vmatpush1.bf16.msra.mxu0 0
    %6894 = vmatprep.subr.bf16.mxu0 0
    %6895 = vmatpush1.bf16.msra.mxu0 0
    %6896 = vmatprep.subr.bf16.mxu0 0
    %6897 = vmatpush1.bf16.msra.mxu0 0
    %6898 = vmatprep.subr.bf16.mxu0 0
    %6899 = vmatpush1.bf16.msra.mxu0 0
    %6900 = vmatprep.subr.bf16.mxu0 0
    %6901 = vmatpush1.bf16.msra.mxu0 0
    %6902 = vmatprep.subr.bf16.mxu0 0
    %6903 = vmatpush1.bf16.msra.mxu0 0
    %6904 = vmatprep.subr.bf16.mxu0 0
    %6905 = vmatpush1.bf16.msra.mxu0 0
    %6906 = vmatprep.mubr.bf16.mxu0 0
    %6907 = vmatmul.mubr.bf16.gmra.mrb[0].mxu0 %v4601
    %v6908 = vpop.f32.mrb[0].mxu0
    %v6909 = vadd.f32 %v6856, %v6908
    %v6910 = vpop.f32.mrb[0].mxu0
    %v6911 = vadd.f32 %v6858, %v6910
    %v6912 = vpop.f32.mrb[0].mxu0
    %v6913 = vadd.f32 %v6860, %v6912
    %v6914 = vpop.f32.mrb[0].mxu0
    %v6915 = vadd.f32 %v6862, %v6914
    %6916 = vmatprep.mubr.bf16.mxu0 0
    %6917 = vmatmul.mubr.bf16.gmra.mrb[0].mxu0 %v4604
    %v6918 = vpop.f32.mrb[0].mxu0
    %v6919 = vadd.f32 %v6866, %v6918
    %v6920 = vpop.f32.mrb[0].mxu0
    %v6921 = vadd.f32 %v6868, %v6920
    %v6922 = vpop.f32.mrb[0].mxu0
    %v6923 = vadd.f32 %v6870, %v6922
    %v6924 = vpop.f32.mrb[0].mxu0
    %v6925 = vadd.f32 %v6872, %v6924
    %6926 = vdwg.mxu0
    %6927 = vmatprep.subr.bf16.mxu0 %v5832
    %6928 = vmatpush1.bf16.msra.mxu0 %v5831
    %6929 = vmatprep.subr.bf16.mxu0 %v5844
    %6930 = vmatpush1.bf16.msra.mxu0 %v5843
    %6931 = vmatprep.subr.bf16.mxu0 %v5856
    %6932 = vmatpush1.bf16.msra.mxu0 %v5855
    %6933 = vmatprep.subr.bf16.mxu0 %v5868
    %6934 = vmatpush1.bf16.msra.mxu0 %v5867
    %6935 = vmatprep.subr.bf16.mxu0 %v5880
    %6936 = vmatpush1.bf16.msra.mxu0 %v5879
    %6937 = vmatprep.subr.bf16.mxu0 %v5892
    %6938 = vmatpush1.bf16.msra.mxu0 %v5891
    %6939 = vmatprep.subr.bf16.mxu0 %v5904
    %6940 = vmatpush1.bf16.msra.mxu0 %v5903
    %6941 = vmatprep.subr.bf16.mxu0 %v5916
    %6942 = vmatpush1.bf16.msra.mxu0 %v5915
    %6943 = vmatprep.subr.bf16.mxu0 %v5928
    %6944 = vmatpush1.bf16.msra.mxu0 %v5927
    %6945 = vmatprep.subr.bf16.mxu0 %v5940
    %6946 = vmatpush1.bf16.msra.mxu0 %v5939
    %6947 = vmatprep.subr.bf16.mxu0 %v5952
    %6948 = vmatpush1.bf16.msra.mxu0 %v5951
    %6949 = vmatprep.subr.bf16.mxu0 %v5964
    %6950 = vmatpush1.bf16.msra.mxu0 %v5963
    %6951 = vmatprep.subr.bf16.mxu0 %v5976
    %6952 = vmatpush1.bf16.msra.mxu0 %v5975
    %6953 = vmatprep.subr.bf16.mxu0 %v5988
    %6954 = vmatpush1.bf16.msra.mxu0 %v5987
    %6955 = vmatprep.subr.bf16.mxu0 %v6000
    %6956 = vmatpush1.bf16.msra.mxu0 %v5999
    %6957 = vmatprep.subr.bf16.mxu0 %v6012
    %6958 = vmatpush1.bf16.msra.mxu0 %v6011
    %6959 = vmatprep.mubr.bf16.mxu0 %v4600
    %6960 = vmatmul.mubr.bf16.gmra.mrb[0].mxu0 %v4599
    %v6961 = vpop.f32.mrb[0].mxu0
    %v6962 = vadd.f32 %v4940, %v6961
    %v6963 = vpop.f32.mrb[0].mxu0
    %v6964 = vadd.f32 %v4944, %v6963
    %v6965 = vpop.f32.mrb[0].mxu0
    %v6966 = vadd.f32 %v4940, %v6965
    %v6967 = vpop.f32.mrb[0].mxu0
    %v6968 = vadd.f32 %v4944, %v6967
    %6969 = vmatprep.mubr.bf16.mxu0 %v4603
    %6970 = vmatmul.mubr.bf16.gmra.mrb[0].mxu0 %v4602
    %v6971 = vpop.f32.mrb[0].mxu0
    %v6972 = vadd.f32 %v4940, %v6971
    %v6973 = vpop.f32.mrb[0].mxu0
    %v6974 = vadd.f32 %v4944, %v6973
    %v6975 = vpop.f32.mrb[0].mxu0
    %v6976 = vadd.f32 %v4940, %v6975
    %v6977 = vpop.f32.mrb[0].mxu0
    %v6978 = vadd.f32 %v4944, %v6977
    %6979 = vdwg.mxu0
    %6980 = vmatprep.subr.bf16.mxu0 %v6024
    %6981 = vmatpush1.bf16.msra.mxu0 %v6023
    %6982 = vmatprep.subr.bf16.mxu0 %v6036
    %6983 = vmatpush1.bf16.msra.mxu0 %v6035
    %6984 = vmatprep.subr.bf16.mxu0 %v6048
    %6985 = vmatpush1.bf16.msra.mxu0 %v6047
    %6986 = vmatprep.subr.bf16.mxu0 %v6060
    %6987 = vmatpush1.bf16.msra.mxu0 %v6059
    %6988 = vmatprep.subr.bf16.mxu0 %v6072
    %6989 = vmatpush1.bf16.msra.mxu0 %v6071
    %6990 = vmatprep.subr.bf16.mxu0 %v6084
    %6991 = vmatpush1.bf16.msra.mxu0 %v6083
    %6992 = vmatprep.subr.bf16.mxu0 %v6096
    %6993 = vmatpush1.bf16.msra.mxu0 %v6095
    %6994 = vmatprep.subr.bf16.mxu0 %v6108
    %6995 = vmatpush1.bf16.msra.mxu0 %v6107
    %6996 = vmatprep.subr.bf16.mxu0 0
    %6997 = vmatpush1.bf16.msra.mxu0 0
    %6998 = vmatprep.subr.bf16.mxu0 0
    %6999 = vmatpush1.bf16.msra.mxu0 0
    %7000 = vmatprep.subr.bf16.mxu0 0
    %7001 = vmatpush1.bf16.msra.mxu0 0
    %7002 = vmatprep.subr.bf16.mxu0 0
    %7003 = vmatpush1.bf16.msra.mxu0 0
    %7004 = vmatprep.subr.bf16.mxu0 0
    %7005 = vmatpush1.bf16.msra.mxu0 0
    %7006 = vmatprep.subr.bf16.mxu0 0
    %7007 = vmatpush1.bf16.msra.mxu0 0
    %7008 = vmatprep.subr.bf16.mxu0 0
    %7009 = vmatpush1.bf16.msra.mxu0 0
    %7010 = vmatprep.subr.bf16.mxu0 0
    %7011 = vmatpush1.bf16.msra.mxu0 0
    %7012 = vmatprep.mubr.bf16.mxu0 0
    %7013 = vmatmul.mubr.bf16.gmra.mrb[0].mxu0 %v4601
    %v7014 = vpop.f32.mrb[0].mxu0
    %v7015 = vadd.f32 %v6962, %v7014
    %v7016 = vpop.f32.mrb[0].mxu0
    %v7017 = vadd.f32 %v6964, %v7016
    %v7018 = vpop.f32.mrb[0].mxu0
    %v7019 = vadd.f32 %v6966, %v7018
    %v7020 = vpop.f32.mrb[0].mxu0
    %v7021 = vadd.f32 %v6968, %v7020
    %7022 = vmatprep.mubr.bf16.mxu0 0
    %7023 = vmatmul.mubr.bf16.gmra.mrb[0].mxu0 %v4604
    %v7024 = vpop.f32.mrb[0].mxu0
    %v7025 = vadd.f32 %v6972, %v7024
    %v7026 = vpop.f32.mrb[0].mxu0
    %v7027 = vadd.f32 %v6974, %v7026
    %v7028 = vpop.f32.mrb[0].mxu0
    %v7029 = vadd.f32 %v6976, %v7028
    %v7030 = vpop.f32.mrb[0].mxu0
    %v7031 = vadd.f32 %v6978, %v7030
    %7032 = vdwg.mxu0
    %v7033 = vmax.f32 %v6485, 0.0
    %v7034 = vmax.f32 %v6487, 0.0
    %v7035 = vmax.f32 %v6591, 0.0
    %v7036 = vmax.f32 %v6593, 0.0
    %v7037 = vmax.f32 %v6697, 0.0
    %v7038 = vmax.f32 %v6699, 0.0
    %v7039 = vmax.f32 %v6803, 0.0
    %v7040 = vmax.f32 %v6805, 0.0
    %v7041 = vmax.f32 %v6909, 0.0
    %v7042 = vmax.f32 %v6911, 0.0
    %v7043 = vmax.f32 %v7015, 0.0
    %v7044 = vmax.f32 %v7017, 0.0
    %v7045 = vmax.f32 %v6489, 0.0
    %v7046 = vmax.f32 %v6491, 0.0
    %v7047 = vmax.f32 %v6595, 0.0
    %v7048 = vmax.f32 %v6597, 0.0
    %v7049 = vmax.f32 %v6701, 0.0
    %v7050 = vmax.f32 %v6703, 0.0
    %v7051 = vmax.f32 %v6807, 0.0
    %v7052 = vmax.f32 %v6809, 0.0
    %v7053 = vmax.f32 %v6913, 0.0
    %v7054 = vmax.f32 %v6915, 0.0
    %v7055 = vmax.f32 %v7019, 0.0
    %v7056 = vmax.f32 %v7021, 0.0
    %v7057 = vmax.f32 %v6495, 0.0
    %v7058 = vmax.f32 %v6497, 0.0
    %v7059 = vmax.f32 %v6601, 0.0
    %v7060 = vmax.f32 %v6603, 0.0
    %v7061 = vmax.f32 %v6707, 0.0
    %v7062 = vmax.f32 %v6709, 0.0
    %v7063 = vmax.f32 %v6813, 0.0
    %v7064 = vmax.f32 %v6815, 0.0
    %v7065 = vmax.f32 %v6919, 0.0
    %v7066 = vmax.f32 %v6921, 0.0
    %v7067 = vmax.f32 %v7025, 0.0
    %v7068 = vmax.f32 %v7027, 0.0
    %v7069 = vmax.f32 %v6499, 0.0
    %v7070 = vmax.f32 %v6501, 0.0
    %v7071 = vmax.f32 %v6605, 0.0
    %v7072 = vmax.f32 %v6607, 0.0
    %v7073 = vmax.f32 %v6711, 0.0
    %v7074 = vmax.f32 %v6713, 0.0
    %v7075 = vmax.f32 %v6817, 0.0
    %v7076 = vmax.f32 %v6819, 0.0
    %v7077 = vmax.f32 %v6923, 0.0
    %v7078 = vmax.f32 %v6925, 0.0
    %v7079 = vmax.f32 %v7029, 0.0
    %v7080 = vmax.f32 %v7031, 0.0
    %v7081 = vpack.c.bf16 %v7045, %v7033
    %v7082 = vpack.c.bf16 %v7046, %v7034
    %v7083 = vpack.c.bf16 %v7047, %v7035
    %v7084 = vpack.c.bf16 %v7048, %v7036
    %v7085 = vpack.c.bf16 %v7049, %v7037
    %v7086 = vpack.c.bf16 %v7050, %v7038
    %v7087 = vpack.c.bf16 %v7051, %v7039
    %v7088 = vpack.c.bf16 %v7052, %v7040
    %v7089 = vpack.c.bf16 %v7053, %v7041
    %v7090 = vpack.c.bf16 %v7054, %v7042
    %v7091 = vpack.c.bf16 %v7055, %v7043
    %v7092 = vpack.c.bf16 %v7056, %v7044
    %v7093 = vpack.c.bf16 %v7069, %v7057
    %v7094 = vpack.c.bf16 %v7070, %v7058
    %v7095 = vpack.c.bf16 %v7071, %v7059
    %v7096 = vpack.c.bf16 %v7072, %v7060
    %v7097 = vpack.c.bf16 %v7073, %v7061
    %v7098 = vpack.c.bf16 %v7074, %v7062
    %v7099 = vpack.c.bf16 %v7075, %v7063
    %v7100 = vpack.c.bf16 %v7076, %v7064
    %v7101 = vpack.c.bf16 %v7077, %v7065
    %v7102 = vpack.c.bf16 %v7078, %v7066
    %v7103 = vpack.c.bf16 %v7079, %v7067
    %v7104 = vpack.c.bf16 %v7080, %v7068
    %v7105 = vld [vmem:[#allocation13] sm:$0xff]
    %v7106 = vld [vmem:[#allocation13 + $0x8] sm:$0xf]
    %v7107 = vld [vmem:[#allocation13 + $0xc] sm:$0xff]
    %v7108 = vld [vmem:[#allocation13 + $0x14] sm:$0xf]
    %v7109 = vld [vmem:[#allocation13 + $0x18] sm:$0xff]
    %v7110 = vld [vmem:[#allocation13 + $0x20] sm:$0xf]
    %v7111 = vld [vmem:[#allocation13 + $0x24] sm:$0xff]
    %v7112 = vld [vmem:[#allocation13 + $0x2c] sm:$0xf]
    %v7113 = vld [vmem:[#allocation13 + $0x30] sm:$0xff]
    %v7114 = vld [vmem:[#allocation13 + $0x38] sm:$0xf]
    %v7115 = vld [vmem:[#allocation13 + $0x3c] sm:$0xff]
    %v7116 = vld [vmem:[#allocation13 + $0x44] sm:$0xf]
    %v7117 = vld [vmem:[#allocation13 + $0x48] sm:$0xff]
    %v7118 = vld [vmem:[#allocation13 + $0x50] sm:$0xf]
    %v7119 = vld [vmem:[#allocation13 + $0x54] sm:$0xff]
    %v7120 = vld [vmem:[#allocation13 + $0x5c] sm:$0xf]
    %v7121 = vld [vmem:[#allocation13 + $0x60] sm:$0xff]
    %v7122 = vld [vmem:[#allocation13 + $0x68] sm:$0xf]
    %v7123 = vld [vmem:[#allocation13 + $0x6c] sm:$0xff]
    %v7124 = vld [vmem:[#allocation13 + $0x74] sm:$0xf]
    %v7125 = vld [vmem:[#allocation13 + $0x78] sm:$0xff]
    %v7126 = vld [vmem:[#allocation13 + $0x80] sm:$0xf]
    %v7127 = vld [vmem:[#allocation13 + $0x84] sm:$0xff]
    %v7128 = vld [vmem:[#allocation13 + $0x8c] sm:$0xf]
    %v7129 = vld [vmem:[#allocation13 + $0x90] sm:$0xff]
    %v7130 = vld [vmem:[#allocation13 + $0x98] sm:$0xf]
    %v7131 = vld [vmem:[#allocation13 + $0x9c] sm:$0xff]
    %v7132 = vld [vmem:[#allocation13 + $0xa4] sm:$0xf]
    %v7133 = vld [vmem:[#allocation13 + $0xa8] sm:$0xff]
    %v7134 = vld [vmem:[#allocation13 + $0xb0] sm:$0xf]
    %v7135 = vld [vmem:[#allocation13 + $0xb4] sm:$0xff]
    %v7136 = vld [vmem:[#allocation13 + $0xbc] sm:$0xf]
    %v7137 = vld [vmem:[#allocation13 + $0xc0] sm:$0xff]
    %v7138 = vld [vmem:[#allocation13 + $0xc8] sm:$0xf]
    %v7139 = vld [vmem:[#allocation13 + $0xcc] sm:$0xff]
    %v7140 = vld [vmem:[#allocation13 + $0xd4] sm:$0xf]
    %v7141 = vld [vmem:[#allocation13 + $0xd8] sm:$0xff]
    %v7142 = vld [vmem:[#allocation13 + $0xe0] sm:$0xf]
    %v7143 = vld [vmem:[#allocation13 + $0xe4] sm:$0xff]
    %v7144 = vld [vmem:[#allocation13 + $0xec] sm:$0xf]
    %v7145 = vld [vmem:[#allocation13 + $0xf0] sm:$0xff]
    %v7146 = vld [vmem:[#allocation13 + $0xf8] sm:$0xf]
    %v7147 = vld [vmem:[#allocation13 + $0xfc] sm:$0xff]
    %v7148 = vld [vmem:[#allocation13 + $0x104] sm:$0xf]
    %v7149 = vld [vmem:[#allocation13 + $0x108] sm:$0xff]
    %v7150 = vld [vmem:[#allocation13 + $0x110] sm:$0xf]
    %v7151 = vld [vmem:[#allocation13 + $0x114] sm:$0xff]
    %v7152 = vld [vmem:[#allocation13 + $0x11c] sm:$0xf]
    %v7153 = vld [vmem:[#allocation13 + $0x120] sm:$0xff]
    %v7154 = vld [vmem:[#allocation13 + $0x128] sm:$0xf]
    %v7155 = vld [vmem:[#allocation13 + $0x12c] sm:$0xff]
    %v7156 = vld [vmem:[#allocation13 + $0x134] sm:$0xf]
    %v7157 = vld [vmem:[#allocation13 + $0x138] sm:$0xff]
    %v7158 = vld [vmem:[#allocation13 + $0x140] sm:$0xf]
    %v7159 = vld [vmem:[#allocation13 + $0x144] sm:$0xff]
    %v7160 = vld [vmem:[#allocation13 + $0x14c] sm:$0xf]
    %v7161 = vld [vmem:[#allocation13 + $0x150] sm:$0xff]
    %v7162 = vld [vmem:[#allocation13 + $0x158] sm:$0xf]
    %v7163 = vld [vmem:[#allocation13 + $0x15c] sm:$0xff]
    %v7164 = vld [vmem:[#allocation13 + $0x164] sm:$0xf]
    %v7165 = vld [vmem:[#allocation13 + $0x168] sm:$0xff]
    %v7166 = vld [vmem:[#allocation13 + $0x170] sm:$0xf]
    %v7167 = vld [vmem:[#allocation13 + $0x174] sm:$0xff]
    %v7168 = vld [vmem:[#allocation13 + $0x17c] sm:$0xf]
    %v7169 = vld [vmem:[#allocation13 + $0x180] sm:$0xff]
    %v7170 = vld [vmem:[#allocation13 + $0x188] sm:$0xf]
    %v7171 = vld [vmem:[#allocation13 + $0x18c] sm:$0xff]
    %v7172 = vld [vmem:[#allocation13 + $0x194] sm:$0xf]
    %v7173 = vld [vmem:[#allocation13 + $0x198] sm:$0xff]
    %v7174 = vld [vmem:[#allocation13 + $0x1a0] sm:$0xf]
    %v7175 = vld [vmem:[#allocation13 + $0x1a4] sm:$0xff]
    %v7176 = vld [vmem:[#allocation13 + $0x1ac] sm:$0xf]
    %v7177 = vld [vmem:[#allocation13 + $0x1b0] sm:$0xff]
    %v7178 = vld [vmem:[#allocation13 + $0x1b8] sm:$0xf]
    %v7179 = vld [vmem:[#allocation13 + $0x1bc] sm:$0xff]
    %v7180 = vld [vmem:[#allocation13 + $0x1c4] sm:$0xf]
    %v7181 = vld [vmem:[#allocation13 + $0x1c8] sm:$0xff]
    %v7182 = vld [vmem:[#allocation13 + $0x1d0] sm:$0xf]
    %v7183 = vld [vmem:[#allocation13 + $0x1d4] sm:$0xff]
    %v7184 = vld [vmem:[#allocation13 + $0x1dc] sm:$0xf]
    %v7185 = vld [vmem:[#allocation13 + $0x1e0] sm:$0xff]
    %v7186 = vld [vmem:[#allocation13 + $0x1e8] sm:$0xf]
    %v7187 = vld [vmem:[#allocation13 + $0x1ec] sm:$0xff]
    %v7188 = vld [vmem:[#allocation13 + $0x1f4] sm:$0xf]
    %v7189 = vld [vmem:[#allocation13 + $0x1f8] sm:$0xff]
    %v7190 = vld [vmem:[#allocation13 + $0x200] sm:$0xf]
    %v7191 = vld [vmem:[#allocation13 + $0x204] sm:$0xff]
    %v7192 = vld [vmem:[#allocation13 + $0x20c] sm:$0xf]
    %v7193 = vld [vmem:[#allocation13 + $0x210] sm:$0xff]
    %v7194 = vld [vmem:[#allocation13 + $0x218] sm:$0xf]
    %v7195 = vld [vmem:[#allocation13 + $0x21c] sm:$0xff]
    %v7196 = vld [vmem:[#allocation13 + $0x224] sm:$0xf]
    %v7197 = vld [vmem:[#allocation13 + $0x228] sm:$0xff]
    %v7198 = vld [vmem:[#allocation13 + $0x230] sm:$0xf]
    %v7199 = vld [vmem:[#allocation13 + $0x234] sm:$0xff]
    %v7200 = vld [vmem:[#allocation13 + $0x23c] sm:$0xf]
    %v7201 = vld [vmem:[#allocation13 + $0x240] sm:$0xff]
    %v7202 = vld [vmem:[#allocation13 + $0x248] sm:$0xf]
    %v7203 = vld [vmem:[#allocation13 + $0x24c] sm:$0xff]
    %v7204 = vld [vmem:[#allocation13 + $0x254] sm:$0xf]
    %v7205 = vld [vmem:[#allocation13 + $0x258] sm:$0xff]
    %v7206 = vld [vmem:[#allocation13 + $0x260] sm:$0xf]
    %v7207 = vld [vmem:[#allocation13 + $0x264] sm:$0xff]
    %v7208 = vld [vmem:[#allocation13 + $0x26c] sm:$0xf]
    %v7209 = vld [vmem:[#allocation13 + $0x270] sm:$0xff]
    %v7210 = vld [vmem:[#allocation13 + $0x278] sm:$0xf]
    %v7211 = vld [vmem:[#allocation13 + $0x27c] sm:$0xff]
    %v7212 = vld [vmem:[#allocation13 + $0x284] sm:$0xf]
    %v7213 = vld [vmem:[#allocation13 + $0x288] sm:$0xff]
    %v7214 = vld [vmem:[#allocation13 + $0x290] sm:$0xf]
    %v7215 = vld [vmem:[#allocation13 + $0x294] sm:$0xff]
    %v7216 = vld [vmem:[#allocation13 + $0x29c] sm:$0xf]
    %v7217 = vld [vmem:[#allocation13 + $0x2a0] sm:$0xff]
    %v7218 = vld [vmem:[#allocation13 + $0x2a8] sm:$0xf]
    %v7219 = vld [vmem:[#allocation13 + $0x2ac] sm:$0xff]
    %v7220 = vld [vmem:[#allocation13 + $0x2b4] sm:$0xf]
    %v7221 = vld [vmem:[#allocation13 + $0x2b8] sm:$0xff]
    %v7222 = vld [vmem:[#allocation13 + $0x2c0] sm:$0xf]
    %v7223 = vld [vmem:[#allocation13 + $0x2c4] sm:$0xff]
    %v7224 = vld [vmem:[#allocation13 + $0x2cc] sm:$0xf]
    %v7225 = vld [vmem:[#allocation13 + $0x2d0] sm:$0xff]
    %v7226 = vld [vmem:[#allocation13 + $0x2d8] sm:$0xf]
    %v7227 = vld [vmem:[#allocation13 + $0x2dc] sm:$0xff]
    %v7228 = vld [vmem:[#allocation13 + $0x2e4] sm:$0xf]
    %v7229 = vld [vmem:[#allocation13 + $0x2e8] sm:$0xff]
    %v7230 = vld [vmem:[#allocation13 + $0x2f0] sm:$0xf]
    %v7231 = vld [vmem:[#allocation13 + $0x2f4] sm:$0xff]
    %v7232 = vld [vmem:[#allocation13 + $0x2fc] sm:$0xf]
    %v7233 = vld [vmem:[#allocation13 + $0x300] sm:$0xff]
    %v7234 = vld [vmem:[#allocation13 + $0x308] sm:$0xf]
    %v7235 = vld [vmem:[#allocation13 + $0x30c] sm:$0xff]
    %v7236 = vld [vmem:[#allocation13 + $0x314] sm:$0xf]
    %v7237 = vld [vmem:[#allocation13 + $0x318] sm:$0xff]
    %v7238 = vld [vmem:[#allocation13 + $0x320] sm:$0xf]
    %v7239 = vld [vmem:[#allocation13 + $0x324] sm:$0xff]
    %v7240 = vld [vmem:[#allocation13 + $0x32c] sm:$0xf]
    %v7241 = vld [vmem:[#allocation13 + $0x330] sm:$0xff]
    %v7242 = vld [vmem:[#allocation13 + $0x338] sm:$0xf]
    %v7243 = vld [vmem:[#allocation13 + $0x33c] sm:$0xff]
    %v7244 = vld [vmem:[#allocation13 + $0x344] sm:$0xf]
    %v7245 = vld [vmem:[#allocation13 + $0x348] sm:$0xff]
    %v7246 = vld [vmem:[#allocation13 + $0x350] sm:$0xf]
    %v7247 = vld [vmem:[#allocation13 + $0x354] sm:$0xff]
    %v7248 = vld [vmem:[#allocation13 + $0x35c] sm:$0xf]
    %v7249 = vld [vmem:[#allocation13 + $0x360] sm:$0xff]
    %v7250 = vld [vmem:[#allocation13 + $0x368] sm:$0xf]
    %v7251 = vld [vmem:[#allocation13 + $0x36c] sm:$0xff]
    %v7252 = vld [vmem:[#allocation13 + $0x374] sm:$0xf]
    %v7253 = vld [vmem:[#allocation13 + $0x378] sm:$0xff]
    %v7254 = vld [vmem:[#allocation13 + $0x380] sm:$0xf]
    %v7255 = vld [vmem:[#allocation13 + $0x384] sm:$0xff]
    %v7256 = vld [vmem:[#allocation13 + $0x38c] sm:$0xf]
    %v7257 = vld [vmem:[#allocation13 + $0x390] sm:$0xff]
    %v7258 = vld [vmem:[#allocation13 + $0x398] sm:$0xf]
    %v7259 = vld [vmem:[#allocation13 + $0x39c] sm:$0xff]
    %v7260 = vld [vmem:[#allocation13 + $0x3a4] sm:$0xf]
    %v7261 = vld [vmem:[#allocation13 + $0x3a8] sm:$0xff]
    %v7262 = vld [vmem:[#allocation13 + $0x3b0] sm:$0xf]
    %v7263 = vld [vmem:[#allocation13 + $0x3b4] sm:$0xff]
    %v7264 = vld [vmem:[#allocation13 + $0x3bc] sm:$0xf]
    %v7265 = vld [vmem:[#allocation13 + $0x3c0] sm:$0xff]
    %v7266 = vld [vmem:[#allocation13 + $0x3c8] sm:$0xf]
    %v7267 = vld [vmem:[#allocation13 + $0x3cc] sm:$0xff]
    %v7268 = vld [vmem:[#allocation13 + $0x3d4] sm:$0xf]
    %v7269 = vld [vmem:[#allocation13 + $0x3d8] sm:$0xff]
    %v7270 = vld [vmem:[#allocation13 + $0x3e0] sm:$0xf]
    %v7271 = vld [vmem:[#allocation13 + $0x3e4] sm:$0xff]
    %v7272 = vld [vmem:[#allocation13 + $0x3ec] sm:$0xf]
    %v7273 = vld [vmem:[#allocation13 + $0x3f0] sm:$0xff]
    %v7274 = vld [vmem:[#allocation13 + $0x3f8] sm:$0xf]
    %v7275 = vld [vmem:[#allocation13 + $0x3fc] sm:$0xff]
    %v7276 = vld [vmem:[#allocation13 + $0x404] sm:$0xf]
    %v7277 = vld [vmem:[#allocation13 + $0x408] sm:$0xff]
    %v7278 = vld [vmem:[#allocation13 + $0x410] sm:$0xf]
    %v7279 = vld [vmem:[#allocation13 + $0x414] sm:$0xff]
    %v7280 = vld [vmem:[#allocation13 + $0x41c] sm:$0xf]
    %v7281 = vld [vmem:[#allocation13 + $0x420] sm:$0xff]
    %v7282 = vld [vmem:[#allocation13 + $0x428] sm:$0xf]
    %v7283 = vld [vmem:[#allocation13 + $0x42c] sm:$0xff]
    %v7284 = vld [vmem:[#allocation13 + $0x434] sm:$0xf]
    %v7285 = vld [vmem:[#allocation13 + $0x438] sm:$0xff]
    %v7286 = vld [vmem:[#allocation13 + $0x440] sm:$0xf]
    %v7287 = vld [vmem:[#allocation13 + $0x444] sm:$0xff]
    %v7288 = vld [vmem:[#allocation13 + $0x44c] sm:$0xf]
    %v7289 = vld [vmem:[#allocation13 + $0x450] sm:$0xff]
    %v7290 = vld [vmem:[#allocation13 + $0x458] sm:$0xf]
    %v7291 = vld [vmem:[#allocation13 + $0x45c] sm:$0xff]
    %v7292 = vld [vmem:[#allocation13 + $0x464] sm:$0xf]
    %v7293 = vld [vmem:[#allocation13 + $0x468] sm:$0xff]
    %v7294 = vld [vmem:[#allocation13 + $0x470] sm:$0xf]
    %v7295 = vld [vmem:[#allocation13 + $0x474] sm:$0xff]
    %v7296 = vld [vmem:[#allocation13 + $0x47c] sm:$0xf]
    %v7297 = vld [vmem:[#allocation13 + $0x480] sm:$0xff]
    %v7298 = vld [vmem:[#allocation13 + $0x488] sm:$0xf]
    %v7299 = vld [vmem:[#allocation13 + $0x48c] sm:$0xff]
    %v7300 = vld [vmem:[#allocation13 + $0x494] sm:$0xf]
    %v7301 = vld [vmem:[#allocation13 + $0x498] sm:$0xff]
    %v7302 = vld [vmem:[#allocation13 + $0x4a0] sm:$0xf]
    %v7303 = vld [vmem:[#allocation13 + $0x4a4] sm:$0xff]
    %v7304 = vld [vmem:[#allocation13 + $0x4ac] sm:$0xf]
    %v7305 = vld [vmem:[#allocation13 + $0x4b0] sm:$0xff]
    %v7306 = vld [vmem:[#allocation13 + $0x4b8] sm:$0xf]
    %v7307 = vld [vmem:[#allocation13 + $0x4bc] sm:$0xff]
    %v7308 = vld [vmem:[#allocation13 + $0x4c4] sm:$0xf]
    %v7309 = vld [vmem:[#allocation13 + $0x4c8] sm:$0xff]
    %v7310 = vld [vmem:[#allocation13 + $0x4d0] sm:$0xf]
    %v7311 = vld [vmem:[#allocation13 + $0x4d4] sm:$0xff]
    %v7312 = vld [vmem:[#allocation13 + $0x4dc] sm:$0xf]
    %v7313 = vld [vmem:[#allocation13 + $0x4e0] sm:$0xff]
    %v7314 = vld [vmem:[#allocation13 + $0x4e8] sm:$0xf]
    %v7315 = vld [vmem:[#allocation13 + $0x4ec] sm:$0xff]
    %v7316 = vld [vmem:[#allocation13 + $0x4f4] sm:$0xf]
    %v7317 = vld [vmem:[#allocation13 + $0x4f8] sm:$0xff]
    %v7318 = vld [vmem:[#allocation13 + $0x500] sm:$0xf]
    %v7319 = vld [vmem:[#allocation13 + $0x504] sm:$0xff]
    %v7320 = vld [vmem:[#allocation13 + $0x50c] sm:$0xf]
    %v7321 = vld [vmem:[#allocation13 + $0x510] sm:$0xff]
    %v7322 = vld [vmem:[#allocation13 + $0x518] sm:$0xf]
    %v7323 = vld [vmem:[#allocation13 + $0x51c] sm:$0xff]
    %v7324 = vld [vmem:[#allocation13 + $0x524] sm:$0xf]
    %v7325 = vld [vmem:[#allocation13 + $0x528] sm:$0xff]
    %v7326 = vld [vmem:[#allocation13 + $0x530] sm:$0xf]
    %v7327 = vld [vmem:[#allocation13 + $0x534] sm:$0xff]
    %v7328 = vld [vmem:[#allocation13 + $0x53c] sm:$0xf]
    %v7329 = vld [vmem:[#allocation13 + $0x540] sm:$0xff]
    %v7330 = vld [vmem:[#allocation13 + $0x548] sm:$0xf]
    %v7331 = vld [vmem:[#allocation13 + $0x54c] sm:$0xff]
    %v7332 = vld [vmem:[#allocation13 + $0x554] sm:$0xf]
    %v7333 = vld [vmem:[#allocation13 + $0x558] sm:$0xff]
    %v7334 = vld [vmem:[#allocation13 + $0x560] sm:$0xf]
    %v7335 = vld [vmem:[#allocation13 + $0x564] sm:$0xff]
    %v7336 = vld [vmem:[#allocation13 + $0x56c] sm:$0xf]
    %v7337 = vld [vmem:[#allocation13 + $0x570] sm:$0xff]
    %v7338 = vld [vmem:[#allocation13 + $0x578] sm:$0xf]
    %v7339 = vld [vmem:[#allocation13 + $0x57c] sm:$0xff]
    %v7340 = vld [vmem:[#allocation13 + $0x584] sm:$0xf]
    %v7341 = vld [vmem:[#allocation13 + $0x588] sm:$0xff]
    %v7342 = vld [vmem:[#allocation13 + $0x590] sm:$0xf]
    %v7343 = vld [vmem:[#allocation13 + $0x594] sm:$0xff]
    %v7344 = vld [vmem:[#allocation13 + $0x59c] sm:$0xf]
    %v7345 = vld [vmem:[#allocation13 + $0x5a0] sm:$0xff]
    %v7346 = vld [vmem:[#allocation13 + $0x5a8] sm:$0xf]
    %v7347 = vld [vmem:[#allocation13 + $0x5ac] sm:$0xff]
    %v7348 = vld [vmem:[#allocation13 + $0x5b4] sm:$0xf]
    %v7349 = vld [vmem:[#allocation13 + $0x5b8] sm:$0xff]
    %v7350 = vld [vmem:[#allocation13 + $0x5c0] sm:$0xf]
    %v7351 = vld [vmem:[#allocation13 + $0x5c4] sm:$0xff]
    %v7352 = vld [vmem:[#allocation13 + $0x5cc] sm:$0xf]
    %v7353 = vld [vmem:[#allocation13 + $0x5d0] sm:$0xff]
    %v7354 = vld [vmem:[#allocation13 + $0x5d8] sm:$0xf]
    %v7355 = vld [vmem:[#allocation13 + $0x5dc] sm:$0xff]
    %v7356 = vld [vmem:[#allocation13 + $0x5e4] sm:$0xf]
    %v7357 = vld [vmem:[#allocation13 + $0x5e8] sm:$0xff]
    %v7358 = vld [vmem:[#allocation13 + $0x5f0] sm:$0xf]
    %v7359 = vld [vmem:[#allocation13 + $0x5f4] sm:$0xff]
    %v7360 = vld [vmem:[#allocation13 + $0x5fc] sm:$0xf]
    %v7361 = vld [vmem:[#allocation13 + $0x600] sm:$0xff]
    %v7362 = vld [vmem:[#allocation13 + $0x608] sm:$0xf]
    %v7363 = vld [vmem:[#allocation13 + $0x60c] sm:$0xff]
    %v7364 = vld [vmem:[#allocation13 + $0x614] sm:$0xf]
    %v7365 = vld [vmem:[#allocation13 + $0x618] sm:$0xff]
    %v7366 = vld [vmem:[#allocation13 + $0x620] sm:$0xf]
    %v7367 = vld [vmem:[#allocation13 + $0x624] sm:$0xff]
    %v7368 = vld [vmem:[#allocation13 + $0x62c] sm:$0xf]
    %v7369 = vld [vmem:[#allocation13 + $0x630] sm:$0xff]
    %v7370 = vld [vmem:[#allocation13 + $0x638] sm:$0xf]
    %v7371 = vld [vmem:[#allocation13 + $0x63c] sm:$0xff]
    %v7372 = vld [vmem:[#allocation13 + $0x644] sm:$0xf]
    %v7373 = vld [vmem:[#allocation13 + $0x648] sm:$0xff]
    %v7374 = vld [vmem:[#allocation13 + $0x650] sm:$0xf]
    %v7375 = vld [vmem:[#allocation13 + $0x654] sm:$0xff]
    %v7376 = vld [vmem:[#allocation13 + $0x65c] sm:$0xf]
    %v7377 = vld [vmem:[#allocation13 + $0x660] sm:$0xff]
    %v7378 = vld [vmem:[#allocation13 + $0x668] sm:$0xf]
    %v7379 = vld [vmem:[#allocation13 + $0x66c] sm:$0xff]
    %v7380 = vld [vmem:[#allocation13 + $0x674] sm:$0xf]
    %v7381 = vld [vmem:[#allocation13 + $0x678] sm:$0xff]
    %v7382 = vld [vmem:[#allocation13 + $0x680] sm:$0xf]
    %v7383 = vld [vmem:[#allocation13 + $0x684] sm:$0xff]
    %v7384 = vld [vmem:[#allocation13 + $0x68c] sm:$0xf]
    %v7385 = vld [vmem:[#allocation13 + $0x690] sm:$0xff]
    %v7386 = vld [vmem:[#allocation13 + $0x698] sm:$0xf]
    %v7387 = vld [vmem:[#allocation13 + $0x69c] sm:$0xff]
    %v7388 = vld [vmem:[#allocation13 + $0x6a4] sm:$0xf]
    %v7389 = vld [vmem:[#allocation13 + $0x6a8] sm:$0xff]
    %v7390 = vld [vmem:[#allocation13 + $0x6b0] sm:$0xf]
    %v7391 = vld [vmem:[#allocation13 + $0x6b4] sm:$0xff]
    %v7392 = vld [vmem:[#allocation13 + $0x6bc] sm:$0xf]
    %v7393 = vld [vmem:[#allocation13 + $0x6c0] sm:$0xff]
    %v7394 = vld [vmem:[#allocation13 + $0x6c8] sm:$0xf]
    %v7395 = vld [vmem:[#allocation13 + $0x6cc] sm:$0xff]
    %v7396 = vld [vmem:[#allocation13 + $0x6d4] sm:$0xf]
    %v7397 = vld [vmem:[#allocation13 + $0x6d8] sm:$0xff]
    %v7398 = vld [vmem:[#allocation13 + $0x6e0] sm:$0xf]
    %v7399 = vld [vmem:[#allocation13 + $0x6e4] sm:$0xff]
    %v7400 = vld [vmem:[#allocation13 + $0x6ec] sm:$0xf]
    %v7401 = vld [vmem:[#allocation13 + $0x6f0] sm:$0xff]
    %v7402 = vld [vmem:[#allocation13 + $0x6f8] sm:$0xf]
    %v7403 = vld [vmem:[#allocation13 + $0x6fc] sm:$0xff]
    %v7404 = vld [vmem:[#allocation13 + $0x704] sm:$0xf]
    %v7405 = vld [vmem:[#allocation13 + $0x708] sm:$0xff]
    %v7406 = vld [vmem:[#allocation13 + $0x710] sm:$0xf]
    %v7407 = vld [vmem:[#allocation13 + $0x714] sm:$0xff]
    %v7408 = vld [vmem:[#allocation13 + $0x71c] sm:$0xf]
    %v7409 = vld [vmem:[#allocation13 + $0x720] sm:$0xff]
    %v7410 = vld [vmem:[#allocation13 + $0x728] sm:$0xf]
    %v7411 = vld [vmem:[#allocation13 + $0x72c] sm:$0xff]
    %v7412 = vld [vmem:[#allocation13 + $0x734] sm:$0xf]
    %v7413 = vld [vmem:[#allocation13 + $0x738] sm:$0xff]
    %v7414 = vld [vmem:[#allocation13 + $0x740] sm:$0xf]
    %v7415 = vld [vmem:[#allocation13 + $0x744] sm:$0xff]
    %v7416 = vld [vmem:[#allocation13 + $0x74c] sm:$0xf]
    %v7417 = vld [vmem:[#allocation13 + $0x750] sm:$0xff]
    %v7418 = vld [vmem:[#allocation13 + $0x758] sm:$0xf]
    %v7419 = vld [vmem:[#allocation13 + $0x75c] sm:$0xff]
    %v7420 = vld [vmem:[#allocation13 + $0x764] sm:$0xf]
    %v7421 = vld [vmem:[#allocation13 + $0x768] sm:$0xff]
    %v7422 = vld [vmem:[#allocation13 + $0x770] sm:$0xf]
    %v7423 = vld [vmem:[#allocation13 + $0x774] sm:$0xff]
    %v7424 = vld [vmem:[#allocation13 + $0x77c] sm:$0xf]
    %v7425 = vld [vmem:[#allocation13 + $0x780] sm:$0xff]
    %v7426 = vld [vmem:[#allocation13 + $0x788] sm:$0xf]
    %v7427 = vld [vmem:[#allocation13 + $0x78c] sm:$0xff]
    %v7428 = vld [vmem:[#allocation13 + $0x794] sm:$0xf]
    %v7429 = vld [vmem:[#allocation13 + $0x798] sm:$0xff]
    %v7430 = vld [vmem:[#allocation13 + $0x7a0] sm:$0xf]
    %v7431 = vld [vmem:[#allocation13 + $0x7a4] sm:$0xff]
    %v7432 = vld [vmem:[#allocation13 + $0x7ac] sm:$0xf]
    %v7433 = vld [vmem:[#allocation13 + $0x7b0] sm:$0xff]
    %v7434 = vld [vmem:[#allocation13 + $0x7b8] sm:$0xf]
    %v7435 = vld [vmem:[#allocation13 + $0x7bc] sm:$0xff]
    %v7436 = vld [vmem:[#allocation13 + $0x7c4] sm:$0xf]
    %v7437 = vld [vmem:[#allocation13 + $0x7c8] sm:$0xff]
    %v7438 = vld [vmem:[#allocation13 + $0x7d0] sm:$0xf]
    %v7439 = vld [vmem:[#allocation13 + $0x7d4] sm:$0xff]
    %v7440 = vld [vmem:[#allocation13 + $0x7dc] sm:$0xf]
    %v7441 = vld [vmem:[#allocation13 + $0x7e0] sm:$0xff]
    %v7442 = vld [vmem:[#allocation13 + $0x7e8] sm:$0xf]
    %v7443 = vld [vmem:[#allocation13 + $0x7ec] sm:$0xff]
    %v7444 = vld [vmem:[#allocation13 + $0x7f4] sm:$0xf]
    %v7445 = vld [vmem:[#allocation13 + $0x7f8] sm:$0xff]
    %v7446 = vld [vmem:[#allocation13 + $0x800] sm:$0xf]
    %v7447 = vld [vmem:[#allocation13 + $0x804] sm:$0xff]
    %v7448 = vld [vmem:[#allocation13 + $0x80c] sm:$0xf]
    %v7449 = vld [vmem:[#allocation13 + $0x810] sm:$0xff]
    %v7450 = vld [vmem:[#allocation13 + $0x818] sm:$0xf]
    %v7451 = vld [vmem:[#allocation13 + $0x81c] sm:$0xff]
    %v7452 = vld [vmem:[#allocation13 + $0x824] sm:$0xf]
    %v7453 = vld [vmem:[#allocation13 + $0x828] sm:$0xff]
    %v7454 = vld [vmem:[#allocation13 + $0x830] sm:$0xf]
    %v7455 = vld [vmem:[#allocation13 + $0x834] sm:$0xff]
    %v7456 = vld [vmem:[#allocation13 + $0x83c] sm:$0xf]
    %v7457 = vld [vmem:[#allocation13 + $0x840] sm:$0xff]
    %v7458 = vld [vmem:[#allocation13 + $0x848] sm:$0xf]
    %v7459 = vld [vmem:[#allocation13 + $0x84c] sm:$0xff]
    %v7460 = vld [vmem:[#allocation13 + $0x854] sm:$0xf]
    %v7461 = vld [vmem:[#allocation13 + $0x858] sm:$0xff]
    %v7462 = vld [vmem:[#allocation13 + $0x860] sm:$0xf]
    %v7463 = vld [vmem:[#allocation13 + $0x864] sm:$0xff]
    %v7464 = vld [vmem:[#allocation13 + $0x86c] sm:$0xf]
    %v7465 = vld [vmem:[#allocation13 + $0x870] sm:$0xff]
    %v7466 = vld [vmem:[#allocation13 + $0x878] sm:$0xf]
    %v7467 = vld [vmem:[#allocation13 + $0x87c] sm:$0xff]
    %v7468 = vld [vmem:[#allocation13 + $0x884] sm:$0xf]
    %v7469 = vld [vmem:[#allocation13 + $0x888] sm:$0xff]
    %v7470 = vld [vmem:[#allocation13 + $0x890] sm:$0xf]
    %v7471 = vld [vmem:[#allocation13 + $0x894] sm:$0xff]
    %v7472 = vld [vmem:[#allocation13 + $0x89c] sm:$0xf]
    %v7473 = vld [vmem:[#allocation13 + $0x8a0] sm:$0xff]
    %v7474 = vld [vmem:[#allocation13 + $0x8a8] sm:$0xf]
    %v7475 = vld [vmem:[#allocation13 + $0x8ac] sm:$0xff]
    %v7476 = vld [vmem:[#allocation13 + $0x8b4] sm:$0xf]
    %v7477 = vld [vmem:[#allocation13 + $0x8b8] sm:$0xff]
    %v7478 = vld [vmem:[#allocation13 + $0x8c0] sm:$0xf]
    %v7479 = vld [vmem:[#allocation13 + $0x8c4] sm:$0xff]
    %v7480 = vld [vmem:[#allocation13 + $0x8cc] sm:$0xf]
    %v7481 = vld [vmem:[#allocation13 + $0x8d0] sm:$0xff]
    %v7482 = vld [vmem:[#allocation13 + $0x8d8] sm:$0xf]
    %v7483 = vld [vmem:[#allocation13 + $0x8dc] sm:$0xff]
    %v7484 = vld [vmem:[#allocation13 + $0x8e4] sm:$0xf]
    %v7485 = vld [vmem:[#allocation13 + $0x8e8] sm:$0xff]
    %v7486 = vld [vmem:[#allocation13 + $0x8f0] sm:$0xf]
    %v7487 = vld [vmem:[#allocation13 + $0x8f4] sm:$0xff]
    %v7488 = vld [vmem:[#allocation13 + $0x8fc] sm:$0xf]
    %v7489 = vld [vmem:[#allocation14] sm:$0x7]
    %v7491 = vlaneseq
    %v7492 = vshrl.u32 %v7491, 7
    %v7493 = vsub.s32 0, %v7492
    %v7494 = vrot.slane %v7489, %v7493
    %v7495 = vlaneseq
    %v7496 = vshrl.u32 %v7495, 7
    %v7497 = vsub.s32 1, %v7496
    %v7498 = vrot.slane %v7489, %v7497
    %v7499 = vlaneseq
    %v7500 = vshrl.u32 %v7499, 7
    %v7501 = vsub.s32 2, %v7500
    %v7502 = vrot.slane %v7489, %v7501
    %v7890 = vunpack.c.l.b16 %v7105
    %v7891 = vunpack.c.h.b16 %v7105
    %v7892 = vunpack.c.l.b16 %v7106
    %v7893 = vunpack.c.l.b16 %v7107
    %v7894 = vunpack.c.h.b16 %v7107
    %v7895 = vunpack.c.l.b16 %v7108
    %v7896 = vunpack.c.l.b16 %v7109
    %v7897 = vunpack.c.h.b16 %v7109
    %v7898 = vunpack.c.l.b16 %v7110
    %v7899 = vunpack.c.l.b16 %v7111
    %v7900 = vunpack.c.h.b16 %v7111
    %v7901 = vunpack.c.l.b16 %v7112
    %v7902 = vunpack.c.l.b16 %v7113
    %v7903 = vunpack.c.h.b16 %v7113
    %v7904 = vunpack.c.l.b16 %v7114
    %v7905 = vunpack.c.l.b16 %v7115
    %v7906 = vunpack.c.h.b16 %v7115
    %v7907 = vunpack.c.l.b16 %v7116
    %v7908 = vunpack.c.l.b16 %v7117
    %v7909 = vunpack.c.h.b16 %v7117
    %v7910 = vunpack.c.l.b16 %v7118
    %v7911 = vunpack.c.l.b16 %v7119
    %v7912 = vunpack.c.h.b16 %v7119
    %v7913 = vunpack.c.l.b16 %v7120
    %v7914 = vunpack.c.l.b16 %v7121
    %v7915 = vunpack.c.h.b16 %v7121
    %v7916 = vunpack.c.l.b16 %v7122
    %v7917 = vunpack.c.l.b16 %v7123
    %v7918 = vunpack.c.h.b16 %v7123
    %v7919 = vunpack.c.l.b16 %v7124
    %v7920 = vunpack.c.l.b16 %v7125
    %v7921 = vunpack.c.h.b16 %v7125
    %v7922 = vunpack.c.l.b16 %v7126
    %v7923 = vunpack.c.l.b16 %v7127
    %v7924 = vunpack.c.h.b16 %v7127
    %v7925 = vunpack.c.l.b16 %v7128
    %v7926 = vunpack.c.l.b16 %v7129
    %v7927 = vunpack.c.h.b16 %v7129
    %v7928 = vunpack.c.l.b16 %v7130
    %v7929 = vunpack.c.l.b16 %v7131
    %v7930 = vunpack.c.h.b16 %v7131
    %v7931 = vunpack.c.l.b16 %v7132
    %v7932 = vunpack.c.l.b16 %v7133
    %v7933 = vunpack.c.h.b16 %v7133
    %v7934 = vunpack.c.l.b16 %v7134
    %v7935 = vunpack.c.l.b16 %v7135
    %v7936 = vunpack.c.h.b16 %v7135
    %v7937 = vunpack.c.l.b16 %v7136
    %v7938 = vunpack.c.l.b16 %v7137
    %v7939 = vunpack.c.h.b16 %v7137
    %v7940 = vunpack.c.l.b16 %v7138
    %v7941 = vunpack.c.l.b16 %v7139
    %v7942 = vunpack.c.h.b16 %v7139
    %v7943 = vunpack.c.l.b16 %v7140
    %v7944 = vunpack.c.l.b16 %v7141
    %v7945 = vunpack.c.h.b16 %v7141
    %v7946 = vunpack.c.l.b16 %v7142
    %v7947 = vunpack.c.l.b16 %v7143
    %v7948 = vunpack.c.h.b16 %v7143
    %v7949 = vunpack.c.l.b16 %v7144
    %v7950 = vunpack.c.l.b16 %v7145
    %v7951 = vunpack.c.h.b16 %v7145
    %v7952 = vunpack.c.l.b16 %v7146
    %v7953 = vunpack.c.l.b16 %v7147
    %v7954 = vunpack.c.h.b16 %v7147
    %v7955 = vunpack.c.l.b16 %v7148
    %v7956 = vunpack.c.l.b16 %v7149
    %v7957 = vunpack.c.h.b16 %v7149
    %v7958 = vunpack.c.l.b16 %v7150
    %v7959 = vunpack.c.l.b16 %v7151
    %v7960 = vunpack.c.h.b16 %v7151
    %v7961 = vunpack.c.l.b16 %v7152
    %v7962 = vunpack.c.l.b16 %v7153
    %v7963 = vunpack.c.h.b16 %v7153
    %v7964 = vunpack.c.l.b16 %v7154
    %v7965 = vunpack.c.l.b16 %v7155
    %v7966 = vunpack.c.h.b16 %v7155
    %v7967 = vunpack.c.l.b16 %v7156
    %v7968 = vunpack.c.l.b16 %v7157
    %v7969 = vunpack.c.h.b16 %v7157
    %v7970 = vunpack.c.l.b16 %v7158
    %v7971 = vunpack.c.l.b16 %v7159
    %v7972 = vunpack.c.h.b16 %v7159
    %v7973 = vunpack.c.l.b16 %v7160
    %v7974 = vunpack.c.l.b16 %v7161
    %v7975 = vunpack.c.h.b16 %v7161
    %v7976 = vunpack.c.l.b16 %v7162
    %v7977 = vunpack.c.l.b16 %v7163
    %v7978 = vunpack.c.h.b16 %v7163
    %v7979 = vunpack.c.l.b16 %v7164
    %v7980 = vunpack.c.l.b16 %v7165
    %v7981 = vunpack.c.h.b16 %v7165
    %v7982 = vunpack.c.l.b16 %v7166
    %v7983 = vunpack.c.l.b16 %v7167
    %v7984 = vunpack.c.h.b16 %v7167
    %v7985 = vunpack.c.l.b16 %v7168
    %v7986 = vunpack.c.l.b16 %v7169
    %v7987 = vunpack.c.h.b16 %v7169
    %v7988 = vunpack.c.l.b16 %v7170
    %v7989 = vunpack.c.l.b16 %v7171
    %v7990 = vunpack.c.h.b16 %v7171
    %v7991 = vunpack.c.l.b16 %v7172
    %v7992 = vunpack.c.l.b16 %v7173
    %v7993 = vunpack.c.h.b16 %v7173
    %v7994 = vunpack.c.l.b16 %v7174
    %v7995 = vunpack.c.l.b16 %v7175
    %v7996 = vunpack.c.h.b16 %v7175
    %v7997 = vunpack.c.l.b16 %v7176
    %v7998 = vunpack.c.l.b16 %v7177
    %v7999 = vunpack.c.h.b16 %v7177
    %v8000 = vunpack.c.l.b16 %v7178
    %v8001 = vunpack.c.l.b16 %v7179
    %v8002 = vunpack.c.h.b16 %v7179
    %v8003 = vunpack.c.l.b16 %v7180
    %v8004 = vunpack.c.l.b16 %v7181
    %v8005 = vunpack.c.h.b16 %v7181
    %v8006 = vunpack.c.l.b16 %v7182
    %v8007 = vunpack.c.l.b16 %v7183
    %v8008 = vunpack.c.h.b16 %v7183
    %v8009 = vunpack.c.l.b16 %v7184
    %v8010 = vunpack.c.l.b16 %v7185
    %v8011 = vunpack.c.h.b16 %v7185
    %v8012 = vunpack.c.l.b16 %v7186
    %v8013 = vunpack.c.l.b16 %v7187
    %v8014 = vunpack.c.h.b16 %v7187
    %v8015 = vunpack.c.l.b16 %v7188
    %v8016 = vunpack.c.l.b16 %v7189
    %v8017 = vunpack.c.h.b16 %v7189
    %v8018 = vunpack.c.l.b16 %v7190
    %v8019 = vunpack.c.l.b16 %v7191
    %v8020 = vunpack.c.h.b16 %v7191
    %v8021 = vunpack.c.l.b16 %v7192
    %v8022 = vunpack.c.l.b16 %v7193
    %v8023 = vunpack.c.h.b16 %v7193
    %v8024 = vunpack.c.l.b16 %v7194
    %v8025 = vunpack.c.l.b16 %v7195
    %v8026 = vunpack.c.h.b16 %v7195
    %v8027 = vunpack.c.l.b16 %v7196
    %v8028 = vunpack.c.l.b16 %v7197
    %v8029 = vunpack.c.h.b16 %v7197
    %v8030 = vunpack.c.l.b16 %v7198
    %v8031 = vunpack.c.l.b16 %v7199
    %v8032 = vunpack.c.h.b16 %v7199
    %v8033 = vunpack.c.l.b16 %v7200
    %v8034 = vunpack.c.l.b16 %v7201
    %v8035 = vunpack.c.h.b16 %v7201
    %v8036 = vunpack.c.l.b16 %v7202
    %v8037 = vunpack.c.l.b16 %v7203
    %v8038 = vunpack.c.h.b16 %v7203
    %v8039 = vunpack.c.l.b16 %v7204
    %v8040 = vunpack.c.l.b16 %v7205
    %v8041 = vunpack.c.h.b16 %v7205
    %v8042 = vunpack.c.l.b16 %v7206
    %v8043 = vunpack.c.l.b16 %v7207
    %v8044 = vunpack.c.h.b16 %v7207
    %v8045 = vunpack.c.l.b16 %v7208
    %v8046 = vunpack.c.l.b16 %v7209
    %v8047 = vunpack.c.h.b16 %v7209
    %v8048 = vunpack.c.l.b16 %v7210
    %v8049 = vunpack.c.l.b16 %v7211
    %v8050 = vunpack.c.h.b16 %v7211
    %v8051 = vunpack.c.l.b16 %v7212
    %v8052 = vunpack.c.l.b16 %v7213
    %v8053 = vunpack.c.h.b16 %v7213
    %v8054 = vunpack.c.l.b16 %v7214
    %v8055 = vunpack.c.l.b16 %v7215
    %v8056 = vunpack.c.h.b16 %v7215
    %v8057 = vunpack.c.l.b16 %v7216
    %v8058 = vunpack.c.l.b16 %v7217
    %v8059 = vunpack.c.h.b16 %v7217
    %v8060 = vunpack.c.l.b16 %v7218
    %v8061 = vunpack.c.l.b16 %v7219
    %v8062 = vunpack.c.h.b16 %v7219
    %v8063 = vunpack.c.l.b16 %v7220
    %v8064 = vunpack.c.l.b16 %v7221
    %v8065 = vunpack.c.h.b16 %v7221
    %v8066 = vunpack.c.l.b16 %v7222
    %v8067 = vunpack.c.l.b16 %v7223
    %v8068 = vunpack.c.h.b16 %v7223
    %v8069 = vunpack.c.l.b16 %v7224
    %v8070 = vunpack.c.l.b16 %v7225
    %v8071 = vunpack.c.h.b16 %v7225
    %v8072 = vunpack.c.l.b16 %v7226
    %v8073 = vunpack.c.l.b16 %v7227
    %v8074 = vunpack.c.h.b16 %v7227
    %v8075 = vunpack.c.l.b16 %v7228
    %v8076 = vunpack.c.l.b16 %v7229
    %v8077 = vunpack.c.h.b16 %v7229
    %v8078 = vunpack.c.l.b16 %v7230
    %v8079 = vunpack.c.l.b16 %v7231
    %v8080 = vunpack.c.h.b16 %v7231
    %v8081 = vunpack.c.l.b16 %v7232
    %v8082 = vunpack.c.l.b16 %v7233
    %v8083 = vunpack.c.h.b16 %v7233
    %v8084 = vunpack.c.l.b16 %v7234
    %v8085 = vunpack.c.l.b16 %v7235
    %v8086 = vunpack.c.h.b16 %v7235
    %v8087 = vunpack.c.l.b16 %v7236
    %v8088 = vunpack.c.l.b16 %v7237
    %v8089 = vunpack.c.h.b16 %v7237
    %v8090 = vunpack.c.l.b16 %v7238
    %v8091 = vunpack.c.l.b16 %v7239
    %v8092 = vunpack.c.h.b16 %v7239
    %v8093 = vunpack.c.l.b16 %v7240
    %v8094 = vunpack.c.l.b16 %v7241
    %v8095 = vunpack.c.h.b16 %v7241
    %v8096 = vunpack.c.l.b16 %v7242
    %v8097 = vunpack.c.l.b16 %v7243
    %v8098 = vunpack.c.h.b16 %v7243
    %v8099 = vunpack.c.l.b16 %v7244
    %v8100 = vunpack.c.l.b16 %v7245
    %v8101 = vunpack.c.h.b16 %v7245
    %v8102 = vunpack.c.l.b16 %v7246
    %v8103 = vunpack.c.l.b16 %v7247
    %v8104 = vunpack.c.h.b16 %v7247
    %v8105 = vunpack.c.l.b16 %v7248
    %v8106 = vunpack.c.l.b16 %v7249
    %v8107 = vunpack.c.h.b16 %v7249
    %v8108 = vunpack.c.l.b16 %v7250
    %v8109 = vunpack.c.l.b16 %v7251
    %v8110 = vunpack.c.h.b16 %v7251
    %v8111 = vunpack.c.l.b16 %v7252
    %v8112 = vunpack.c.l.b16 %v7253
    %v8113 = vunpack.c.h.b16 %v7253
    %v8114 = vunpack.c.l.b16 %v7254
    %v8115 = vunpack.c.l.b16 %v7255
    %v8116 = vunpack.c.h.b16 %v7255
    %v8117 = vunpack.c.l.b16 %v7256
    %v8118 = vunpack.c.l.b16 %v7257
    %v8119 = vunpack.c.h.b16 %v7257
    %v8120 = vunpack.c.l.b16 %v7258
    %v8121 = vunpack.c.l.b16 %v7259
    %v8122 = vunpack.c.h.b16 %v7259
    %v8123 = vunpack.c.l.b16 %v7260
    %v8124 = vunpack.c.l.b16 %v7261
    %v8125 = vunpack.c.h.b16 %v7261
    %v8126 = vunpack.c.l.b16 %v7262
    %v8127 = vunpack.c.l.b16 %v7263
    %v8128 = vunpack.c.h.b16 %v7263
    %v8129 = vunpack.c.l.b16 %v7264
    %v8130 = vunpack.c.l.b16 %v7265
    %v8131 = vunpack.c.h.b16 %v7265
    %v8132 = vunpack.c.l.b16 %v7266
    %v8133 = vunpack.c.l.b16 %v7267
    %v8134 = vunpack.c.h.b16 %v7267
    %v8135 = vunpack.c.l.b16 %v7268
    %v8136 = vunpack.c.l.b16 %v7269
    %v8137 = vunpack.c.h.b16 %v7269
    %v8138 = vunpack.c.l.b16 %v7270
    %v8139 = vunpack.c.l.b16 %v7271
    %v8140 = vunpack.c.h.b16 %v7271
    %v8141 = vunpack.c.l.b16 %v7272
    %v8142 = vunpack.c.l.b16 %v7273
    %v8143 = vunpack.c.h.b16 %v7273
    %v8144 = vunpack.c.l.b16 %v7274
    %v8145 = vunpack.c.l.b16 %v7275
    %v8146 = vunpack.c.h.b16 %v7275
    %v8147 = vunpack.c.l.b16 %v7276
    %v8148 = vunpack.c.l.b16 %v7277
    %v8149 = vunpack.c.h.b16 %v7277
    %v8150 = vunpack.c.l.b16 %v7278
    %v8151 = vunpack.c.l.b16 %v7279
    %v8152 = vunpack.c.h.b16 %v7279
    %v8153 = vunpack.c.l.b16 %v7280
    %v8154 = vunpack.c.l.b16 %v7281
    %v8155 = vunpack.c.h.b16 %v7281
    %v8156 = vunpack.c.l.b16 %v7282
    %v8157 = vunpack.c.l.b16 %v7283
    %v8158 = vunpack.c.h.b16 %v7283
    %v8159 = vunpack.c.l.b16 %v7284
    %v8160 = vunpack.c.l.b16 %v7285
    %v8161 = vunpack.c.h.b16 %v7285
    %v8162 = vunpack.c.l.b16 %v7286
    %v8163 = vunpack.c.l.b16 %v7287
    %v8164 = vunpack.c.h.b16 %v7287
    %v8165 = vunpack.c.l.b16 %v7288
    %v8166 = vunpack.c.l.b16 %v7289
    %v8167 = vunpack.c.h.b16 %v7289
    %v8168 = vunpack.c.l.b16 %v7290
    %v8169 = vunpack.c.l.b16 %v7291
    %v8170 = vunpack.c.h.b16 %v7291
    %v8171 = vunpack.c.l.b16 %v7292
    %v8172 = vunpack.c.l.b16 %v7293
    %v8173 = vunpack.c.h.b16 %v7293
    %v8174 = vunpack.c.l.b16 %v7294
    %v8175 = vunpack.c.l.b16 %v7295
    %v8176 = vunpack.c.h.b16 %v7295
    %v8177 = vunpack.c.l.b16 %v7296
    %v8178 = vunpack.c.l.b16 %v7297
    %v8179 = vunpack.c.h.b16 %v7297
    %v8180 = vunpack.c.l.b16 %v7298
    %v8181 = vunpack.c.l.b16 %v7299
    %v8182 = vunpack.c.h.b16 %v7299
    %v8183 = vunpack.c.l.b16 %v7300
    %v8184 = vunpack.c.l.b16 %v7301
    %v8185 = vunpack.c.h.b16 %v7301
    %v8186 = vunpack.c.l.b16 %v7302
    %v8187 = vunpack.c.l.b16 %v7303
    %v8188 = vunpack.c.h.b16 %v7303
    %v8189 = vunpack.c.l.b16 %v7304
    %v8190 = vunpack.c.l.b16 %v7305
    %v8191 = vunpack.c.h.b16 %v7305
    %v8192 = vunpack.c.l.b16 %v7306
    %v8193 = vunpack.c.l.b16 %v7307
    %v8194 = vunpack.c.h.b16 %v7307
    %v8195 = vunpack.c.l.b16 %v7308
    %v8196 = vunpack.c.l.b16 %v7309
    %v8197 = vunpack.c.h.b16 %v7309
    %v8198 = vunpack.c.l.b16 %v7310
    %v8199 = vunpack.c.l.b16 %v7311
    %v8200 = vunpack.c.h.b16 %v7311
    %v8201 = vunpack.c.l.b16 %v7312
    %v8202 = vunpack.c.l.b16 %v7313
    %v8203 = vunpack.c.h.b16 %v7313
    %v8204 = vunpack.c.l.b16 %v7314
    %v8205 = vunpack.c.l.b16 %v7315
    %v8206 = vunpack.c.h.b16 %v7315
    %v8207 = vunpack.c.l.b16 %v7316
    %v8208 = vunpack.c.l.b16 %v7317
    %v8209 = vunpack.c.h.b16 %v7317
    %v8210 = vunpack.c.l.b16 %v7318
    %v8211 = vunpack.c.l.b16 %v7319
    %v8212 = vunpack.c.h.b16 %v7319
    %v8213 = vunpack.c.l.b16 %v7320
    %v8214 = vunpack.c.l.b16 %v7321
    %v8215 = vunpack.c.h.b16 %v7321
    %v8216 = vunpack.c.l.b16 %v7322
    %v8217 = vunpack.c.l.b16 %v7323
    %v8218 = vunpack.c.h.b16 %v7323
    %v8219 = vunpack.c.l.b16 %v7324
    %v8220 = vunpack.c.l.b16 %v7325
    %v8221 = vunpack.c.h.b16 %v7325
    %v8222 = vunpack.c.l.b16 %v7326
    %v8223 = vunpack.c.l.b16 %v7327
    %v8224 = vunpack.c.h.b16 %v7327
    %v8225 = vunpack.c.l.b16 %v7328
    %v8226 = vunpack.c.l.b16 %v7329
    %v8227 = vunpack.c.h.b16 %v7329
    %v8228 = vunpack.c.l.b16 %v7330
    %v8229 = vunpack.c.l.b16 %v7331
    %v8230 = vunpack.c.h.b16 %v7331
    %v8231 = vunpack.c.l.b16 %v7332
    %v8232 = vunpack.c.l.b16 %v7333
    %v8233 = vunpack.c.h.b16 %v7333
    %v8234 = vunpack.c.l.b16 %v7334
    %v8235 = vunpack.c.l.b16 %v7335
    %v8236 = vunpack.c.h.b16 %v7335
    %v8237 = vunpack.c.l.b16 %v7336
    %v8238 = vunpack.c.l.b16 %v7337
    %v8239 = vunpack.c.h.b16 %v7337
    %v8240 = vunpack.c.l.b16 %v7338
    %v8241 = vunpack.c.l.b16 %v7339
    %v8242 = vunpack.c.h.b16 %v7339
    %v8243 = vunpack.c.l.b16 %v7340
    %v8244 = vunpack.c.l.b16 %v7341
    %v8245 = vunpack.c.h.b16 %v7341
    %v8246 = vunpack.c.l.b16 %v7342
    %v8247 = vunpack.c.l.b16 %v7343
    %v8248 = vunpack.c.h.b16 %v7343
    %v8249 = vunpack.c.l.b16 %v7344
    %v8250 = vunpack.c.l.b16 %v7345
    %v8251 = vunpack.c.h.b16 %v7345
    %v8252 = vunpack.c.l.b16 %v7346
    %v8253 = vunpack.c.l.b16 %v7347
    %v8254 = vunpack.c.h.b16 %v7347
    %v8255 = vunpack.c.l.b16 %v7348
    %v8256 = vunpack.c.l.b16 %v7349
    %v8257 = vunpack.c.h.b16 %v7349
    %v8258 = vunpack.c.l.b16 %v7350
    %v8259 = vunpack.c.l.b16 %v7351
    %v8260 = vunpack.c.h.b16 %v7351
    %v8261 = vunpack.c.l.b16 %v7352
    %v8262 = vunpack.c.l.b16 %v7353
    %v8263 = vunpack.c.h.b16 %v7353
    %v8264 = vunpack.c.l.b16 %v7354
    %v8265 = vunpack.c.l.b16 %v7355
    %v8266 = vunpack.c.h.b16 %v7355
    %v8267 = vunpack.c.l.b16 %v7356
    %v8268 = vunpack.c.l.b16 %v7357
    %v8269 = vunpack.c.h.b16 %v7357
    %v8270 = vunpack.c.l.b16 %v7358
    %v8271 = vunpack.c.l.b16 %v7359
    %v8272 = vunpack.c.h.b16 %v7359
    %v8273 = vunpack.c.l.b16 %v7360
    %v8274 = vunpack.c.l.b16 %v7361
    %v8275 = vunpack.c.h.b16 %v7361
    %v8276 = vunpack.c.l.b16 %v7362
    %v8277 = vunpack.c.l.b16 %v7363
    %v8278 = vunpack.c.h.b16 %v7363
    %v8279 = vunpack.c.l.b16 %v7364
    %v8280 = vunpack.c.l.b16 %v7365
    %v8281 = vunpack.c.h.b16 %v7365
    %v8282 = vunpack.c.l.b16 %v7366
    %v8283 = vunpack.c.l.b16 %v7367
    %v8284 = vunpack.c.h.b16 %v7367
    %v8285 = vunpack.c.l.b16 %v7368
    %v8286 = vunpack.c.l.b16 %v7369
    %v8287 = vunpack.c.h.b16 %v7369
    %v8288 = vunpack.c.l.b16 %v7370
    %v8289 = vunpack.c.l.b16 %v7371
    %v8290 = vunpack.c.h.b16 %v7371
    %v8291 = vunpack.c.l.b16 %v7372
    %v8292 = vunpack.c.l.b16 %v7373
    %v8293 = vunpack.c.h.b16 %v7373
    %v8294 = vunpack.c.l.b16 %v7374
    %v8295 = vunpack.c.l.b16 %v7375
    %v8296 = vunpack.c.h.b16 %v7375
    %v8297 = vunpack.c.l.b16 %v7376
    %v8298 = vunpack.c.l.b16 %v7377
    %v8299 = vunpack.c.h.b16 %v7377
    %v8300 = vunpack.c.l.b16 %v7378
    %v8301 = vunpack.c.l.b16 %v7379
    %v8302 = vunpack.c.h.b16 %v7379
    %v8303 = vunpack.c.l.b16 %v7380
    %v8304 = vunpack.c.l.b16 %v7381
    %v8305 = vunpack.c.h.b16 %v7381
    %v8306 = vunpack.c.l.b16 %v7382
    %v8307 = vunpack.c.l.b16 %v7383
    %v8308 = vunpack.c.h.b16 %v7383
    %v8309 = vunpack.c.l.b16 %v7384
    %v8310 = vunpack.c.l.b16 %v7385
    %v8311 = vunpack.c.h.b16 %v7385
    %v8312 = vunpack.c.l.b16 %v7386
    %v8313 = vunpack.c.l.b16 %v7387
    %v8314 = vunpack.c.h.b16 %v7387
    %v8315 = vunpack.c.l.b16 %v7388
    %v8316 = vunpack.c.l.b16 %v7389
    %v8317 = vunpack.c.h.b16 %v7389
    %v8318 = vunpack.c.l.b16 %v7390
    %v8319 = vunpack.c.l.b16 %v7391
    %v8320 = vunpack.c.h.b16 %v7391
    %v8321 = vunpack.c.l.b16 %v7392
    %v8322 = vunpack.c.l.b16 %v7393
    %v8323 = vunpack.c.h.b16 %v7393
    %v8324 = vunpack.c.l.b16 %v7394
    %v8325 = vunpack.c.l.b16 %v7395
    %v8326 = vunpack.c.h.b16 %v7395
    %v8327 = vunpack.c.l.b16 %v7396
    %v8328 = vunpack.c.l.b16 %v7397
    %v8329 = vunpack.c.h.b16 %v7397
    %v8330 = vunpack.c.l.b16 %v7398
    %v8331 = vunpack.c.l.b16 %v7399
    %v8332 = vunpack.c.h.b16 %v7399
    %v8333 = vunpack.c.l.b16 %v7400
    %v8334 = vunpack.c.l.b16 %v7401
    %v8335 = vunpack.c.h.b16 %v7401
    %v8336 = vunpack.c.l.b16 %v7402
    %v8337 = vunpack.c.l.b16 %v7403
    %v8338 = vunpack.c.h.b16 %v7403
    %v8339 = vunpack.c.l.b16 %v7404
    %v8340 = vunpack.c.l.b16 %v7405
    %v8341 = vunpack.c.h.b16 %v7405
    %v8342 = vunpack.c.l.b16 %v7406
    %v8343 = vunpack.c.l.b16 %v7407
    %v8344 = vunpack.c.h.b16 %v7407
    %v8345 = vunpack.c.l.b16 %v7408
    %v8346 = vunpack.c.l.b16 %v7409
    %v8347 = vunpack.c.h.b16 %v7409
    %v8348 = vunpack.c.l.b16 %v7410
    %v8349 = vunpack.c.l.b16 %v7411
    %v8350 = vunpack.c.h.b16 %v7411
    %v8351 = vunpack.c.l.b16 %v7412
    %v8352 = vunpack.c.l.b16 %v7413
    %v8353 = vunpack.c.h.b16 %v7413
    %v8354 = vunpack.c.l.b16 %v7414
    %v8355 = vunpack.c.l.b16 %v7415
    %v8356 = vunpack.c.h.b16 %v7415
    %v8357 = vunpack.c.l.b16 %v7416
    %v8358 = vunpack.c.l.b16 %v7417
    %v8359 = vunpack.c.h.b16 %v7417
    %v8360 = vunpack.c.l.b16 %v7418
    %v8361 = vunpack.c.l.b16 %v7419
    %v8362 = vunpack.c.h.b16 %v7419
    %v8363 = vunpack.c.l.b16 %v7420
    %v8364 = vunpack.c.l.b16 %v7421
    %v8365 = vunpack.c.h.b16 %v7421
    %v8366 = vunpack.c.l.b16 %v7422
    %v8367 = vunpack.c.l.b16 %v7423
    %v8368 = vunpack.c.h.b16 %v7423
    %v8369 = vunpack.c.l.b16 %v7424
    %v8370 = vunpack.c.l.b16 %v7425
    %v8371 = vunpack.c.h.b16 %v7425
    %v8372 = vunpack.c.l.b16 %v7426
    %v8373 = vunpack.c.l.b16 %v7427
    %v8374 = vunpack.c.h.b16 %v7427
    %v8375 = vunpack.c.l.b16 %v7428
    %v8376 = vunpack.c.l.b16 %v7429
    %v8377 = vunpack.c.h.b16 %v7429
    %v8378 = vunpack.c.l.b16 %v7430
    %v8379 = vunpack.c.l.b16 %v7431
    %v8380 = vunpack.c.h.b16 %v7431
    %v8381 = vunpack.c.l.b16 %v7432
    %v8382 = vunpack.c.l.b16 %v7433
    %v8383 = vunpack.c.h.b16 %v7433
    %v8384 = vunpack.c.l.b16 %v7434
    %v8385 = vunpack.c.l.b16 %v7435
    %v8386 = vunpack.c.h.b16 %v7435
    %v8387 = vunpack.c.l.b16 %v7436
    %v8388 = vunpack.c.l.b16 %v7437
    %v8389 = vunpack.c.h.b16 %v7437
    %v8390 = vunpack.c.l.b16 %v7438
    %v8391 = vunpack.c.l.b16 %v7439
    %v8392 = vunpack.c.h.b16 %v7439
    %v8393 = vunpack.c.l.b16 %v7440
    %v8394 = vunpack.c.l.b16 %v7441
    %v8395 = vunpack.c.h.b16 %v7441
    %v8396 = vunpack.c.l.b16 %v7442
    %v8397 = vunpack.c.l.b16 %v7443
    %v8398 = vunpack.c.h.b16 %v7443
    %v8399 = vunpack.c.l.b16 %v7444
    %v8400 = vunpack.c.l.b16 %v7445
    %v8401 = vunpack.c.h.b16 %v7445
    %v8402 = vunpack.c.l.b16 %v7446
    %v8403 = vunpack.c.l.b16 %v7447
    %v8404 = vunpack.c.h.b16 %v7447
    %v8405 = vunpack.c.l.b16 %v7448
    %v8406 = vunpack.c.l.b16 %v7449
    %v8407 = vunpack.c.h.b16 %v7449
    %v8408 = vunpack.c.l.b16 %v7450
    %v8409 = vunpack.c.l.b16 %v7451
    %v8410 = vunpack.c.h.b16 %v7451
    %v8411 = vunpack.c.l.b16 %v7452
    %v8412 = vunpack.c.l.b16 %v7453
    %v8413 = vunpack.c.h.b16 %v7453
    %v8414 = vunpack.c.l.b16 %v7454
    %v8415 = vunpack.c.l.b16 %v7455
    %v8416 = vunpack.c.h.b16 %v7455
    %v8417 = vunpack.c.l.b16 %v7456
    %v8418 = vunpack.c.l.b16 %v7457
    %v8419 = vunpack.c.h.b16 %v7457
    %v8420 = vunpack.c.l.b16 %v7458
    %v8421 = vunpack.c.l.b16 %v7459
    %v8422 = vunpack.c.h.b16 %v7459
    %v8423 = vunpack.c.l.b16 %v7460
    %v8424 = vunpack.c.l.b16 %v7461
    %v8425 = vunpack.c.h.b16 %v7461
    %v8426 = vunpack.c.l.b16 %v7462
    %v8427 = vunpack.c.l.b16 %v7463
    %v8428 = vunpack.c.h.b16 %v7463
    %v8429 = vunpack.c.l.b16 %v7464
    %v8430 = vunpack.c.l.b16 %v7465
    %v8431 = vunpack.c.h.b16 %v7465
    %v8432 = vunpack.c.l.b16 %v7466
    %v8433 = vunpack.c.l.b16 %v7467
    %v8434 = vunpack.c.h.b16 %v7467
    %v8435 = vunpack.c.l.b16 %v7468
    %v8436 = vunpack.c.l.b16 %v7469
    %v8437 = vunpack.c.h.b16 %v7469
    %v8438 = vunpack.c.l.b16 %v7470
    %v8439 = vunpack.c.l.b16 %v7471
    %v8440 = vunpack.c.h.b16 %v7471
    %v8441 = vunpack.c.l.b16 %v7472
    %v8442 = vunpack.c.l.b16 %v7473
    %v8443 = vunpack.c.h.b16 %v7473
    %v8444 = vunpack.c.l.b16 %v7474
    %v8445 = vunpack.c.l.b16 %v7475
    %v8446 = vunpack.c.h.b16 %v7475
    %v8447 = vunpack.c.l.b16 %v7476
    %v8448 = vunpack.c.l.b16 %v7477
    %v8449 = vunpack.c.h.b16 %v7477
    %v8450 = vunpack.c.l.b16 %v7478
    %v8451 = vunpack.c.l.b16 %v7479
    %v8452 = vunpack.c.h.b16 %v7479
    %v8453 = vunpack.c.l.b16 %v7480
    %v8454 = vunpack.c.l.b16 %v7481
    %v8455 = vunpack.c.h.b16 %v7481
    %v8456 = vunpack.c.l.b16 %v7482
    %v8457 = vunpack.c.l.b16 %v7483
    %v8458 = vunpack.c.h.b16 %v7483
    %v8459 = vunpack.c.l.b16 %v7484
    %v8460 = vunpack.c.l.b16 %v7485
    %v8461 = vunpack.c.h.b16 %v7485
    %v8462 = vunpack.c.l.b16 %v7486
    %v8463 = vunpack.c.l.b16 %v7487
    %v8464 = vunpack.c.h.b16 %v7487
    %v8465 = vunpack.c.l.b16 %v7488
    %v8466 = vpack.c.b16 %v7893, %v7890
    %v8467 = vpack.c.b16 %v7894, %v7891
    %v8468 = vpack.c.b16 %v7895, %v7892
    %v8469 = vpack.c.b16 %v7899, %v7896
    %v8470 = vpack.c.b16 %v7900, %v7897
    %v8471 = vpack.c.b16 %v7901, %v7898
    %v8472 = vpack.c.b16 %v7905, %v7902
    %v8473 = vpack.c.b16 %v7906, %v7903
    %v8474 = vpack.c.b16 %v7907, %v7904
    %v8475 = vpack.c.b16 %v7911, %v7908
    %v8476 = vpack.c.b16 %v7912, %v7909
    %v8477 = vpack.c.b16 %v7913, %v7910
    %v8478 = vpack.c.b16 %v7917, %v7914
    %v8479 = vpack.c.b16 %v7918, %v7915
    %v8480 = vpack.c.b16 %v7919, %v7916
    %v8481 = vpack.c.b16 %v7923, %v7920
    %v8482 = vpack.c.b16 %v7924, %v7921
    %v8483 = vpack.c.b16 %v7925, %v7922
    %v8484 = vpack.c.b16 %v7929, %v7926
    %v8485 = vpack.c.b16 %v7930, %v7927
    %v8486 = vpack.c.b16 %v7931, %v7928
    %v8487 = vpack.c.b16 %v7935, %v7932
    %v8488 = vpack.c.b16 %v7936, %v7933
    %v8489 = vpack.c.b16 %v7937, %v7934
    %v8490 = vpack.c.b16 %v7941, %v7938
    %v8491 = vpack.c.b16 %v7942, %v7939
    %v8492 = vpack.c.b16 %v7943, %v7940
    %v8493 = vpack.c.b16 %v7947, %v7944
    %v8494 = vpack.c.b16 %v7948, %v7945
    %v8495 = vpack.c.b16 %v7949, %v7946
    %v8496 = vpack.c.b16 %v7953, %v7950
    %v8497 = vpack.c.b16 %v7954, %v7951
    %v8498 = vpack.c.b16 %v7955, %v7952
    %v8499 = vpack.c.b16 %v7959, %v7956
    %v8500 = vpack.c.b16 %v7960, %v7957
    %v8501 = vpack.c.b16 %v7961, %v7958
    %v8502 = vpack.c.b16 %v7965, %v7962
    %v8503 = vpack.c.b16 %v7966, %v7963
    %v8504 = vpack.c.b16 %v7967, %v7964
    %v8505 = vpack.c.b16 %v7971, %v7968
    %v8506 = vpack.c.b16 %v7972, %v7969
    %v8507 = vpack.c.b16 %v7973, %v7970
    %v8508 = vpack.c.b16 %v7977, %v7974
    %v8509 = vpack.c.b16 %v7978, %v7975
    %v8510 = vpack.c.b16 %v7979, %v7976
    %v8511 = vpack.c.b16 %v7983, %v7980
    %v8512 = vpack.c.b16 %v7984, %v7981
    %v8513 = vpack.c.b16 %v7985, %v7982
    %v8514 = vpack.c.b16 %v7989, %v7986
    %v8515 = vpack.c.b16 %v7990, %v7987
    %v8516 = vpack.c.b16 %v7991, %v7988
    %v8517 = vpack.c.b16 %v7995, %v7992
    %v8518 = vpack.c.b16 %v7996, %v7993
    %v8519 = vpack.c.b16 %v7997, %v7994
    %v8520 = vpack.c.b16 %v8001, %v7998
    %v8521 = vpack.c.b16 %v8002, %v7999
    %v8522 = vpack.c.b16 %v8003, %v8000
    %v8523 = vpack.c.b16 %v8007, %v8004
    %v8524 = vpack.c.b16 %v8008, %v8005
    %v8525 = vpack.c.b16 %v8009, %v8006
    %v8526 = vpack.c.b16 %v8013, %v8010
    %v8527 = vpack.c.b16 %v8014, %v8011
    %v8528 = vpack.c.b16 %v8015, %v8012
    %v8529 = vpack.c.b16 %v8019, %v8016
    %v8530 = vpack.c.b16 %v8020, %v8017
    %v8531 = vpack.c.b16 %v8021, %v8018
    %v8532 = vpack.c.b16 %v8025, %v8022
    %v8533 = vpack.c.b16 %v8026, %v8023
    %v8534 = vpack.c.b16 %v8027, %v8024
    %v8535 = vpack.c.b16 %v8031, %v8028
    %v8536 = vpack.c.b16 %v8032, %v8029
    %v8537 = vpack.c.b16 %v8033, %v8030
    %v8538 = vpack.c.b16 %v8037, %v8034
    %v8539 = vpack.c.b16 %v8038, %v8035
    %v8540 = vpack.c.b16 %v8039, %v8036
    %v8541 = vpack.c.b16 %v8043, %v8040
    %v8542 = vpack.c.b16 %v8044, %v8041
    %v8543 = vpack.c.b16 %v8045, %v8042
    %v8544 = vpack.c.b16 %v8049, %v8046
    %v8545 = vpack.c.b16 %v8050, %v8047
    %v8546 = vpack.c.b16 %v8051, %v8048
    %v8547 = vpack.c.b16 %v8055, %v8052
    %v8548 = vpack.c.b16 %v8056, %v8053
    %v8549 = vpack.c.b16 %v8057, %v8054
    %v8550 = vpack.c.b16 %v8061, %v8058
    %v8551 = vpack.c.b16 %v8062, %v8059
    %v8552 = vpack.c.b16 %v8063, %v8060
    %v8553 = vpack.c.b16 %v8067, %v8064
    %v8554 = vpack.c.b16 %v8068, %v8065
    %v8555 = vpack.c.b16 %v8069, %v8066
    %v8556 = vpack.c.b16 %v8073, %v8070
    %v8557 = vpack.c.b16 %v8074, %v8071
    %v8558 = vpack.c.b16 %v8075, %v8072
    %v8559 = vpack.c.b16 %v8079, %v8076
    %v8560 = vpack.c.b16 %v8080, %v8077
    %v8561 = vpack.c.b16 %v8081, %v8078
    %v8562 = vpack.c.b16 %v8085, %v8082
    %v8563 = vpack.c.b16 %v8086, %v8083
    %v8564 = vpack.c.b16 %v8087, %v8084
    %v8565 = vpack.c.b16 %v8091, %v8088
    %v8566 = vpack.c.b16 %v8092, %v8089
    %v8567 = vpack.c.b16 %v8093, %v8090
    %v8568 = vpack.c.b16 %v8097, %v8094
    %v8569 = vpack.c.b16 %v8098, %v8095
    %v8570 = vpack.c.b16 %v8099, %v8096
    %v8571 = vpack.c.b16 %v8103, %v8100
    %v8572 = vpack.c.b16 %v8104, %v8101
    %v8573 = vpack.c.b16 %v8105, %v8102
    %v8574 = vpack.c.b16 %v8109, %v8106
    %v8575 = vpack.c.b16 %v8110, %v8107
    %v8576 = vpack.c.b16 %v8111, %v8108
    %v8577 = vpack.c.b16 %v8115, %v8112
    %v8578 = vpack.c.b16 %v8116, %v8113
    %v8579 = vpack.c.b16 %v8117, %v8114
    %v8580 = vpack.c.b16 %v8121, %v8118
    %v8581 = vpack.c.b16 %v8122, %v8119
    %v8582 = vpack.c.b16 %v8123, %v8120
    %v8583 = vpack.c.b16 %v8127, %v8124
    %v8584 = vpack.c.b16 %v8128, %v8125
    %v8585 = vpack.c.b16 %v8129, %v8126
    %v8586 = vpack.c.b16 %v8133, %v8130
    %v8587 = vpack.c.b16 %v8134, %v8131
    %v8588 = vpack.c.b16 %v8135, %v8132
    %v8589 = vpack.c.b16 %v8139, %v8136
    %v8590 = vpack.c.b16 %v8140, %v8137
    %v8591 = vpack.c.b16 %v8141, %v8138
    %v8592 = vpack.c.b16 %v8145, %v8142
    %v8593 = vpack.c.b16 %v8146, %v8143
    %v8594 = vpack.c.b16 %v8147, %v8144
    %v8595 = vpack.c.b16 %v8151, %v8148
    %v8596 = vpack.c.b16 %v8152, %v8149
    %v8597 = vpack.c.b16 %v8153, %v8150
    %v8598 = vpack.c.b16 %v8157, %v8154
    %v8599 = vpack.c.b16 %v8158, %v8155
    %v8600 = vpack.c.b16 %v8159, %v8156
    %v8601 = vpack.c.b16 %v8163, %v8160
    %v8602 = vpack.c.b16 %v8164, %v8161
    %v8603 = vpack.c.b16 %v8165, %v8162
    %v8604 = vpack.c.b16 %v8169, %v8166
    %v8605 = vpack.c.b16 %v8170, %v8167
    %v8606 = vpack.c.b16 %v8171, %v8168
    %v8607 = vpack.c.b16 %v8175, %v8172
    %v8608 = vpack.c.b16 %v8176, %v8173
    %v8609 = vpack.c.b16 %v8177, %v8174
    %v8610 = vpack.c.b16 %v8181, %v8178
    %v8611 = vpack.c.b16 %v8182, %v8179
    %v8612 = vpack.c.b16 %v8183, %v8180
    %v8613 = vpack.c.b16 %v8187, %v8184
    %v8614 = vpack.c.b16 %v8188, %v8185
    %v8615 = vpack.c.b16 %v8189, %v8186
    %v8616 = vpack.c.b16 %v8193, %v8190
    %v8617 = vpack.c.b16 %v8194, %v8191
    %v8618 = vpack.c.b16 %v8195, %v8192
    %v8619 = vpack.c.b16 %v8199, %v8196
    %v8620 = vpack.c.b16 %v8200, %v8197
    %v8621 = vpack.c.b16 %v8201, %v8198
    %v8622 = vpack.c.b16 %v8205, %v8202
    %v8623 = vpack.c.b16 %v8206, %v8203
    %v8624 = vpack.c.b16 %v8207, %v8204
    %v8625 = vpack.c.b16 %v8211, %v8208
    %v8626 = vpack.c.b16 %v8212, %v8209
    %v8627 = vpack.c.b16 %v8213, %v8210
    %v8628 = vpack.c.b16 %v8217, %v8214
    %v8629 = vpack.c.b16 %v8218, %v8215
    %v8630 = vpack.c.b16 %v8219, %v8216
    %v8631 = vpack.c.b16 %v8223, %v8220
    %v8632 = vpack.c.b16 %v8224, %v8221
    %v8633 = vpack.c.b16 %v8225, %v8222
    %v8634 = vpack.c.b16 %v8229, %v8226
    %v8635 = vpack.c.b16 %v8230, %v8227
    %v8636 = vpack.c.b16 %v8231, %v8228
    %v8637 = vpack.c.b16 %v8235, %v8232
    %v8638 = vpack.c.b16 %v8236, %v8233
    %v8639 = vpack.c.b16 %v8237, %v8234
    %v8640 = vpack.c.b16 %v8241, %v8238
    %v8641 = vpack.c.b16 %v8242, %v8239
    %v8642 = vpack.c.b16 %v8243, %v8240
    %v8643 = vpack.c.b16 %v8247, %v8244
    %v8644 = vpack.c.b16 %v8248, %v8245
    %v8645 = vpack.c.b16 %v8249, %v8246
    %v8646 = vpack.c.b16 %v8253, %v8250
    %v8647 = vpack.c.b16 %v8254, %v8251
    %v8648 = vpack.c.b16 %v8255, %v8252
    %v8649 = vpack.c.b16 %v8259, %v8256
    %v8650 = vpack.c.b16 %v8260, %v8257
    %v8651 = vpack.c.b16 %v8261, %v8258
    %v8652 = vpack.c.b16 %v8265, %v8262
    %v8653 = vpack.c.b16 %v8266, %v8263
    %v8654 = vpack.c.b16 %v8267, %v8264
    %v8655 = vpack.c.b16 %v8271, %v8268
    %v8656 = vpack.c.b16 %v8272, %v8269
    %v8657 = vpack.c.b16 %v8273, %v8270
    %v8658 = vpack.c.b16 %v8277, %v8274
    %v8659 = vpack.c.b16 %v8278, %v8275
    %v8660 = vpack.c.b16 %v8279, %v8276
    %v8661 = vpack.c.b16 %v8283, %v8280
    %v8662 = vpack.c.b16 %v8284, %v8281
    %v8663 = vpack.c.b16 %v8285, %v8282
    %v8664 = vpack.c.b16 %v8289, %v8286
    %v8665 = vpack.c.b16 %v8290, %v8287
    %v8666 = vpack.c.b16 %v8291, %v8288
    %v8667 = vpack.c.b16 %v8295, %v8292
    %v8668 = vpack.c.b16 %v8296, %v8293
    %v8669 = vpack.c.b16 %v8297, %v8294
    %v8670 = vpack.c.b16 %v8301, %v8298
    %v8671 = vpack.c.b16 %v8302, %v8299
    %v8672 = vpack.c.b16 %v8303, %v8300
    %v8673 = vpack.c.b16 %v8307, %v8304
    %v8674 = vpack.c.b16 %v8308, %v8305
    %v8675 = vpack.c.b16 %v8309, %v8306
    %v8676 = vpack.c.b16 %v8313, %v8310
    %v8677 = vpack.c.b16 %v8314, %v8311
    %v8678 = vpack.c.b16 %v8315, %v8312
    %v8679 = vpack.c.b16 %v8319, %v8316
    %v8680 = vpack.c.b16 %v8320, %v8317
    %v8681 = vpack.c.b16 %v8321, %v8318
    %v8682 = vpack.c.b16 %v8325, %v8322
    %v8683 = vpack.c.b16 %v8326, %v8323
    %v8684 = vpack.c.b16 %v8327, %v8324
    %v8685 = vpack.c.b16 %v8331, %v8328
    %v8686 = vpack.c.b16 %v8332, %v8329
    %v8687 = vpack.c.b16 %v8333, %v8330
    %v8688 = vpack.c.b16 %v8337, %v8334
    %v8689 = vpack.c.b16 %v8338, %v8335
    %v8690 = vpack.c.b16 %v8339, %v8336
    %v8691 = vpack.c.b16 %v8343, %v8340
    %v8692 = vpack.c.b16 %v8344, %v8341
    %v8693 = vpack.c.b16 %v8345, %v8342
    %v8694 = vpack.c.b16 %v8349, %v8346
    %v8695 = vpack.c.b16 %v8350, %v8347
    %v8696 = vpack.c.b16 %v8351, %v8348
    %v8697 = vpack.c.b16 %v8355, %v8352
    %v8698 = vpack.c.b16 %v8356, %v8353
    %v8699 = vpack.c.b16 %v8357, %v8354
    %v8700 = vpack.c.b16 %v8361, %v8358
    %v8701 = vpack.c.b16 %v8362, %v8359
    %v8702 = vpack.c.b16 %v8363, %v8360
    %v8703 = vpack.c.b16 %v8367, %v8364
    %v8704 = vpack.c.b16 %v8368, %v8365
    %v8705 = vpack.c.b16 %v8369, %v8366
    %v8706 = vpack.c.b16 %v8373, %v8370
    %v8707 = vpack.c.b16 %v8374, %v8371
    %v8708 = vpack.c.b16 %v8375, %v8372
    %v8709 = vpack.c.b16 %v8379, %v8376
    %v8710 = vpack.c.b16 %v8380, %v8377
    %v8711 = vpack.c.b16 %v8381, %v8378
    %v8712 = vpack.c.b16 %v8385, %v8382
    %v8713 = vpack.c.b16 %v8386, %v8383
    %v8714 = vpack.c.b16 %v8387, %v8384
    %v8715 = vpack.c.b16 %v8391, %v8388
    %v8716 = vpack.c.b16 %v8392, %v8389
    %v8717 = vpack.c.b16 %v8393, %v8390
    %v8718 = vpack.c.b16 %v8397, %v8394
    %v8719 = vpack.c.b16 %v8398, %v8395
    %v8720 = vpack.c.b16 %v8399, %v8396
    %v8721 = vpack.c.b16 %v8403, %v8400
    %v8722 = vpack.c.b16 %v8404, %v8401
    %v8723 = vpack.c.b16 %v8405, %v8402
    %v8724 = vpack.c.b16 %v8409, %v8406
    %v8725 = vpack.c.b16 %v8410, %v8407
    %v8726 = vpack.c.b16 %v8411, %v8408
    %v8727 = vpack.c.b16 %v8415, %v8412
    %v8728 = vpack.c.b16 %v8416, %v8413
    %v8729 = vpack.c.b16 %v8417, %v8414
    %v8730 = vpack.c.b16 %v8421, %v8418
    %v8731 = vpack.c.b16 %v8422, %v8419
    %v8732 = vpack.c.b16 %v8423, %v8420
    %v8733 = vpack.c.b16 %v8427, %v8424
    %v8734 = vpack.c.b16 %v8428, %v8425
    %v8735 = vpack.c.b16 %v8429, %v8426
    %v8736 = vpack.c.b16 %v8433, %v8430
    %v8737 = vpack.c.b16 %v8434, %v8431
    %v8738 = vpack.c.b16 %v8435, %v8432
    %v8739 = vpack.c.b16 %v8439, %v8436
    %v8740 = vpack.c.b16 %v8440, %v8437
    %v8741 = vpack.c.b16 %v8441, %v8438
    %v8742 = vpack.c.b16 %v8445, %v8442
    %v8743 = vpack.c.b16 %v8446, %v8443
    %v8744 = vpack.c.b16 %v8447, %v8444
    %v8745 = vpack.c.b16 %v8451, %v8448
    %v8746 = vpack.c.b16 %v8452, %v8449
    %v8747 = vpack.c.b16 %v8453, %v8450
    %v8748 = vpack.c.b16 %v8457, %v8454
    %v8749 = vpack.c.b16 %v8458, %v8455
    %v8750 = vpack.c.b16 %v8459, %v8456
    %v8751 = vpack.c.b16 %v8463, %v8460
    %v8752 = vpack.c.b16 %v8464, %v8461
    %v8753 = vpack.c.b16 %v8465, %v8462
    %9042 = vmatprep.subr.bf16.mxu0 %v8467
    %9043 = vmatpush1.bf16.msra.mxu0 %v8466
    %9044 = vmatprep.subr.bf16.mxu0 %v8470
    %9045 = vmatpush1.bf16.msra.mxu0 %v8469
    %9046 = vmatprep.subr.bf16.mxu0 %v8473
    %9047 = vmatpush1.bf16.msra.mxu0 %v8472
    %9048 = vmatprep.subr.bf16.mxu0 %v8476
    %9049 = vmatpush1.bf16.msra.mxu0 %v8475
    %9050 = vmatprep.subr.bf16.mxu0 %v8479
    %9051 = vmatpush1.bf16.msra.mxu0 %v8478
    %9052 = vmatprep.subr.bf16.mxu0 %v8482
    %9053 = vmatpush1.bf16.msra.mxu0 %v8481
    %9054 = vmatprep.subr.bf16.mxu0 %v8485
    %9055 = vmatpush1.bf16.msra.mxu0 %v8484
    %9056 = vmatprep.subr.bf16.mxu0 %v8488
    %9057 = vmatpush1.bf16.msra.mxu0 %v8487
    %9058 = vmatprep.subr.bf16.mxu0 %v8491
    %9059 = vmatpush1.bf16.msra.mxu0 %v8490
    %9060 = vmatprep.subr.bf16.mxu0 %v8494
    %9061 = vmatpush1.bf16.msra.mxu0 %v8493
    %9062 = vmatprep.subr.bf16.mxu0 %v8497
    %9063 = vmatpush1.bf16.msra.mxu0 %v8496
    %9064 = vmatprep.subr.bf16.mxu0 %v8500
    %9065 = vmatpush1.bf16.msra.mxu0 %v8499
    %9066 = vmatprep.subr.bf16.mxu0 %v8503
    %9067 = vmatpush1.bf16.msra.mxu0 %v8502
    %9068 = vmatprep.subr.bf16.mxu0 %v8506
    %9069 = vmatpush1.bf16.msra.mxu0 %v8505
    %9070 = vmatprep.subr.bf16.mxu0 %v8509
    %9071 = vmatpush1.bf16.msra.mxu0 %v8508
    %9072 = vmatprep.subr.bf16.mxu0 %v8512
    %9073 = vmatpush1.bf16.msra.mxu0 %v8511
    %9074 = vmatprep.mubr.bf16.mxu0 %v7082
    %9075 = vmatmul.mubr.bf16.gmra.mrb[0].mxu0 %v7081
    %v9076 = vpop.f32.mrb[0].mxu0
    %v9077 = vadd.f32 %v7494, %v9076
    %v9078 = vpop.f32.mrb[0].mxu0
    %v9079 = vadd.f32 %v7498, %v9078
    %v9080 = vpop.f32.mrb[0].mxu0
    %v9081 = vadd.f32 %v7494, %v9080
    %v9082 = vpop.f32.mrb[0].mxu0
    %v9083 = vadd.f32 %v7498, %v9082
    %9084 = vmatprep.mubr.bf16.mxu0 %v7094
    %9085 = vmatmul.mubr.bf16.gmra.mrb[0].mxu0 %v7093
    %v9086 = vpop.f32.mrb[0].mxu0
    %v9087 = vadd.f32 %v7494, %v9086
    %v9088 = vpop.f32.mrb[0].mxu0
    %v9089 = vadd.f32 %v7498, %v9088
    %v9090 = vpop.f32.mrb[0].mxu0
    %v9091 = vadd.f32 %v7494, %v9090
    %v9092 = vpop.f32.mrb[0].mxu0
    %v9093 = vadd.f32 %v7498, %v9092
    %9094 = vdwg.mxu0
    %9095 = vmatprep.subr.bf16.mxu0 %v8515
    %9096 = vmatpush1.bf16.msra.mxu0 %v8514
    %9097 = vmatprep.subr.bf16.mxu0 %v8518
    %9098 = vmatpush1.bf16.msra.mxu0 %v8517
    %9099 = vmatprep.subr.bf16.mxu0 %v8521
    %9100 = vmatpush1.bf16.msra.mxu0 %v8520
    %9101 = vmatprep.subr.bf16.mxu0 %v8524
    %9102 = vmatpush1.bf16.msra.mxu0 %v8523
    %9103 = vmatprep.subr.bf16.mxu0 %v8527
    %9104 = vmatpush1.bf16.msra.mxu0 %v8526
    %9105 = vmatprep.subr.bf16.mxu0 %v8530
    %9106 = vmatpush1.bf16.msra.mxu0 %v8529
    %9107 = vmatprep.subr.bf16.mxu0 %v8533
    %9108 = vmatpush1.bf16.msra.mxu0 %v8532
    %9109 = vmatprep.subr.bf16.mxu0 %v8536
    %9110 = vmatpush1.bf16.msra.mxu0 %v8535
    %9111 = vmatprep.subr.bf16.mxu0 %v8539
    %9112 = vmatpush1.bf16.msra.mxu0 %v8538
    %9113 = vmatprep.subr.bf16.mxu0 %v8542
    %9114 = vmatpush1.bf16.msra.mxu0 %v8541
    %9115 = vmatprep.subr.bf16.mxu0 %v8545
    %9116 = vmatpush1.bf16.msra.mxu0 %v8544
    %9117 = vmatprep.subr.bf16.mxu0 %v8548
    %9118 = vmatpush1.bf16.msra.mxu0 %v8547
    %9119 = vmatprep.subr.bf16.mxu0 %v8551
    %9120 = vmatpush1.bf16.msra.mxu0 %v8550
    %9121 = vmatprep.subr.bf16.mxu0 %v8554
    %9122 = vmatpush1.bf16.msra.mxu0 %v8553
    %9123 = vmatprep.subr.bf16.mxu0 %v8557
    %9124 = vmatpush1.bf16.msra.mxu0 %v8556
    %9125 = vmatprep.subr.bf16.mxu0 %v8560
    %9126 = vmatpush1.bf16.msra.mxu0 %v8559
    %9127 = vmatprep.mubr.bf16.mxu0 %v7084
    %9128 = vmatmul.mubr.bf16.gmra.mrb[0].mxu0 %v7083
    %v9129 = vpop.f32.mrb[0].mxu0
    %v9130 = vadd.f32 %v9077, %v9129
    %v9131 = vpop.f32.mrb[0].mxu0
    %v9132 = vadd.f32 %v9079, %v9131
    %v9133 = vpop.f32.mrb[0].mxu0
    %v9134 = vadd.f32 %v9081, %v9133
    %v9135 = vpop.f32.mrb[0].mxu0
    %v9136 = vadd.f32 %v9083, %v9135
    %9137 = vmatprep.mubr.bf16.mxu0 %v7096
    %9138 = vmatmul.mubr.bf16.gmra.mrb[0].mxu0 %v7095
    %v9139 = vpop.f32.mrb[0].mxu0
    %v9140 = vadd.f32 %v9087, %v9139
    %v9141 = vpop.f32.mrb[0].mxu0
    %v9142 = vadd.f32 %v9089, %v9141
    %v9143 = vpop.f32.mrb[0].mxu0
    %v9144 = vadd.f32 %v9091, %v9143
    %v9145 = vpop.f32.mrb[0].mxu0
    %v9146 = vadd.f32 %v9093, %v9145
    %9147 = vdwg.mxu0
    %9148 = vmatprep.subr.bf16.mxu0 %v8563
    %9149 = vmatpush1.bf16.msra.mxu0 %v8562
    %9150 = vmatprep.subr.bf16.mxu0 %v8566
    %9151 = vmatpush1.bf16.msra.mxu0 %v8565
    %9152 = vmatprep.subr.bf16.mxu0 %v8569
    %9153 = vmatpush1.bf16.msra.mxu0 %v8568
    %9154 = vmatprep.subr.bf16.mxu0 %v8572
    %9155 = vmatpush1.bf16.msra.mxu0 %v8571
    %9156 = vmatprep.subr.bf16.mxu0 %v8575
    %9157 = vmatpush1.bf16.msra.mxu0 %v8574
    %9158 = vmatprep.subr.bf16.mxu0 %v8578
    %9159 = vmatpush1.bf16.msra.mxu0 %v8577
    %9160 = vmatprep.subr.bf16.mxu0 %v8581
    %9161 = vmatpush1.bf16.msra.mxu0 %v8580
    %9162 = vmatprep.subr.bf16.mxu0 %v8584
    %9163 = vmatpush1.bf16.msra.mxu0 %v8583
    %9164 = vmatprep.subr.bf16.mxu0 %v8587
    %9165 = vmatpush1.bf16.msra.mxu0 %v8586
    %9166 = vmatprep.subr.bf16.mxu0 %v8590
    %9167 = vmatpush1.bf16.msra.mxu0 %v8589
    %9168 = vmatprep.subr.bf16.mxu0 %v8593
    %9169 = vmatpush1.bf16.msra.mxu0 %v8592
    %9170 = vmatprep.subr.bf16.mxu0 %v8596
    %9171 = vmatpush1.bf16.msra.mxu0 %v8595
    %9172 = vmatprep.subr.bf16.mxu0 %v8599
    %9173 = vmatpush1.bf16.msra.mxu0 %v8598
    %9174 = vmatprep.subr.bf16.mxu0 %v8602
    %9175 = vmatpush1.bf16.msra.mxu0 %v8601
    %9176 = vmatprep.subr.bf16.mxu0 %v8605
    %9177 = vmatpush1.bf16.msra.mxu0 %v8604
    %9178 = vmatprep.subr.bf16.mxu0 %v8608
    %9179 = vmatpush1.bf16.msra.mxu0 %v8607
    %9180 = vmatprep.mubr.bf16.mxu0 %v7086
    %9181 = vmatmul.mubr.bf16.gmra.mrb[0].mxu0 %v7085
    %v9182 = vpop.f32.mrb[0].mxu0
    %v9183 = vadd.f32 %v9130, %v9182
    %v9184 = vpop.f32.mrb[0].mxu0
    %v9185 = vadd.f32 %v9132, %v9184
    %v9186 = vpop.f32.mrb[0].mxu0
    %v9187 = vadd.f32 %v9134, %v9186
    %v9188 = vpop.f32.mrb[0].mxu0
    %v9189 = vadd.f32 %v9136, %v9188
    %9190 = vmatprep.mubr.bf16.mxu0 %v7098
    %9191 = vmatmul.mubr.bf16.gmra.mrb[0].mxu0 %v7097
    %v9192 = vpop.f32.mrb[0].mxu0
    %v9193 = vadd.f32 %v9140, %v9192
    %v9194 = vpop.f32.mrb[0].mxu0
    %v9195 = vadd.f32 %v9142, %v9194
    %v9196 = vpop.f32.mrb[0].mxu0
    %v9197 = vadd.f32 %v9144, %v9196
    %v9198 = vpop.f32.mrb[0].mxu0
    %v9199 = vadd.f32 %v9146, %v9198
    %9200 = vdwg.mxu0
    %9201 = vmatprep.subr.bf16.mxu0 %v8611
    %9202 = vmatpush1.bf16.msra.mxu0 %v8610
    %9203 = vmatprep.subr.bf16.mxu0 %v8614
    %9204 = vmatpush1.bf16.msra.mxu0 %v8613
    %9205 = vmatprep.subr.bf16.mxu0 %v8617
    %9206 = vmatpush1.bf16.msra.mxu0 %v8616
    %9207 = vmatprep.subr.bf16.mxu0 %v8620
    %9208 = vmatpush1.bf16.msra.mxu0 %v8619
    %9209 = vmatprep.subr.bf16.mxu0 %v8623
    %9210 = vmatpush1.bf16.msra.mxu0 %v8622
    %9211 = vmatprep.subr.bf16.mxu0 %v8626
    %9212 = vmatpush1.bf16.msra.mxu0 %v8625
    %9213 = vmatprep.subr.bf16.mxu0 %v8629
    %9214 = vmatpush1.bf16.msra.mxu0 %v8628
    %9215 = vmatprep.subr.bf16.mxu0 %v8632
    %9216 = vmatpush1.bf16.msra.mxu0 %v8631
    %9217 = vmatprep.subr.bf16.mxu0 %v8635
    %9218 = vmatpush1.bf16.msra.mxu0 %v8634
    %9219 = vmatprep.subr.bf16.mxu0 %v8638
    %9220 = vmatpush1.bf16.msra.mxu0 %v8637
    %9221 = vmatprep.subr.bf16.mxu0 %v8641
    %9222 = vmatpush1.bf16.msra.mxu0 %v8640
    %9223 = vmatprep.subr.bf16.mxu0 %v8644
    %9224 = vmatpush1.bf16.msra.mxu0 %v8643
    %9225 = vmatprep.subr.bf16.mxu0 %v8647
    %9226 = vmatpush1.bf16.msra.mxu0 %v8646
    %9227 = vmatprep.subr.bf16.mxu0 %v8650
    %9228 = vmatpush1.bf16.msra.mxu0 %v8649
    %9229 = vmatprep.subr.bf16.mxu0 %v8653
    %9230 = vmatpush1.bf16.msra.mxu0 %v8652
    %9231 = vmatprep.subr.bf16.mxu0 %v8656
    %9232 = vmatpush1.bf16.msra.mxu0 %v8655
    %9233 = vmatprep.mubr.bf16.mxu0 %v7088
    %9234 = vmatmul.mubr.bf16.gmra.mrb[0].mxu0 %v7087
    %v9235 = vpop.f32.mrb[0].mxu0
    %v9236 = vadd.f32 %v9183, %v9235
    %v9237 = vpop.f32.mrb[0].mxu0
    %v9238 = vadd.f32 %v9185, %v9237
    %v9239 = vpop.f32.mrb[0].mxu0
    %v9240 = vadd.f32 %v9187, %v9239
    %v9241 = vpop.f32.mrb[0].mxu0
    %v9242 = vadd.f32 %v9189, %v9241
    %9243 = vmatprep.mubr.bf16.mxu0 %v7100
    %9244 = vmatmul.mubr.bf16.gmra.mrb[0].mxu0 %v7099
    %v9245 = vpop.f32.mrb[0].mxu0
    %v9246 = vadd.f32 %v9193, %v9245
    %v9247 = vpop.f32.mrb[0].mxu0
    %v9248 = vadd.f32 %v9195, %v9247
    %v9249 = vpop.f32.mrb[0].mxu0
    %v9250 = vadd.f32 %v9197, %v9249
    %v9251 = vpop.f32.mrb[0].mxu0
    %v9252 = vadd.f32 %v9199, %v9251
    %9253 = vdwg.mxu0
    %9254 = vmatprep.subr.bf16.mxu0 %v8659
    %9255 = vmatpush1.bf16.msra.mxu0 %v8658
    %9256 = vmatprep.subr.bf16.mxu0 %v8662
    %9257 = vmatpush1.bf16.msra.mxu0 %v8661
    %9258 = vmatprep.subr.bf16.mxu0 %v8665
    %9259 = vmatpush1.bf16.msra.mxu0 %v8664
    %9260 = vmatprep.subr.bf16.mxu0 %v8668
    %9261 = vmatpush1.bf16.msra.mxu0 %v8667
    %9262 = vmatprep.subr.bf16.mxu0 %v8671
    %9263 = vmatpush1.bf16.msra.mxu0 %v8670
    %9264 = vmatprep.subr.bf16.mxu0 %v8674
    %9265 = vmatpush1.bf16.msra.mxu0 %v8673
    %9266 = vmatprep.subr.bf16.mxu0 %v8677
    %9267 = vmatpush1.bf16.msra.mxu0 %v8676
    %9268 = vmatprep.subr.bf16.mxu0 %v8680
    %9269 = vmatpush1.bf16.msra.mxu0 %v8679
    %9270 = vmatprep.subr.bf16.mxu0 %v8683
    %9271 = vmatpush1.bf16.msra.mxu0 %v8682
    %9272 = vmatprep.subr.bf16.mxu0 %v8686
    %9273 = vmatpush1.bf16.msra.mxu0 %v8685
    %9274 = vmatprep.subr.bf16.mxu0 %v8689
    %9275 = vmatpush1.bf16.msra.mxu0 %v8688
    %9276 = vmatprep.subr.bf16.mxu0 %v8692
    %9277 = vmatpush1.bf16.msra.mxu0 %v8691
    %9278 = vmatprep.subr.bf16.mxu0 %v8695
    %9279 = vmatpush1.bf16.msra.mxu0 %v8694
    %9280 = vmatprep.subr.bf16.mxu0 %v8698
    %9281 = vmatpush1.bf16.msra.mxu0 %v8697
    %9282 = vmatprep.subr.bf16.mxu0 %v8701
    %9283 = vmatpush1.bf16.msra.mxu0 %v8700
    %9284 = vmatprep.subr.bf16.mxu0 %v8704
    %9285 = vmatpush1.bf16.msra.mxu0 %v8703
    %9286 = vmatprep.mubr.bf16.mxu0 %v7090
    %9287 = vmatmul.mubr.bf16.gmra.mrb[0].mxu0 %v7089
    %v9288 = vpop.f32.mrb[0].mxu0
    %v9289 = vadd.f32 %v9236, %v9288
    %v9290 = vpop.f32.mrb[0].mxu0
    %v9291 = vadd.f32 %v9238, %v9290
    %v9292 = vpop.f32.mrb[0].mxu0
    %v9293 = vadd.f32 %v9240, %v9292
    %v9294 = vpop.f32.mrb[0].mxu0
    %v9295 = vadd.f32 %v9242, %v9294
    %9296 = vmatprep.mubr.bf16.mxu0 %v7102
    %9297 = vmatmul.mubr.bf16.gmra.mrb[0].mxu0 %v7101
    %v9298 = vpop.f32.mrb[0].mxu0
    %v9299 = vadd.f32 %v9246, %v9298
    %v9300 = vpop.f32.mrb[0].mxu0
    %v9301 = vadd.f32 %v9248, %v9300
    %v9302 = vpop.f32.mrb[0].mxu0
    %v9303 = vadd.f32 %v9250, %v9302
    %v9304 = vpop.f32.mrb[0].mxu0
    %v9305 = vadd.f32 %v9252, %v9304
    %9306 = vdwg.mxu0
    %9307 = vmatprep.subr.bf16.mxu0 %v8707
    %9308 = vmatpush1.bf16.msra.mxu0 %v8706
    %9309 = vmatprep.subr.bf16.mxu0 %v8710
    %9310 = vmatpush1.bf16.msra.mxu0 %v8709
    %9311 = vmatprep.subr.bf16.mxu0 %v8713
    %9312 = vmatpush1.bf16.msra.mxu0 %v8712
    %9313 = vmatprep.subr.bf16.mxu0 %v8716
    %9314 = vmatpush1.bf16.msra.mxu0 %v8715
    %9315 = vmatprep.subr.bf16.mxu0 %v8719
    %9316 = vmatpush1.bf16.msra.mxu0 %v8718
    %9317 = vmatprep.subr.bf16.mxu0 %v8722
    %9318 = vmatpush1.bf16.msra.mxu0 %v8721
    %9319 = vmatprep.subr.bf16.mxu0 %v8725
    %9320 = vmatpush1.bf16.msra.mxu0 %v8724
    %9321 = vmatprep.subr.bf16.mxu0 %v8728
    %9322 = vmatpush1.bf16.msra.mxu0 %v8727
    %9323 = vmatprep.subr.bf16.mxu0 %v8731
    %9324 = vmatpush1.bf16.msra.mxu0 %v8730
    %9325 = vmatprep.subr.bf16.mxu0 %v8734
    %9326 = vmatpush1.bf16.msra.mxu0 %v8733
    %9327 = vmatprep.subr.bf16.mxu0 %v8737
    %9328 = vmatpush1.bf16.msra.mxu0 %v8736
    %9329 = vmatprep.subr.bf16.mxu0 %v8740
    %9330 = vmatpush1.bf16.msra.mxu0 %v8739
    %9331 = vmatprep.subr.bf16.mxu0 %v8743
    %9332 = vmatpush1.bf16.msra.mxu0 %v8742
    %9333 = vmatprep.subr.bf16.mxu0 %v8746
    %9334 = vmatpush1.bf16.msra.mxu0 %v8745
    %9335 = vmatprep.subr.bf16.mxu0 %v8749
    %9336 = vmatpush1.bf16.msra.mxu0 %v8748
    %9337 = vmatprep.subr.bf16.mxu0 %v8752
    %9338 = vmatpush1.bf16.msra.mxu0 %v8751
    %9339 = vmatprep.mubr.bf16.mxu0 %v7092
    %9340 = vmatmul.mubr.bf16.gmra.mrb[0].mxu0 %v7091
    %v9341 = vpop.f32.mrb[0].mxu0
    %v9342 = vadd.f32 %v9289, %v9341
    %v9343 = vpop.f32.mrb[0].mxu0
    %v9344 = vadd.f32 %v9291, %v9343
    %v9345 = vpop.f32.mrb[0].mxu0
    %v9346 = vadd.f32 %v9293, %v9345
    %v9347 = vpop.f32.mrb[0].mxu0
    %v9348 = vadd.f32 %v9295, %v9347
    %9349 = vmatprep.mubr.bf16.mxu0 %v7104
    %9350 = vmatmul.mubr.bf16.gmra.mrb[0].mxu0 %v7103
    %v9351 = vpop.f32.mrb[0].mxu0
    %v9352 = vadd.f32 %v9299, %v9351
    %v9353 = vpop.f32.mrb[0].mxu0
    %v9354 = vadd.f32 %v9301, %v9353
    %v9355 = vpop.f32.mrb[0].mxu0
    %v9356 = vadd.f32 %v9303, %v9355
    %v9357 = vpop.f32.mrb[0].mxu0
    %v9358 = vadd.f32 %v9305, %v9357
    %9359 = vdwg.mxu0
    %9360 = vmatprep.subr.bf16.mxu0 0
    %9361 = vmatpush1.bf16.msra.mxu0 %v8468
    %9362 = vmatprep.subr.bf16.mxu0 0
    %9363 = vmatpush1.bf16.msra.mxu0 %v8471
    %9364 = vmatprep.subr.bf16.mxu0 0
    %9365 = vmatpush1.bf16.msra.mxu0 %v8474
    %9366 = vmatprep.subr.bf16.mxu0 0
    %9367 = vmatpush1.bf16.msra.mxu0 %v8477
    %9368 = vmatprep.subr.bf16.mxu0 0
    %9369 = vmatpush1.bf16.msra.mxu0 %v8480
    %9370 = vmatprep.subr.bf16.mxu0 0
    %9371 = vmatpush1.bf16.msra.mxu0 %v8483
    %9372 = vmatprep.subr.bf16.mxu0 0
    %9373 = vmatpush1.bf16.msra.mxu0 %v8486
    %9374 = vmatprep.subr.bf16.mxu0 0
    %9375 = vmatpush1.bf16.msra.mxu0 %v8489
    %9376 = vmatprep.subr.bf16.mxu0 0
    %9377 = vmatpush1.bf16.msra.mxu0 %v8492
    %9378 = vmatprep.subr.bf16.mxu0 0
    %9379 = vmatpush1.bf16.msra.mxu0 %v8495
    %9380 = vmatprep.subr.bf16.mxu0 0
    %9381 = vmatpush1.bf16.msra.mxu0 %v8498
    %9382 = vmatprep.subr.bf16.mxu0 0
    %9383 = vmatpush1.bf16.msra.mxu0 %v8501
    %9384 = vmatprep.subr.bf16.mxu0 0
    %9385 = vmatpush1.bf16.msra.mxu0 %v8504
    %9386 = vmatprep.subr.bf16.mxu0 0
    %9387 = vmatpush1.bf16.msra.mxu0 %v8507
    %9388 = vmatprep.subr.bf16.mxu0 0
    %9389 = vmatpush1.bf16.msra.mxu0 %v8510
    %9390 = vmatprep.subr.bf16.mxu0 0
    %9391 = vmatpush1.bf16.msra.mxu0 %v8513
    %9392 = vmatprep.mubr.bf16.mxu0 %v7082
    %9393 = vmatmul.mubr.bf16.gmra.mrb[0].mxu0 %v7081
    %v9394 = vpop.f32.mrb[0].mxu0
    %v9395 = vadd.f32 %v7502, %v9394
    %v9396 = vpop.f32.mrb[0].mxu0
    %v9397 = vpop.f32.mrb[0].mxu0
    %v9398 = vadd.f32 %v7502, %v9397
    %v9399 = vpop.f32.mrb[0].mxu0
    %9400 = vmatprep.mubr.bf16.mxu0 %v7094
    %9401 = vmatmul.mubr.bf16.gmra.mrb[0].mxu0 %v7093
    %v9402 = vpop.f32.mrb[0].mxu0
    %v9403 = vadd.f32 %v7502, %v9402
    %v9404 = vpop.f32.mrb[0].mxu0
    %v9405 = vpop.f32.mrb[0].mxu0
    %v9406 = vadd.f32 %v7502, %v9405
    %v9407 = vpop.f32.mrb[0].mxu0
    %9408 = vdwg.mxu0
    %9409 = vmatprep.subr.bf16.mxu0 0
    %9410 = vmatpush1.bf16.msra.mxu0 %v8516
    %9411 = vmatprep.subr.bf16.mxu0 0
    %9412 = vmatpush1.bf16.msra.mxu0 %v8519
    %9413 = vmatprep.subr.bf16.mxu0 0
    %9414 = vmatpush1.bf16.msra.mxu0 %v8522
    %9415 = vmatprep.subr.bf16.mxu0 0
    %9416 = vmatpush1.bf16.msra.mxu0 %v8525
    %9417 = vmatprep.subr.bf16.mxu0 0
    %9418 = vmatpush1.bf16.msra.mxu0 %v8528
    %9419 = vmatprep.subr.bf16.mxu0 0
    %9420 = vmatpush1.bf16.msra.mxu0 %v8531
    %9421 = vmatprep.subr.bf16.mxu0 0
    %9422 = vmatpush1.bf16.msra.mxu0 %v8534
    %9423 = vmatprep.subr.bf16.mxu0 0
    %9424 = vmatpush1.bf16.msra.mxu0 %v8537
    %9425 = vmatprep.subr.bf16.mxu0 0
    %9426 = vmatpush1.bf16.msra.mxu0 %v8540
    %9427 = vmatprep.subr.bf16.mxu0 0
    %9428 = vmatpush1.bf16.msra.mxu0 %v8543
    %9429 = vmatprep.subr.bf16.mxu0 0
    %9430 = vmatpush1.bf16.msra.mxu0 %v8546
    %9431 = vmatprep.subr.bf16.mxu0 0
    %9432 = vmatpush1.bf16.msra.mxu0 %v8549
    %9433 = vmatprep.subr.bf16.mxu0 0
    %9434 = vmatpush1.bf16.msra.mxu0 %v8552
    %9435 = vmatprep.subr.bf16.mxu0 0
    %9436 = vmatpush1.bf16.msra.mxu0 %v8555
    %9437 = vmatprep.subr.bf16.mxu0 0
    %9438 = vmatpush1.bf16.msra.mxu0 %v8558
    %9439 = vmatprep.subr.bf16.mxu0 0
    %9440 = vmatpush1.bf16.msra.mxu0 %v8561
    %9441 = vmatprep.mubr.bf16.mxu0 %v7084
    %9442 = vmatmul.mubr.bf16.gmra.mrb[0].mxu0 %v7083
    %v9443 = vpop.f32.mrb[0].mxu0
    %v9444 = vadd.f32 %v9395, %v9443
    %v9445 = vpop.f32.mrb[0].mxu0
    %v9446 = vpop.f32.mrb[0].mxu0
    %v9447 = vadd.f32 %v9398, %v9446
    %v9448 = vpop.f32.mrb[0].mxu0
    %9449 = vmatprep.mubr.bf16.mxu0 %v7096
    %9450 = vmatmul.mubr.bf16.gmra.mrb[0].mxu0 %v7095
    %v9451 = vpop.f32.mrb[0].mxu0
    %v9452 = vadd.f32 %v9403, %v9451
    %v9453 = vpop.f32.mrb[0].mxu0
    %v9454 = vpop.f32.mrb[0].mxu0
    %v9455 = vadd.f32 %v9406, %v9454
    %v9456 = vpop.f32.mrb[0].mxu0
    %9457 = vdwg.mxu0
    %9458 = vmatprep.subr.bf16.mxu0 0
    %9459 = vmatpush1.bf16.msra.mxu0 %v8564
    %9460 = vmatprep.subr.bf16.mxu0 0
    %9461 = vmatpush1.bf16.msra.mxu0 %v8567
    %9462 = vmatprep.subr.bf16.mxu0 0
    %9463 = vmatpush1.bf16.msra.mxu0 %v8570
    %9464 = vmatprep.subr.bf16.mxu0 0
    %9465 = vmatpush1.bf16.msra.mxu0 %v8573
    %9466 = vmatprep.subr.bf16.mxu0 0
    %9467 = vmatpush1.bf16.msra.mxu0 %v8576
    %9468 = vmatprep.subr.bf16.mxu0 0
    %9469 = vmatpush1.bf16.msra.mxu0 %v8579
    %9470 = vmatprep.subr.bf16.mxu0 0
    %9471 = vmatpush1.bf16.msra.mxu0 %v8582
    %9472 = vmatprep.subr.bf16.mxu0 0
    %9473 = vmatpush1.bf16.msra.mxu0 %v8585
    %9474 = vmatprep.subr.bf16.mxu0 0
    %9475 = vmatpush1.bf16.msra.mxu0 %v8588
    %9476 = vmatprep.subr.bf16.mxu0 0
    %9477 = vmatpush1.bf16.msra.mxu0 %v8591
    %9478 = vmatprep.subr.bf16.mxu0 0
    %9479 = vmatpush1.bf16.msra.mxu0 %v8594
    %9480 = vmatprep.subr.bf16.mxu0 0
    %9481 = vmatpush1.bf16.msra.mxu0 %v8597
    %9482 = vmatprep.subr.bf16.mxu0 0
    %9483 = vmatpush1.bf16.msra.mxu0 %v8600
    %9484 = vmatprep.subr.bf16.mxu0 0
    %9485 = vmatpush1.bf16.msra.mxu0 %v8603
    %9486 = vmatprep.subr.bf16.mxu0 0
    %9487 = vmatpush1.bf16.msra.mxu0 %v8606
    %9488 = vmatprep.subr.bf16.mxu0 0
    %9489 = vmatpush1.bf16.msra.mxu0 %v8609
    %9490 = vmatprep.mubr.bf16.mxu0 %v7086
    %9491 = vmatmul.mubr.bf16.gmra.mrb[0].mxu0 %v7085
    %v9492 = vpop.f32.mrb[0].mxu0
    %v9493 = vadd.f32 %v9444, %v9492
    %v9494 = vpop.f32.mrb[0].mxu0
    %v9495 = vpop.f32.mrb[0].mxu0
    %v9496 = vadd.f32 %v9447, %v9495
    %v9497 = vpop.f32.mrb[0].mxu0
    %9498 = vmatprep.mubr.bf16.mxu0 %v7098
    %9499 = vmatmul.mubr.bf16.gmra.mrb[0].mxu0 %v7097
    %v9500 = vpop.f32.mrb[0].mxu0
    %v9501 = vadd.f32 %v9452, %v9500
    %v9502 = vpop.f32.mrb[0].mxu0
    %v9503 = vpop.f32.mrb[0].mxu0
    %v9504 = vadd.f32 %v9455, %v9503
    %v9505 = vpop.f32.mrb[0].mxu0
    %9506 = vdwg.mxu0
    %9507 = vmatprep.subr.bf16.mxu0 0
    %9508 = vmatpush1.bf16.msra.mxu0 %v8612
    %9509 = vmatprep.subr.bf16.mxu0 0
    %9510 = vmatpush1.bf16.msra.mxu0 %v8615
    %9511 = vmatprep.subr.bf16.mxu0 0
    %9512 = vmatpush1.bf16.msra.mxu0 %v8618
    %9513 = vmatprep.subr.bf16.mxu0 0
    %9514 = vmatpush1.bf16.msra.mxu0 %v8621
    %9515 = vmatprep.subr.bf16.mxu0 0
    %9516 = vmatpush1.bf16.msra.mxu0 %v8624
    %9517 = vmatprep.subr.bf16.mxu0 0
    %9518 = vmatpush1.bf16.msra.mxu0 %v8627
    %9519 = vmatprep.subr.bf16.mxu0 0
    %9520 = vmatpush1.bf16.msra.mxu0 %v8630
    %9521 = vmatprep.subr.bf16.mxu0 0
    %9522 = vmatpush1.bf16.msra.mxu0 %v8633
    %9523 = vmatprep.subr.bf16.mxu0 0
    %9524 = vmatpush1.bf16.msra.mxu0 %v8636
    %9525 = vmatprep.subr.bf16.mxu0 0
    %9526 = vmatpush1.bf16.msra.mxu0 %v8639
    %9527 = vmatprep.subr.bf16.mxu0 0
    %9528 = vmatpush1.bf16.msra.mxu0 %v8642
    %9529 = vmatprep.subr.bf16.mxu0 0
    %9530 = vmatpush1.bf16.msra.mxu0 %v8645
    %9531 = vmatprep.subr.bf16.mxu0 0
    %9532 = vmatpush1.bf16.msra.mxu0 %v8648
    %9533 = vmatprep.subr.bf16.mxu0 0
    %9534 = vmatpush1.bf16.msra.mxu0 %v8651
    %9535 = vmatprep.subr.bf16.mxu0 0
    %9536 = vmatpush1.bf16.msra.mxu0 %v8654
    %9537 = vmatprep.subr.bf16.mxu0 0
    %9538 = vmatpush1.bf16.msra.mxu0 %v8657
    %9539 = vmatprep.mubr.bf16.mxu0 %v7088
    %9540 = vmatmul.mubr.bf16.gmra.mrb[0].mxu0 %v7087
    %v9541 = vpop.f32.mrb[0].mxu0
    %v9542 = vadd.f32 %v9493, %v9541
    %v9543 = vpop.f32.mrb[0].mxu0
    %v9544 = vpop.f32.mrb[0].mxu0
    %v9545 = vadd.f32 %v9496, %v9544
    %v9546 = vpop.f32.mrb[0].mxu0
    %9547 = vmatprep.mubr.bf16.mxu0 %v7100
    %9548 = vmatmul.mubr.bf16.gmra.mrb[0].mxu0 %v7099
    %v9549 = vpop.f32.mrb[0].mxu0
    %v9550 = vadd.f32 %v9501, %v9549
    %v9551 = vpop.f32.mrb[0].mxu0
    %v9552 = vpop.f32.mrb[0].mxu0
    %v9553 = vadd.f32 %v9504, %v9552
    %v9554 = vpop.f32.mrb[0].mxu0
    %9555 = vdwg.mxu0
    %9556 = vmatprep.subr.bf16.mxu0 0
    %9557 = vmatpush1.bf16.msra.mxu0 %v8660
    %9558 = vmatprep.subr.bf16.mxu0 0
    %9559 = vmatpush1.bf16.msra.mxu0 %v8663
    %9560 = vmatprep.subr.bf16.mxu0 0
    %9561 = vmatpush1.bf16.msra.mxu0 %v8666
    %9562 = vmatprep.subr.bf16.mxu0 0
    %9563 = vmatpush1.bf16.msra.mxu0 %v8669
    %9564 = vmatprep.subr.bf16.mxu0 0
    %9565 = vmatpush1.bf16.msra.mxu0 %v8672
    %9566 = vmatprep.subr.bf16.mxu0 0
    %9567 = vmatpush1.bf16.msra.mxu0 %v8675
    %9568 = vmatprep.subr.bf16.mxu0 0
    %9569 = vmatpush1.bf16.msra.mxu0 %v8678
    %9570 = vmatprep.subr.bf16.mxu0 0
    %9571 = vmatpush1.bf16.msra.mxu0 %v8681
    %9572 = vmatprep.subr.bf16.mxu0 0
    %9573 = vmatpush1.bf16.msra.mxu0 %v8684
    %9574 = vmatprep.subr.bf16.mxu0 0
    %9575 = vmatpush1.bf16.msra.mxu0 %v8687
    %9576 = vmatprep.subr.bf16.mxu0 0
    %9577 = vmatpush1.bf16.msra.mxu0 %v8690
    %9578 = vmatprep.subr.bf16.mxu0 0
    %9579 = vmatpush1.bf16.msra.mxu0 %v8693
    %9580 = vmatprep.subr.bf16.mxu0 0
    %9581 = vmatpush1.bf16.msra.mxu0 %v8696
    %9582 = vmatprep.subr.bf16.mxu0 0
    %9583 = vmatpush1.bf16.msra.mxu0 %v8699
    %9584 = vmatprep.subr.bf16.mxu0 0
    %9585 = vmatpush1.bf16.msra.mxu0 %v8702
    %9586 = vmatprep.subr.bf16.mxu0 0
    %9587 = vmatpush1.bf16.msra.mxu0 %v8705
    %9588 = vmatprep.mubr.bf16.mxu0 %v7090
    %9589 = vmatmul.mubr.bf16.gmra.mrb[0].mxu0 %v7089
    %v9590 = vpop.f32.mrb[0].mxu0
    %v9591 = vadd.f32 %v9542, %v9590
    %v9592 = vpop.f32.mrb[0].mxu0
    %v9593 = vpop.f32.mrb[0].mxu0
    %v9594 = vadd.f32 %v9545, %v9593
    %v9595 = vpop.f32.mrb[0].mxu0
    %9596 = vmatprep.mubr.bf16.mxu0 %v7102
    %9597 = vmatmul.mubr.bf16.gmra.mrb[0].mxu0 %v7101
    %v9598 = vpop.f32.mrb[0].mxu0
    %v9599 = vadd.f32 %v9550, %v9598
    %v9600 = vpop.f32.mrb[0].mxu0
    %v9601 = vpop.f32.mrb[0].mxu0
    %v9602 = vadd.f32 %v9553, %v9601
    %v9603 = vpop.f32.mrb[0].mxu0
    %9604 = vdwg.mxu0
    %9605 = vmatprep.subr.bf16.mxu0 0
    %9606 = vmatpush1.bf16.msra.mxu0 %v8708
    %9607 = vmatprep.subr.bf16.mxu0 0
    %9608 = vmatpush1.bf16.msra.mxu0 %v8711
    %9609 = vmatprep.subr.bf16.mxu0 0
    %9610 = vmatpush1.bf16.msra.mxu0 %v8714
    %9611 = vmatprep.subr.bf16.mxu0 0
    %9612 = vmatpush1.bf16.msra.mxu0 %v8717
    %9613 = vmatprep.subr.bf16.mxu0 0
    %9614 = vmatpush1.bf16.msra.mxu0 %v8720
    %9615 = vmatprep.subr.bf16.mxu0 0
    %9616 = vmatpush1.bf16.msra.mxu0 %v8723
    %9617 = vmatprep.subr.bf16.mxu0 0
    %9618 = vmatpush1.bf16.msra.mxu0 %v8726
    %9619 = vmatprep.subr.bf16.mxu0 0
    %9620 = vmatpush1.bf16.msra.mxu0 %v8729
    %9621 = vmatprep.subr.bf16.mxu0 0
    %9622 = vmatpush1.bf16.msra.mxu0 %v8732
    %9623 = vmatprep.subr.bf16.mxu0 0
    %9624 = vmatpush1.bf16.msra.mxu0 %v8735
    %9625 = vmatprep.subr.bf16.mxu0 0
    %9626 = vmatpush1.bf16.msra.mxu0 %v8738
    %9627 = vmatprep.subr.bf16.mxu0 0
    %9628 = vmatpush1.bf16.msra.mxu0 %v8741
    %9629 = vmatprep.subr.bf16.mxu0 0
    %9630 = vmatpush1.bf16.msra.mxu0 %v8744
    %9631 = vmatprep.subr.bf16.mxu0 0
    %9632 = vmatpush1.bf16.msra.mxu0 %v8747
    %9633 = vmatprep.subr.bf16.mxu0 0
    %9634 = vmatpush1.bf16.msra.mxu0 %v8750
    %9635 = vmatprep.subr.bf16.mxu0 0
    %9636 = vmatpush1.bf16.msra.mxu0 %v8753
    %9637 = vmatprep.mubr.bf16.mxu0 %v7092
    %9638 = vmatmul.mubr.bf16.gmra.mrb[0].mxu0 %v7091
    %v9639 = vpop.f32.mrb[0].mxu0
    %v9640 = vadd.f32 %v9591, %v9639
    %v9641 = vpop.f32.mrb[0].mxu0
    %v9642 = vpop.f32.mrb[0].mxu0
    %v9643 = vadd.f32 %v9594, %v9642
    %v9644 = vpop.f32.mrb[0].mxu0
    %9645 = vmatprep.mubr.bf16.mxu0 %v7104
    %9646 = vmatmul.mubr.bf16.gmra.mrb[0].mxu0 %v7103
    %v9647 = vpop.f32.mrb[0].mxu0
    %v9648 = vadd.f32 %v9599, %v9647
    %v9649 = vpop.f32.mrb[0].mxu0
    %v9650 = vpop.f32.mrb[0].mxu0
    %v9651 = vadd.f32 %v9602, %v9650
    %v9652 = vpop.f32.mrb[0].mxu0
    %9653 = vdwg.mxu0
    %9654 = vst [vmem:[#allocation22] sm:$0xff] %v9342
    %9655 = vst [vmem:[#allocation22 + $0x8] sm:$0xff] %v9344
    %9656 = vst [vmem:[#allocation22 + $0x10] sm:$0xff] %v9640
    %9657 = vst [vmem:[#allocation22 + $0x18] sm:$0xff] %v9346
    %9658 = vst [vmem:[#allocation22 + $0x20] sm:$0xff] %v9348
    %9659 = vst [vmem:[#allocation22 + $0x28] sm:$0xff] %v9643
    %9660 = vst [vmem:[#allocation22 + $0x30] sm:$0xff] %v9352
    %9661 = vst [vmem:[#allocation22 + $0x38] sm:$0xff] %v9354
    %9662 = vst [vmem:[#allocation22 + $0x40] sm:$0xff] %v9648
    %9663 = vst [vmem:[#allocation22 + $0x48] sm:$0xff] %v9356
    %9664 = vst [vmem:[#allocation22 + $0x50] sm:$0xff] %v9358
    %9665 = vst [vmem:[#allocation22 + $0x58] sm:$0xff] %v9651
    // Predicated region
    $region98: #{tpu_custom_call.1} parent=1 // pred_check
      _
    $region99: #{tpu_custom_call.1} parent=1 // pred_check_branch
      %9667 = sbr.rel (0) target = $region101
    $region100: #{tpu_custom_call.1} parent=1 // pred_region
      %s9669 = ssub.s32 1536, 1536
      %9670 = vsyncadd [#allocation4], %s9669
      %s9671 = sshll.u32 [#allocation22], 4
      %s9672 = int_to_ptr.vmem [resolvable:$true] %s9671
      %9677 = dma.vmem_to_hbm [thread:$0]  %s9672, 1536, %s12, [#allocation4], 384, 384, 24
    $region101: #{tpu_custom_call.1} parent=1 // pred_fallthru
      _
    // Predicated region
    $region102: #{tpu_custom_call.1} parent=1 // pred_check
      _
    $region103: #{tpu_custom_call.1} parent=1 // pred_check_branch
      %9679 = sbr.rel (0) target = $region105
    $region104: #{tpu_custom_call.1} parent=1 // pred_region
      %9680 = dma.done [#allocation4], 1536
    $region105: #{tpu_custom_call.1} parent=1 // pred_fallthru
      _
    %9681 = vsyncpa [#allocation3], 1
    %9682 = vsyncpa [#allocation6], 1
    %9683 = vsyncpa [#allocation9], 1
    %9684 = vsyncpa [#allocation12], 1
    %9685 = vsyncpa [#allocation15], 1
    %9686 = vsyncpa [#allocation18], 1
    %9687 = vsyncpa [#allocation21], 1
    %9688 = vsyncpa [#allocation4], 1

</llo_original>
